<compile_context>
chip_gen: v7x
topology: tpu7x:2x2x1
jax: 0.10.0
libtpu: 0.0.40
codegen_flags: <defaults>
</compile_context>

<pallas_src>
import functools

import jax
import jax.numpy as jnp
from jax.experimental import pallas as pl
from jax.experimental.pallas import tpu as pltpu

# Logical (torch) layer dims and their lane-dense (multiple-of-128) padding.
DIMS = [784, 1000, 500, 250, 30, 250, 500, 1000, 784]
PDIMS = [896, 1024, 512, 256, 128, 256, 512, 1024, 896]
N_LAYERS = len(DIMS) - 1

# LeakyReLU after layers 0,1,2 and 4,5,6 (matches the nn.Sequential: no
# activation after the 250->30 bottleneck, Sigmoid after the final layer).
LEAKY_AFTER = (0, 1, 2, 4, 5, 6)
NEG_SLOPE = 0.01  # torch nn.LeakyReLU default


def _leaky_relu(x):
    return jnp.where(x > 0, x, NEG_SLOPE * x)


def ae_kernel(x_ref, *refs):
    # refs = (w1, b1, ..., w8, b8, out_ref); weights bf16, biases/out f32.
    out_ref = refs[-1]
    param_refs = refs[:-1]

    h = x_ref[...]  # (batch_tile, 896) f32
    for layer in range(N_LAYERS):
        w = param_refs[2 * layer][...]      # bf16 (pin, pout)
        b = param_refs[2 * layer + 1][...]  # f32  (1, pout)
        # bf16 x bf16 MXU matmul with f32 accumulation.
        h = jnp.dot(h.astype(jnp.bfloat16), w,
                    preferred_element_type=jnp.float32)
        h = h + b
        if layer in LEAKY_AFTER:
            h = _leaky_relu(h)
    # Final layer (1024 -> 896 padded) followed by Sigmoid.
    out_ref[...] = jax.nn.sigmoid(h).astype(out_ref.dtype)


def init_params(key):
    """Deterministic synthetic params at the original (unpadded) sizes, f32.

    The torch module's sparse numpy init assigns to a `.weights` attribute that
    never reaches the real nn.Linear parameters, so any reasonable random init
    preserves the forward semantics; we use dense small-scale normal weights
    and zero biases.
    """
    ws, bs = [], []
    for i in range(N_LAYERS):
        key, sub = jax.random.split(key)
        fan_in, fan_out = DIMS[i], DIMS[i + 1]
        w = jax.random.normal(sub, (fan_in, fan_out), jnp.float32) * (fan_in ** -0.5)
        b = jnp.zeros((fan_out,), jnp.float32)
        ws.append(w)
        bs.append(b)
    return ws, bs


def pack_params(ws, bs):
    """Zero-pad params to lane-dense PDIMS and cast weights to bf16."""
    pws, pbs = [], []
    for i, (w, b) in enumerate(zip(ws, bs)):
        pin, pout = PDIMS[i], PDIMS[i + 1]
        pw = (jnp.zeros((pin, pout), jnp.bfloat16)
              .at[: w.shape[0], : w.shape[1]].set(w.astype(jnp.bfloat16)))
        pb = jnp.zeros((1, pout), jnp.float32).at[0, : b.shape[0]].set(b)
        pws.append(pw)
        pbs.append(pb)
    return pws, pbs


def _const_spec(shape):
    """Full-array block with a constant index map; single-buffered when the
    installed Pallas supports pipeline_mode (the block never changes, so a
    second buffer would only waste VMEM)."""
    idx_map = lambda i: (0,) * len(shape)
    try:
        return pl.BlockSpec(shape, idx_map, pipeline_mode=pl.Buffered(1))
    except (TypeError, AttributeError):
        return pl.BlockSpec(shape, idx_map)


@functools.partial(jax.jit, static_argnames=("batch_tile",))
def _ae_forward_padded(xp, pws, pbs, batch_tile):
    B = xp.shape[0]
    grid = (B // batch_tile,)

    params, param_specs = [], []
    for w, b in zip(pws, pbs):
        params += [w, b]
        param_specs += [_const_spec(w.shape), _const_spec(b.shape)]

    x_spec = pl.BlockSpec((batch_tile, PDIMS[0]), lambda i: (i, 0))
    out_spec = pl.BlockSpec((batch_tile, PDIMS[-1]), lambda i: (i, 0))

    return pl.pallas_call(
        ae_kernel,
        out_shape=jax.ShapeDtypeStruct((B, PDIMS[-1]), jnp.float32),
        grid=grid,
        in_specs=[x_spec] + param_specs,
        out_specs=out_spec,
        compiler_params=pltpu.CompilerParams(
            dimension_semantics=("parallel",),
            # Fits v5e/v6e (128 MiB) and v7x (64 MiB per TC): bf16 params
            # ~6.4 MB single-buffered + double-buffered I/O tiles + scratch.
            vmem_limit_bytes=56 << 20,
        ),
    )(xp, *params)


def ae_forward(x, pws, pbs, batch_tile=None):
    """x: (B, 1, 28, 28) (or (B, 784)); returns (B, 784) f32, like the torch model."""
    B = x.shape[0]
    # Flatten exactly like torch's x.view(-1, 784) (row-major NCHW flatten).
    x2d = x.reshape(B, DIMS[0]).astype(jnp.float32)
    if batch_tile is None:
        # Largest multiple-of-8 divisor of B up to 256 (fills the MXU M dim on
        # all generations while keeping activation VMEM modest).
        cands = [t for t in range(8, min(B, 256) + 1, 8) if B % t == 0]
        batch_tile = max(cands) if cands else B
    assert B % batch_tile == 0, "batch must be a multiple of the batch tile"
    xp = jnp.pad(x2d, ((0, 0), (0, PDIMS[0] - DIMS[0])))
    out_p = _ae_forward_padded(xp, tuple(pws), tuple(pbs), batch_tile=batch_tile)
    return out_p[:, : DIMS[-1]]


def ae_reference(x, ws, bs):
    """Pure-JAX f32 reference using the original (unpadded) params."""
    h = x.reshape(x.shape[0], DIMS[0]).astype(jnp.float32)
    for layer, (w, b) in enumerate(zip(ws, bs)):
        h = h @ w + b
        if layer in LEAKY_AFTER:
            h = _leaky_relu(h)
    return jax.nn.sigmoid(h)


if __name__ == "__main__":
    key = jax.random.PRNGKey(0)
    key, pkey, xkey = jax.random.split(key, 3)

    ws, bs = init_params(pkey)        # original-size f32 params (for reference)
    pws, pbs = pack_params(ws, bs)    # padded, weights in bf16 (for the kernel)

    # Small MNIST-like NCHW batch: (B, 1, 28, 28) -> view(-1, 784).
    B = 32
    x = jax.random.uniform(xkey, (B, 1, 28, 28), jnp.float32)

    # batch_tile=16 -> grid=(2,) exercises the pipelined / parallel grid path
    # at this small demo size; for production batches use batch_tile=128..256.
    out = ae_forward(x, pws, pbs, batch_tile=16)
    out = jax.block_until_ready(out)

    ref = ae_reference(x, ws, bs)
    assert out.shape == (B, 784)
    # bf16 matmul operands (f32 accumulation) -> looser tolerance than pure f32.
    assert jnp.allclose(out, ref, atol=2e-2, rtol=2e-2), "mismatch vs pure-JAX reference"

    print("KERNEL_OK")
</pallas_src>

<mosaic_0001>
module attributes {stable_mosaic.version = 11 : i64} {
  func.func @ae_kernel(%arg0: i32, %arg1: memref<16x896xf32, #tpu.memory_space<vmem>>, %arg2: memref<896x1024xbf16, #tpu.memory_space<vmem>>, %arg3: memref<1x1024xf32, #tpu.memory_space<vmem>>, %arg4: memref<1024x512xbf16, #tpu.memory_space<vmem>>, %arg5: memref<1x512xf32, #tpu.memory_space<vmem>>, %arg6: memref<512x256xbf16, #tpu.memory_space<vmem>>, %arg7: memref<1x256xf32, #tpu.memory_space<vmem>>, %arg8: memref<256x128xbf16, #tpu.memory_space<vmem>>, %arg9: memref<1x128xf32, #tpu.memory_space<vmem>>, %arg10: memref<128x256xbf16, #tpu.memory_space<vmem>>, %arg11: memref<1x256xf32, #tpu.memory_space<vmem>>, %arg12: memref<256x512xbf16, #tpu.memory_space<vmem>>, %arg13: memref<1x512xf32, #tpu.memory_space<vmem>>, %arg14: memref<512x1024xbf16, #tpu.memory_space<vmem>>, %arg15: memref<1x1024xf32, #tpu.memory_space<vmem>>, %arg16: memref<1024x896xbf16, #tpu.memory_space<vmem>>, %arg17: memref<1x896xf32, #tpu.memory_space<vmem>>, %arg18: memref<16x896xf32, #tpu.memory_space<vmem>>) attributes {dimension_semantics = [#tpu.dimension_semantics<parallel>], iteration_bounds = array<i64: 2>, scalar_prefetch = 0 : i64, scratch_operands = 0 : i64, tpu.core_type = #tpu.core_type<tc>, window_params = [{transform_indices = @transform_0, window_bounds = array<i64: 16, 896>}, {pipeline_mode = #tpu.pipeline_mode<synchronous>, transform_indices = @transform_1, window_bounds = array<i64: 896, 1024>}, {pipeline_mode = #tpu.pipeline_mode<synchronous>, transform_indices = @transform_2, window_bounds = array<i64: 1, 1024>}, {pipeline_mode = #tpu.pipeline_mode<synchronous>, transform_indices = @transform_3, window_bounds = array<i64: 1024, 512>}, {pipeline_mode = #tpu.pipeline_mode<synchronous>, transform_indices = @transform_4, window_bounds = array<i64: 1, 512>}, {pipeline_mode = #tpu.pipeline_mode<synchronous>, transform_indices = @transform_5, window_bounds = array<i64: 512, 256>}, {pipeline_mode = #tpu.pipeline_mode<synchronous>, transform_indices = @transform_6, window_bounds = array<i64: 1, 256>}, {pipeline_mode = #tpu.pipeline_mode<synchronous>, transform_indices = @transform_7, window_bounds = array<i64: 256, 128>}, {pipeline_mode = #tpu.pipeline_mode<synchronous>, transform_indices = @transform_8, window_bounds = array<i64: 1, 128>}, {pipeline_mode = #tpu.pipeline_mode<synchronous>, transform_indices = @transform_9, window_bounds = array<i64: 128, 256>}, {pipeline_mode = #tpu.pipeline_mode<synchronous>, transform_indices = @transform_10, window_bounds = array<i64: 1, 256>}, {pipeline_mode = #tpu.pipeline_mode<synchronous>, transform_indices = @transform_11, window_bounds = array<i64: 256, 512>}, {pipeline_mode = #tpu.pipeline_mode<synchronous>, transform_indices = @transform_12, window_bounds = array<i64: 1, 512>}, {pipeline_mode = #tpu.pipeline_mode<synchronous>, transform_indices = @transform_13, window_bounds = array<i64: 512, 1024>}, {pipeline_mode = #tpu.pipeline_mode<synchronous>, transform_indices = @transform_14, window_bounds = array<i64: 1, 1024>}, {pipeline_mode = #tpu.pipeline_mode<synchronous>, transform_indices = @transform_15, window_bounds = array<i64: 1024, 896>}, {pipeline_mode = #tpu.pipeline_mode<synchronous>, transform_indices = @transform_16, window_bounds = array<i64: 1, 896>}, {transform_indices = @transform_17, window_bounds = array<i64: 16, 896>}]} {
    %c0 = arith.constant 0 : index
    %c0_0 = arith.constant 0 : index
    %0 = vector.load %arg1[%c0, %c0_0] : memref<16x896xf32, #tpu.memory_space<vmem>>, vector<16x896xf32>
    %c0_1 = arith.constant 0 : index
    %c0_2 = arith.constant 0 : index
    %1 = vector.load %arg2[%c0_1, %c0_2] : memref<896x1024xbf16, #tpu.memory_space<vmem>>, vector<896x1024xbf16>
    %c0_3 = arith.constant 0 : index
    %c0_4 = arith.constant 0 : index
    %2 = vector.load %arg3[%c0_3, %c0_4] : memref<1x1024xf32, #tpu.memory_space<vmem>>, vector<1x1024xf32>
    %3 = arith.truncf %0 : vector<16x896xf32> to vector<16x896xbf16>
    %cst = arith.constant dense<0.000000e+00> : vector<16x1024xf32>
    %4 = tpu.matmul %3, %1, %cst {dimension_numbers = #tpu.dot_dimension_numbers<[1], [0], [0], [1], [0, 0, 1, 1], [], []>} : vector<16x896xbf16>, vector<896x1024xbf16>, vector<16x1024xf32> -> vector<16x1024xf32>
    %5 = vector.broadcast %2 : vector<1x1024xf32> to vector<16x1024xf32>
    %6 = arith.addf %4, %5 : vector<16x1024xf32>
    %cst_5 = arith.constant 0.000000e+00 : f32
    %7 = vector.broadcast %cst_5 : f32 to vector<16x1024xf32>
    %8 = arith.cmpf ogt, %6, %7 : vector<16x1024xf32>
    %cst_6 = arith.constant 0.00999999977 : f32
    %9 = vector.broadcast %cst_6 : f32 to vector<16x1024xf32>
    %10 = arith.mulf %9, %6 : vector<16x1024xf32>
    %11 = arith.select %8, %6, %10 : vector<16x1024xi1>, vector<16x1024xf32>
    %c0_7 = arith.constant 0 : index
    %c0_8 = arith.constant 0 : index
    %12 = vector.load %arg4[%c0_7, %c0_8] : memref<1024x512xbf16, #tpu.memory_space<vmem>>, vector<1024x512xbf16>
    %c0_9 = arith.constant 0 : index
    %c0_10 = arith.constant 0 : index
    %13 = vector.load %arg5[%c0_9, %c0_10] : memref<1x512xf32, #tpu.memory_space<vmem>>, vector<1x512xf32>
    %14 = arith.truncf %11 : vector<16x1024xf32> to vector<16x1024xbf16>
    %cst_11 = arith.constant dense<0.000000e+00> : vector<16x512xf32>
    %15 = tpu.matmul %14, %12, %cst_11 {dimension_numbers = #tpu.dot_dimension_numbers<[1], [0], [0], [1], [0, 0, 1, 1], [], []>} : vector<16x1024xbf16>, vector<1024x512xbf16>, vector<16x512xf32> -> vector<16x512xf32>
    %16 = vector.broadcast %13 : vector<1x512xf32> to vector<16x512xf32>
    %17 = arith.addf %15, %16 : vector<16x512xf32>
    %cst_12 = arith.constant 0.000000e+00 : f32
    %18 = vector.broadcast %cst_12 : f32 to vector<16x512xf32>
    %19 = arith.cmpf ogt, %17, %18 : vector<16x512xf32>
    %cst_13 = arith.constant 0.00999999977 : f32
    %20 = vector.broadcast %cst_13 : f32 to vector<16x512xf32>
    %21 = arith.mulf %20, %17 : vector<16x512xf32>
    %22 = arith.select %19, %17, %21 : vector<16x512xi1>, vector<16x512xf32>
    %c0_14 = arith.constant 0 : index
    %c0_15 = arith.constant 0 : index
    %23 = vector.load %arg6[%c0_14, %c0_15] : memref<512x256xbf16, #tpu.memory_space<vmem>>, vector<512x256xbf16>
    %c0_16 = arith.constant 0 : index
    %c0_17 = arith.constant 0 : index
    %24 = vector.load %arg7[%c0_16, %c0_17] : memref<1x256xf32, #tpu.memory_space<vmem>>, vector<1x256xf32>
    %25 = arith.truncf %22 : vector<16x512xf32> to vector<16x512xbf16>
    %cst_18 = arith.constant dense<0.000000e+00> : vector<16x256xf32>
    %26 = tpu.matmul %25, %23, %cst_18 {dimension_numbers = #tpu.dot_dimension_numbers<[1], [0], [0], [1], [0, 0, 1, 1], [], []>} : vector<16x512xbf16>, vector<512x256xbf16>, vector<16x256xf32> -> vector<16x256xf32>
    %27 = vector.broadcast %24 : vector<1x256xf32> to vector<16x256xf32>
    %28 = arith.addf %26, %27 : vector<16x256xf32>
    %cst_19 = arith.constant 0.000000e+00 : f32
    %29 = vector.broadcast %cst_19 : f32 to vector<16x256xf32>
    %30 = arith.cmpf ogt, %28, %29 : vector<16x256xf32>
    %cst_20 = arith.constant 0.00999999977 : f32
    %31 = vector.broadcast %cst_20 : f32 to vector<16x256xf32>
    %32 = arith.mulf %31, %28 : vector<16x256xf32>
    %33 = arith.select %30, %28, %32 : vector<16x256xi1>, vector<16x256xf32>
    %c0_21 = arith.constant 0 : index
    %c0_22 = arith.constant 0 : index
    %34 = vector.load %arg8[%c0_21, %c0_22] : memref<256x128xbf16, #tpu.memory_space<vmem>>, vector<256x128xbf16>
    %c0_23 = arith.constant 0 : index
    %c0_24 = arith.constant 0 : index
    %35 = vector.load %arg9[%c0_23, %c0_24] : memref<1x128xf32, #tpu.memory_space<vmem>>, vector<1x128xf32>
    %36 = arith.truncf %33 : vector<16x256xf32> to vector<16x256xbf16>
    %cst_25 = arith.constant dense<0.000000e+00> : vector<16x128xf32>
    %37 = tpu.matmul %36, %34, %cst_25 {dimension_numbers = #tpu.dot_dimension_numbers<[1], [0], [0], [1], [0, 0, 1, 1], [], []>} : vector<16x256xbf16>, vector<256x128xbf16>, vector<16x128xf32> -> vector<16x128xf32>
    %38 = vector.broadcast %35 : vector<1x128xf32> to vector<16x128xf32>
    %39 = arith.addf %37, %38 : vector<16x128xf32>
    %c0_26 = arith.constant 0 : index
    %c0_27 = arith.constant 0 : index
    %40 = vector.load %arg10[%c0_26, %c0_27] : memref<128x256xbf16, #tpu.memory_space<vmem>>, vector<128x256xbf16>
    %c0_28 = arith.constant 0 : index
    %c0_29 = arith.constant 0 : index
    %41 = vector.load %arg11[%c0_28, %c0_29] : memref<1x256xf32, #tpu.memory_space<vmem>>, vector<1x256xf32>
    %42 = arith.truncf %39 : vector<16x128xf32> to vector<16x128xbf16>
    %cst_30 = arith.constant dense<0.000000e+00> : vector<16x256xf32>
    %43 = tpu.matmul %42, %40, %cst_30 {dimension_numbers = #tpu.dot_dimension_numbers<[1], [0], [0], [1], [0, 0, 1, 1], [], []>} : vector<16x128xbf16>, vector<128x256xbf16>, vector<16x256xf32> -> vector<16x256xf32>
    %44 = vector.broadcast %41 : vector<1x256xf32> to vector<16x256xf32>
    %45 = arith.addf %43, %44 : vector<16x256xf32>
    %cst_31 = arith.constant 0.000000e+00 : f32
    %46 = vector.broadcast %cst_31 : f32 to vector<16x256xf32>
    %47 = arith.cmpf ogt, %45, %46 : vector<16x256xf32>
    %cst_32 = arith.constant 0.00999999977 : f32
    %48 = vector.broadcast %cst_32 : f32 to vector<16x256xf32>
    %49 = arith.mulf %48, %45 : vector<16x256xf32>
    %50 = arith.select %47, %45, %49 : vector<16x256xi1>, vector<16x256xf32>
    %c0_33 = arith.constant 0 : index
    %c0_34 = arith.constant 0 : index
    %51 = vector.load %arg12[%c0_33, %c0_34] : memref<256x512xbf16, #tpu.memory_space<vmem>>, vector<256x512xbf16>
    %c0_35 = arith.constant 0 : index
    %c0_36 = arith.constant 0 : index
    %52 = vector.load %arg13[%c0_35, %c0_36] : memref<1x512xf32, #tpu.memory_space<vmem>>, vector<1x512xf32>
    %53 = arith.truncf %50 : vector<16x256xf32> to vector<16x256xbf16>
    %cst_37 = arith.constant dense<0.000000e+00> : vector<16x512xf32>
    %54 = tpu.matmul %53, %51, %cst_37 {dimension_numbers = #tpu.dot_dimension_numbers<[1], [0], [0], [1], [0, 0, 1, 1], [], []>} : vector<16x256xbf16>, vector<256x512xbf16>, vector<16x512xf32> -> vector<16x512xf32>
    %55 = vector.broadcast %52 : vector<1x512xf32> to vector<16x512xf32>
    %56 = arith.addf %54, %55 : vector<16x512xf32>
    %cst_38 = arith.constant 0.000000e+00 : f32
    %57 = vector.broadcast %cst_38 : f32 to vector<16x512xf32>
    %58 = arith.cmpf ogt, %56, %57 : vector<16x512xf32>
    %cst_39 = arith.constant 0.00999999977 : f32
    %59 = vector.broadcast %cst_39 : f32 to vector<16x512xf32>
    %60 = arith.mulf %59, %56 : vector<16x512xf32>
    %61 = arith.select %58, %56, %60 : vector<16x512xi1>, vector<16x512xf32>
    %c0_40 = arith.constant 0 : index
    %c0_41 = arith.constant 0 : index
    %62 = vector.load %arg14[%c0_40, %c0_41] : memref<512x1024xbf16, #tpu.memory_space<vmem>>, vector<512x1024xbf16>
    %c0_42 = arith.constant 0 : index
    %c0_43 = arith.constant 0 : index
    %63 = vector.load %arg15[%c0_42, %c0_43] : memref<1x1024xf32, #tpu.memory_space<vmem>>, vector<1x1024xf32>
    %64 = arith.truncf %61 : vector<16x512xf32> to vector<16x512xbf16>
    %cst_44 = arith.constant dense<0.000000e+00> : vector<16x1024xf32>
    %65 = tpu.matmul %64, %62, %cst_44 {dimension_numbers = #tpu.dot_dimension_numbers<[1], [0], [0], [1], [0, 0, 1, 1], [], []>} : vector<16x512xbf16>, vector<512x1024xbf16>, vector<16x1024xf32> -> vector<16x1024xf32>
    %66 = vector.broadcast %63 : vector<1x1024xf32> to vector<16x1024xf32>
    %67 = arith.addf %65, %66 : vector<16x1024xf32>
    %cst_45 = arith.constant 0.000000e+00 : f32
    %68 = vector.broadcast %cst_45 : f32 to vector<16x1024xf32>
    %69 = arith.cmpf ogt, %67, %68 : vector<16x1024xf32>
    %cst_46 = arith.constant 0.00999999977 : f32
    %70 = vector.broadcast %cst_46 : f32 to vector<16x1024xf32>
    %71 = arith.mulf %70, %67 : vector<16x1024xf32>
    %72 = arith.select %69, %67, %71 : vector<16x1024xi1>, vector<16x1024xf32>
    %c0_47 = arith.constant 0 : index
    %c0_48 = arith.constant 0 : index
    %73 = vector.load %arg16[%c0_47, %c0_48] : memref<1024x896xbf16, #tpu.memory_space<vmem>>, vector<1024x896xbf16>
    %c0_49 = arith.constant 0 : index
    %c0_50 = arith.constant 0 : index
    %74 = vector.load %arg17[%c0_49, %c0_50] : memref<1x896xf32, #tpu.memory_space<vmem>>, vector<1x896xf32>
    %75 = arith.truncf %72 : vector<16x1024xf32> to vector<16x1024xbf16>
    %cst_51 = arith.constant dense<0.000000e+00> : vector<16x896xf32>
    %76 = tpu.matmul %75, %73, %cst_51 {dimension_numbers = #tpu.dot_dimension_numbers<[1], [0], [0], [1], [0, 0, 1, 1], [], []>} : vector<16x1024xbf16>, vector<1024x896xbf16>, vector<16x896xf32> -> vector<16x896xf32>
    %77 = vector.broadcast %74 : vector<1x896xf32> to vector<16x896xf32>
    %78 = arith.addf %76, %77 : vector<16x896xf32>
    %79 = arith.negf %78 : vector<16x896xf32>
    %80 = math.exp %79 : vector<16x896xf32>
    %cst_52 = arith.constant 1.000000e+00 : f32
    %81 = vector.broadcast %cst_52 : f32 to vector<16x896xf32>
    %82 = arith.addf %81, %80 : vector<16x896xf32>
    %83 = arith.divf %81, %82 : vector<16x896xf32>
    %c0_53 = arith.constant 0 : index
    %c0_54 = arith.constant 0 : index
    %84 = vector.load %arg18[%c0_53, %c0_54] : memref<16x896xf32, #tpu.memory_space<vmem>>, vector<16x896xf32>
    tpu.vector_store %arg18[%c0_53, %c0_54], %83 {strides = array<i32>} : memref<16x896xf32, #tpu.memory_space<vmem>>, vector<16x896xf32>,
    return
  }
  func.func @transform_0(%arg0: i32) -> (i32, i32) {
    %c0_i32 = arith.constant 0 : i32
    %c0_i32_0 = arith.constant 0 : i32
    return %arg0, %c0_i32 : i32, i32
  }
  func.func @transform_1(%arg0: i32) -> (i32, i32) {
    %c0_i32 = arith.constant 0 : i32
    %c0_i32_0 = arith.constant 0 : i32
    %c0_i32_1 = arith.constant 0 : i32
    return %c0_i32, %c0_i32_0 : i32, i32
  }
  func.func @transform_2(%arg0: i32) -> (i32, i32) {
    %c0_i32 = arith.constant 0 : i32
    %c0_i32_0 = arith.constant 0 : i32
    %c0_i32_1 = arith.constant 0 : i32
    return %c0_i32, %c0_i32_0 : i32, i32
  }
  func.func @transform_3(%arg0: i32) -> (i32, i32) {
    %c0_i32 = arith.constant 0 : i32
    %c0_i32_0 = arith.constant 0 : i32
    %c0_i32_1 = arith.constant 0 : i32
    return %c0_i32, %c0_i32_0 : i32, i32
  }
  func.func @transform_4(%arg0: i32) -> (i32, i32) {
    %c0_i32 = arith.constant 0 : i32
    %c0_i32_0 = arith.constant 0 : i32
    %c0_i32_1 = arith.constant 0 : i32
    return %c0_i32, %c0_i32_0 : i32, i32
  }
  func.func @transform_5(%arg0: i32) -> (i32, i32) {
    %c0_i32 = arith.constant 0 : i32
    %c0_i32_0 = arith.constant 0 : i32
    %c0_i32_1 = arith.constant 0 : i32
    return %c0_i32, %c0_i32_0 : i32, i32
  }
  func.func @transform_6(%arg0: i32) -> (i32, i32) {
    %c0_i32 = arith.constant 0 : i32
    %c0_i32_0 = arith.constant 0 : i32
    %c0_i32_1 = arith.constant 0 : i32
    return %c0_i32, %c0_i32_0 : i32, i32
  }
  func.func @transform_7(%arg0: i32) -> (i32, i32) {
    %c0_i32 = arith.constant 0 : i32
    %c0_i32_0 = arith.constant 0 : i32
    %c0_i32_1 = arith.constant 0 : i32
    return %c0_i32, %c0_i32_0 : i32, i32
  }
  func.func @transform_8(%arg0: i32) -> (i32, i32) {
    %c0_i32 = arith.constant 0 : i32
    %c0_i32_0 = arith.constant 0 : i32
    %c0_i32_1 = arith.constant 0 : i32
    return %c0_i32, %c0_i32_0 : i32, i32
  }
  func.func @transform_9(%arg0: i32) -> (i32, i32) {
    %c0_i32 = arith.constant 0 : i32
    %c0_i32_0 = arith.constant 0 : i32
    %c0_i32_1 = arith.constant 0 : i32
    return %c0_i32, %c0_i32_0 : i32, i32
  }
  func.func @transform_10(%arg0: i32) -> (i32, i32) {
    %c0_i32 = arith.constant 0 : i32
    %c0_i32_0 = arith.constant 0 : i32
    %c0_i32_1 = arith.constant 0 : i32
    return %c0_i32, %c0_i32_0 : i32, i32
  }
  func.func @transform_11(%arg0: i32) -> (i32, i32) {
    %c0_i32 = arith.constant 0 : i32
    %c0_i32_0 = arith.constant 0 : i32
    %c0_i32_1 = arith.constant 0 : i32
    return %c0_i32, %c0_i32_0 : i32, i32
  }
  func.func @transform_12(%arg0: i32) -> (i32, i32) {
    %c0_i32 = arith.constant 0 : i32
    %c0_i32_0 = arith.constant 0 : i32
    %c0_i32_1 = arith.constant 0 : i32
    return %c0_i32, %c0_i32_0 : i32, i32
  }
  func.func @transform_13(%arg0: i32) -> (i32, i32) {
    %c0_i32 = arith.constant 0 : i32
    %c0_i32_0 = arith.constant 0 : i32
    %c0_i32_1 = arith.constant 0 : i32
    return %c0_i32, %c0_i32_0 : i32, i32
  }
  func.func @transform_14(%arg0: i32) -> (i32, i32) {
    %c0_i32 = arith.constant 0 : i32
    %c0_i32_0 = arith.constant 0 : i32
    %c0_i32_1 = arith.constant 0 : i32
    return %c0_i32, %c0_i32_0 : i32, i32
  }
  func.func @transform_15(%arg0: i32) -> (i32, i32) {
    %c0_i32 = arith.constant 0 : i32
    %c0_i32_0 = arith.constant 0 : i32
    %c0_i32_1 = arith.constant 0 : i32
    return %c0_i32, %c0_i32_0 : i32, i32
  }
  func.func @transform_16(%arg0: i32) -> (i32, i32) {
    %c0_i32 = arith.constant 0 : i32
    %c0_i32_0 = arith.constant 0 : i32
    %c0_i32_1 = arith.constant 0 : i32
    return %c0_i32, %c0_i32_0 : i32, i32
  }
  func.func @transform_17(%arg0: i32) -> (i32, i32) {
    %c0_i32 = arith.constant 0 : i32
    %c0_i32_0 = arith.constant 0 : i32
    return %arg0, %c0_i32 : i32, i32
  }
}

</mosaic_0001>

<llo_original>
// kernel: _ae_forward_padded.1
$region0: #{_ae_forward_padded.1}
  #allocation0 [shape = 'u32[]', space=smem, size = 0x4, offset = 0x4, fixed_abs, tag = 'smem constant byte address 0x4 - core index']
  #allocation1 [shape = 'u32[144,128]{1,0:T(1,128)}', space=vmem, size = 0x12000, scoped, tag = 'internal scratch']
  %s0 = inlined_call_operand.hbm [shape: f32[32,896], index: 0, kind: input, shape index: {}]
  %s1 = inlined_call_operand.hbm [shape: bf16[896,1024], index: 1, kind: input, shape index: {}]
  %s2 = inlined_call_operand.hbm [shape: f32[1,1024], index: 2, kind: input, shape index: {}]
  %s3 = inlined_call_operand.hbm [shape: bf16[1024,512], index: 3, kind: input, shape index: {}]
  %s4 = inlined_call_operand.hbm [shape: f32[1,512], index: 4, kind: input, shape index: {}]
  %s5 = inlined_call_operand.hbm [shape: bf16[512,256], index: 5, kind: input, shape index: {}]
  %s6 = inlined_call_operand.hbm [shape: f32[1,256], index: 6, kind: input, shape index: {}]
  %s7 = inlined_call_operand.hbm [shape: bf16[256,128], index: 7, kind: input, shape index: {}]
  %s8 = inlined_call_operand.hbm [shape: f32[1,128], index: 8, kind: input, shape index: {}]
  %s9 = inlined_call_operand.hbm [shape: bf16[128,256], index: 9, kind: input, shape index: {}]
  %s10 = inlined_call_operand.hbm [shape: f32[1,256], index: 10, kind: input, shape index: {}]
  %s11 = inlined_call_operand.hbm [shape: bf16[256,512], index: 11, kind: input, shape index: {}]
  %s12 = inlined_call_operand.hbm [shape: f32[1,512], index: 12, kind: input, shape index: {}]
  %s13 = inlined_call_operand.hbm [shape: bf16[512,1024], index: 13, kind: input, shape index: {}]
  %s14 = inlined_call_operand.hbm [shape: f32[1,1024], index: 14, kind: input, shape index: {}]
  %s15 = inlined_call_operand.hbm [shape: bf16[1024,896], index: 15, kind: input, shape index: {}]
  %s16 = inlined_call_operand.hbm [shape: f32[1,896], index: 16, kind: input, shape index: {}]
  %s17 = inlined_call_operand.hbm [shape: f32[32,896], index: 17, kind: output, shape index: {}]
  %s18 = sld [smem:[#allocation0]]
  $region169: #{_ae_forward_padded.1} parent=0
    _
  %s20 = ssub.s32 1, %s18
  %s21 = scalar_select 0, %s20, %s18
  $region1: #{_ae_forward_padded.1} parent=0
    #allocation2 [shape = 'u8[114688]{0}', space=vmem, size = 0x1c000, scoped, tag = 'input window, operand 0']
    #allocation3 [shape = 's32[2]{0}', space=sflag, size = 0x8, scoped, tag = 'scoped memory for _ae_forward_padded.1']
    #allocation4 [shape = 's32[2]{0}', space=sflag, size = 0x8, scoped, tag = 'scoped memory for _ae_forward_padded.1']
    #allocation5 [shape = 'u8[1835008]{0}', space=vmem, size = 0x1c0000, scoped, tag = 'input window, operand 1, single buffered']
    #allocation6 [shape = 's32[1]{0}', space=sflag, size = 0x4, scoped, tag = 'scoped memory for _ae_forward_padded.1']
    #allocation7 [shape = 'u8[4096]{0}', space=vmem, size = 0x1000, scoped, tag = 'input window, operand 2, single buffered']
    #allocation8 [shape = 'u8[1048576]{0}', space=vmem, size = 0x100000, scoped, tag = 'input window, operand 3, single buffered']
    #allocation9 [shape = 's32[1]{0}', space=sflag, size = 0x4, scoped, tag = 'scoped memory for _ae_forward_padded.1']
    #allocation10 [shape = 'u8[2048]{0}', space=vmem, size = 0x800, scoped, tag = 'input window, operand 4, single buffered']
    #allocation11 [shape = 'u8[262144]{0}', space=vmem, size = 0x40000, scoped, tag = 'input window, operand 5, single buffered']
    #allocation12 [shape = 's32[1]{0}', space=sflag, size = 0x4, scoped, tag = 'scoped memory for _ae_forward_padded.1']
    #allocation13 [shape = 'u8[1024]{0}', space=vmem, size = 0x400, scoped, tag = 'input window, operand 6, single buffered']
    #allocation14 [shape = 'u8[65536]{0}', space=vmem, size = 0x10000, scoped, tag = 'input window, operand 7, single buffered']
    #allocation15 [shape = 's32[1]{0}', space=sflag, size = 0x4, scoped, tag = 'scoped memory for _ae_forward_padded.1']
    #allocation16 [shape = 'u8[512]{0}', space=vmem, size = 0x400, scoped, tag = 'input window, operand 8, single buffered']
    #allocation17 [shape = 'u8[65536]{0}', space=vmem, size = 0x10000, scoped, tag = 'input window, operand 9, single buffered']
    #allocation18 [shape = 's32[1]{0}', space=sflag, size = 0x4, scoped, tag = 'scoped memory for _ae_forward_padded.1']
    #allocation19 [shape = 'u8[1024]{0}', space=vmem, size = 0x400, scoped, tag = 'input window, operand 10, single buffered']
    #allocation20 [shape = 'u8[262144]{0}', space=vmem, size = 0x40000, scoped, tag = 'input window, operand 11, single buffered']
    #allocation21 [shape = 's32[1]{0}', space=sflag, size = 0x4, scoped, tag = 'scoped memory for _ae_forward_padded.1']
    #allocation22 [shape = 'u8[2048]{0}', space=vmem, size = 0x800, scoped, tag = 'input window, operand 12, single buffered']
    #allocation23 [shape = 'u8[1048576]{0}', space=vmem, size = 0x100000, scoped, tag = 'input window, operand 13, single buffered']
    #allocation24 [shape = 's32[1]{0}', space=sflag, size = 0x4, scoped, tag = 'scoped memory for _ae_forward_padded.1']
    #allocation25 [shape = 'u8[4096]{0}', space=vmem, size = 0x1000, scoped, tag = 'input window, operand 14, single buffered']
    #allocation26 [shape = 'u8[1835008]{0}', space=vmem, size = 0x1c0000, scoped, tag = 'input window, operand 15, single buffered']
    #allocation27 [shape = 's32[1]{0}', space=sflag, size = 0x4, scoped, tag = 'scoped memory for _ae_forward_padded.1']
    #allocation28 [shape = 'u8[3584]{0}', space=vmem, size = 0x1000, scoped, tag = 'input window, operand 16, single buffered']
    #allocation29 [shape = 'u8[114688]{0}', space=vmem, size = 0x1c000, scoped, tag = 'output window, operand 0']
    %22 = vsyncpa [#allocation3], 0
    %s23 = scalar_lea.sflag [#allocation3], 1
    %24 = vsyncpa %s23, 0
    %25 = vsyncpa [#allocation6], 0
    %26 = vsyncpa [#allocation9], 0
    %27 = vsyncpa [#allocation12], 0
    %28 = vsyncpa [#allocation15], 0
    %29 = vsyncpa [#allocation18], 0
    %30 = vsyncpa [#allocation21], 0
    %31 = vsyncpa [#allocation24], 0
    %32 = vsyncpa [#allocation27], 0
    %33 = vsyncpa [#allocation4], 0
    %s34 = scalar_lea.sflag [#allocation4], 1
    %35 = vsyncpa %s34, 0
    loop: start=0, step=1, limit=4
    $region2: #{_ae_forward_padded.1} parent=1 // loop_pre_header
      _
    $region3: #{_ae_forward_padded.1} parent=1 // loop_header
      %s37 = sphi 0, %s41
      %p38 = scmp.ge.s32.totalorder %s37, 4
      %s47 = sphi 0, %s49
      %s50 = sphi 0, %s47
      %s51 = sphi 0, %s50
      %s67 = sphi 0, %s51
      %s71 = sphi 0, %s71
      %s73 = sphi 0, %s71
      %s74 = sphi 0, %s73
      %s88 = sphi 0, %s74
      %s92 = sphi 0, %s92
      %s94 = sphi 0, %s92
      %s95 = sphi 0, %s94
      %s109 = sphi 0, %s95
      %s113 = sphi 0, %s113
      %s115 = sphi 0, %s113
      %s116 = sphi 0, %s115
      %s130 = sphi 0, %s116
      %s134 = sphi 0, %s134
      %s136 = sphi 0, %s134
      %s137 = sphi 0, %s136
      %s151 = sphi 0, %s137
      %s155 = sphi 0, %s155
      %s157 = sphi 0, %s155
      %s158 = sphi 0, %s157
      %s172 = sphi 0, %s158
      %s176 = sphi 0, %s176
      %s178 = sphi 0, %s176
      %s179 = sphi 0, %s178
      %s193 = sphi 0, %s179
      %s197 = sphi 0, %s197
      %s199 = sphi 0, %s197
      %s200 = sphi 0, %s199
      %s214 = sphi 0, %s200
      %s218 = sphi 0, %s218
      %s220 = sphi 0, %s218
      %s221 = sphi 0, %s220
      %s235 = sphi 0, %s221
      %s239 = sphi 0, %s239
      %s241 = sphi 0, %s239
      %s242 = sphi 0, %s241
      %s256 = sphi 0, %s242
      %s260 = sphi 0, %s260
      %s262 = sphi 0, %s260
      %s263 = sphi 0, %s262
      %s277 = sphi 0, %s263
      %s281 = sphi 0, %s281
      %s283 = sphi 0, %s281
      %s284 = sphi 0, %s283
      %s298 = sphi 0, %s284
      %s302 = sphi 0, %s302
      %s304 = sphi 0, %s302
      %s305 = sphi 0, %s304
      %s319 = sphi 0, %s305
      %s323 = sphi 0, %s323
      %s325 = sphi 0, %s323
      %s326 = sphi 0, %s325
      %s340 = sphi 0, %s326
      %s344 = sphi 0, %s344
      %s346 = sphi 0, %s344
      %s347 = sphi 0, %s346
      %s361 = sphi 0, %s347
      %s365 = sphi 0, %s365
      %s367 = sphi 0, %s365
      %s368 = sphi 0, %s367
      %s382 = sphi 0, %s368
      %s386 = sphi 0, %s386
      %s388 = sphi 0, %s386
      %s389 = sphi 0, %s388
      %s403 = sphi 0, %s389
      %s409 = sphi 0, %s411
      %s412 = sphi 0, %s409
      %s413 = sphi 0, %s412
      %s429 = sphi 0, %s413
    $region4: #{_ae_forward_padded.1} parent=1 // loop_header_branch
      %40 = sbr.rel (%p38) target = $region8
    $region5: #{_ae_forward_padded.1} parent=1 // loop_body
      %s42 = ssub.s32 %s37, 1
      %s43 = ssub.s32 %s37, 2
      %s44 = sadd.s32 %s37, 1
      %s45 = ssub.s32 %s37, %s44
      %p46 = scmp.eq.s32.totalorder %s45, 0
      %s48 = sadd.s32 %s47, 1
      %s49 = scalar_select %p46, %s47, %s48
      %p52 = pneg %p46
      %p53 = scmp.eq.s32.totalorder %s37, 1
      %p54 = por %p52, %p53
      %p55 = scmp.ne.s32.totalorder %s47, %s50
      %p56 = scmp.eq.s32.totalorder %s37, 0
      %p57 = por %p55, %p56
      %p58 = scmp.ne.s32.totalorder %s47, %s50
      %p59 = scmp.eq.s32.totalorder %s42, 1
      %p60 = por %p58, %p59
      %p61 = scmp.ne.s32.totalorder %s50, %s51
      %p62 = scmp.eq.s32.totalorder %s42, 0
      %p63 = por %p61, %p62
      %p64 = scmp.ne.s32.totalorder %s50, %s51
      %p65 = scmp.eq.s32.totalorder %s43, 1
      %p66 = por %p64, %p65
      %p68 = scmp.ne.s32.totalorder %s51, %s67
      %p69 = scmp.eq.s32.totalorder %s43, 0
      %p70 = por %p68, %p69
      %s72 = sadd.s32 %s71, 1
      %p75 = scmp.eq.s32.totalorder %s37, 1
      %p76 = scmp.ne.s32.totalorder %s71, %s73
      %p77 = scmp.eq.s32.totalorder %s37, 0
      %p78 = por %p76, %p77
      %p79 = scmp.ne.s32.totalorder %s71, %s73
      %p80 = scmp.eq.s32.totalorder %s42, 1
      %p81 = por %p79, %p80
      %p82 = scmp.ne.s32.totalorder %s73, %s74
      %p83 = scmp.eq.s32.totalorder %s42, 0
      %p84 = por %p82, %p83
      %p85 = scmp.ne.s32.totalorder %s73, %s74
      %p86 = scmp.eq.s32.totalorder %s43, 1
      %p87 = por %p85, %p86
      %p89 = scmp.ne.s32.totalorder %s74, %s88
      %p90 = scmp.eq.s32.totalorder %s43, 0
      %p91 = por %p89, %p90
      %s93 = sadd.s32 %s92, 1
      %p96 = scmp.eq.s32.totalorder %s37, 1
      %p97 = scmp.ne.s32.totalorder %s92, %s94
      %p98 = scmp.eq.s32.totalorder %s37, 0
      %p99 = por %p97, %p98
      %p100 = scmp.ne.s32.totalorder %s92, %s94
      %p101 = scmp.eq.s32.totalorder %s42, 1
      %p102 = por %p100, %p101
      %p103 = scmp.ne.s32.totalorder %s94, %s95
      %p104 = scmp.eq.s32.totalorder %s42, 0
      %p105 = por %p103, %p104
      %p106 = scmp.ne.s32.totalorder %s94, %s95
      %p107 = scmp.eq.s32.totalorder %s43, 1
      %p108 = por %p106, %p107
      %p110 = scmp.ne.s32.totalorder %s95, %s109
      %p111 = scmp.eq.s32.totalorder %s43, 0
      %p112 = por %p110, %p111
      %s114 = sadd.s32 %s113, 1
      %p117 = scmp.eq.s32.totalorder %s37, 1
      %p118 = scmp.ne.s32.totalorder %s113, %s115
      %p119 = scmp.eq.s32.totalorder %s37, 0
      %p120 = por %p118, %p119
      %p121 = scmp.ne.s32.totalorder %s113, %s115
      %p122 = scmp.eq.s32.totalorder %s42, 1
      %p123 = por %p121, %p122
      %p124 = scmp.ne.s32.totalorder %s115, %s116
      %p125 = scmp.eq.s32.totalorder %s42, 0
      %p126 = por %p124, %p125
      %p127 = scmp.ne.s32.totalorder %s115, %s116
      %p128 = scmp.eq.s32.totalorder %s43, 1
      %p129 = por %p127, %p128
      %p131 = scmp.ne.s32.totalorder %s116, %s130
      %p132 = scmp.eq.s32.totalorder %s43, 0
      %p133 = por %p131, %p132
      %s135 = sadd.s32 %s134, 1
      %p138 = scmp.eq.s32.totalorder %s37, 1
      %p139 = scmp.ne.s32.totalorder %s134, %s136
      %p140 = scmp.eq.s32.totalorder %s37, 0
      %p141 = por %p139, %p140
      %p142 = scmp.ne.s32.totalorder %s134, %s136
      %p143 = scmp.eq.s32.totalorder %s42, 1
      %p144 = por %p142, %p143
      %p145 = scmp.ne.s32.totalorder %s136, %s137
      %p146 = scmp.eq.s32.totalorder %s42, 0
      %p147 = por %p145, %p146
      %p148 = scmp.ne.s32.totalorder %s136, %s137
      %p149 = scmp.eq.s32.totalorder %s43, 1
      %p150 = por %p148, %p149
      %p152 = scmp.ne.s32.totalorder %s137, %s151
      %p153 = scmp.eq.s32.totalorder %s43, 0
      %p154 = por %p152, %p153
      %s156 = sadd.s32 %s155, 1
      %p159 = scmp.eq.s32.totalorder %s37, 1
      %p160 = scmp.ne.s32.totalorder %s155, %s157
      %p161 = scmp.eq.s32.totalorder %s37, 0
      %p162 = por %p160, %p161
      %p163 = scmp.ne.s32.totalorder %s155, %s157
      %p164 = scmp.eq.s32.totalorder %s42, 1
      %p165 = por %p163, %p164
      %p166 = scmp.ne.s32.totalorder %s157, %s158
      %p167 = scmp.eq.s32.totalorder %s42, 0
      %p168 = por %p166, %p167
      %p169 = scmp.ne.s32.totalorder %s157, %s158
      %p170 = scmp.eq.s32.totalorder %s43, 1
      %p171 = por %p169, %p170
      %p173 = scmp.ne.s32.totalorder %s158, %s172
      %p174 = scmp.eq.s32.totalorder %s43, 0
      %p175 = por %p173, %p174
      %s177 = sadd.s32 %s176, 1
      %p180 = scmp.eq.s32.totalorder %s37, 1
      %p181 = scmp.ne.s32.totalorder %s176, %s178
      %p182 = scmp.eq.s32.totalorder %s37, 0
      %p183 = por %p181, %p182
      %p184 = scmp.ne.s32.totalorder %s176, %s178
      %p185 = scmp.eq.s32.totalorder %s42, 1
      %p186 = por %p184, %p185
      %p187 = scmp.ne.s32.totalorder %s178, %s179
      %p188 = scmp.eq.s32.totalorder %s42, 0
      %p189 = por %p187, %p188
      %p190 = scmp.ne.s32.totalorder %s178, %s179
      %p191 = scmp.eq.s32.totalorder %s43, 1
      %p192 = por %p190, %p191
      %p194 = scmp.ne.s32.totalorder %s179, %s193
      %p195 = scmp.eq.s32.totalorder %s43, 0
      %p196 = por %p194, %p195
      %s198 = sadd.s32 %s197, 1
      %p201 = scmp.eq.s32.totalorder %s37, 1
      %p202 = scmp.ne.s32.totalorder %s197, %s199
      %p203 = scmp.eq.s32.totalorder %s37, 0
      %p204 = por %p202, %p203
      %p205 = scmp.ne.s32.totalorder %s197, %s199
      %p206 = scmp.eq.s32.totalorder %s42, 1
      %p207 = por %p205, %p206
      %p208 = scmp.ne.s32.totalorder %s199, %s200
      %p209 = scmp.eq.s32.totalorder %s42, 0
      %p210 = por %p208, %p209
      %p211 = scmp.ne.s32.totalorder %s199, %s200
      %p212 = scmp.eq.s32.totalorder %s43, 1
      %p213 = por %p211, %p212
      %p215 = scmp.ne.s32.totalorder %s200, %s214
      %p216 = scmp.eq.s32.totalorder %s43, 0
      %p217 = por %p215, %p216
      %s219 = sadd.s32 %s218, 1
      %p222 = scmp.eq.s32.totalorder %s37, 1
      %p223 = scmp.ne.s32.totalorder %s218, %s220
      %p224 = scmp.eq.s32.totalorder %s37, 0
      %p225 = por %p223, %p224
      %p226 = scmp.ne.s32.totalorder %s218, %s220
      %p227 = scmp.eq.s32.totalorder %s42, 1
      %p228 = por %p226, %p227
      %p229 = scmp.ne.s32.totalorder %s220, %s221
      %p230 = scmp.eq.s32.totalorder %s42, 0
      %p231 = por %p229, %p230
      %p232 = scmp.ne.s32.totalorder %s220, %s221
      %p233 = scmp.eq.s32.totalorder %s43, 1
      %p234 = por %p232, %p233
      %p236 = scmp.ne.s32.totalorder %s221, %s235
      %p237 = scmp.eq.s32.totalorder %s43, 0
      %p238 = por %p236, %p237
      %s240 = sadd.s32 %s239, 1
      %p243 = scmp.eq.s32.totalorder %s37, 1
      %p244 = scmp.ne.s32.totalorder %s239, %s241
      %p245 = scmp.eq.s32.totalorder %s37, 0
      %p246 = por %p244, %p245
      %p247 = scmp.ne.s32.totalorder %s239, %s241
      %p248 = scmp.eq.s32.totalorder %s42, 1
      %p249 = por %p247, %p248
      %p250 = scmp.ne.s32.totalorder %s241, %s242
      %p251 = scmp.eq.s32.totalorder %s42, 0
      %p252 = por %p250, %p251
      %p253 = scmp.ne.s32.totalorder %s241, %s242
      %p254 = scmp.eq.s32.totalorder %s43, 1
      %p255 = por %p253, %p254
      %p257 = scmp.ne.s32.totalorder %s242, %s256
      %p258 = scmp.eq.s32.totalorder %s43, 0
      %p259 = por %p257, %p258
      %s261 = sadd.s32 %s260, 1
      %p264 = scmp.eq.s32.totalorder %s37, 1
      %p265 = scmp.ne.s32.totalorder %s260, %s262
      %p266 = scmp.eq.s32.totalorder %s37, 0
      %p267 = por %p265, %p266
      %p268 = scmp.ne.s32.totalorder %s260, %s262
      %p269 = scmp.eq.s32.totalorder %s42, 1
      %p270 = por %p268, %p269
      %p271 = scmp.ne.s32.totalorder %s262, %s263
      %p272 = scmp.eq.s32.totalorder %s42, 0
      %p273 = por %p271, %p272
      %p274 = scmp.ne.s32.totalorder %s262, %s263
      %p275 = scmp.eq.s32.totalorder %s43, 1
      %p276 = por %p274, %p275
      %p278 = scmp.ne.s32.totalorder %s263, %s277
      %p279 = scmp.eq.s32.totalorder %s43, 0
      %p280 = por %p278, %p279
      %s282 = sadd.s32 %s281, 1
      %p285 = scmp.eq.s32.totalorder %s37, 1
      %p286 = scmp.ne.s32.totalorder %s281, %s283
      %p287 = scmp.eq.s32.totalorder %s37, 0
      %p288 = por %p286, %p287
      %p289 = scmp.ne.s32.totalorder %s281, %s283
      %p290 = scmp.eq.s32.totalorder %s42, 1
      %p291 = por %p289, %p290
      %p292 = scmp.ne.s32.totalorder %s283, %s284
      %p293 = scmp.eq.s32.totalorder %s42, 0
      %p294 = por %p292, %p293
      %p295 = scmp.ne.s32.totalorder %s283, %s284
      %p296 = scmp.eq.s32.totalorder %s43, 1
      %p297 = por %p295, %p296
      %p299 = scmp.ne.s32.totalorder %s284, %s298
      %p300 = scmp.eq.s32.totalorder %s43, 0
      %p301 = por %p299, %p300
      %s303 = sadd.s32 %s302, 1
      %p306 = scmp.eq.s32.totalorder %s37, 1
      %p307 = scmp.ne.s32.totalorder %s302, %s304
      %p308 = scmp.eq.s32.totalorder %s37, 0
      %p309 = por %p307, %p308
      %p310 = scmp.ne.s32.totalorder %s302, %s304
      %p311 = scmp.eq.s32.totalorder %s42, 1
      %p312 = por %p310, %p311
      %p313 = scmp.ne.s32.totalorder %s304, %s305
      %p314 = scmp.eq.s32.totalorder %s42, 0
      %p315 = por %p313, %p314
      %p316 = scmp.ne.s32.totalorder %s304, %s305
      %p317 = scmp.eq.s32.totalorder %s43, 1
      %p318 = por %p316, %p317
      %p320 = scmp.ne.s32.totalorder %s305, %s319
      %p321 = scmp.eq.s32.totalorder %s43, 0
      %p322 = por %p320, %p321
      %s324 = sadd.s32 %s323, 1
      %p327 = scmp.eq.s32.totalorder %s37, 1
      %p328 = scmp.ne.s32.totalorder %s323, %s325
      %p329 = scmp.eq.s32.totalorder %s37, 0
      %p330 = por %p328, %p329
      %p331 = scmp.ne.s32.totalorder %s323, %s325
      %p332 = scmp.eq.s32.totalorder %s42, 1
      %p333 = por %p331, %p332
      %p334 = scmp.ne.s32.totalorder %s325, %s326
      %p335 = scmp.eq.s32.totalorder %s42, 0
      %p336 = por %p334, %p335
      %p337 = scmp.ne.s32.totalorder %s325, %s326
      %p338 = scmp.eq.s32.totalorder %s43, 1
      %p339 = por %p337, %p338
      %p341 = scmp.ne.s32.totalorder %s326, %s340
      %p342 = scmp.eq.s32.totalorder %s43, 0
      %p343 = por %p341, %p342
      %s345 = sadd.s32 %s344, 1
      %p348 = scmp.eq.s32.totalorder %s37, 1
      %p349 = scmp.ne.s32.totalorder %s344, %s346
      %p350 = scmp.eq.s32.totalorder %s37, 0
      %p351 = por %p349, %p350
      %p352 = scmp.ne.s32.totalorder %s344, %s346
      %p353 = scmp.eq.s32.totalorder %s42, 1
      %p354 = por %p352, %p353
      %p355 = scmp.ne.s32.totalorder %s346, %s347
      %p356 = scmp.eq.s32.totalorder %s42, 0
      %p357 = por %p355, %p356
      %p358 = scmp.ne.s32.totalorder %s346, %s347
      %p359 = scmp.eq.s32.totalorder %s43, 1
      %p360 = por %p358, %p359
      %p362 = scmp.ne.s32.totalorder %s347, %s361
      %p363 = scmp.eq.s32.totalorder %s43, 0
      %p364 = por %p362, %p363
      %s366 = sadd.s32 %s365, 1
      %p369 = scmp.eq.s32.totalorder %s37, 1
      %p370 = scmp.ne.s32.totalorder %s365, %s367
      %p371 = scmp.eq.s32.totalorder %s37, 0
      %p372 = por %p370, %p371
      %p373 = scmp.ne.s32.totalorder %s365, %s367
      %p374 = scmp.eq.s32.totalorder %s42, 1
      %p375 = por %p373, %p374
      %p376 = scmp.ne.s32.totalorder %s367, %s368
      %p377 = scmp.eq.s32.totalorder %s42, 0
      %p378 = por %p376, %p377
      %p379 = scmp.ne.s32.totalorder %s367, %s368
      %p380 = scmp.eq.s32.totalorder %s43, 1
      %p381 = por %p379, %p380
      %p383 = scmp.ne.s32.totalorder %s368, %s382
      %p384 = scmp.eq.s32.totalorder %s43, 0
      %p385 = por %p383, %p384
      %s387 = sadd.s32 %s386, 1
      %p390 = scmp.eq.s32.totalorder %s37, 1
      %p391 = scmp.ne.s32.totalorder %s386, %s388
      %p392 = scmp.eq.s32.totalorder %s37, 0
      %p393 = por %p391, %p392
      %p394 = scmp.ne.s32.totalorder %s386, %s388
      %p395 = scmp.eq.s32.totalorder %s42, 1
      %p396 = por %p394, %p395
      %p397 = scmp.ne.s32.totalorder %s388, %s389
      %p398 = scmp.eq.s32.totalorder %s42, 0
      %p399 = por %p397, %p398
      %p400 = scmp.ne.s32.totalorder %s388, %s389
      %p401 = scmp.eq.s32.totalorder %s43, 1
      %p402 = por %p400, %p401
      %p404 = scmp.ne.s32.totalorder %s389, %s403
      %p405 = scmp.eq.s32.totalorder %s43, 0
      %p406 = por %p404, %p405
      %s407 = ssub.s32 %s37, %s44
      %p408 = scmp.eq.s32.totalorder %s407, 0
      %s410 = sadd.s32 %s409, 1
      %s411 = scalar_select %p408, %s409, %s410
      %p414 = pneg %p408
      %p415 = scmp.eq.s32.totalorder %s37, 1
      %p416 = por %p414, %p415
      %p417 = scmp.ne.s32.totalorder %s409, %s412
      %p418 = scmp.eq.s32.totalorder %s37, 0
      %p419 = por %p417, %p418
      %p420 = scmp.ne.s32.totalorder %s409, %s412
      %p421 = scmp.eq.s32.totalorder %s42, 1
      %p422 = por %p420, %p421
      %p423 = scmp.ne.s32.totalorder %s412, %s413
      %p424 = scmp.eq.s32.totalorder %s42, 0
      %p425 = por %p423, %p424
      %p426 = scmp.ne.s32.totalorder %s412, %s413
      %p427 = scmp.eq.s32.totalorder %s43, 1
      %p428 = por %p426, %p427
      %p430 = scmp.ne.s32.totalorder %s413, %s429
      %p431 = scmp.eq.s32.totalorder %s43, 0
      %p432 = por %p430, %p431
      %p433 = scmp.le.s32.totalorder 1, %s37
      %p434 = scmp.lt.s32.totalorder %s37, 3
      %p435 = pnand %p433, %p434
      %p436 = pneg %p435
      // Predicated region
      $region9: #{_ae_forward_padded.1} parent=5 // pred_check
        _
      $region10: #{_ae_forward_padded.1} parent=5 // pred_check_branch
        %438 = sbr.rel (%p435) target = $region12
      $region11: #{_ae_forward_padded.1} parent=5 // pred_region
        %s439 = ssub.s32 %s37, 1
        // Predicated region
        $region13: #{_ae_forward_padded.1} parent=11 // pred_check
          %p440 = pneg %p84
        $region14: #{_ae_forward_padded.1} parent=11 // pred_check_branch
          %442 = sbr.rel (%p440) target = $region16
        $region15: #{_ae_forward_padded.1} parent=11 // pred_region
          %s444 = ssub.s32 57344, 57344
          %445 = vsyncadd [#allocation6], %s444
          %s446 = sshll.u32 [#allocation5], 4
          %s447 = int_to_ptr.vmem [resolvable:$true] %s446
          %452 = dma.hbm_to_vmem [thread:$0]  %s1, 57344, %s447, [#allocation6], 512, 512, 32
        $region16: #{_ae_forward_padded.1} parent=11 // pred_fallthru
          _
        // Predicated region
        $region17: #{_ae_forward_padded.1} parent=11 // pred_check
          %p453 = pneg %p105
        $region18: #{_ae_forward_padded.1} parent=11 // pred_check_branch
          %455 = sbr.rel (%p453) target = $region20
        $region19: #{_ae_forward_padded.1} parent=11 // pred_region
          %s457 = ssub.s32 128, 128
          %458 = vsyncadd [#allocation6], %s457
          %s460 = sshll.u32 [#allocation7], 4
          %s461 = int_to_ptr.vmem [resolvable:$true] %s460
          %463 = dma.hbm_to_vmem [thread:$0]  %s2, 128, %s461, [#allocation6]
        $region20: #{_ae_forward_padded.1} parent=11 // pred_fallthru
          _
        // Predicated region
        $region21: #{_ae_forward_padded.1} parent=11 // pred_check
          %p464 = pneg %p126
        $region22: #{_ae_forward_padded.1} parent=11 // pred_check_branch
          %466 = sbr.rel (%p464) target = $region24
        $region23: #{_ae_forward_padded.1} parent=11 // pred_region
          %s468 = ssub.s32 32768, 32768
          %469 = vsyncadd [#allocation9], %s468
          %s470 = sshll.u32 [#allocation8], 4
          %s471 = int_to_ptr.vmem [resolvable:$true] %s470
          %476 = dma.hbm_to_vmem [thread:$0]  %s3, 32768, %s471, [#allocation9], 256, 256, 16
        $region24: #{_ae_forward_padded.1} parent=11 // pred_fallthru
          _
        // Predicated region
        $region25: #{_ae_forward_padded.1} parent=11 // pred_check
          %p477 = pneg %p147
        $region26: #{_ae_forward_padded.1} parent=11 // pred_check_branch
          %479 = sbr.rel (%p477) target = $region28
        $region27: #{_ae_forward_padded.1} parent=11 // pred_region
          %s481 = ssub.s32 64, 64
          %482 = vsyncadd [#allocation9], %s481
          %s484 = sshll.u32 [#allocation10], 4
          %s485 = int_to_ptr.vmem [resolvable:$true] %s484
          %487 = dma.hbm_to_vmem [thread:$0]  %s4, 64, %s485, [#allocation9]
        $region28: #{_ae_forward_padded.1} parent=11 // pred_fallthru
          _
        // Predicated region
        $region29: #{_ae_forward_padded.1} parent=11 // pred_check
          %p488 = pneg %p168
        $region30: #{_ae_forward_padded.1} parent=11 // pred_check_branch
          %490 = sbr.rel (%p488) target = $region32
        $region31: #{_ae_forward_padded.1} parent=11 // pred_region
          %s492 = ssub.s32 8192, 8192
          %493 = vsyncadd [#allocation12], %s492
          %s494 = sshll.u32 [#allocation11], 4
          %s495 = int_to_ptr.vmem [resolvable:$true] %s494
          %500 = dma.hbm_to_vmem [thread:$0]  %s5, 8192, %s495, [#allocation12], 128, 128, 8
        $region32: #{_ae_forward_padded.1} parent=11 // pred_fallthru
          _
        // Predicated region
        $region33: #{_ae_forward_padded.1} parent=11 // pred_check
          %p501 = pneg %p189
        $region34: #{_ae_forward_padded.1} parent=11 // pred_check_branch
          %503 = sbr.rel (%p501) target = $region36
        $region35: #{_ae_forward_padded.1} parent=11 // pred_region
          %s505 = ssub.s32 32, 32
          %506 = vsyncadd [#allocation12], %s505
          %s508 = sshll.u32 [#allocation13], 4
          %s509 = int_to_ptr.vmem [resolvable:$true] %s508
          %511 = dma.hbm_to_vmem [thread:$0]  %s6, 32, %s509, [#allocation12]
        $region36: #{_ae_forward_padded.1} parent=11 // pred_fallthru
          _
        // Predicated region
        $region37: #{_ae_forward_padded.1} parent=11 // pred_check
          %p512 = pneg %p210
        $region38: #{_ae_forward_padded.1} parent=11 // pred_check_branch
          %514 = sbr.rel (%p512) target = $region40
        $region39: #{_ae_forward_padded.1} parent=11 // pred_region
          %s516 = ssub.s32 2048, 2048
          %517 = vsyncadd [#allocation15], %s516
          %s518 = sshll.u32 [#allocation14], 4
          %s519 = int_to_ptr.vmem [resolvable:$true] %s518
          %524 = dma.hbm_to_vmem [thread:$0]  %s7, 2048, %s519, [#allocation15], 64, 64, 4
        $region40: #{_ae_forward_padded.1} parent=11 // pred_fallthru
          _
        // Predicated region
        $region41: #{_ae_forward_padded.1} parent=11 // pred_check
          %p525 = pneg %p231
        $region42: #{_ae_forward_padded.1} parent=11 // pred_check_branch
          %527 = sbr.rel (%p525) target = $region44
        $region43: #{_ae_forward_padded.1} parent=11 // pred_region
          %s529 = ssub.s32 16, 16
          %530 = vsyncadd [#allocation15], %s529
          %s532 = sshll.u32 [#allocation16], 4
          %s533 = int_to_ptr.vmem [resolvable:$true] %s532
          %535 = dma.hbm_to_vmem [thread:$0]  %s8, 16, %s533, [#allocation15]
        $region44: #{_ae_forward_padded.1} parent=11 // pred_fallthru
          _
        // Predicated region
        $region45: #{_ae_forward_padded.1} parent=11 // pred_check
          %p536 = pneg %p252
        $region46: #{_ae_forward_padded.1} parent=11 // pred_check_branch
          %538 = sbr.rel (%p536) target = $region48
        $region47: #{_ae_forward_padded.1} parent=11 // pred_region
          %s540 = ssub.s32 2048, 2048
          %541 = vsyncadd [#allocation18], %s540
          %s542 = sshll.u32 [#allocation17], 4
          %s543 = int_to_ptr.vmem [resolvable:$true] %s542
          %548 = dma.hbm_to_vmem [thread:$0]  %s9, 2048, %s543, [#allocation18], 128, 128, 8
        $region48: #{_ae_forward_padded.1} parent=11 // pred_fallthru
          _
        // Predicated region
        $region49: #{_ae_forward_padded.1} parent=11 // pred_check
          %p549 = pneg %p273
        $region50: #{_ae_forward_padded.1} parent=11 // pred_check_branch
          %551 = sbr.rel (%p549) target = $region52
        $region51: #{_ae_forward_padded.1} parent=11 // pred_region
          %s553 = ssub.s32 32, 32
          %554 = vsyncadd [#allocation18], %s553
          %s556 = sshll.u32 [#allocation19], 4
          %s557 = int_to_ptr.vmem [resolvable:$true] %s556
          %559 = dma.hbm_to_vmem [thread:$0]  %s10, 32, %s557, [#allocation18]
        $region52: #{_ae_forward_padded.1} parent=11 // pred_fallthru
          _
        // Predicated region
        $region53: #{_ae_forward_padded.1} parent=11 // pred_check
          %p560 = pneg %p294
        $region54: #{_ae_forward_padded.1} parent=11 // pred_check_branch
          %562 = sbr.rel (%p560) target = $region56
        $region55: #{_ae_forward_padded.1} parent=11 // pred_region
          %s564 = ssub.s32 8192, 8192
          %565 = vsyncadd [#allocation21], %s564
          %s566 = sshll.u32 [#allocation20], 4
          %s567 = int_to_ptr.vmem [resolvable:$true] %s566
          %572 = dma.hbm_to_vmem [thread:$0]  %s11, 8192, %s567, [#allocation21], 256, 256, 16
        $region56: #{_ae_forward_padded.1} parent=11 // pred_fallthru
          _
        // Predicated region
        $region57: #{_ae_forward_padded.1} parent=11 // pred_check
          %p573 = pneg %p315
        $region58: #{_ae_forward_padded.1} parent=11 // pred_check_branch
          %575 = sbr.rel (%p573) target = $region60
        $region59: #{_ae_forward_padded.1} parent=11 // pred_region
          %s577 = ssub.s32 64, 64
          %578 = vsyncadd [#allocation21], %s577
          %s580 = sshll.u32 [#allocation22], 4
          %s581 = int_to_ptr.vmem [resolvable:$true] %s580
          %583 = dma.hbm_to_vmem [thread:$0]  %s12, 64, %s581, [#allocation21]
        $region60: #{_ae_forward_padded.1} parent=11 // pred_fallthru
          _
        // Predicated region
        $region61: #{_ae_forward_padded.1} parent=11 // pred_check
          %p584 = pneg %p336
        $region62: #{_ae_forward_padded.1} parent=11 // pred_check_branch
          %586 = sbr.rel (%p584) target = $region64
        $region63: #{_ae_forward_padded.1} parent=11 // pred_region
          %s588 = ssub.s32 32768, 32768
          %589 = vsyncadd [#allocation24], %s588
          %s590 = sshll.u32 [#allocation23], 4
          %s591 = int_to_ptr.vmem [resolvable:$true] %s590
          %596 = dma.hbm_to_vmem [thread:$0]  %s13, 32768, %s591, [#allocation24], 512, 512, 32
        $region64: #{_ae_forward_padded.1} parent=11 // pred_fallthru
          _
        // Predicated region
        $region65: #{_ae_forward_padded.1} parent=11 // pred_check
          %p597 = pneg %p357
        $region66: #{_ae_forward_padded.1} parent=11 // pred_check_branch
          %599 = sbr.rel (%p597) target = $region68
        $region67: #{_ae_forward_padded.1} parent=11 // pred_region
          %s601 = ssub.s32 128, 128
          %602 = vsyncadd [#allocation24], %s601
          %s604 = sshll.u32 [#allocation25], 4
          %s605 = int_to_ptr.vmem [resolvable:$true] %s604
          %607 = dma.hbm_to_vmem [thread:$0]  %s14, 128, %s605, [#allocation24]
        $region68: #{_ae_forward_padded.1} parent=11 // pred_fallthru
          _
        // Predicated region
        $region69: #{_ae_forward_padded.1} parent=11 // pred_check
          %p608 = pneg %p378
        $region70: #{_ae_forward_padded.1} parent=11 // pred_check_branch
          %610 = sbr.rel (%p608) target = $region72
        $region71: #{_ae_forward_padded.1} parent=11 // pred_region
          %s612 = ssub.s32 57344, 57344
          %613 = vsyncadd [#allocation27], %s612
          %s614 = sshll.u32 [#allocation26], 4
          %s615 = int_to_ptr.vmem [resolvable:$true] %s614
          %620 = dma.hbm_to_vmem [thread:$0]  %s15, 57344, %s615, [#allocation27], 448, 448, 28
        $region72: #{_ae_forward_padded.1} parent=11 // pred_fallthru
          _
        // Predicated region
        $region73: #{_ae_forward_padded.1} parent=11 // pred_check
          %p621 = pneg %p399
        $region74: #{_ae_forward_padded.1} parent=11 // pred_check_branch
          %623 = sbr.rel (%p621) target = $region76
        $region75: #{_ae_forward_padded.1} parent=11 // pred_region
          %s625 = ssub.s32 112, 112
          %626 = vsyncadd [#allocation27], %s625
          %s628 = sshll.u32 [#allocation28], 4
          %s629 = int_to_ptr.vmem [resolvable:$true] %s628
          %631 = dma.hbm_to_vmem [thread:$0]  %s16, 112, %s629, [#allocation27]
        $region76: #{_ae_forward_padded.1} parent=11 // pred_fallthru
          _
      $region12: #{_ae_forward_padded.1} parent=5 // pred_fallthru
        _
      %p632 = scmp.lt.s32.totalorder %s37, 2
      // Predicated region
      $region77: #{_ae_forward_padded.1} parent=5 // pred_check
        %p633 = pneg %p632
      $region78: #{_ae_forward_padded.1} parent=5 // pred_check_branch
        %635 = sbr.rel (%p633) target = $region80
      $region79: #{_ae_forward_padded.1} parent=5 // pred_region
        // Predicated region
        $region81: #{_ae_forward_padded.1} parent=79 // pred_check
          %p636 = pneg %p57
        $region82: #{_ae_forward_padded.1} parent=79 // pred_check_branch
          %638 = sbr.rel (%p636) target = $region84
        $region83: #{_ae_forward_padded.1} parent=79 // pred_region
          %s639 = sand.u32 %s47, 1
          %s640 = scalar_lea.sflag [#allocation3], %s639
          %s641 = sand.u32 %s47, 1
          %s642 = smul.addr %s641, 112
          %s643 = scalar_lea.vmem [#allocation2], %s642
          %s644 = smul.u32 2, %s37
          %s646 = ssub.s32 1792, 1792
          %647 = vsyncadd %s640, %s646
          %s648 = smul.addr %s644, 7
          %s649 = smul.addr %s648, 128
          %s650 = scalar_lea.hbm %s0, %s649
          %s651 = sshll.u32 %s643, 4
          %s652 = int_to_ptr.vmem [resolvable:$true] %s651
          %657 = dma.hbm_to_vmem [thread:$0]  %s650, 1792, %s652, %s640, 896, 896, 56
        $region84: #{_ae_forward_padded.1} parent=79 // pred_fallthru
          _
      $region80: #{_ae_forward_padded.1} parent=5 // pred_fallthru
        _
      %p658 = scmp.le.s32.totalorder 1, %s37
      %p659 = scmp.lt.s32.totalorder %s37, 3
      %p660 = pnand %p658, %p659
      %p661 = pneg %p660
      // Predicated region
      $region85: #{_ae_forward_padded.1} parent=5 // pred_check
        _
      $region86: #{_ae_forward_padded.1} parent=5 // pred_check_branch
        %663 = sbr.rel (%p660) target = $region88
      $region87: #{_ae_forward_padded.1} parent=5 // pred_region
        %s664 = ssub.s32 %s37, 1
        %s665 = sand.u32 %s50, 1
        %s666 = scalar_lea.sflag [#allocation3], %s665
        %s667 = sand.u32 %s50, 1
        %s668 = smul.addr %s667, 112
        %s669 = scalar_lea.vmem [#allocation2], %s668
        // Predicated region
        $region89: #{_ae_forward_padded.1} parent=87 // pred_check
          %p670 = pneg %p63
        $region90: #{_ae_forward_padded.1} parent=87 // pred_check_branch
          %672 = sbr.rel (%p670) target = $region92
        $region91: #{_ae_forward_padded.1} parent=87 // pred_region
          %673 = dma.done %s666, 1792
        $region92: #{_ae_forward_padded.1} parent=87 // pred_fallthru
          _
        // Predicated region
        $region93: #{_ae_forward_padded.1} parent=87 // pred_check
          %p674 = pneg %p84
        $region94: #{_ae_forward_padded.1} parent=87 // pred_check_branch
          %676 = sbr.rel (%p674) target = $region96
        $region95: #{_ae_forward_padded.1} parent=87 // pred_region
          %677 = dma.done [#allocation6], 57344
        $region96: #{_ae_forward_padded.1} parent=87 // pred_fallthru
          _
        // Predicated region
        $region97: #{_ae_forward_padded.1} parent=87 // pred_check
          %p678 = pneg %p105
        $region98: #{_ae_forward_padded.1} parent=87 // pred_check_branch
          %680 = sbr.rel (%p678) target = $region100
        $region99: #{_ae_forward_padded.1} parent=87 // pred_region
          %681 = dma.done [#allocation6], 128
        $region100: #{_ae_forward_padded.1} parent=87 // pred_fallthru
          _
        // Predicated region
        $region101: #{_ae_forward_padded.1} parent=87 // pred_check
          %p682 = pneg %p126
        $region102: #{_ae_forward_padded.1} parent=87 // pred_check_branch
          %684 = sbr.rel (%p682) target = $region104
        $region103: #{_ae_forward_padded.1} parent=87 // pred_region
          %685 = dma.done [#allocation9], 32768
        $region104: #{_ae_forward_padded.1} parent=87 // pred_fallthru
          _
        // Predicated region
        $region105: #{_ae_forward_padded.1} parent=87 // pred_check
          %p686 = pneg %p147
        $region106: #{_ae_forward_padded.1} parent=87 // pred_check_branch
          %688 = sbr.rel (%p686) target = $region108
        $region107: #{_ae_forward_padded.1} parent=87 // pred_region
          %689 = dma.done [#allocation9], 64
        $region108: #{_ae_forward_padded.1} parent=87 // pred_fallthru
          _
        // Predicated region
        $region109: #{_ae_forward_padded.1} parent=87 // pred_check
          %p690 = pneg %p168
        $region110: #{_ae_forward_padded.1} parent=87 // pred_check_branch
          %692 = sbr.rel (%p690) target = $region112
        $region111: #{_ae_forward_padded.1} parent=87 // pred_region
          %693 = dma.done [#allocation12], 8192
        $region112: #{_ae_forward_padded.1} parent=87 // pred_fallthru
          _
        // Predicated region
        $region113: #{_ae_forward_padded.1} parent=87 // pred_check
          %p694 = pneg %p189
        $region114: #{_ae_forward_padded.1} parent=87 // pred_check_branch
          %696 = sbr.rel (%p694) target = $region116
        $region115: #{_ae_forward_padded.1} parent=87 // pred_region
          %697 = dma.done [#allocation12], 32
        $region116: #{_ae_forward_padded.1} parent=87 // pred_fallthru
          _
        // Predicated region
        $region117: #{_ae_forward_padded.1} parent=87 // pred_check
          %p698 = pneg %p210
        $region118: #{_ae_forward_padded.1} parent=87 // pred_check_branch
          %700 = sbr.rel (%p698) target = $region120
        $region119: #{_ae_forward_padded.1} parent=87 // pred_region
          %701 = dma.done [#allocation15], 2048
        $region120: #{_ae_forward_padded.1} parent=87 // pred_fallthru
          _
        // Predicated region
        $region121: #{_ae_forward_padded.1} parent=87 // pred_check
          %p702 = pneg %p231
        $region122: #{_ae_forward_padded.1} parent=87 // pred_check_branch
          %704 = sbr.rel (%p702) target = $region124
        $region123: #{_ae_forward_padded.1} parent=87 // pred_region
          %705 = dma.done [#allocation15], 16
        $region124: #{_ae_forward_padded.1} parent=87 // pred_fallthru
          _
        // Predicated region
        $region125: #{_ae_forward_padded.1} parent=87 // pred_check
          %p706 = pneg %p252
        $region126: #{_ae_forward_padded.1} parent=87 // pred_check_branch
          %708 = sbr.rel (%p706) target = $region128
        $region127: #{_ae_forward_padded.1} parent=87 // pred_region
          %709 = dma.done [#allocation18], 2048
        $region128: #{_ae_forward_padded.1} parent=87 // pred_fallthru
          _
        // Predicated region
        $region129: #{_ae_forward_padded.1} parent=87 // pred_check
          %p710 = pneg %p273
        $region130: #{_ae_forward_padded.1} parent=87 // pred_check_branch
          %712 = sbr.rel (%p710) target = $region132
        $region131: #{_ae_forward_padded.1} parent=87 // pred_region
          %713 = dma.done [#allocation18], 32
        $region132: #{_ae_forward_padded.1} parent=87 // pred_fallthru
          _
        // Predicated region
        $region133: #{_ae_forward_padded.1} parent=87 // pred_check
          %p714 = pneg %p294
        $region134: #{_ae_forward_padded.1} parent=87 // pred_check_branch
          %716 = sbr.rel (%p714) target = $region136
        $region135: #{_ae_forward_padded.1} parent=87 // pred_region
          %717 = dma.done [#allocation21], 8192
        $region136: #{_ae_forward_padded.1} parent=87 // pred_fallthru
          _
        // Predicated region
        $region137: #{_ae_forward_padded.1} parent=87 // pred_check
          %p718 = pneg %p315
        $region138: #{_ae_forward_padded.1} parent=87 // pred_check_branch
          %720 = sbr.rel (%p718) target = $region140
        $region139: #{_ae_forward_padded.1} parent=87 // pred_region
          %721 = dma.done [#allocation21], 64
        $region140: #{_ae_forward_padded.1} parent=87 // pred_fallthru
          _
        // Predicated region
        $region141: #{_ae_forward_padded.1} parent=87 // pred_check
          %p722 = pneg %p336
        $region142: #{_ae_forward_padded.1} parent=87 // pred_check_branch
          %724 = sbr.rel (%p722) target = $region144
        $region143: #{_ae_forward_padded.1} parent=87 // pred_region
          %725 = dma.done [#allocation24], 32768
        $region144: #{_ae_forward_padded.1} parent=87 // pred_fallthru
          _
        // Predicated region
        $region145: #{_ae_forward_padded.1} parent=87 // pred_check
          %p726 = pneg %p357
        $region146: #{_ae_forward_padded.1} parent=87 // pred_check_branch
          %728 = sbr.rel (%p726) target = $region148
        $region147: #{_ae_forward_padded.1} parent=87 // pred_region
          %729 = dma.done [#allocation24], 128
        $region148: #{_ae_forward_padded.1} parent=87 // pred_fallthru
          _
        // Predicated region
        $region149: #{_ae_forward_padded.1} parent=87 // pred_check
          %p730 = pneg %p378
        $region150: #{_ae_forward_padded.1} parent=87 // pred_check_branch
          %732 = sbr.rel (%p730) target = $region152
        $region151: #{_ae_forward_padded.1} parent=87 // pred_region
          %733 = dma.done [#allocation27], 57344
        $region152: #{_ae_forward_padded.1} parent=87 // pred_fallthru
          _
        // Predicated region
        $region153: #{_ae_forward_padded.1} parent=87 // pred_check
          %p734 = pneg %p399
        $region154: #{_ae_forward_padded.1} parent=87 // pred_check_branch
          %736 = sbr.rel (%p734) target = $region156
        $region155: #{_ae_forward_padded.1} parent=87 // pred_region
          %737 = dma.done [#allocation27], 112
        $region156: #{_ae_forward_padded.1} parent=87 // pred_fallthru
          _
        %s738 = sand.u32 %s50, 1
        %s739 = scalar_lea.sflag [#allocation3], %s738
        %s740 = sand.u32 %s50, 1
        %s741 = smul.addr %s740, 112
        %s742 = scalar_lea.vmem [#allocation2], %s741
        %p743 = pneg %p63
        %p744 = pneg %p60
        %p745 = pneg %p84
        %p746 = pneg %p81
        %p747 = pneg %p105
        %p748 = pneg %p102
        %p749 = pneg %p126
        %p750 = pneg %p123
        %p751 = pneg %p147
        %p752 = pneg %p144
        %p753 = pneg %p168
        %p754 = pneg %p165
        %p755 = pneg %p189
        %p756 = pneg %p186
        %p757 = pneg %p210
        %p758 = pneg %p207
        %p759 = pneg %p231
        %p760 = pneg %p228
        %p761 = pneg %p252
        %p762 = pneg %p249
        %p763 = pneg %p273
        %p764 = pneg %p270
        %p765 = pneg %p294
        %p766 = pneg %p291
        %p767 = pneg %p315
        %p768 = pneg %p312
        %p769 = pneg %p336
        %p770 = pneg %p333
        %p771 = pneg %p357
        %p772 = pneg %p354
        %p773 = pneg %p378
        %p774 = pneg %p375
        %p775 = pneg %p399
        %p776 = pneg %p396
        %p777 = pneg %p425
        %p778 = pneg %p422
        %s779 = sand.u32 %s412, 1
        %s780 = scalar_lea.sflag [#allocation4], %s779
        %s781 = sand.u32 %s412, 1
        %s782 = smul.addr %s781, 112
        %s783 = scalar_lea.vmem [#allocation29], %s782
        %s784 = smul.u32 2, %s42
        %s785 = smul.u32 2, %s42
        %v787 = vld [vmem:[%s669] sm:$0xff]
        %v788 = vld [vmem:[%s669 + $0x8] sm:$0xff]
        %v789 = vld [vmem:[%s669 + $0x10] sm:$0xff]
        %v790 = vld [vmem:[%s669 + $0x18] sm:$0xff]
        %v791 = vld [vmem:[%s669 + $0x20] sm:$0xff]
        %v792 = vld [vmem:[%s669 + $0x28] sm:$0xff]
        %v793 = vld [vmem:[%s669 + $0x30] sm:$0xff]
        %v794 = vld [vmem:[%s669 + $0x38] sm:$0xff]
        %v795 = vld [vmem:[%s669 + $0x40] sm:$0xff]
        %v796 = vld [vmem:[%s669 + $0x48] sm:$0xff]
        %v797 = vld [vmem:[%s669 + $0x50] sm:$0xff]
        %v798 = vld [vmem:[%s669 + $0x58] sm:$0xff]
        %v799 = vld [vmem:[%s669 + $0x60] sm:$0xff]
        %v800 = vld [vmem:[%s669 + $0x68] sm:$0xff]
        %v801 = vld [vmem:[#allocation5] sm:$0xff]
        %v802 = vld [vmem:[#allocation5 + $0x8] sm:$0xff]
        %v803 = vld [vmem:[#allocation5 + $0x10] sm:$0xff]
        %v804 = vld [vmem:[#allocation5 + $0x18] sm:$0xff]
        %v805 = vld [vmem:[#allocation5 + $0x20] sm:$0xff]
        %v806 = vld [vmem:[#allocation5 + $0x28] sm:$0xff]
        %v807 = vld [vmem:[#allocation5 + $0x30] sm:$0xff]
        %v808 = vld [vmem:[#allocation5 + $0x38] sm:$0xff]
        %v809 = vld [vmem:[#allocation5 + $0x40] sm:$0xff]
        %v810 = vld [vmem:[#allocation5 + $0x48] sm:$0xff]
        %v811 = vld [vmem:[#allocation5 + $0x50] sm:$0xff]
        %v812 = vld [vmem:[#allocation5 + $0x58] sm:$0xff]
        %v813 = vld [vmem:[#allocation5 + $0x60] sm:$0xff]
        %v814 = vld [vmem:[#allocation5 + $0x68] sm:$0xff]
        %v815 = vld [vmem:[#allocation5 + $0x70] sm:$0xff]
        %v816 = vld [vmem:[#allocation5 + $0x78] sm:$0xff]
        %v817 = vld [vmem:[#allocation5 + $0x80] sm:$0xff]
        %v818 = vld [vmem:[#allocation5 + $0x88] sm:$0xff]
        %v819 = vld [vmem:[#allocation5 + $0x90] sm:$0xff]
        %v820 = vld [vmem:[#allocation5 + $0x98] sm:$0xff]
        %v821 = vld [vmem:[#allocation5 + $0xa0] sm:$0xff]
        %v822 = vld [vmem:[#allocation5 + $0xa8] sm:$0xff]
        %v823 = vld [vmem:[#allocation5 + $0xb0] sm:$0xff]
        %v824 = vld [vmem:[#allocation5 + $0xb8] sm:$0xff]
        %v825 = vld [vmem:[#allocation5 + $0xc0] sm:$0xff]
        %v826 = vld [vmem:[#allocation5 + $0xc8] sm:$0xff]
        %v827 = vld [vmem:[#allocation5 + $0xd0] sm:$0xff]
        %v828 = vld [vmem:[#allocation5 + $0xd8] sm:$0xff]
        %v829 = vld [vmem:[#allocation5 + $0xe0] sm:$0xff]
        %v830 = vld [vmem:[#allocation5 + $0xe8] sm:$0xff]
        %v831 = vld [vmem:[#allocation5 + $0xf0] sm:$0xff]
        %v832 = vld [vmem:[#allocation5 + $0xf8] sm:$0xff]
        %v833 = vld [vmem:[#allocation5 + $0x100] sm:$0xff]
        %v834 = vld [vmem:[#allocation5 + $0x108] sm:$0xff]
        %v835 = vld [vmem:[#allocation5 + $0x110] sm:$0xff]
        %v836 = vld [vmem:[#allocation5 + $0x118] sm:$0xff]
        %v837 = vld [vmem:[#allocation5 + $0x120] sm:$0xff]
        %v838 = vld [vmem:[#allocation5 + $0x128] sm:$0xff]
        %v839 = vld [vmem:[#allocation5 + $0x130] sm:$0xff]
        %v840 = vld [vmem:[#allocation5 + $0x138] sm:$0xff]
        %v841 = vld [vmem:[#allocation5 + $0x140] sm:$0xff]
        %v842 = vld [vmem:[#allocation5 + $0x148] sm:$0xff]
        %v843 = vld [vmem:[#allocation5 + $0x150] sm:$0xff]
        %v844 = vld [vmem:[#allocation5 + $0x158] sm:$0xff]
        %v845 = vld [vmem:[#allocation5 + $0x160] sm:$0xff]
        %v846 = vld [vmem:[#allocation5 + $0x168] sm:$0xff]
        %v847 = vld [vmem:[#allocation5 + $0x170] sm:$0xff]
        %v848 = vld [vmem:[#allocation5 + $0x178] sm:$0xff]
        %v849 = vld [vmem:[#allocation5 + $0x180] sm:$0xff]
        %v850 = vld [vmem:[#allocation5 + $0x188] sm:$0xff]
        %v851 = vld [vmem:[#allocation5 + $0x190] sm:$0xff]
        %v852 = vld [vmem:[#allocation5 + $0x198] sm:$0xff]
        %v853 = vld [vmem:[#allocation5 + $0x1a0] sm:$0xff]
        %v854 = vld [vmem:[#allocation5 + $0x1a8] sm:$0xff]
        %v855 = vld [vmem:[#allocation5 + $0x1b0] sm:$0xff]
        %v856 = vld [vmem:[#allocation5 + $0x1b8] sm:$0xff]
        %v857 = vld [vmem:[#allocation5 + $0x1c0] sm:$0xff]
        %v858 = vld [vmem:[#allocation5 + $0x1c8] sm:$0xff]
        %v859 = vld [vmem:[#allocation5 + $0x1d0] sm:$0xff]
        %v860 = vld [vmem:[#allocation5 + $0x1d8] sm:$0xff]
        %v861 = vld [vmem:[#allocation5 + $0x1e0] sm:$0xff]
        %v862 = vld [vmem:[#allocation5 + $0x1e8] sm:$0xff]
        %v863 = vld [vmem:[#allocation5 + $0x1f0] sm:$0xff]
        %v864 = vld [vmem:[#allocation5 + $0x1f8] sm:$0xff]
        %v865 = vld [vmem:[#allocation5 + $0x200] sm:$0xff]
        %v866 = vld [vmem:[#allocation5 + $0x208] sm:$0xff]
        %v867 = vld [vmem:[#allocation5 + $0x210] sm:$0xff]
        %v868 = vld [vmem:[#allocation5 + $0x218] sm:$0xff]
        %v869 = vld [vmem:[#allocation5 + $0x220] sm:$0xff]
        %v870 = vld [vmem:[#allocation5 + $0x228] sm:$0xff]
        %v871 = vld [vmem:[#allocation5 + $0x230] sm:$0xff]
        %v872 = vld [vmem:[#allocation5 + $0x238] sm:$0xff]
        %v873 = vld [vmem:[#allocation5 + $0x240] sm:$0xff]
        %v874 = vld [vmem:[#allocation5 + $0x248] sm:$0xff]
        %v875 = vld [vmem:[#allocation5 + $0x250] sm:$0xff]
        %v876 = vld [vmem:[#allocation5 + $0x258] sm:$0xff]
        %v877 = vld [vmem:[#allocation5 + $0x260] sm:$0xff]
        %v878 = vld [vmem:[#allocation5 + $0x268] sm:$0xff]
        %v879 = vld [vmem:[#allocation5 + $0x270] sm:$0xff]
        %v880 = vld [vmem:[#allocation5 + $0x278] sm:$0xff]
        %v881 = vld [vmem:[#allocation5 + $0x280] sm:$0xff]
        %v882 = vld [vmem:[#allocation5 + $0x288] sm:$0xff]
        %v883 = vld [vmem:[#allocation5 + $0x290] sm:$0xff]
        %v884 = vld [vmem:[#allocation5 + $0x298] sm:$0xff]
        %v885 = vld [vmem:[#allocation5 + $0x2a0] sm:$0xff]
        %v886 = vld [vmem:[#allocation5 + $0x2a8] sm:$0xff]
        %v887 = vld [vmem:[#allocation5 + $0x2b0] sm:$0xff]
        %v888 = vld [vmem:[#allocation5 + $0x2b8] sm:$0xff]
        %v889 = vld [vmem:[#allocation5 + $0x2c0] sm:$0xff]
        %v890 = vld [vmem:[#allocation5 + $0x2c8] sm:$0xff]
        %v891 = vld [vmem:[#allocation5 + $0x2d0] sm:$0xff]
        %v892 = vld [vmem:[#allocation5 + $0x2d8] sm:$0xff]
        %v893 = vld [vmem:[#allocation5 + $0x2e0] sm:$0xff]
        %v894 = vld [vmem:[#allocation5 + $0x2e8] sm:$0xff]
        %v895 = vld [vmem:[#allocation5 + $0x2f0] sm:$0xff]
        %v896 = vld [vmem:[#allocation5 + $0x2f8] sm:$0xff]
        %v897 = vld [vmem:[#allocation5 + $0x300] sm:$0xff]
        %v898 = vld [vmem:[#allocation5 + $0x308] sm:$0xff]
        %v899 = vld [vmem:[#allocation5 + $0x310] sm:$0xff]
        %v900 = vld [vmem:[#allocation5 + $0x318] sm:$0xff]
        %v901 = vld [vmem:[#allocation5 + $0x320] sm:$0xff]
        %v902 = vld [vmem:[#allocation5 + $0x328] sm:$0xff]
        %v903 = vld [vmem:[#allocation5 + $0x330] sm:$0xff]
        %v904 = vld [vmem:[#allocation5 + $0x338] sm:$0xff]
        %v905 = vld [vmem:[#allocation5 + $0x340] sm:$0xff]
        %v906 = vld [vmem:[#allocation5 + $0x348] sm:$0xff]
        %v907 = vld [vmem:[#allocation5 + $0x350] sm:$0xff]
        %v908 = vld [vmem:[#allocation5 + $0x358] sm:$0xff]
        %v909 = vld [vmem:[#allocation5 + $0x360] sm:$0xff]
        %v910 = vld [vmem:[#allocation5 + $0x368] sm:$0xff]
        %v911 = vld [vmem:[#allocation5 + $0x370] sm:$0xff]
        %v912 = vld [vmem:[#allocation5 + $0x378] sm:$0xff]
        %v913 = vld [vmem:[#allocation5 + $0x380] sm:$0xff]
        %v914 = vld [vmem:[#allocation5 + $0x388] sm:$0xff]
        %v915 = vld [vmem:[#allocation5 + $0x390] sm:$0xff]
        %v916 = vld [vmem:[#allocation5 + $0x398] sm:$0xff]
        %v917 = vld [vmem:[#allocation5 + $0x3a0] sm:$0xff]
        %v918 = vld [vmem:[#allocation5 + $0x3a8] sm:$0xff]
        %v919 = vld [vmem:[#allocation5 + $0x3b0] sm:$0xff]
        %v920 = vld [vmem:[#allocation5 + $0x3b8] sm:$0xff]
        %v921 = vld [vmem:[#allocation5 + $0x3c0] sm:$0xff]
        %v922 = vld [vmem:[#allocation5 + $0x3c8] sm:$0xff]
        %v923 = vld [vmem:[#allocation5 + $0x3d0] sm:$0xff]
        %v924 = vld [vmem:[#allocation5 + $0x3d8] sm:$0xff]
        %v925 = vld [vmem:[#allocation5 + $0x3e0] sm:$0xff]
        %v926 = vld [vmem:[#allocation5 + $0x3e8] sm:$0xff]
        %v927 = vld [vmem:[#allocation5 + $0x3f0] sm:$0xff]
        %v928 = vld [vmem:[#allocation5 + $0x3f8] sm:$0xff]
        %v929 = vld [vmem:[#allocation5 + $0x400] sm:$0xff]
        %v930 = vld [vmem:[#allocation5 + $0x408] sm:$0xff]
        %v931 = vld [vmem:[#allocation5 + $0x410] sm:$0xff]
        %v932 = vld [vmem:[#allocation5 + $0x418] sm:$0xff]
        %v933 = vld [vmem:[#allocation5 + $0x420] sm:$0xff]
        %v934 = vld [vmem:[#allocation5 + $0x428] sm:$0xff]
        %v935 = vld [vmem:[#allocation5 + $0x430] sm:$0xff]
        %v936 = vld [vmem:[#allocation5 + $0x438] sm:$0xff]
        %v937 = vld [vmem:[#allocation5 + $0x440] sm:$0xff]
        %v938 = vld [vmem:[#allocation5 + $0x448] sm:$0xff]
        %v939 = vld [vmem:[#allocation5 + $0x450] sm:$0xff]
        %v940 = vld [vmem:[#allocation5 + $0x458] sm:$0xff]
        %v941 = vld [vmem:[#allocation5 + $0x460] sm:$0xff]
        %v942 = vld [vmem:[#allocation5 + $0x468] sm:$0xff]
        %v943 = vld [vmem:[#allocation5 + $0x470] sm:$0xff]
        %v944 = vld [vmem:[#allocation5 + $0x478] sm:$0xff]
        %v945 = vld [vmem:[#allocation5 + $0x480] sm:$0xff]
        %v946 = vld [vmem:[#allocation5 + $0x488] sm:$0xff]
        %v947 = vld [vmem:[#allocation5 + $0x490] sm:$0xff]
        %v948 = vld [vmem:[#allocation5 + $0x498] sm:$0xff]
        %v949 = vld [vmem:[#allocation5 + $0x4a0] sm:$0xff]
        %v950 = vld [vmem:[#allocation5 + $0x4a8] sm:$0xff]
        %v951 = vld [vmem:[#allocation5 + $0x4b0] sm:$0xff]
        %v952 = vld [vmem:[#allocation5 + $0x4b8] sm:$0xff]
        %v953 = vld [vmem:[#allocation5 + $0x4c0] sm:$0xff]
        %v954 = vld [vmem:[#allocation5 + $0x4c8] sm:$0xff]
        %v955 = vld [vmem:[#allocation5 + $0x4d0] sm:$0xff]
        %v956 = vld [vmem:[#allocation5 + $0x4d8] sm:$0xff]
        %v957 = vld [vmem:[#allocation5 + $0x4e0] sm:$0xff]
        %v958 = vld [vmem:[#allocation5 + $0x4e8] sm:$0xff]
        %v959 = vld [vmem:[#allocation5 + $0x4f0] sm:$0xff]
        %v960 = vld [vmem:[#allocation5 + $0x4f8] sm:$0xff]
        %v961 = vld [vmem:[#allocation5 + $0x500] sm:$0xff]
        %v962 = vld [vmem:[#allocation5 + $0x508] sm:$0xff]
        %v963 = vld [vmem:[#allocation5 + $0x510] sm:$0xff]
        %v964 = vld [vmem:[#allocation5 + $0x518] sm:$0xff]
        %v965 = vld [vmem:[#allocation5 + $0x520] sm:$0xff]
        %v966 = vld [vmem:[#allocation5 + $0x528] sm:$0xff]
        %v967 = vld [vmem:[#allocation5 + $0x530] sm:$0xff]
        %v968 = vld [vmem:[#allocation5 + $0x538] sm:$0xff]
        %v969 = vld [vmem:[#allocation5 + $0x540] sm:$0xff]
        %v970 = vld [vmem:[#allocation5 + $0x548] sm:$0xff]
        %v971 = vld [vmem:[#allocation5 + $0x550] sm:$0xff]
        %v972 = vld [vmem:[#allocation5 + $0x558] sm:$0xff]
        %v973 = vld [vmem:[#allocation5 + $0x560] sm:$0xff]
        %v974 = vld [vmem:[#allocation5 + $0x568] sm:$0xff]
        %v975 = vld [vmem:[#allocation5 + $0x570] sm:$0xff]
        %v976 = vld [vmem:[#allocation5 + $0x578] sm:$0xff]
        %v977 = vld [vmem:[#allocation5 + $0x580] sm:$0xff]
        %v978 = vld [vmem:[#allocation5 + $0x588] sm:$0xff]
        %v979 = vld [vmem:[#allocation5 + $0x590] sm:$0xff]
        %v980 = vld [vmem:[#allocation5 + $0x598] sm:$0xff]
        %v981 = vld [vmem:[#allocation5 + $0x5a0] sm:$0xff]
        %v982 = vld [vmem:[#allocation5 + $0x5a8] sm:$0xff]
        %v983 = vld [vmem:[#allocation5 + $0x5b0] sm:$0xff]
        %v984 = vld [vmem:[#allocation5 + $0x5b8] sm:$0xff]
        %v985 = vld [vmem:[#allocation5 + $0x5c0] sm:$0xff]
        %v986 = vld [vmem:[#allocation5 + $0x5c8] sm:$0xff]
        %v987 = vld [vmem:[#allocation5 + $0x5d0] sm:$0xff]
        %v988 = vld [vmem:[#allocation5 + $0x5d8] sm:$0xff]
        %v989 = vld [vmem:[#allocation5 + $0x5e0] sm:$0xff]
        %v990 = vld [vmem:[#allocation5 + $0x5e8] sm:$0xff]
        %v991 = vld [vmem:[#allocation5 + $0x5f0] sm:$0xff]
        %v992 = vld [vmem:[#allocation5 + $0x5f8] sm:$0xff]
        %v993 = vld [vmem:[#allocation5 + $0x600] sm:$0xff]
        %v994 = vld [vmem:[#allocation5 + $0x608] sm:$0xff]
        %v995 = vld [vmem:[#allocation5 + $0x610] sm:$0xff]
        %v996 = vld [vmem:[#allocation5 + $0x618] sm:$0xff]
        %v997 = vld [vmem:[#allocation5 + $0x620] sm:$0xff]
        %v998 = vld [vmem:[#allocation5 + $0x628] sm:$0xff]
        %v999 = vld [vmem:[#allocation5 + $0x630] sm:$0xff]
        %v1000 = vld [vmem:[#allocation5 + $0x638] sm:$0xff]
        %v1001 = vld [vmem:[#allocation5 + $0x640] sm:$0xff]
        %v1002 = vld [vmem:[#allocation5 + $0x648] sm:$0xff]
        %v1003 = vld [vmem:[#allocation5 + $0x650] sm:$0xff]
        %v1004 = vld [vmem:[#allocation5 + $0x658] sm:$0xff]
        %v1005 = vld [vmem:[#allocation5 + $0x660] sm:$0xff]
        %v1006 = vld [vmem:[#allocation5 + $0x668] sm:$0xff]
        %v1007 = vld [vmem:[#allocation5 + $0x670] sm:$0xff]
        %v1008 = vld [vmem:[#allocation5 + $0x678] sm:$0xff]
        %v1009 = vld [vmem:[#allocation5 + $0x680] sm:$0xff]
        %v1010 = vld [vmem:[#allocation5 + $0x688] sm:$0xff]
        %v1011 = vld [vmem:[#allocation5 + $0x690] sm:$0xff]
        %v1012 = vld [vmem:[#allocation5 + $0x698] sm:$0xff]
        %v1013 = vld [vmem:[#allocation5 + $0x6a0] sm:$0xff]
        %v1014 = vld [vmem:[#allocation5 + $0x6a8] sm:$0xff]
        %v1015 = vld [vmem:[#allocation5 + $0x6b0] sm:$0xff]
        %v1016 = vld [vmem:[#allocation5 + $0x6b8] sm:$0xff]
        %v1017 = vld [vmem:[#allocation5 + $0x6c0] sm:$0xff]
        %v1018 = vld [vmem:[#allocation5 + $0x6c8] sm:$0xff]
        %v1019 = vld [vmem:[#allocation5 + $0x6d0] sm:$0xff]
        %v1020 = vld [vmem:[#allocation5 + $0x6d8] sm:$0xff]
        %v1021 = vld [vmem:[#allocation5 + $0x6e0] sm:$0xff]
        %v1022 = vld [vmem:[#allocation5 + $0x6e8] sm:$0xff]
        %v1023 = vld [vmem:[#allocation5 + $0x6f0] sm:$0xff]
        %v1024 = vld [vmem:[#allocation5 + $0x6f8] sm:$0xff]
        %v1025 = vld [vmem:[#allocation5 + $0x700] sm:$0xff]
        %v1026 = vld [vmem:[#allocation5 + $0x708] sm:$0xff]
        %v1027 = vld [vmem:[#allocation5 + $0x710] sm:$0xff]
        %v1028 = vld [vmem:[#allocation5 + $0x718] sm:$0xff]
        %v1029 = vld [vmem:[#allocation5 + $0x720] sm:$0xff]
        %v1030 = vld [vmem:[#allocation5 + $0x728] sm:$0xff]
        %v1031 = vld [vmem:[#allocation5 + $0x730] sm:$0xff]
        %v1032 = vld [vmem:[#allocation5 + $0x738] sm:$0xff]
        %v1033 = vld [vmem:[#allocation5 + $0x740] sm:$0xff]
        %v1034 = vld [vmem:[#allocation5 + $0x748] sm:$0xff]
        %v1035 = vld [vmem:[#allocation5 + $0x750] sm:$0xff]
        %v1036 = vld [vmem:[#allocation5 + $0x758] sm:$0xff]
        %v1037 = vld [vmem:[#allocation5 + $0x760] sm:$0xff]
        %v1038 = vld [vmem:[#allocation5 + $0x768] sm:$0xff]
        %v1039 = vld [vmem:[#allocation5 + $0x770] sm:$0xff]
        %v1040 = vld [vmem:[#allocation5 + $0x778] sm:$0xff]
        %v1041 = vld [vmem:[#allocation5 + $0x780] sm:$0xff]
        %v1042 = vld [vmem:[#allocation5 + $0x788] sm:$0xff]
        %v1043 = vld [vmem:[#allocation5 + $0x790] sm:$0xff]
        %v1044 = vld [vmem:[#allocation5 + $0x798] sm:$0xff]
        %v1045 = vld [vmem:[#allocation5 + $0x7a0] sm:$0xff]
        %v1046 = vld [vmem:[#allocation5 + $0x7a8] sm:$0xff]
        %v1047 = vld [vmem:[#allocation5 + $0x7b0] sm:$0xff]
        %v1048 = vld [vmem:[#allocation5 + $0x7b8] sm:$0xff]
        %v1049 = vld [vmem:[#allocation5 + $0x7c0] sm:$0xff]
        %v1050 = vld [vmem:[#allocation5 + $0x7c8] sm:$0xff]
        %v1051 = vld [vmem:[#allocation5 + $0x7d0] sm:$0xff]
        %v1052 = vld [vmem:[#allocation5 + $0x7d8] sm:$0xff]
        %v1053 = vld [vmem:[#allocation5 + $0x7e0] sm:$0xff]
        %v1054 = vld [vmem:[#allocation5 + $0x7e8] sm:$0xff]
        %v1055 = vld [vmem:[#allocation5 + $0x7f0] sm:$0xff]
        %v1056 = vld [vmem:[#allocation5 + $0x7f8] sm:$0xff]
        %v1057 = vld [vmem:[#allocation5 + $0x800] sm:$0xff]
        %v1058 = vld [vmem:[#allocation5 + $0x808] sm:$0xff]
        %v1059 = vld [vmem:[#allocation5 + $0x810] sm:$0xff]
        %v1060 = vld [vmem:[#allocation5 + $0x818] sm:$0xff]
        %v1061 = vld [vmem:[#allocation5 + $0x820] sm:$0xff]
        %v1062 = vld [vmem:[#allocation5 + $0x828] sm:$0xff]
        %v1063 = vld [vmem:[#allocation5 + $0x830] sm:$0xff]
        %v1064 = vld [vmem:[#allocation5 + $0x838] sm:$0xff]
        %v1065 = vld [vmem:[#allocation5 + $0x840] sm:$0xff]
        %v1066 = vld [vmem:[#allocation5 + $0x848] sm:$0xff]
        %v1067 = vld [vmem:[#allocation5 + $0x850] sm:$0xff]
        %v1068 = vld [vmem:[#allocation5 + $0x858] sm:$0xff]
        %v1069 = vld [vmem:[#allocation5 + $0x860] sm:$0xff]
        %v1070 = vld [vmem:[#allocation5 + $0x868] sm:$0xff]
        %v1071 = vld [vmem:[#allocation5 + $0x870] sm:$0xff]
        %v1072 = vld [vmem:[#allocation5 + $0x878] sm:$0xff]
        %v1073 = vld [vmem:[#allocation5 + $0x880] sm:$0xff]
        %v1074 = vld [vmem:[#allocation5 + $0x888] sm:$0xff]
        %v1075 = vld [vmem:[#allocation5 + $0x890] sm:$0xff]
        %v1076 = vld [vmem:[#allocation5 + $0x898] sm:$0xff]
        %v1077 = vld [vmem:[#allocation5 + $0x8a0] sm:$0xff]
        %v1078 = vld [vmem:[#allocation5 + $0x8a8] sm:$0xff]
        %v1079 = vld [vmem:[#allocation5 + $0x8b0] sm:$0xff]
        %v1080 = vld [vmem:[#allocation5 + $0x8b8] sm:$0xff]
        %v1081 = vld [vmem:[#allocation5 + $0x8c0] sm:$0xff]
        %v1082 = vld [vmem:[#allocation5 + $0x8c8] sm:$0xff]
        %v1083 = vld [vmem:[#allocation5 + $0x8d0] sm:$0xff]
        %v1084 = vld [vmem:[#allocation5 + $0x8d8] sm:$0xff]
        %v1085 = vld [vmem:[#allocation5 + $0x8e0] sm:$0xff]
        %v1086 = vld [vmem:[#allocation5 + $0x8e8] sm:$0xff]
        %v1087 = vld [vmem:[#allocation5 + $0x8f0] sm:$0xff]
        %v1088 = vld [vmem:[#allocation5 + $0x8f8] sm:$0xff]
        %v1089 = vld [vmem:[#allocation5 + $0x900] sm:$0xff]
        %v1090 = vld [vmem:[#allocation5 + $0x908] sm:$0xff]
        %v1091 = vld [vmem:[#allocation5 + $0x910] sm:$0xff]
        %v1092 = vld [vmem:[#allocation5 + $0x918] sm:$0xff]
        %v1093 = vld [vmem:[#allocation5 + $0x920] sm:$0xff]
        %v1094 = vld [vmem:[#allocation5 + $0x928] sm:$0xff]
        %v1095 = vld [vmem:[#allocation5 + $0x930] sm:$0xff]
        %v1096 = vld [vmem:[#allocation5 + $0x938] sm:$0xff]
        %v1097 = vld [vmem:[#allocation5 + $0x940] sm:$0xff]
        %v1098 = vld [vmem:[#allocation5 + $0x948] sm:$0xff]
        %v1099 = vld [vmem:[#allocation5 + $0x950] sm:$0xff]
        %v1100 = vld [vmem:[#allocation5 + $0x958] sm:$0xff]
        %v1101 = vld [vmem:[#allocation5 + $0x960] sm:$0xff]
        %v1102 = vld [vmem:[#allocation5 + $0x968] sm:$0xff]
        %v1103 = vld [vmem:[#allocation5 + $0x970] sm:$0xff]
        %v1104 = vld [vmem:[#allocation5 + $0x978] sm:$0xff]
        %v1105 = vld [vmem:[#allocation5 + $0x980] sm:$0xff]
        %v1106 = vld [vmem:[#allocation5 + $0x988] sm:$0xff]
        %v1107 = vld [vmem:[#allocation5 + $0x990] sm:$0xff]
        %v1108 = vld [vmem:[#allocation5 + $0x998] sm:$0xff]
        %v1109 = vld [vmem:[#allocation5 + $0x9a0] sm:$0xff]
        %v1110 = vld [vmem:[#allocation5 + $0x9a8] sm:$0xff]
        %v1111 = vld [vmem:[#allocation5 + $0x9b0] sm:$0xff]
        %v1112 = vld [vmem:[#allocation5 + $0x9b8] sm:$0xff]
        %v1113 = vld [vmem:[#allocation5 + $0x9c0] sm:$0xff]
        %v1114 = vld [vmem:[#allocation5 + $0x9c8] sm:$0xff]
        %v1115 = vld [vmem:[#allocation5 + $0x9d0] sm:$0xff]
        %v1116 = vld [vmem:[#allocation5 + $0x9d8] sm:$0xff]
        %v1117 = vld [vmem:[#allocation5 + $0x9e0] sm:$0xff]
        %v1118 = vld [vmem:[#allocation5 + $0x9e8] sm:$0xff]
        %v1119 = vld [vmem:[#allocation5 + $0x9f0] sm:$0xff]
        %v1120 = vld [vmem:[#allocation5 + $0x9f8] sm:$0xff]
        %v1121 = vld [vmem:[#allocation5 + $0xa00] sm:$0xff]
        %v1122 = vld [vmem:[#allocation5 + $0xa08] sm:$0xff]
        %v1123 = vld [vmem:[#allocation5 + $0xa10] sm:$0xff]
        %v1124 = vld [vmem:[#allocation5 + $0xa18] sm:$0xff]
        %v1125 = vld [vmem:[#allocation5 + $0xa20] sm:$0xff]
        %v1126 = vld [vmem:[#allocation5 + $0xa28] sm:$0xff]
        %v1127 = vld [vmem:[#allocation5 + $0xa30] sm:$0xff]
        %v1128 = vld [vmem:[#allocation5 + $0xa38] sm:$0xff]
        %v1129 = vld [vmem:[#allocation5 + $0xa40] sm:$0xff]
        %v1130 = vld [vmem:[#allocation5 + $0xa48] sm:$0xff]
        %v1131 = vld [vmem:[#allocation5 + $0xa50] sm:$0xff]
        %v1132 = vld [vmem:[#allocation5 + $0xa58] sm:$0xff]
        %v1133 = vld [vmem:[#allocation5 + $0xa60] sm:$0xff]
        %v1134 = vld [vmem:[#allocation5 + $0xa68] sm:$0xff]
        %v1135 = vld [vmem:[#allocation5 + $0xa70] sm:$0xff]
        %v1136 = vld [vmem:[#allocation5 + $0xa78] sm:$0xff]
        %v1137 = vld [vmem:[#allocation5 + $0xa80] sm:$0xff]
        %v1138 = vld [vmem:[#allocation5 + $0xa88] sm:$0xff]
        %v1139 = vld [vmem:[#allocation5 + $0xa90] sm:$0xff]
        %v1140 = vld [vmem:[#allocation5 + $0xa98] sm:$0xff]
        %v1141 = vld [vmem:[#allocation5 + $0xaa0] sm:$0xff]
        %v1142 = vld [vmem:[#allocation5 + $0xaa8] sm:$0xff]
        %v1143 = vld [vmem:[#allocation5 + $0xab0] sm:$0xff]
        %v1144 = vld [vmem:[#allocation5 + $0xab8] sm:$0xff]
        %v1145 = vld [vmem:[#allocation5 + $0xac0] sm:$0xff]
        %v1146 = vld [vmem:[#allocation5 + $0xac8] sm:$0xff]
        %v1147 = vld [vmem:[#allocation5 + $0xad0] sm:$0xff]
        %v1148 = vld [vmem:[#allocation5 + $0xad8] sm:$0xff]
        %v1149 = vld [vmem:[#allocation5 + $0xae0] sm:$0xff]
        %v1150 = vld [vmem:[#allocation5 + $0xae8] sm:$0xff]
        %v1151 = vld [vmem:[#allocation5 + $0xaf0] sm:$0xff]
        %v1152 = vld [vmem:[#allocation5 + $0xaf8] sm:$0xff]
        %v1153 = vld [vmem:[#allocation5 + $0xb00] sm:$0xff]
        %v1154 = vld [vmem:[#allocation5 + $0xb08] sm:$0xff]
        %v1155 = vld [vmem:[#allocation5 + $0xb10] sm:$0xff]
        %v1156 = vld [vmem:[#allocation5 + $0xb18] sm:$0xff]
        %v1157 = vld [vmem:[#allocation5 + $0xb20] sm:$0xff]
        %v1158 = vld [vmem:[#allocation5 + $0xb28] sm:$0xff]
        %v1159 = vld [vmem:[#allocation5 + $0xb30] sm:$0xff]
        %v1160 = vld [vmem:[#allocation5 + $0xb38] sm:$0xff]
        %v1161 = vld [vmem:[#allocation5 + $0xb40] sm:$0xff]
        %v1162 = vld [vmem:[#allocation5 + $0xb48] sm:$0xff]
        %v1163 = vld [vmem:[#allocation5 + $0xb50] sm:$0xff]
        %v1164 = vld [vmem:[#allocation5 + $0xb58] sm:$0xff]
        %v1165 = vld [vmem:[#allocation5 + $0xb60] sm:$0xff]
        %v1166 = vld [vmem:[#allocation5 + $0xb68] sm:$0xff]
        %v1167 = vld [vmem:[#allocation5 + $0xb70] sm:$0xff]
        %v1168 = vld [vmem:[#allocation5 + $0xb78] sm:$0xff]
        %v1169 = vld [vmem:[#allocation5 + $0xb80] sm:$0xff]
        %v1170 = vld [vmem:[#allocation5 + $0xb88] sm:$0xff]
        %v1171 = vld [vmem:[#allocation5 + $0xb90] sm:$0xff]
        %v1172 = vld [vmem:[#allocation5 + $0xb98] sm:$0xff]
        %v1173 = vld [vmem:[#allocation5 + $0xba0] sm:$0xff]
        %v1174 = vld [vmem:[#allocation5 + $0xba8] sm:$0xff]
        %v1175 = vld [vmem:[#allocation5 + $0xbb0] sm:$0xff]
        %v1176 = vld [vmem:[#allocation5 + $0xbb8] sm:$0xff]
        %v1177 = vld [vmem:[#allocation5 + $0xbc0] sm:$0xff]
        %v1178 = vld [vmem:[#allocation5 + $0xbc8] sm:$0xff]
        %v1179 = vld [vmem:[#allocation5 + $0xbd0] sm:$0xff]
        %v1180 = vld [vmem:[#allocation5 + $0xbd8] sm:$0xff]
        %v1181 = vld [vmem:[#allocation5 + $0xbe0] sm:$0xff]
        %v1182 = vld [vmem:[#allocation5 + $0xbe8] sm:$0xff]
        %v1183 = vld [vmem:[#allocation5 + $0xbf0] sm:$0xff]
        %v1184 = vld [vmem:[#allocation5 + $0xbf8] sm:$0xff]
        %v1185 = vld [vmem:[#allocation5 + $0xc00] sm:$0xff]
        %v1186 = vld [vmem:[#allocation5 + $0xc08] sm:$0xff]
        %v1187 = vld [vmem:[#allocation5 + $0xc10] sm:$0xff]
        %v1188 = vld [vmem:[#allocation5 + $0xc18] sm:$0xff]
        %v1189 = vld [vmem:[#allocation5 + $0xc20] sm:$0xff]
        %v1190 = vld [vmem:[#allocation5 + $0xc28] sm:$0xff]
        %v1191 = vld [vmem:[#allocation5 + $0xc30] sm:$0xff]
        %v1192 = vld [vmem:[#allocation5 + $0xc38] sm:$0xff]
        %v1193 = vld [vmem:[#allocation5 + $0xc40] sm:$0xff]
        %v1194 = vld [vmem:[#allocation5 + $0xc48] sm:$0xff]
        %v1195 = vld [vmem:[#allocation5 + $0xc50] sm:$0xff]
        %v1196 = vld [vmem:[#allocation5 + $0xc58] sm:$0xff]
        %v1197 = vld [vmem:[#allocation5 + $0xc60] sm:$0xff]
        %v1198 = vld [vmem:[#allocation5 + $0xc68] sm:$0xff]
        %v1199 = vld [vmem:[#allocation5 + $0xc70] sm:$0xff]
        %v1200 = vld [vmem:[#allocation5 + $0xc78] sm:$0xff]
        %v1201 = vld [vmem:[#allocation5 + $0xc80] sm:$0xff]
        %v1202 = vld [vmem:[#allocation5 + $0xc88] sm:$0xff]
        %v1203 = vld [vmem:[#allocation5 + $0xc90] sm:$0xff]
        %v1204 = vld [vmem:[#allocation5 + $0xc98] sm:$0xff]
        %v1205 = vld [vmem:[#allocation5 + $0xca0] sm:$0xff]
        %v1206 = vld [vmem:[#allocation5 + $0xca8] sm:$0xff]
        %v1207 = vld [vmem:[#allocation5 + $0xcb0] sm:$0xff]
        %v1208 = vld [vmem:[#allocation5 + $0xcb8] sm:$0xff]
        %v1209 = vld [vmem:[#allocation5 + $0xcc0] sm:$0xff]
        %v1210 = vld [vmem:[#allocation5 + $0xcc8] sm:$0xff]
        %v1211 = vld [vmem:[#allocation5 + $0xcd0] sm:$0xff]
        %v1212 = vld [vmem:[#allocation5 + $0xcd8] sm:$0xff]
        %v1213 = vld [vmem:[#allocation5 + $0xce0] sm:$0xff]
        %v1214 = vld [vmem:[#allocation5 + $0xce8] sm:$0xff]
        %v1215 = vld [vmem:[#allocation5 + $0xcf0] sm:$0xff]
        %v1216 = vld [vmem:[#allocation5 + $0xcf8] sm:$0xff]
        %v1217 = vld [vmem:[#allocation5 + $0xd00] sm:$0xff]
        %v1218 = vld [vmem:[#allocation5 + $0xd08] sm:$0xff]
        %v1219 = vld [vmem:[#allocation5 + $0xd10] sm:$0xff]
        %v1220 = vld [vmem:[#allocation5 + $0xd18] sm:$0xff]
        %v1221 = vld [vmem:[#allocation5 + $0xd20] sm:$0xff]
        %v1222 = vld [vmem:[#allocation5 + $0xd28] sm:$0xff]
        %v1223 = vld [vmem:[#allocation5 + $0xd30] sm:$0xff]
        %v1224 = vld [vmem:[#allocation5 + $0xd38] sm:$0xff]
        %v1225 = vld [vmem:[#allocation5 + $0xd40] sm:$0xff]
        %v1226 = vld [vmem:[#allocation5 + $0xd48] sm:$0xff]
        %v1227 = vld [vmem:[#allocation5 + $0xd50] sm:$0xff]
        %v1228 = vld [vmem:[#allocation5 + $0xd58] sm:$0xff]
        %v1229 = vld [vmem:[#allocation5 + $0xd60] sm:$0xff]
        %v1230 = vld [vmem:[#allocation5 + $0xd68] sm:$0xff]
        %v1231 = vld [vmem:[#allocation5 + $0xd70] sm:$0xff]
        %v1232 = vld [vmem:[#allocation5 + $0xd78] sm:$0xff]
        %v1233 = vld [vmem:[#allocation5 + $0xd80] sm:$0xff]
        %v1234 = vld [vmem:[#allocation5 + $0xd88] sm:$0xff]
        %v1235 = vld [vmem:[#allocation5 + $0xd90] sm:$0xff]
        %v1236 = vld [vmem:[#allocation5 + $0xd98] sm:$0xff]
        %v1237 = vld [vmem:[#allocation5 + $0xda0] sm:$0xff]
        %v1238 = vld [vmem:[#allocation5 + $0xda8] sm:$0xff]
        %v1239 = vld [vmem:[#allocation5 + $0xdb0] sm:$0xff]
        %v1240 = vld [vmem:[#allocation5 + $0xdb8] sm:$0xff]
        %v1241 = vld [vmem:[#allocation5 + $0xdc0] sm:$0xff]
        %v1242 = vld [vmem:[#allocation5 + $0xdc8] sm:$0xff]
        %v1243 = vld [vmem:[#allocation5 + $0xdd0] sm:$0xff]
        %v1244 = vld [vmem:[#allocation5 + $0xdd8] sm:$0xff]
        %v1245 = vld [vmem:[#allocation5 + $0xde0] sm:$0xff]
        %v1246 = vld [vmem:[#allocation5 + $0xde8] sm:$0xff]
        %v1247 = vld [vmem:[#allocation5 + $0xdf0] sm:$0xff]
        %v1248 = vld [vmem:[#allocation5 + $0xdf8] sm:$0xff]
        %v1249 = vld [vmem:[#allocation7] sm:$0xff]
        %v1250 = vpack.c.bf16 %v794, %v787
        %v1251 = vpack.c.bf16 %v795, %v788
        %v1252 = vpack.c.bf16 %v796, %v789
        %v1253 = vpack.c.bf16 %v797, %v790
        %v1254 = vpack.c.bf16 %v798, %v791
        %v1255 = vpack.c.bf16 %v799, %v792
        %v1256 = vpack.c.bf16 %v800, %v793
        %v1258 = vlaneseq
        %v1259 = vshrl.u32 %v1258, 7
        %v1260 = vsub.s32 0, %v1259
        %v1261 = vrot.slane %v1249, %v1260
        %v1262 = vlaneseq
        %v1263 = vshrl.u32 %v1262, 7
        %v1264 = vsub.s32 1, %v1263
        %v1265 = vrot.slane %v1249, %v1264
        %v1266 = vlaneseq
        %v1267 = vshrl.u32 %v1266, 7
        %v1268 = vsub.s32 2, %v1267
        %v1269 = vrot.slane %v1249, %v1268
        %v1270 = vlaneseq
        %v1271 = vshrl.u32 %v1270, 7
        %v1272 = vsub.s32 3, %v1271
        %v1273 = vrot.slane %v1249, %v1272
        %v1274 = vlaneseq
        %v1275 = vshrl.u32 %v1274, 7
        %v1276 = vsub.s32 4, %v1275
        %v1277 = vrot.slane %v1249, %v1276
        %v1278 = vlaneseq
        %v1279 = vshrl.u32 %v1278, 7
        %v1280 = vsub.s32 5, %v1279
        %v1281 = vrot.slane %v1249, %v1280
        %v1282 = vlaneseq
        %v1283 = vshrl.u32 %v1282, 7
        %v1284 = vsub.s32 6, %v1283
        %v1285 = vrot.slane %v1249, %v1284
        %v1286 = vlaneseq
        %v1287 = vshrl.u32 %v1286, 7
        %v1288 = vsub.s32 7, %v1287
        %v1289 = vrot.slane %v1249, %v1288
        %v1746 = vunpack.c.l.b16 %v801
        %v1747 = vunpack.c.h.b16 %v801
        %v1748 = vunpack.c.l.b16 %v802
        %v1749 = vunpack.c.h.b16 %v802
        %v1750 = vunpack.c.l.b16 %v803
        %v1751 = vunpack.c.h.b16 %v803
        %v1752 = vunpack.c.l.b16 %v804
        %v1753 = vunpack.c.h.b16 %v804
        %v1754 = vunpack.c.l.b16 %v805
        %v1755 = vunpack.c.h.b16 %v805
        %v1756 = vunpack.c.l.b16 %v806
        %v1757 = vunpack.c.h.b16 %v806
        %v1758 = vunpack.c.l.b16 %v807
        %v1759 = vunpack.c.h.b16 %v807
        %v1760 = vunpack.c.l.b16 %v808
        %v1761 = vunpack.c.h.b16 %v808
        %v1762 = vunpack.c.l.b16 %v809
        %v1763 = vunpack.c.h.b16 %v809
        %v1764 = vunpack.c.l.b16 %v810
        %v1765 = vunpack.c.h.b16 %v810
        %v1766 = vunpack.c.l.b16 %v811
        %v1767 = vunpack.c.h.b16 %v811
        %v1768 = vunpack.c.l.b16 %v812
        %v1769 = vunpack.c.h.b16 %v812
        %v1770 = vunpack.c.l.b16 %v813
        %v1771 = vunpack.c.h.b16 %v813
        %v1772 = vunpack.c.l.b16 %v814
        %v1773 = vunpack.c.h.b16 %v814
        %v1774 = vunpack.c.l.b16 %v815
        %v1775 = vunpack.c.h.b16 %v815
        %v1776 = vunpack.c.l.b16 %v816
        %v1777 = vunpack.c.h.b16 %v816
        %v1778 = vunpack.c.l.b16 %v817
        %v1779 = vunpack.c.h.b16 %v817
        %v1780 = vunpack.c.l.b16 %v818
        %v1781 = vunpack.c.h.b16 %v818
        %v1782 = vunpack.c.l.b16 %v819
        %v1783 = vunpack.c.h.b16 %v819
        %v1784 = vunpack.c.l.b16 %v820
        %v1785 = vunpack.c.h.b16 %v820
        %v1786 = vunpack.c.l.b16 %v821
        %v1787 = vunpack.c.h.b16 %v821
        %v1788 = vunpack.c.l.b16 %v822
        %v1789 = vunpack.c.h.b16 %v822
        %v1790 = vunpack.c.l.b16 %v823
        %v1791 = vunpack.c.h.b16 %v823
        %v1792 = vunpack.c.l.b16 %v824
        %v1793 = vunpack.c.h.b16 %v824
        %v1794 = vunpack.c.l.b16 %v825
        %v1795 = vunpack.c.h.b16 %v825
        %v1796 = vunpack.c.l.b16 %v826
        %v1797 = vunpack.c.h.b16 %v826
        %v1798 = vunpack.c.l.b16 %v827
        %v1799 = vunpack.c.h.b16 %v827
        %v1800 = vunpack.c.l.b16 %v828
        %v1801 = vunpack.c.h.b16 %v828
        %v1802 = vunpack.c.l.b16 %v829
        %v1803 = vunpack.c.h.b16 %v829
        %v1804 = vunpack.c.l.b16 %v830
        %v1805 = vunpack.c.h.b16 %v830
        %v1806 = vunpack.c.l.b16 %v831
        %v1807 = vunpack.c.h.b16 %v831
        %v1808 = vunpack.c.l.b16 %v832
        %v1809 = vunpack.c.h.b16 %v832
        %v1810 = vunpack.c.l.b16 %v833
        %v1811 = vunpack.c.h.b16 %v833
        %v1812 = vunpack.c.l.b16 %v834
        %v1813 = vunpack.c.h.b16 %v834
        %v1814 = vunpack.c.l.b16 %v835
        %v1815 = vunpack.c.h.b16 %v835
        %v1816 = vunpack.c.l.b16 %v836
        %v1817 = vunpack.c.h.b16 %v836
        %v1818 = vunpack.c.l.b16 %v837
        %v1819 = vunpack.c.h.b16 %v837
        %v1820 = vunpack.c.l.b16 %v838
        %v1821 = vunpack.c.h.b16 %v838
        %v1822 = vunpack.c.l.b16 %v839
        %v1823 = vunpack.c.h.b16 %v839
        %v1824 = vunpack.c.l.b16 %v840
        %v1825 = vunpack.c.h.b16 %v840
        %v1826 = vunpack.c.l.b16 %v841
        %v1827 = vunpack.c.h.b16 %v841
        %v1828 = vunpack.c.l.b16 %v842
        %v1829 = vunpack.c.h.b16 %v842
        %v1830 = vunpack.c.l.b16 %v843
        %v1831 = vunpack.c.h.b16 %v843
        %v1832 = vunpack.c.l.b16 %v844
        %v1833 = vunpack.c.h.b16 %v844
        %v1834 = vunpack.c.l.b16 %v845
        %v1835 = vunpack.c.h.b16 %v845
        %v1836 = vunpack.c.l.b16 %v846
        %v1837 = vunpack.c.h.b16 %v846
        %v1838 = vunpack.c.l.b16 %v847
        %v1839 = vunpack.c.h.b16 %v847
        %v1840 = vunpack.c.l.b16 %v848
        %v1841 = vunpack.c.h.b16 %v848
        %v1842 = vunpack.c.l.b16 %v849
        %v1843 = vunpack.c.h.b16 %v849
        %v1844 = vunpack.c.l.b16 %v850
        %v1845 = vunpack.c.h.b16 %v850
        %v1846 = vunpack.c.l.b16 %v851
        %v1847 = vunpack.c.h.b16 %v851
        %v1848 = vunpack.c.l.b16 %v852
        %v1849 = vunpack.c.h.b16 %v852
        %v1850 = vunpack.c.l.b16 %v853
        %v1851 = vunpack.c.h.b16 %v853
        %v1852 = vunpack.c.l.b16 %v854
        %v1853 = vunpack.c.h.b16 %v854
        %v1854 = vunpack.c.l.b16 %v855
        %v1855 = vunpack.c.h.b16 %v855
        %v1856 = vunpack.c.l.b16 %v856
        %v1857 = vunpack.c.h.b16 %v856
        %v1858 = vunpack.c.l.b16 %v857
        %v1859 = vunpack.c.h.b16 %v857
        %v1860 = vunpack.c.l.b16 %v858
        %v1861 = vunpack.c.h.b16 %v858
        %v1862 = vunpack.c.l.b16 %v859
        %v1863 = vunpack.c.h.b16 %v859
        %v1864 = vunpack.c.l.b16 %v860
        %v1865 = vunpack.c.h.b16 %v860
        %v1866 = vunpack.c.l.b16 %v861
        %v1867 = vunpack.c.h.b16 %v861
        %v1868 = vunpack.c.l.b16 %v862
        %v1869 = vunpack.c.h.b16 %v862
        %v1870 = vunpack.c.l.b16 %v863
        %v1871 = vunpack.c.h.b16 %v863
        %v1872 = vunpack.c.l.b16 %v864
        %v1873 = vunpack.c.h.b16 %v864
        %v1874 = vunpack.c.l.b16 %v865
        %v1875 = vunpack.c.h.b16 %v865
        %v1876 = vunpack.c.l.b16 %v866
        %v1877 = vunpack.c.h.b16 %v866
        %v1878 = vunpack.c.l.b16 %v867
        %v1879 = vunpack.c.h.b16 %v867
        %v1880 = vunpack.c.l.b16 %v868
        %v1881 = vunpack.c.h.b16 %v868
        %v1882 = vunpack.c.l.b16 %v869
        %v1883 = vunpack.c.h.b16 %v869
        %v1884 = vunpack.c.l.b16 %v870
        %v1885 = vunpack.c.h.b16 %v870
        %v1886 = vunpack.c.l.b16 %v871
        %v1887 = vunpack.c.h.b16 %v871
        %v1888 = vunpack.c.l.b16 %v872
        %v1889 = vunpack.c.h.b16 %v872
        %v1890 = vunpack.c.l.b16 %v873
        %v1891 = vunpack.c.h.b16 %v873
        %v1892 = vunpack.c.l.b16 %v874
        %v1893 = vunpack.c.h.b16 %v874
        %v1894 = vunpack.c.l.b16 %v875
        %v1895 = vunpack.c.h.b16 %v875
        %v1896 = vunpack.c.l.b16 %v876
        %v1897 = vunpack.c.h.b16 %v876
        %v1898 = vunpack.c.l.b16 %v877
        %v1899 = vunpack.c.h.b16 %v877
        %v1900 = vunpack.c.l.b16 %v878
        %v1901 = vunpack.c.h.b16 %v878
        %v1902 = vunpack.c.l.b16 %v879
        %v1903 = vunpack.c.h.b16 %v879
        %v1904 = vunpack.c.l.b16 %v880
        %v1905 = vunpack.c.h.b16 %v880
        %v1906 = vunpack.c.l.b16 %v881
        %v1907 = vunpack.c.h.b16 %v881
        %v1908 = vunpack.c.l.b16 %v882
        %v1909 = vunpack.c.h.b16 %v882
        %v1910 = vunpack.c.l.b16 %v883
        %v1911 = vunpack.c.h.b16 %v883
        %v1912 = vunpack.c.l.b16 %v884
        %v1913 = vunpack.c.h.b16 %v884
        %v1914 = vunpack.c.l.b16 %v885
        %v1915 = vunpack.c.h.b16 %v885
        %v1916 = vunpack.c.l.b16 %v886
        %v1917 = vunpack.c.h.b16 %v886
        %v1918 = vunpack.c.l.b16 %v887
        %v1919 = vunpack.c.h.b16 %v887
        %v1920 = vunpack.c.l.b16 %v888
        %v1921 = vunpack.c.h.b16 %v888
        %v1922 = vunpack.c.l.b16 %v889
        %v1923 = vunpack.c.h.b16 %v889
        %v1924 = vunpack.c.l.b16 %v890
        %v1925 = vunpack.c.h.b16 %v890
        %v1926 = vunpack.c.l.b16 %v891
        %v1927 = vunpack.c.h.b16 %v891
        %v1928 = vunpack.c.l.b16 %v892
        %v1929 = vunpack.c.h.b16 %v892
        %v1930 = vunpack.c.l.b16 %v893
        %v1931 = vunpack.c.h.b16 %v893
        %v1932 = vunpack.c.l.b16 %v894
        %v1933 = vunpack.c.h.b16 %v894
        %v1934 = vunpack.c.l.b16 %v895
        %v1935 = vunpack.c.h.b16 %v895
        %v1936 = vunpack.c.l.b16 %v896
        %v1937 = vunpack.c.h.b16 %v896
        %v1938 = vunpack.c.l.b16 %v897
        %v1939 = vunpack.c.h.b16 %v897
        %v1940 = vunpack.c.l.b16 %v898
        %v1941 = vunpack.c.h.b16 %v898
        %v1942 = vunpack.c.l.b16 %v899
        %v1943 = vunpack.c.h.b16 %v899
        %v1944 = vunpack.c.l.b16 %v900
        %v1945 = vunpack.c.h.b16 %v900
        %v1946 = vunpack.c.l.b16 %v901
        %v1947 = vunpack.c.h.b16 %v901
        %v1948 = vunpack.c.l.b16 %v902
        %v1949 = vunpack.c.h.b16 %v902
        %v1950 = vunpack.c.l.b16 %v903
        %v1951 = vunpack.c.h.b16 %v903
        %v1952 = vunpack.c.l.b16 %v904
        %v1953 = vunpack.c.h.b16 %v904
        %v1954 = vunpack.c.l.b16 %v905
        %v1955 = vunpack.c.h.b16 %v905
        %v1956 = vunpack.c.l.b16 %v906
        %v1957 = vunpack.c.h.b16 %v906
        %v1958 = vunpack.c.l.b16 %v907
        %v1959 = vunpack.c.h.b16 %v907
        %v1960 = vunpack.c.l.b16 %v908
        %v1961 = vunpack.c.h.b16 %v908
        %v1962 = vunpack.c.l.b16 %v909
        %v1963 = vunpack.c.h.b16 %v909
        %v1964 = vunpack.c.l.b16 %v910
        %v1965 = vunpack.c.h.b16 %v910
        %v1966 = vunpack.c.l.b16 %v911
        %v1967 = vunpack.c.h.b16 %v911
        %v1968 = vunpack.c.l.b16 %v912
        %v1969 = vunpack.c.h.b16 %v912
        %v1970 = vunpack.c.l.b16 %v913
        %v1971 = vunpack.c.h.b16 %v913
        %v1972 = vunpack.c.l.b16 %v914
        %v1973 = vunpack.c.h.b16 %v914
        %v1974 = vunpack.c.l.b16 %v915
        %v1975 = vunpack.c.h.b16 %v915
        %v1976 = vunpack.c.l.b16 %v916
        %v1977 = vunpack.c.h.b16 %v916
        %v1978 = vunpack.c.l.b16 %v917
        %v1979 = vunpack.c.h.b16 %v917
        %v1980 = vunpack.c.l.b16 %v918
        %v1981 = vunpack.c.h.b16 %v918
        %v1982 = vunpack.c.l.b16 %v919
        %v1983 = vunpack.c.h.b16 %v919
        %v1984 = vunpack.c.l.b16 %v920
        %v1985 = vunpack.c.h.b16 %v920
        %v1986 = vunpack.c.l.b16 %v921
        %v1987 = vunpack.c.h.b16 %v921
        %v1988 = vunpack.c.l.b16 %v922
        %v1989 = vunpack.c.h.b16 %v922
        %v1990 = vunpack.c.l.b16 %v923
        %v1991 = vunpack.c.h.b16 %v923
        %v1992 = vunpack.c.l.b16 %v924
        %v1993 = vunpack.c.h.b16 %v924
        %v1994 = vunpack.c.l.b16 %v925
        %v1995 = vunpack.c.h.b16 %v925
        %v1996 = vunpack.c.l.b16 %v926
        %v1997 = vunpack.c.h.b16 %v926
        %v1998 = vunpack.c.l.b16 %v927
        %v1999 = vunpack.c.h.b16 %v927
        %v2000 = vunpack.c.l.b16 %v928
        %v2001 = vunpack.c.h.b16 %v928
        %v2002 = vunpack.c.l.b16 %v929
        %v2003 = vunpack.c.h.b16 %v929
        %v2004 = vunpack.c.l.b16 %v930
        %v2005 = vunpack.c.h.b16 %v930
        %v2006 = vunpack.c.l.b16 %v931
        %v2007 = vunpack.c.h.b16 %v931
        %v2008 = vunpack.c.l.b16 %v932
        %v2009 = vunpack.c.h.b16 %v932
        %v2010 = vunpack.c.l.b16 %v933
        %v2011 = vunpack.c.h.b16 %v933
        %v2012 = vunpack.c.l.b16 %v934
        %v2013 = vunpack.c.h.b16 %v934
        %v2014 = vunpack.c.l.b16 %v935
        %v2015 = vunpack.c.h.b16 %v935
        %v2016 = vunpack.c.l.b16 %v936
        %v2017 = vunpack.c.h.b16 %v936
        %v2018 = vunpack.c.l.b16 %v937
        %v2019 = vunpack.c.h.b16 %v937
        %v2020 = vunpack.c.l.b16 %v938
        %v2021 = vunpack.c.h.b16 %v938
        %v2022 = vunpack.c.l.b16 %v939
        %v2023 = vunpack.c.h.b16 %v939
        %v2024 = vunpack.c.l.b16 %v940
        %v2025 = vunpack.c.h.b16 %v940
        %v2026 = vunpack.c.l.b16 %v941
        %v2027 = vunpack.c.h.b16 %v941
        %v2028 = vunpack.c.l.b16 %v942
        %v2029 = vunpack.c.h.b16 %v942
        %v2030 = vunpack.c.l.b16 %v943
        %v2031 = vunpack.c.h.b16 %v943
        %v2032 = vunpack.c.l.b16 %v944
        %v2033 = vunpack.c.h.b16 %v944
        %v2034 = vunpack.c.l.b16 %v945
        %v2035 = vunpack.c.h.b16 %v945
        %v2036 = vunpack.c.l.b16 %v946
        %v2037 = vunpack.c.h.b16 %v946
        %v2038 = vunpack.c.l.b16 %v947
        %v2039 = vunpack.c.h.b16 %v947
        %v2040 = vunpack.c.l.b16 %v948
        %v2041 = vunpack.c.h.b16 %v948
        %v2042 = vunpack.c.l.b16 %v949
        %v2043 = vunpack.c.h.b16 %v949
        %v2044 = vunpack.c.l.b16 %v950
        %v2045 = vunpack.c.h.b16 %v950
        %v2046 = vunpack.c.l.b16 %v951
        %v2047 = vunpack.c.h.b16 %v951
        %v2048 = vunpack.c.l.b16 %v952
        %v2049 = vunpack.c.h.b16 %v952
        %v2050 = vunpack.c.l.b16 %v953
        %v2051 = vunpack.c.h.b16 %v953
        %v2052 = vunpack.c.l.b16 %v954
        %v2053 = vunpack.c.h.b16 %v954
        %v2054 = vunpack.c.l.b16 %v955
        %v2055 = vunpack.c.h.b16 %v955
        %v2056 = vunpack.c.l.b16 %v956
        %v2057 = vunpack.c.h.b16 %v956
        %v2058 = vunpack.c.l.b16 %v957
        %v2059 = vunpack.c.h.b16 %v957
        %v2060 = vunpack.c.l.b16 %v958
        %v2061 = vunpack.c.h.b16 %v958
        %v2062 = vunpack.c.l.b16 %v959
        %v2063 = vunpack.c.h.b16 %v959
        %v2064 = vunpack.c.l.b16 %v960
        %v2065 = vunpack.c.h.b16 %v960
        %v2066 = vunpack.c.l.b16 %v961
        %v2067 = vunpack.c.h.b16 %v961
        %v2068 = vunpack.c.l.b16 %v962
        %v2069 = vunpack.c.h.b16 %v962
        %v2070 = vunpack.c.l.b16 %v963
        %v2071 = vunpack.c.h.b16 %v963
        %v2072 = vunpack.c.l.b16 %v964
        %v2073 = vunpack.c.h.b16 %v964
        %v2074 = vunpack.c.l.b16 %v965
        %v2075 = vunpack.c.h.b16 %v965
        %v2076 = vunpack.c.l.b16 %v966
        %v2077 = vunpack.c.h.b16 %v966
        %v2078 = vunpack.c.l.b16 %v967
        %v2079 = vunpack.c.h.b16 %v967
        %v2080 = vunpack.c.l.b16 %v968
        %v2081 = vunpack.c.h.b16 %v968
        %v2082 = vunpack.c.l.b16 %v969
        %v2083 = vunpack.c.h.b16 %v969
        %v2084 = vunpack.c.l.b16 %v970
        %v2085 = vunpack.c.h.b16 %v970
        %v2086 = vunpack.c.l.b16 %v971
        %v2087 = vunpack.c.h.b16 %v971
        %v2088 = vunpack.c.l.b16 %v972
        %v2089 = vunpack.c.h.b16 %v972
        %v2090 = vunpack.c.l.b16 %v973
        %v2091 = vunpack.c.h.b16 %v973
        %v2092 = vunpack.c.l.b16 %v974
        %v2093 = vunpack.c.h.b16 %v974
        %v2094 = vunpack.c.l.b16 %v975
        %v2095 = vunpack.c.h.b16 %v975
        %v2096 = vunpack.c.l.b16 %v976
        %v2097 = vunpack.c.h.b16 %v976
        %v2098 = vunpack.c.l.b16 %v977
        %v2099 = vunpack.c.h.b16 %v977
        %v2100 = vunpack.c.l.b16 %v978
        %v2101 = vunpack.c.h.b16 %v978
        %v2102 = vunpack.c.l.b16 %v979
        %v2103 = vunpack.c.h.b16 %v979
        %v2104 = vunpack.c.l.b16 %v980
        %v2105 = vunpack.c.h.b16 %v980
        %v2106 = vunpack.c.l.b16 %v981
        %v2107 = vunpack.c.h.b16 %v981
        %v2108 = vunpack.c.l.b16 %v982
        %v2109 = vunpack.c.h.b16 %v982
        %v2110 = vunpack.c.l.b16 %v983
        %v2111 = vunpack.c.h.b16 %v983
        %v2112 = vunpack.c.l.b16 %v984
        %v2113 = vunpack.c.h.b16 %v984
        %v2114 = vunpack.c.l.b16 %v985
        %v2115 = vunpack.c.h.b16 %v985
        %v2116 = vunpack.c.l.b16 %v986
        %v2117 = vunpack.c.h.b16 %v986
        %v2118 = vunpack.c.l.b16 %v987
        %v2119 = vunpack.c.h.b16 %v987
        %v2120 = vunpack.c.l.b16 %v988
        %v2121 = vunpack.c.h.b16 %v988
        %v2122 = vunpack.c.l.b16 %v989
        %v2123 = vunpack.c.h.b16 %v989
        %v2124 = vunpack.c.l.b16 %v990
        %v2125 = vunpack.c.h.b16 %v990
        %v2126 = vunpack.c.l.b16 %v991
        %v2127 = vunpack.c.h.b16 %v991
        %v2128 = vunpack.c.l.b16 %v992
        %v2129 = vunpack.c.h.b16 %v992
        %v2130 = vunpack.c.l.b16 %v993
        %v2131 = vunpack.c.h.b16 %v993
        %v2132 = vunpack.c.l.b16 %v994
        %v2133 = vunpack.c.h.b16 %v994
        %v2134 = vunpack.c.l.b16 %v995
        %v2135 = vunpack.c.h.b16 %v995
        %v2136 = vunpack.c.l.b16 %v996
        %v2137 = vunpack.c.h.b16 %v996
        %v2138 = vunpack.c.l.b16 %v997
        %v2139 = vunpack.c.h.b16 %v997
        %v2140 = vunpack.c.l.b16 %v998
        %v2141 = vunpack.c.h.b16 %v998
        %v2142 = vunpack.c.l.b16 %v999
        %v2143 = vunpack.c.h.b16 %v999
        %v2144 = vunpack.c.l.b16 %v1000
        %v2145 = vunpack.c.h.b16 %v1000
        %v2146 = vunpack.c.l.b16 %v1001
        %v2147 = vunpack.c.h.b16 %v1001
        %v2148 = vunpack.c.l.b16 %v1002
        %v2149 = vunpack.c.h.b16 %v1002
        %v2150 = vunpack.c.l.b16 %v1003
        %v2151 = vunpack.c.h.b16 %v1003
        %v2152 = vunpack.c.l.b16 %v1004
        %v2153 = vunpack.c.h.b16 %v1004
        %v2154 = vunpack.c.l.b16 %v1005
        %v2155 = vunpack.c.h.b16 %v1005
        %v2156 = vunpack.c.l.b16 %v1006
        %v2157 = vunpack.c.h.b16 %v1006
        %v2158 = vunpack.c.l.b16 %v1007
        %v2159 = vunpack.c.h.b16 %v1007
        %v2160 = vunpack.c.l.b16 %v1008
        %v2161 = vunpack.c.h.b16 %v1008
        %v2162 = vunpack.c.l.b16 %v1009
        %v2163 = vunpack.c.h.b16 %v1009
        %v2164 = vunpack.c.l.b16 %v1010
        %v2165 = vunpack.c.h.b16 %v1010
        %v2166 = vunpack.c.l.b16 %v1011
        %v2167 = vunpack.c.h.b16 %v1011
        %v2168 = vunpack.c.l.b16 %v1012
        %v2169 = vunpack.c.h.b16 %v1012
        %v2170 = vunpack.c.l.b16 %v1013
        %v2171 = vunpack.c.h.b16 %v1013
        %v2172 = vunpack.c.l.b16 %v1014
        %v2173 = vunpack.c.h.b16 %v1014
        %v2174 = vunpack.c.l.b16 %v1015
        %v2175 = vunpack.c.h.b16 %v1015
        %v2176 = vunpack.c.l.b16 %v1016
        %v2177 = vunpack.c.h.b16 %v1016
        %v2178 = vunpack.c.l.b16 %v1017
        %v2179 = vunpack.c.h.b16 %v1017
        %v2180 = vunpack.c.l.b16 %v1018
        %v2181 = vunpack.c.h.b16 %v1018
        %v2182 = vunpack.c.l.b16 %v1019
        %v2183 = vunpack.c.h.b16 %v1019
        %v2184 = vunpack.c.l.b16 %v1020
        %v2185 = vunpack.c.h.b16 %v1020
        %v2186 = vunpack.c.l.b16 %v1021
        %v2187 = vunpack.c.h.b16 %v1021
        %v2188 = vunpack.c.l.b16 %v1022
        %v2189 = vunpack.c.h.b16 %v1022
        %v2190 = vunpack.c.l.b16 %v1023
        %v2191 = vunpack.c.h.b16 %v1023
        %v2192 = vunpack.c.l.b16 %v1024
        %v2193 = vunpack.c.h.b16 %v1024
        %v2194 = vunpack.c.l.b16 %v1025
        %v2195 = vunpack.c.h.b16 %v1025
        %v2196 = vunpack.c.l.b16 %v1026
        %v2197 = vunpack.c.h.b16 %v1026
        %v2198 = vunpack.c.l.b16 %v1027
        %v2199 = vunpack.c.h.b16 %v1027
        %v2200 = vunpack.c.l.b16 %v1028
        %v2201 = vunpack.c.h.b16 %v1028
        %v2202 = vunpack.c.l.b16 %v1029
        %v2203 = vunpack.c.h.b16 %v1029
        %v2204 = vunpack.c.l.b16 %v1030
        %v2205 = vunpack.c.h.b16 %v1030
        %v2206 = vunpack.c.l.b16 %v1031
        %v2207 = vunpack.c.h.b16 %v1031
        %v2208 = vunpack.c.l.b16 %v1032
        %v2209 = vunpack.c.h.b16 %v1032
        %v2210 = vunpack.c.l.b16 %v1033
        %v2211 = vunpack.c.h.b16 %v1033
        %v2212 = vunpack.c.l.b16 %v1034
        %v2213 = vunpack.c.h.b16 %v1034
        %v2214 = vunpack.c.l.b16 %v1035
        %v2215 = vunpack.c.h.b16 %v1035
        %v2216 = vunpack.c.l.b16 %v1036
        %v2217 = vunpack.c.h.b16 %v1036
        %v2218 = vunpack.c.l.b16 %v1037
        %v2219 = vunpack.c.h.b16 %v1037
        %v2220 = vunpack.c.l.b16 %v1038
        %v2221 = vunpack.c.h.b16 %v1038
        %v2222 = vunpack.c.l.b16 %v1039
        %v2223 = vunpack.c.h.b16 %v1039
        %v2224 = vunpack.c.l.b16 %v1040
        %v2225 = vunpack.c.h.b16 %v1040
        %v2226 = vunpack.c.l.b16 %v1041
        %v2227 = vunpack.c.h.b16 %v1041
        %v2228 = vunpack.c.l.b16 %v1042
        %v2229 = vunpack.c.h.b16 %v1042
        %v2230 = vunpack.c.l.b16 %v1043
        %v2231 = vunpack.c.h.b16 %v1043
        %v2232 = vunpack.c.l.b16 %v1044
        %v2233 = vunpack.c.h.b16 %v1044
        %v2234 = vunpack.c.l.b16 %v1045
        %v2235 = vunpack.c.h.b16 %v1045
        %v2236 = vunpack.c.l.b16 %v1046
        %v2237 = vunpack.c.h.b16 %v1046
        %v2238 = vunpack.c.l.b16 %v1047
        %v2239 = vunpack.c.h.b16 %v1047
        %v2240 = vunpack.c.l.b16 %v1048
        %v2241 = vunpack.c.h.b16 %v1048
        %v2242 = vunpack.c.l.b16 %v1049
        %v2243 = vunpack.c.h.b16 %v1049
        %v2244 = vunpack.c.l.b16 %v1050
        %v2245 = vunpack.c.h.b16 %v1050
        %v2246 = vunpack.c.l.b16 %v1051
        %v2247 = vunpack.c.h.b16 %v1051
        %v2248 = vunpack.c.l.b16 %v1052
        %v2249 = vunpack.c.h.b16 %v1052
        %v2250 = vunpack.c.l.b16 %v1053
        %v2251 = vunpack.c.h.b16 %v1053
        %v2252 = vunpack.c.l.b16 %v1054
        %v2253 = vunpack.c.h.b16 %v1054
        %v2254 = vunpack.c.l.b16 %v1055
        %v2255 = vunpack.c.h.b16 %v1055
        %v2256 = vunpack.c.l.b16 %v1056
        %v2257 = vunpack.c.h.b16 %v1056
        %v2258 = vunpack.c.l.b16 %v1057
        %v2259 = vunpack.c.h.b16 %v1057
        %v2260 = vunpack.c.l.b16 %v1058
        %v2261 = vunpack.c.h.b16 %v1058
        %v2262 = vunpack.c.l.b16 %v1059
        %v2263 = vunpack.c.h.b16 %v1059
        %v2264 = vunpack.c.l.b16 %v1060
        %v2265 = vunpack.c.h.b16 %v1060
        %v2266 = vunpack.c.l.b16 %v1061
        %v2267 = vunpack.c.h.b16 %v1061
        %v2268 = vunpack.c.l.b16 %v1062
        %v2269 = vunpack.c.h.b16 %v1062
        %v2270 = vunpack.c.l.b16 %v1063
        %v2271 = vunpack.c.h.b16 %v1063
        %v2272 = vunpack.c.l.b16 %v1064
        %v2273 = vunpack.c.h.b16 %v1064
        %v2274 = vunpack.c.l.b16 %v1065
        %v2275 = vunpack.c.h.b16 %v1065
        %v2276 = vunpack.c.l.b16 %v1066
        %v2277 = vunpack.c.h.b16 %v1066
        %v2278 = vunpack.c.l.b16 %v1067
        %v2279 = vunpack.c.h.b16 %v1067
        %v2280 = vunpack.c.l.b16 %v1068
        %v2281 = vunpack.c.h.b16 %v1068
        %v2282 = vunpack.c.l.b16 %v1069
        %v2283 = vunpack.c.h.b16 %v1069
        %v2284 = vunpack.c.l.b16 %v1070
        %v2285 = vunpack.c.h.b16 %v1070
        %v2286 = vunpack.c.l.b16 %v1071
        %v2287 = vunpack.c.h.b16 %v1071
        %v2288 = vunpack.c.l.b16 %v1072
        %v2289 = vunpack.c.h.b16 %v1072
        %v2290 = vunpack.c.l.b16 %v1073
        %v2291 = vunpack.c.h.b16 %v1073
        %v2292 = vunpack.c.l.b16 %v1074
        %v2293 = vunpack.c.h.b16 %v1074
        %v2294 = vunpack.c.l.b16 %v1075
        %v2295 = vunpack.c.h.b16 %v1075
        %v2296 = vunpack.c.l.b16 %v1076
        %v2297 = vunpack.c.h.b16 %v1076
        %v2298 = vunpack.c.l.b16 %v1077
        %v2299 = vunpack.c.h.b16 %v1077
        %v2300 = vunpack.c.l.b16 %v1078
        %v2301 = vunpack.c.h.b16 %v1078
        %v2302 = vunpack.c.l.b16 %v1079
        %v2303 = vunpack.c.h.b16 %v1079
        %v2304 = vunpack.c.l.b16 %v1080
        %v2305 = vunpack.c.h.b16 %v1080
        %v2306 = vunpack.c.l.b16 %v1081
        %v2307 = vunpack.c.h.b16 %v1081
        %v2308 = vunpack.c.l.b16 %v1082
        %v2309 = vunpack.c.h.b16 %v1082
        %v2310 = vunpack.c.l.b16 %v1083
        %v2311 = vunpack.c.h.b16 %v1083
        %v2312 = vunpack.c.l.b16 %v1084
        %v2313 = vunpack.c.h.b16 %v1084
        %v2314 = vunpack.c.l.b16 %v1085
        %v2315 = vunpack.c.h.b16 %v1085
        %v2316 = vunpack.c.l.b16 %v1086
        %v2317 = vunpack.c.h.b16 %v1086
        %v2318 = vunpack.c.l.b16 %v1087
        %v2319 = vunpack.c.h.b16 %v1087
        %v2320 = vunpack.c.l.b16 %v1088
        %v2321 = vunpack.c.h.b16 %v1088
        %v2322 = vunpack.c.l.b16 %v1089
        %v2323 = vunpack.c.h.b16 %v1089
        %v2324 = vunpack.c.l.b16 %v1090
        %v2325 = vunpack.c.h.b16 %v1090
        %v2326 = vunpack.c.l.b16 %v1091
        %v2327 = vunpack.c.h.b16 %v1091
        %v2328 = vunpack.c.l.b16 %v1092
        %v2329 = vunpack.c.h.b16 %v1092
        %v2330 = vunpack.c.l.b16 %v1093
        %v2331 = vunpack.c.h.b16 %v1093
        %v2332 = vunpack.c.l.b16 %v1094
        %v2333 = vunpack.c.h.b16 %v1094
        %v2334 = vunpack.c.l.b16 %v1095
        %v2335 = vunpack.c.h.b16 %v1095
        %v2336 = vunpack.c.l.b16 %v1096
        %v2337 = vunpack.c.h.b16 %v1096
        %v2338 = vunpack.c.l.b16 %v1097
        %v2339 = vunpack.c.h.b16 %v1097
        %v2340 = vunpack.c.l.b16 %v1098
        %v2341 = vunpack.c.h.b16 %v1098
        %v2342 = vunpack.c.l.b16 %v1099
        %v2343 = vunpack.c.h.b16 %v1099
        %v2344 = vunpack.c.l.b16 %v1100
        %v2345 = vunpack.c.h.b16 %v1100
        %v2346 = vunpack.c.l.b16 %v1101
        %v2347 = vunpack.c.h.b16 %v1101
        %v2348 = vunpack.c.l.b16 %v1102
        %v2349 = vunpack.c.h.b16 %v1102
        %v2350 = vunpack.c.l.b16 %v1103
        %v2351 = vunpack.c.h.b16 %v1103
        %v2352 = vunpack.c.l.b16 %v1104
        %v2353 = vunpack.c.h.b16 %v1104
        %v2354 = vunpack.c.l.b16 %v1105
        %v2355 = vunpack.c.h.b16 %v1105
        %v2356 = vunpack.c.l.b16 %v1106
        %v2357 = vunpack.c.h.b16 %v1106
        %v2358 = vunpack.c.l.b16 %v1107
        %v2359 = vunpack.c.h.b16 %v1107
        %v2360 = vunpack.c.l.b16 %v1108
        %v2361 = vunpack.c.h.b16 %v1108
        %v2362 = vunpack.c.l.b16 %v1109
        %v2363 = vunpack.c.h.b16 %v1109
        %v2364 = vunpack.c.l.b16 %v1110
        %v2365 = vunpack.c.h.b16 %v1110
        %v2366 = vunpack.c.l.b16 %v1111
        %v2367 = vunpack.c.h.b16 %v1111
        %v2368 = vunpack.c.l.b16 %v1112
        %v2369 = vunpack.c.h.b16 %v1112
        %v2370 = vunpack.c.l.b16 %v1113
        %v2371 = vunpack.c.h.b16 %v1113
        %v2372 = vunpack.c.l.b16 %v1114
        %v2373 = vunpack.c.h.b16 %v1114
        %v2374 = vunpack.c.l.b16 %v1115
        %v2375 = vunpack.c.h.b16 %v1115
        %v2376 = vunpack.c.l.b16 %v1116
        %v2377 = vunpack.c.h.b16 %v1116
        %v2378 = vunpack.c.l.b16 %v1117
        %v2379 = vunpack.c.h.b16 %v1117
        %v2380 = vunpack.c.l.b16 %v1118
        %v2381 = vunpack.c.h.b16 %v1118
        %v2382 = vunpack.c.l.b16 %v1119
        %v2383 = vunpack.c.h.b16 %v1119
        %v2384 = vunpack.c.l.b16 %v1120
        %v2385 = vunpack.c.h.b16 %v1120
        %v2386 = vunpack.c.l.b16 %v1121
        %v2387 = vunpack.c.h.b16 %v1121
        %v2388 = vunpack.c.l.b16 %v1122
        %v2389 = vunpack.c.h.b16 %v1122
        %v2390 = vunpack.c.l.b16 %v1123
        %v2391 = vunpack.c.h.b16 %v1123
        %v2392 = vunpack.c.l.b16 %v1124
        %v2393 = vunpack.c.h.b16 %v1124
        %v2394 = vunpack.c.l.b16 %v1125
        %v2395 = vunpack.c.h.b16 %v1125
        %v2396 = vunpack.c.l.b16 %v1126
        %v2397 = vunpack.c.h.b16 %v1126
        %v2398 = vunpack.c.l.b16 %v1127
        %v2399 = vunpack.c.h.b16 %v1127
        %v2400 = vunpack.c.l.b16 %v1128
        %v2401 = vunpack.c.h.b16 %v1128
        %v2402 = vunpack.c.l.b16 %v1129
        %v2403 = vunpack.c.h.b16 %v1129
        %v2404 = vunpack.c.l.b16 %v1130
        %v2405 = vunpack.c.h.b16 %v1130
        %v2406 = vunpack.c.l.b16 %v1131
        %v2407 = vunpack.c.h.b16 %v1131
        %v2408 = vunpack.c.l.b16 %v1132
        %v2409 = vunpack.c.h.b16 %v1132
        %v2410 = vunpack.c.l.b16 %v1133
        %v2411 = vunpack.c.h.b16 %v1133
        %v2412 = vunpack.c.l.b16 %v1134
        %v2413 = vunpack.c.h.b16 %v1134
        %v2414 = vunpack.c.l.b16 %v1135
        %v2415 = vunpack.c.h.b16 %v1135
        %v2416 = vunpack.c.l.b16 %v1136
        %v2417 = vunpack.c.h.b16 %v1136
        %v2418 = vunpack.c.l.b16 %v1137
        %v2419 = vunpack.c.h.b16 %v1137
        %v2420 = vunpack.c.l.b16 %v1138
        %v2421 = vunpack.c.h.b16 %v1138
        %v2422 = vunpack.c.l.b16 %v1139
        %v2423 = vunpack.c.h.b16 %v1139
        %v2424 = vunpack.c.l.b16 %v1140
        %v2425 = vunpack.c.h.b16 %v1140
        %v2426 = vunpack.c.l.b16 %v1141
        %v2427 = vunpack.c.h.b16 %v1141
        %v2428 = vunpack.c.l.b16 %v1142
        %v2429 = vunpack.c.h.b16 %v1142
        %v2430 = vunpack.c.l.b16 %v1143
        %v2431 = vunpack.c.h.b16 %v1143
        %v2432 = vunpack.c.l.b16 %v1144
        %v2433 = vunpack.c.h.b16 %v1144
        %v2434 = vunpack.c.l.b16 %v1145
        %v2435 = vunpack.c.h.b16 %v1145
        %v2436 = vunpack.c.l.b16 %v1146
        %v2437 = vunpack.c.h.b16 %v1146
        %v2438 = vunpack.c.l.b16 %v1147
        %v2439 = vunpack.c.h.b16 %v1147
        %v2440 = vunpack.c.l.b16 %v1148
        %v2441 = vunpack.c.h.b16 %v1148
        %v2442 = vunpack.c.l.b16 %v1149
        %v2443 = vunpack.c.h.b16 %v1149
        %v2444 = vunpack.c.l.b16 %v1150
        %v2445 = vunpack.c.h.b16 %v1150
        %v2446 = vunpack.c.l.b16 %v1151
        %v2447 = vunpack.c.h.b16 %v1151
        %v2448 = vunpack.c.l.b16 %v1152
        %v2449 = vunpack.c.h.b16 %v1152
        %v2450 = vunpack.c.l.b16 %v1153
        %v2451 = vunpack.c.h.b16 %v1153
        %v2452 = vunpack.c.l.b16 %v1154
        %v2453 = vunpack.c.h.b16 %v1154
        %v2454 = vunpack.c.l.b16 %v1155
        %v2455 = vunpack.c.h.b16 %v1155
        %v2456 = vunpack.c.l.b16 %v1156
        %v2457 = vunpack.c.h.b16 %v1156
        %v2458 = vunpack.c.l.b16 %v1157
        %v2459 = vunpack.c.h.b16 %v1157
        %v2460 = vunpack.c.l.b16 %v1158
        %v2461 = vunpack.c.h.b16 %v1158
        %v2462 = vunpack.c.l.b16 %v1159
        %v2463 = vunpack.c.h.b16 %v1159
        %v2464 = vunpack.c.l.b16 %v1160
        %v2465 = vunpack.c.h.b16 %v1160
        %v2466 = vunpack.c.l.b16 %v1161
        %v2467 = vunpack.c.h.b16 %v1161
        %v2468 = vunpack.c.l.b16 %v1162
        %v2469 = vunpack.c.h.b16 %v1162
        %v2470 = vunpack.c.l.b16 %v1163
        %v2471 = vunpack.c.h.b16 %v1163
        %v2472 = vunpack.c.l.b16 %v1164
        %v2473 = vunpack.c.h.b16 %v1164
        %v2474 = vunpack.c.l.b16 %v1165
        %v2475 = vunpack.c.h.b16 %v1165
        %v2476 = vunpack.c.l.b16 %v1166
        %v2477 = vunpack.c.h.b16 %v1166
        %v2478 = vunpack.c.l.b16 %v1167
        %v2479 = vunpack.c.h.b16 %v1167
        %v2480 = vunpack.c.l.b16 %v1168
        %v2481 = vunpack.c.h.b16 %v1168
        %v2482 = vunpack.c.l.b16 %v1169
        %v2483 = vunpack.c.h.b16 %v1169
        %v2484 = vunpack.c.l.b16 %v1170
        %v2485 = vunpack.c.h.b16 %v1170
        %v2486 = vunpack.c.l.b16 %v1171
        %v2487 = vunpack.c.h.b16 %v1171
        %v2488 = vunpack.c.l.b16 %v1172
        %v2489 = vunpack.c.h.b16 %v1172
        %v2490 = vunpack.c.l.b16 %v1173
        %v2491 = vunpack.c.h.b16 %v1173
        %v2492 = vunpack.c.l.b16 %v1174
        %v2493 = vunpack.c.h.b16 %v1174
        %v2494 = vunpack.c.l.b16 %v1175
        %v2495 = vunpack.c.h.b16 %v1175
        %v2496 = vunpack.c.l.b16 %v1176
        %v2497 = vunpack.c.h.b16 %v1176
        %v2498 = vunpack.c.l.b16 %v1177
        %v2499 = vunpack.c.h.b16 %v1177
        %v2500 = vunpack.c.l.b16 %v1178
        %v2501 = vunpack.c.h.b16 %v1178
        %v2502 = vunpack.c.l.b16 %v1179
        %v2503 = vunpack.c.h.b16 %v1179
        %v2504 = vunpack.c.l.b16 %v1180
        %v2505 = vunpack.c.h.b16 %v1180
        %v2506 = vunpack.c.l.b16 %v1181
        %v2507 = vunpack.c.h.b16 %v1181
        %v2508 = vunpack.c.l.b16 %v1182
        %v2509 = vunpack.c.h.b16 %v1182
        %v2510 = vunpack.c.l.b16 %v1183
        %v2511 = vunpack.c.h.b16 %v1183
        %v2512 = vunpack.c.l.b16 %v1184
        %v2513 = vunpack.c.h.b16 %v1184
        %v2514 = vunpack.c.l.b16 %v1185
        %v2515 = vunpack.c.h.b16 %v1185
        %v2516 = vunpack.c.l.b16 %v1186
        %v2517 = vunpack.c.h.b16 %v1186
        %v2518 = vunpack.c.l.b16 %v1187
        %v2519 = vunpack.c.h.b16 %v1187
        %v2520 = vunpack.c.l.b16 %v1188
        %v2521 = vunpack.c.h.b16 %v1188
        %v2522 = vunpack.c.l.b16 %v1189
        %v2523 = vunpack.c.h.b16 %v1189
        %v2524 = vunpack.c.l.b16 %v1190
        %v2525 = vunpack.c.h.b16 %v1190
        %v2526 = vunpack.c.l.b16 %v1191
        %v2527 = vunpack.c.h.b16 %v1191
        %v2528 = vunpack.c.l.b16 %v1192
        %v2529 = vunpack.c.h.b16 %v1192
        %v2530 = vunpack.c.l.b16 %v1193
        %v2531 = vunpack.c.h.b16 %v1193
        %v2532 = vunpack.c.l.b16 %v1194
        %v2533 = vunpack.c.h.b16 %v1194
        %v2534 = vunpack.c.l.b16 %v1195
        %v2535 = vunpack.c.h.b16 %v1195
        %v2536 = vunpack.c.l.b16 %v1196
        %v2537 = vunpack.c.h.b16 %v1196
        %v2538 = vunpack.c.l.b16 %v1197
        %v2539 = vunpack.c.h.b16 %v1197
        %v2540 = vunpack.c.l.b16 %v1198
        %v2541 = vunpack.c.h.b16 %v1198
        %v2542 = vunpack.c.l.b16 %v1199
        %v2543 = vunpack.c.h.b16 %v1199
        %v2544 = vunpack.c.l.b16 %v1200
        %v2545 = vunpack.c.h.b16 %v1200
        %v2546 = vunpack.c.l.b16 %v1201
        %v2547 = vunpack.c.h.b16 %v1201
        %v2548 = vunpack.c.l.b16 %v1202
        %v2549 = vunpack.c.h.b16 %v1202
        %v2550 = vunpack.c.l.b16 %v1203
        %v2551 = vunpack.c.h.b16 %v1203
        %v2552 = vunpack.c.l.b16 %v1204
        %v2553 = vunpack.c.h.b16 %v1204
        %v2554 = vunpack.c.l.b16 %v1205
        %v2555 = vunpack.c.h.b16 %v1205
        %v2556 = vunpack.c.l.b16 %v1206
        %v2557 = vunpack.c.h.b16 %v1206
        %v2558 = vunpack.c.l.b16 %v1207
        %v2559 = vunpack.c.h.b16 %v1207
        %v2560 = vunpack.c.l.b16 %v1208
        %v2561 = vunpack.c.h.b16 %v1208
        %v2562 = vunpack.c.l.b16 %v1209
        %v2563 = vunpack.c.h.b16 %v1209
        %v2564 = vunpack.c.l.b16 %v1210
        %v2565 = vunpack.c.h.b16 %v1210
        %v2566 = vunpack.c.l.b16 %v1211
        %v2567 = vunpack.c.h.b16 %v1211
        %v2568 = vunpack.c.l.b16 %v1212
        %v2569 = vunpack.c.h.b16 %v1212
        %v2570 = vunpack.c.l.b16 %v1213
        %v2571 = vunpack.c.h.b16 %v1213
        %v2572 = vunpack.c.l.b16 %v1214
        %v2573 = vunpack.c.h.b16 %v1214
        %v2574 = vunpack.c.l.b16 %v1215
        %v2575 = vunpack.c.h.b16 %v1215
        %v2576 = vunpack.c.l.b16 %v1216
        %v2577 = vunpack.c.h.b16 %v1216
        %v2578 = vunpack.c.l.b16 %v1217
        %v2579 = vunpack.c.h.b16 %v1217
        %v2580 = vunpack.c.l.b16 %v1218
        %v2581 = vunpack.c.h.b16 %v1218
        %v2582 = vunpack.c.l.b16 %v1219
        %v2583 = vunpack.c.h.b16 %v1219
        %v2584 = vunpack.c.l.b16 %v1220
        %v2585 = vunpack.c.h.b16 %v1220
        %v2586 = vunpack.c.l.b16 %v1221
        %v2587 = vunpack.c.h.b16 %v1221
        %v2588 = vunpack.c.l.b16 %v1222
        %v2589 = vunpack.c.h.b16 %v1222
        %v2590 = vunpack.c.l.b16 %v1223
        %v2591 = vunpack.c.h.b16 %v1223
        %v2592 = vunpack.c.l.b16 %v1224
        %v2593 = vunpack.c.h.b16 %v1224
        %v2594 = vunpack.c.l.b16 %v1225
        %v2595 = vunpack.c.h.b16 %v1225
        %v2596 = vunpack.c.l.b16 %v1226
        %v2597 = vunpack.c.h.b16 %v1226
        %v2598 = vunpack.c.l.b16 %v1227
        %v2599 = vunpack.c.h.b16 %v1227
        %v2600 = vunpack.c.l.b16 %v1228
        %v2601 = vunpack.c.h.b16 %v1228
        %v2602 = vunpack.c.l.b16 %v1229
        %v2603 = vunpack.c.h.b16 %v1229
        %v2604 = vunpack.c.l.b16 %v1230
        %v2605 = vunpack.c.h.b16 %v1230
        %v2606 = vunpack.c.l.b16 %v1231
        %v2607 = vunpack.c.h.b16 %v1231
        %v2608 = vunpack.c.l.b16 %v1232
        %v2609 = vunpack.c.h.b16 %v1232
        %v2610 = vunpack.c.l.b16 %v1233
        %v2611 = vunpack.c.h.b16 %v1233
        %v2612 = vunpack.c.l.b16 %v1234
        %v2613 = vunpack.c.h.b16 %v1234
        %v2614 = vunpack.c.l.b16 %v1235
        %v2615 = vunpack.c.h.b16 %v1235
        %v2616 = vunpack.c.l.b16 %v1236
        %v2617 = vunpack.c.h.b16 %v1236
        %v2618 = vunpack.c.l.b16 %v1237
        %v2619 = vunpack.c.h.b16 %v1237
        %v2620 = vunpack.c.l.b16 %v1238
        %v2621 = vunpack.c.h.b16 %v1238
        %v2622 = vunpack.c.l.b16 %v1239
        %v2623 = vunpack.c.h.b16 %v1239
        %v2624 = vunpack.c.l.b16 %v1240
        %v2625 = vunpack.c.h.b16 %v1240
        %v2626 = vunpack.c.l.b16 %v1241
        %v2627 = vunpack.c.h.b16 %v1241
        %v2628 = vunpack.c.l.b16 %v1242
        %v2629 = vunpack.c.h.b16 %v1242
        %v2630 = vunpack.c.l.b16 %v1243
        %v2631 = vunpack.c.h.b16 %v1243
        %v2632 = vunpack.c.l.b16 %v1244
        %v2633 = vunpack.c.h.b16 %v1244
        %v2634 = vunpack.c.l.b16 %v1245
        %v2635 = vunpack.c.h.b16 %v1245
        %v2636 = vunpack.c.l.b16 %v1246
        %v2637 = vunpack.c.h.b16 %v1246
        %v2638 = vunpack.c.l.b16 %v1247
        %v2639 = vunpack.c.h.b16 %v1247
        %v2640 = vunpack.c.l.b16 %v1248
        %v2641 = vunpack.c.h.b16 %v1248
        %v2642 = vpack.c.b16 %v1754, %v1746
        %v2643 = vpack.c.b16 %v1755, %v1747
        %v2644 = vpack.c.b16 %v1756, %v1748
        %v2645 = vpack.c.b16 %v1757, %v1749
        %v2646 = vpack.c.b16 %v1758, %v1750
        %v2647 = vpack.c.b16 %v1759, %v1751
        %v2648 = vpack.c.b16 %v1760, %v1752
        %v2649 = vpack.c.b16 %v1761, %v1753
        %v2650 = vpack.c.b16 %v1770, %v1762
        %v2651 = vpack.c.b16 %v1771, %v1763
        %v2652 = vpack.c.b16 %v1772, %v1764
        %v2653 = vpack.c.b16 %v1773, %v1765
        %v2654 = vpack.c.b16 %v1774, %v1766
        %v2655 = vpack.c.b16 %v1775, %v1767
        %v2656 = vpack.c.b16 %v1776, %v1768
        %v2657 = vpack.c.b16 %v1777, %v1769
        %v2658 = vpack.c.b16 %v1786, %v1778
        %v2659 = vpack.c.b16 %v1787, %v1779
        %v2660 = vpack.c.b16 %v1788, %v1780
        %v2661 = vpack.c.b16 %v1789, %v1781
        %v2662 = vpack.c.b16 %v1790, %v1782
        %v2663 = vpack.c.b16 %v1791, %v1783
        %v2664 = vpack.c.b16 %v1792, %v1784
        %v2665 = vpack.c.b16 %v1793, %v1785
        %v2666 = vpack.c.b16 %v1802, %v1794
        %v2667 = vpack.c.b16 %v1803, %v1795
        %v2668 = vpack.c.b16 %v1804, %v1796
        %v2669 = vpack.c.b16 %v1805, %v1797
        %v2670 = vpack.c.b16 %v1806, %v1798
        %v2671 = vpack.c.b16 %v1807, %v1799
        %v2672 = vpack.c.b16 %v1808, %v1800
        %v2673 = vpack.c.b16 %v1809, %v1801
        %v2674 = vpack.c.b16 %v1818, %v1810
        %v2675 = vpack.c.b16 %v1819, %v1811
        %v2676 = vpack.c.b16 %v1820, %v1812
        %v2677 = vpack.c.b16 %v1821, %v1813
        %v2678 = vpack.c.b16 %v1822, %v1814
        %v2679 = vpack.c.b16 %v1823, %v1815
        %v2680 = vpack.c.b16 %v1824, %v1816
        %v2681 = vpack.c.b16 %v1825, %v1817
        %v2682 = vpack.c.b16 %v1834, %v1826
        %v2683 = vpack.c.b16 %v1835, %v1827
        %v2684 = vpack.c.b16 %v1836, %v1828
        %v2685 = vpack.c.b16 %v1837, %v1829
        %v2686 = vpack.c.b16 %v1838, %v1830
        %v2687 = vpack.c.b16 %v1839, %v1831
        %v2688 = vpack.c.b16 %v1840, %v1832
        %v2689 = vpack.c.b16 %v1841, %v1833
        %v2690 = vpack.c.b16 %v1850, %v1842
        %v2691 = vpack.c.b16 %v1851, %v1843
        %v2692 = vpack.c.b16 %v1852, %v1844
        %v2693 = vpack.c.b16 %v1853, %v1845
        %v2694 = vpack.c.b16 %v1854, %v1846
        %v2695 = vpack.c.b16 %v1855, %v1847
        %v2696 = vpack.c.b16 %v1856, %v1848
        %v2697 = vpack.c.b16 %v1857, %v1849
        %v2698 = vpack.c.b16 %v1866, %v1858
        %v2699 = vpack.c.b16 %v1867, %v1859
        %v2700 = vpack.c.b16 %v1868, %v1860
        %v2701 = vpack.c.b16 %v1869, %v1861
        %v2702 = vpack.c.b16 %v1870, %v1862
        %v2703 = vpack.c.b16 %v1871, %v1863
        %v2704 = vpack.c.b16 %v1872, %v1864
        %v2705 = vpack.c.b16 %v1873, %v1865
        %v2706 = vpack.c.b16 %v1882, %v1874
        %v2707 = vpack.c.b16 %v1883, %v1875
        %v2708 = vpack.c.b16 %v1884, %v1876
        %v2709 = vpack.c.b16 %v1885, %v1877
        %v2710 = vpack.c.b16 %v1886, %v1878
        %v2711 = vpack.c.b16 %v1887, %v1879
        %v2712 = vpack.c.b16 %v1888, %v1880
        %v2713 = vpack.c.b16 %v1889, %v1881
        %v2714 = vpack.c.b16 %v1898, %v1890
        %v2715 = vpack.c.b16 %v1899, %v1891
        %v2716 = vpack.c.b16 %v1900, %v1892
        %v2717 = vpack.c.b16 %v1901, %v1893
        %v2718 = vpack.c.b16 %v1902, %v1894
        %v2719 = vpack.c.b16 %v1903, %v1895
        %v2720 = vpack.c.b16 %v1904, %v1896
        %v2721 = vpack.c.b16 %v1905, %v1897
        %v2722 = vpack.c.b16 %v1914, %v1906
        %v2723 = vpack.c.b16 %v1915, %v1907
        %v2724 = vpack.c.b16 %v1916, %v1908
        %v2725 = vpack.c.b16 %v1917, %v1909
        %v2726 = vpack.c.b16 %v1918, %v1910
        %v2727 = vpack.c.b16 %v1919, %v1911
        %v2728 = vpack.c.b16 %v1920, %v1912
        %v2729 = vpack.c.b16 %v1921, %v1913
        %v2730 = vpack.c.b16 %v1930, %v1922
        %v2731 = vpack.c.b16 %v1931, %v1923
        %v2732 = vpack.c.b16 %v1932, %v1924
        %v2733 = vpack.c.b16 %v1933, %v1925
        %v2734 = vpack.c.b16 %v1934, %v1926
        %v2735 = vpack.c.b16 %v1935, %v1927
        %v2736 = vpack.c.b16 %v1936, %v1928
        %v2737 = vpack.c.b16 %v1937, %v1929
        %v2738 = vpack.c.b16 %v1946, %v1938
        %v2739 = vpack.c.b16 %v1947, %v1939
        %v2740 = vpack.c.b16 %v1948, %v1940
        %v2741 = vpack.c.b16 %v1949, %v1941
        %v2742 = vpack.c.b16 %v1950, %v1942
        %v2743 = vpack.c.b16 %v1951, %v1943
        %v2744 = vpack.c.b16 %v1952, %v1944
        %v2745 = vpack.c.b16 %v1953, %v1945
        %v2746 = vpack.c.b16 %v1962, %v1954
        %v2747 = vpack.c.b16 %v1963, %v1955
        %v2748 = vpack.c.b16 %v1964, %v1956
        %v2749 = vpack.c.b16 %v1965, %v1957
        %v2750 = vpack.c.b16 %v1966, %v1958
        %v2751 = vpack.c.b16 %v1967, %v1959
        %v2752 = vpack.c.b16 %v1968, %v1960
        %v2753 = vpack.c.b16 %v1969, %v1961
        %v2754 = vpack.c.b16 %v1978, %v1970
        %v2755 = vpack.c.b16 %v1979, %v1971
        %v2756 = vpack.c.b16 %v1980, %v1972
        %v2757 = vpack.c.b16 %v1981, %v1973
        %v2758 = vpack.c.b16 %v1982, %v1974
        %v2759 = vpack.c.b16 %v1983, %v1975
        %v2760 = vpack.c.b16 %v1984, %v1976
        %v2761 = vpack.c.b16 %v1985, %v1977
        %v2762 = vpack.c.b16 %v1994, %v1986
        %v2763 = vpack.c.b16 %v1995, %v1987
        %v2764 = vpack.c.b16 %v1996, %v1988
        %v2765 = vpack.c.b16 %v1997, %v1989
        %v2766 = vpack.c.b16 %v1998, %v1990
        %v2767 = vpack.c.b16 %v1999, %v1991
        %v2768 = vpack.c.b16 %v2000, %v1992
        %v2769 = vpack.c.b16 %v2001, %v1993
        %v2770 = vpack.c.b16 %v2010, %v2002
        %v2771 = vpack.c.b16 %v2011, %v2003
        %v2772 = vpack.c.b16 %v2012, %v2004
        %v2773 = vpack.c.b16 %v2013, %v2005
        %v2774 = vpack.c.b16 %v2014, %v2006
        %v2775 = vpack.c.b16 %v2015, %v2007
        %v2776 = vpack.c.b16 %v2016, %v2008
        %v2777 = vpack.c.b16 %v2017, %v2009
        %v2778 = vpack.c.b16 %v2026, %v2018
        %v2779 = vpack.c.b16 %v2027, %v2019
        %v2780 = vpack.c.b16 %v2028, %v2020
        %v2781 = vpack.c.b16 %v2029, %v2021
        %v2782 = vpack.c.b16 %v2030, %v2022
        %v2783 = vpack.c.b16 %v2031, %v2023
        %v2784 = vpack.c.b16 %v2032, %v2024
        %v2785 = vpack.c.b16 %v2033, %v2025
        %v2786 = vpack.c.b16 %v2042, %v2034
        %v2787 = vpack.c.b16 %v2043, %v2035
        %v2788 = vpack.c.b16 %v2044, %v2036
        %v2789 = vpack.c.b16 %v2045, %v2037
        %v2790 = vpack.c.b16 %v2046, %v2038
        %v2791 = vpack.c.b16 %v2047, %v2039
        %v2792 = vpack.c.b16 %v2048, %v2040
        %v2793 = vpack.c.b16 %v2049, %v2041
        %v2794 = vpack.c.b16 %v2058, %v2050
        %v2795 = vpack.c.b16 %v2059, %v2051
        %v2796 = vpack.c.b16 %v2060, %v2052
        %v2797 = vpack.c.b16 %v2061, %v2053
        %v2798 = vpack.c.b16 %v2062, %v2054
        %v2799 = vpack.c.b16 %v2063, %v2055
        %v2800 = vpack.c.b16 %v2064, %v2056
        %v2801 = vpack.c.b16 %v2065, %v2057
        %v2802 = vpack.c.b16 %v2074, %v2066
        %v2803 = vpack.c.b16 %v2075, %v2067
        %v2804 = vpack.c.b16 %v2076, %v2068
        %v2805 = vpack.c.b16 %v2077, %v2069
        %v2806 = vpack.c.b16 %v2078, %v2070
        %v2807 = vpack.c.b16 %v2079, %v2071
        %v2808 = vpack.c.b16 %v2080, %v2072
        %v2809 = vpack.c.b16 %v2081, %v2073
        %v2810 = vpack.c.b16 %v2090, %v2082
        %v2811 = vpack.c.b16 %v2091, %v2083
        %v2812 = vpack.c.b16 %v2092, %v2084
        %v2813 = vpack.c.b16 %v2093, %v2085
        %v2814 = vpack.c.b16 %v2094, %v2086
        %v2815 = vpack.c.b16 %v2095, %v2087
        %v2816 = vpack.c.b16 %v2096, %v2088
        %v2817 = vpack.c.b16 %v2097, %v2089
        %v2818 = vpack.c.b16 %v2106, %v2098
        %v2819 = vpack.c.b16 %v2107, %v2099
        %v2820 = vpack.c.b16 %v2108, %v2100
        %v2821 = vpack.c.b16 %v2109, %v2101
        %v2822 = vpack.c.b16 %v2110, %v2102
        %v2823 = vpack.c.b16 %v2111, %v2103
        %v2824 = vpack.c.b16 %v2112, %v2104
        %v2825 = vpack.c.b16 %v2113, %v2105
        %v2826 = vpack.c.b16 %v2122, %v2114
        %v2827 = vpack.c.b16 %v2123, %v2115
        %v2828 = vpack.c.b16 %v2124, %v2116
        %v2829 = vpack.c.b16 %v2125, %v2117
        %v2830 = vpack.c.b16 %v2126, %v2118
        %v2831 = vpack.c.b16 %v2127, %v2119
        %v2832 = vpack.c.b16 %v2128, %v2120
        %v2833 = vpack.c.b16 %v2129, %v2121
        %v2834 = vpack.c.b16 %v2138, %v2130
        %v2835 = vpack.c.b16 %v2139, %v2131
        %v2836 = vpack.c.b16 %v2140, %v2132
        %v2837 = vpack.c.b16 %v2141, %v2133
        %v2838 = vpack.c.b16 %v2142, %v2134
        %v2839 = vpack.c.b16 %v2143, %v2135
        %v2840 = vpack.c.b16 %v2144, %v2136
        %v2841 = vpack.c.b16 %v2145, %v2137
        %v2842 = vpack.c.b16 %v2154, %v2146
        %v2843 = vpack.c.b16 %v2155, %v2147
        %v2844 = vpack.c.b16 %v2156, %v2148
        %v2845 = vpack.c.b16 %v2157, %v2149
        %v2846 = vpack.c.b16 %v2158, %v2150
        %v2847 = vpack.c.b16 %v2159, %v2151
        %v2848 = vpack.c.b16 %v2160, %v2152
        %v2849 = vpack.c.b16 %v2161, %v2153
        %v2850 = vpack.c.b16 %v2170, %v2162
        %v2851 = vpack.c.b16 %v2171, %v2163
        %v2852 = vpack.c.b16 %v2172, %v2164
        %v2853 = vpack.c.b16 %v2173, %v2165
        %v2854 = vpack.c.b16 %v2174, %v2166
        %v2855 = vpack.c.b16 %v2175, %v2167
        %v2856 = vpack.c.b16 %v2176, %v2168
        %v2857 = vpack.c.b16 %v2177, %v2169
        %v2858 = vpack.c.b16 %v2186, %v2178
        %v2859 = vpack.c.b16 %v2187, %v2179
        %v2860 = vpack.c.b16 %v2188, %v2180
        %v2861 = vpack.c.b16 %v2189, %v2181
        %v2862 = vpack.c.b16 %v2190, %v2182
        %v2863 = vpack.c.b16 %v2191, %v2183
        %v2864 = vpack.c.b16 %v2192, %v2184
        %v2865 = vpack.c.b16 %v2193, %v2185
        %v2866 = vpack.c.b16 %v2202, %v2194
        %v2867 = vpack.c.b16 %v2203, %v2195
        %v2868 = vpack.c.b16 %v2204, %v2196
        %v2869 = vpack.c.b16 %v2205, %v2197
        %v2870 = vpack.c.b16 %v2206, %v2198
        %v2871 = vpack.c.b16 %v2207, %v2199
        %v2872 = vpack.c.b16 %v2208, %v2200
        %v2873 = vpack.c.b16 %v2209, %v2201
        %v2874 = vpack.c.b16 %v2218, %v2210
        %v2875 = vpack.c.b16 %v2219, %v2211
        %v2876 = vpack.c.b16 %v2220, %v2212
        %v2877 = vpack.c.b16 %v2221, %v2213
        %v2878 = vpack.c.b16 %v2222, %v2214
        %v2879 = vpack.c.b16 %v2223, %v2215
        %v2880 = vpack.c.b16 %v2224, %v2216
        %v2881 = vpack.c.b16 %v2225, %v2217
        %v2882 = vpack.c.b16 %v2234, %v2226
        %v2883 = vpack.c.b16 %v2235, %v2227
        %v2884 = vpack.c.b16 %v2236, %v2228
        %v2885 = vpack.c.b16 %v2237, %v2229
        %v2886 = vpack.c.b16 %v2238, %v2230
        %v2887 = vpack.c.b16 %v2239, %v2231
        %v2888 = vpack.c.b16 %v2240, %v2232
        %v2889 = vpack.c.b16 %v2241, %v2233
        %v2890 = vpack.c.b16 %v2250, %v2242
        %v2891 = vpack.c.b16 %v2251, %v2243
        %v2892 = vpack.c.b16 %v2252, %v2244
        %v2893 = vpack.c.b16 %v2253, %v2245
        %v2894 = vpack.c.b16 %v2254, %v2246
        %v2895 = vpack.c.b16 %v2255, %v2247
        %v2896 = vpack.c.b16 %v2256, %v2248
        %v2897 = vpack.c.b16 %v2257, %v2249
        %v2898 = vpack.c.b16 %v2266, %v2258
        %v2899 = vpack.c.b16 %v2267, %v2259
        %v2900 = vpack.c.b16 %v2268, %v2260
        %v2901 = vpack.c.b16 %v2269, %v2261
        %v2902 = vpack.c.b16 %v2270, %v2262
        %v2903 = vpack.c.b16 %v2271, %v2263
        %v2904 = vpack.c.b16 %v2272, %v2264
        %v2905 = vpack.c.b16 %v2273, %v2265
        %v2906 = vpack.c.b16 %v2282, %v2274
        %v2907 = vpack.c.b16 %v2283, %v2275
        %v2908 = vpack.c.b16 %v2284, %v2276
        %v2909 = vpack.c.b16 %v2285, %v2277
        %v2910 = vpack.c.b16 %v2286, %v2278
        %v2911 = vpack.c.b16 %v2287, %v2279
        %v2912 = vpack.c.b16 %v2288, %v2280
        %v2913 = vpack.c.b16 %v2289, %v2281
        %v2914 = vpack.c.b16 %v2298, %v2290
        %v2915 = vpack.c.b16 %v2299, %v2291
        %v2916 = vpack.c.b16 %v2300, %v2292
        %v2917 = vpack.c.b16 %v2301, %v2293
        %v2918 = vpack.c.b16 %v2302, %v2294
        %v2919 = vpack.c.b16 %v2303, %v2295
        %v2920 = vpack.c.b16 %v2304, %v2296
        %v2921 = vpack.c.b16 %v2305, %v2297
        %v2922 = vpack.c.b16 %v2314, %v2306
        %v2923 = vpack.c.b16 %v2315, %v2307
        %v2924 = vpack.c.b16 %v2316, %v2308
        %v2925 = vpack.c.b16 %v2317, %v2309
        %v2926 = vpack.c.b16 %v2318, %v2310
        %v2927 = vpack.c.b16 %v2319, %v2311
        %v2928 = vpack.c.b16 %v2320, %v2312
        %v2929 = vpack.c.b16 %v2321, %v2313
        %v2930 = vpack.c.b16 %v2330, %v2322
        %v2931 = vpack.c.b16 %v2331, %v2323
        %v2932 = vpack.c.b16 %v2332, %v2324
        %v2933 = vpack.c.b16 %v2333, %v2325
        %v2934 = vpack.c.b16 %v2334, %v2326
        %v2935 = vpack.c.b16 %v2335, %v2327
        %v2936 = vpack.c.b16 %v2336, %v2328
        %v2937 = vpack.c.b16 %v2337, %v2329
        %v2938 = vpack.c.b16 %v2346, %v2338
        %v2939 = vpack.c.b16 %v2347, %v2339
        %v2940 = vpack.c.b16 %v2348, %v2340
        %v2941 = vpack.c.b16 %v2349, %v2341
        %v2942 = vpack.c.b16 %v2350, %v2342
        %v2943 = vpack.c.b16 %v2351, %v2343
        %v2944 = vpack.c.b16 %v2352, %v2344
        %v2945 = vpack.c.b16 %v2353, %v2345
        %v2946 = vpack.c.b16 %v2362, %v2354
        %v2947 = vpack.c.b16 %v2363, %v2355
        %v2948 = vpack.c.b16 %v2364, %v2356
        %v2949 = vpack.c.b16 %v2365, %v2357
        %v2950 = vpack.c.b16 %v2366, %v2358
        %v2951 = vpack.c.b16 %v2367, %v2359
        %v2952 = vpack.c.b16 %v2368, %v2360
        %v2953 = vpack.c.b16 %v2369, %v2361
        %v2954 = vpack.c.b16 %v2378, %v2370
        %v2955 = vpack.c.b16 %v2379, %v2371
        %v2956 = vpack.c.b16 %v2380, %v2372
        %v2957 = vpack.c.b16 %v2381, %v2373
        %v2958 = vpack.c.b16 %v2382, %v2374
        %v2959 = vpack.c.b16 %v2383, %v2375
        %v2960 = vpack.c.b16 %v2384, %v2376
        %v2961 = vpack.c.b16 %v2385, %v2377
        %v2962 = vpack.c.b16 %v2394, %v2386
        %v2963 = vpack.c.b16 %v2395, %v2387
        %v2964 = vpack.c.b16 %v2396, %v2388
        %v2965 = vpack.c.b16 %v2397, %v2389
        %v2966 = vpack.c.b16 %v2398, %v2390
        %v2967 = vpack.c.b16 %v2399, %v2391
        %v2968 = vpack.c.b16 %v2400, %v2392
        %v2969 = vpack.c.b16 %v2401, %v2393
        %v2970 = vpack.c.b16 %v2410, %v2402
        %v2971 = vpack.c.b16 %v2411, %v2403
        %v2972 = vpack.c.b16 %v2412, %v2404
        %v2973 = vpack.c.b16 %v2413, %v2405
        %v2974 = vpack.c.b16 %v2414, %v2406
        %v2975 = vpack.c.b16 %v2415, %v2407
        %v2976 = vpack.c.b16 %v2416, %v2408
        %v2977 = vpack.c.b16 %v2417, %v2409
        %v2978 = vpack.c.b16 %v2426, %v2418
        %v2979 = vpack.c.b16 %v2427, %v2419
        %v2980 = vpack.c.b16 %v2428, %v2420
        %v2981 = vpack.c.b16 %v2429, %v2421
        %v2982 = vpack.c.b16 %v2430, %v2422
        %v2983 = vpack.c.b16 %v2431, %v2423
        %v2984 = vpack.c.b16 %v2432, %v2424
        %v2985 = vpack.c.b16 %v2433, %v2425
        %v2986 = vpack.c.b16 %v2442, %v2434
        %v2987 = vpack.c.b16 %v2443, %v2435
        %v2988 = vpack.c.b16 %v2444, %v2436
        %v2989 = vpack.c.b16 %v2445, %v2437
        %v2990 = vpack.c.b16 %v2446, %v2438
        %v2991 = vpack.c.b16 %v2447, %v2439
        %v2992 = vpack.c.b16 %v2448, %v2440
        %v2993 = vpack.c.b16 %v2449, %v2441
        %v2994 = vpack.c.b16 %v2458, %v2450
        %v2995 = vpack.c.b16 %v2459, %v2451
        %v2996 = vpack.c.b16 %v2460, %v2452
        %v2997 = vpack.c.b16 %v2461, %v2453
        %v2998 = vpack.c.b16 %v2462, %v2454
        %v2999 = vpack.c.b16 %v2463, %v2455
        %v3000 = vpack.c.b16 %v2464, %v2456
        %v3001 = vpack.c.b16 %v2465, %v2457
        %v3002 = vpack.c.b16 %v2474, %v2466
        %v3003 = vpack.c.b16 %v2475, %v2467
        %v3004 = vpack.c.b16 %v2476, %v2468
        %v3005 = vpack.c.b16 %v2477, %v2469
        %v3006 = vpack.c.b16 %v2478, %v2470
        %v3007 = vpack.c.b16 %v2479, %v2471
        %v3008 = vpack.c.b16 %v2480, %v2472
        %v3009 = vpack.c.b16 %v2481, %v2473
        %v3010 = vpack.c.b16 %v2490, %v2482
        %v3011 = vpack.c.b16 %v2491, %v2483
        %v3012 = vpack.c.b16 %v2492, %v2484
        %v3013 = vpack.c.b16 %v2493, %v2485
        %v3014 = vpack.c.b16 %v2494, %v2486
        %v3015 = vpack.c.b16 %v2495, %v2487
        %v3016 = vpack.c.b16 %v2496, %v2488
        %v3017 = vpack.c.b16 %v2497, %v2489
        %v3018 = vpack.c.b16 %v2506, %v2498
        %v3019 = vpack.c.b16 %v2507, %v2499
        %v3020 = vpack.c.b16 %v2508, %v2500
        %v3021 = vpack.c.b16 %v2509, %v2501
        %v3022 = vpack.c.b16 %v2510, %v2502
        %v3023 = vpack.c.b16 %v2511, %v2503
        %v3024 = vpack.c.b16 %v2512, %v2504
        %v3025 = vpack.c.b16 %v2513, %v2505
        %v3026 = vpack.c.b16 %v2522, %v2514
        %v3027 = vpack.c.b16 %v2523, %v2515
        %v3028 = vpack.c.b16 %v2524, %v2516
        %v3029 = vpack.c.b16 %v2525, %v2517
        %v3030 = vpack.c.b16 %v2526, %v2518
        %v3031 = vpack.c.b16 %v2527, %v2519
        %v3032 = vpack.c.b16 %v2528, %v2520
        %v3033 = vpack.c.b16 %v2529, %v2521
        %v3034 = vpack.c.b16 %v2538, %v2530
        %v3035 = vpack.c.b16 %v2539, %v2531
        %v3036 = vpack.c.b16 %v2540, %v2532
        %v3037 = vpack.c.b16 %v2541, %v2533
        %v3038 = vpack.c.b16 %v2542, %v2534
        %v3039 = vpack.c.b16 %v2543, %v2535
        %v3040 = vpack.c.b16 %v2544, %v2536
        %v3041 = vpack.c.b16 %v2545, %v2537
        %v3042 = vpack.c.b16 %v2554, %v2546
        %v3043 = vpack.c.b16 %v2555, %v2547
        %v3044 = vpack.c.b16 %v2556, %v2548
        %v3045 = vpack.c.b16 %v2557, %v2549
        %v3046 = vpack.c.b16 %v2558, %v2550
        %v3047 = vpack.c.b16 %v2559, %v2551
        %v3048 = vpack.c.b16 %v2560, %v2552
        %v3049 = vpack.c.b16 %v2561, %v2553
        %v3050 = vpack.c.b16 %v2570, %v2562
        %v3051 = vpack.c.b16 %v2571, %v2563
        %v3052 = vpack.c.b16 %v2572, %v2564
        %v3053 = vpack.c.b16 %v2573, %v2565
        %v3054 = vpack.c.b16 %v2574, %v2566
        %v3055 = vpack.c.b16 %v2575, %v2567
        %v3056 = vpack.c.b16 %v2576, %v2568
        %v3057 = vpack.c.b16 %v2577, %v2569
        %v3058 = vpack.c.b16 %v2586, %v2578
        %v3059 = vpack.c.b16 %v2587, %v2579
        %v3060 = vpack.c.b16 %v2588, %v2580
        %v3061 = vpack.c.b16 %v2589, %v2581
        %v3062 = vpack.c.b16 %v2590, %v2582
        %v3063 = vpack.c.b16 %v2591, %v2583
        %v3064 = vpack.c.b16 %v2592, %v2584
        %v3065 = vpack.c.b16 %v2593, %v2585
        %v3066 = vpack.c.b16 %v2602, %v2594
        %v3067 = vpack.c.b16 %v2603, %v2595
        %v3068 = vpack.c.b16 %v2604, %v2596
        %v3069 = vpack.c.b16 %v2605, %v2597
        %v3070 = vpack.c.b16 %v2606, %v2598
        %v3071 = vpack.c.b16 %v2607, %v2599
        %v3072 = vpack.c.b16 %v2608, %v2600
        %v3073 = vpack.c.b16 %v2609, %v2601
        %v3074 = vpack.c.b16 %v2618, %v2610
        %v3075 = vpack.c.b16 %v2619, %v2611
        %v3076 = vpack.c.b16 %v2620, %v2612
        %v3077 = vpack.c.b16 %v2621, %v2613
        %v3078 = vpack.c.b16 %v2622, %v2614
        %v3079 = vpack.c.b16 %v2623, %v2615
        %v3080 = vpack.c.b16 %v2624, %v2616
        %v3081 = vpack.c.b16 %v2625, %v2617
        %v3082 = vpack.c.b16 %v2634, %v2626
        %v3083 = vpack.c.b16 %v2635, %v2627
        %v3084 = vpack.c.b16 %v2636, %v2628
        %v3085 = vpack.c.b16 %v2637, %v2629
        %v3086 = vpack.c.b16 %v2638, %v2630
        %v3087 = vpack.c.b16 %v2639, %v2631
        %v3088 = vpack.c.b16 %v2640, %v2632
        %v3089 = vpack.c.b16 %v2641, %v2633
        %3538 = vmatprep.subr.bf16.mxu0 %v2643
        %3539 = vmatpush1.bf16.msra.mxu0 %v2642
        %3540 = vmatprep.subr.bf16.mxu0 %v2651
        %3541 = vmatpush1.bf16.msra.mxu0 %v2650
        %3542 = vmatprep.subr.bf16.mxu0 %v2659
        %3543 = vmatpush1.bf16.msra.mxu0 %v2658
        %3544 = vmatprep.subr.bf16.mxu0 %v2667
        %3545 = vmatpush1.bf16.msra.mxu0 %v2666
        %3546 = vmatprep.subr.bf16.mxu0 %v2675
        %3547 = vmatpush1.bf16.msra.mxu0 %v2674
        %3548 = vmatprep.subr.bf16.mxu0 %v2683
        %3549 = vmatpush1.bf16.msra.mxu0 %v2682
        %3550 = vmatprep.subr.bf16.mxu0 %v2691
        %3551 = vmatpush1.bf16.msra.mxu0 %v2690
        %3552 = vmatprep.subr.bf16.mxu0 %v2699
        %3553 = vmatpush1.bf16.msra.mxu0 %v2698
        %3554 = vmatprep.subr.bf16.mxu0 %v2707
        %3555 = vmatpush1.bf16.msra.mxu0 %v2706
        %3556 = vmatprep.subr.bf16.mxu0 %v2715
        %3557 = vmatpush1.bf16.msra.mxu0 %v2714
        %3558 = vmatprep.subr.bf16.mxu0 %v2723
        %3559 = vmatpush1.bf16.msra.mxu0 %v2722
        %3560 = vmatprep.subr.bf16.mxu0 %v2731
        %3561 = vmatpush1.bf16.msra.mxu0 %v2730
        %3562 = vmatprep.subr.bf16.mxu0 %v2739
        %3563 = vmatpush1.bf16.msra.mxu0 %v2738
        %3564 = vmatprep.subr.bf16.mxu0 %v2747
        %3565 = vmatpush1.bf16.msra.mxu0 %v2746
        %3566 = vmatprep.subr.bf16.mxu0 %v2755
        %3567 = vmatpush1.bf16.msra.mxu0 %v2754
        %3568 = vmatprep.subr.bf16.mxu0 %v2763
        %3569 = vmatpush1.bf16.msra.mxu0 %v2762
        %3570 = vmatprep.mubr.bf16.mxu0 %v1251
        %3571 = vmatmul.mubr.bf16.gmra.mrb[0].mxu0 %v1250
        %v3572 = vpop.f32.mrb[0].mxu0
        %v3573 = vadd.f32 %v1261, %v3572
        %v3574 = vpop.f32.mrb[0].mxu0
        %v3575 = vadd.f32 %v1265, %v3574
        %v3576 = vpop.f32.mrb[0].mxu0
        %v3577 = vadd.f32 %v1261, %v3576
        %v3578 = vpop.f32.mrb[0].mxu0
        %v3579 = vadd.f32 %v1265, %v3578
        %3580 = vdwg.mxu0
        %3581 = vmatprep.subr.bf16.mxu0 %v2771
        %3582 = vmatpush1.bf16.msra.mxu0 %v2770
        %3583 = vmatprep.subr.bf16.mxu0 %v2779
        %3584 = vmatpush1.bf16.msra.mxu0 %v2778
        %3585 = vmatprep.subr.bf16.mxu0 %v2787
        %3586 = vmatpush1.bf16.msra.mxu0 %v2786
        %3587 = vmatprep.subr.bf16.mxu0 %v2795
        %3588 = vmatpush1.bf16.msra.mxu0 %v2794
        %3589 = vmatprep.subr.bf16.mxu0 %v2803
        %3590 = vmatpush1.bf16.msra.mxu0 %v2802
        %3591 = vmatprep.subr.bf16.mxu0 %v2811
        %3592 = vmatpush1.bf16.msra.mxu0 %v2810
        %3593 = vmatprep.subr.bf16.mxu0 %v2819
        %3594 = vmatpush1.bf16.msra.mxu0 %v2818
        %3595 = vmatprep.subr.bf16.mxu0 %v2827
        %3596 = vmatpush1.bf16.msra.mxu0 %v2826
        %3597 = vmatprep.subr.bf16.mxu0 %v2835
        %3598 = vmatpush1.bf16.msra.mxu0 %v2834
        %3599 = vmatprep.subr.bf16.mxu0 %v2843
        %3600 = vmatpush1.bf16.msra.mxu0 %v2842
        %3601 = vmatprep.subr.bf16.mxu0 %v2851
        %3602 = vmatpush1.bf16.msra.mxu0 %v2850
        %3603 = vmatprep.subr.bf16.mxu0 %v2859
        %3604 = vmatpush1.bf16.msra.mxu0 %v2858
        %3605 = vmatprep.subr.bf16.mxu0 %v2867
        %3606 = vmatpush1.bf16.msra.mxu0 %v2866
        %3607 = vmatprep.subr.bf16.mxu0 %v2875
        %3608 = vmatpush1.bf16.msra.mxu0 %v2874
        %3609 = vmatprep.subr.bf16.mxu0 %v2883
        %3610 = vmatpush1.bf16.msra.mxu0 %v2882
        %3611 = vmatprep.subr.bf16.mxu0 %v2891
        %3612 = vmatpush1.bf16.msra.mxu0 %v2890
        %3613 = vmatprep.mubr.bf16.mxu0 %v1253
        %3614 = vmatmul.mubr.bf16.gmra.mrb[0].mxu0 %v1252
        %v3615 = vpop.f32.mrb[0].mxu0
        %v3616 = vadd.f32 %v3573, %v3615
        %v3617 = vpop.f32.mrb[0].mxu0
        %v3618 = vadd.f32 %v3575, %v3617
        %v3619 = vpop.f32.mrb[0].mxu0
        %v3620 = vadd.f32 %v3577, %v3619
        %v3621 = vpop.f32.mrb[0].mxu0
        %v3622 = vadd.f32 %v3579, %v3621
        %3623 = vdwg.mxu0
        %3624 = vmatprep.subr.bf16.mxu0 %v2899
        %3625 = vmatpush1.bf16.msra.mxu0 %v2898
        %3626 = vmatprep.subr.bf16.mxu0 %v2907
        %3627 = vmatpush1.bf16.msra.mxu0 %v2906
        %3628 = vmatprep.subr.bf16.mxu0 %v2915
        %3629 = vmatpush1.bf16.msra.mxu0 %v2914
        %3630 = vmatprep.subr.bf16.mxu0 %v2923
        %3631 = vmatpush1.bf16.msra.mxu0 %v2922
        %3632 = vmatprep.subr.bf16.mxu0 %v2931
        %3633 = vmatpush1.bf16.msra.mxu0 %v2930
        %3634 = vmatprep.subr.bf16.mxu0 %v2939
        %3635 = vmatpush1.bf16.msra.mxu0 %v2938
        %3636 = vmatprep.subr.bf16.mxu0 %v2947
        %3637 = vmatpush1.bf16.msra.mxu0 %v2946
        %3638 = vmatprep.subr.bf16.mxu0 %v2955
        %3639 = vmatpush1.bf16.msra.mxu0 %v2954
        %3640 = vmatprep.subr.bf16.mxu0 %v2963
        %3641 = vmatpush1.bf16.msra.mxu0 %v2962
        %3642 = vmatprep.subr.bf16.mxu0 %v2971
        %3643 = vmatpush1.bf16.msra.mxu0 %v2970
        %3644 = vmatprep.subr.bf16.mxu0 %v2979
        %3645 = vmatpush1.bf16.msra.mxu0 %v2978
        %3646 = vmatprep.subr.bf16.mxu0 %v2987
        %3647 = vmatpush1.bf16.msra.mxu0 %v2986
        %3648 = vmatprep.subr.bf16.mxu0 %v2995
        %3649 = vmatpush1.bf16.msra.mxu0 %v2994
        %3650 = vmatprep.subr.bf16.mxu0 %v3003
        %3651 = vmatpush1.bf16.msra.mxu0 %v3002
        %3652 = vmatprep.subr.bf16.mxu0 %v3011
        %3653 = vmatpush1.bf16.msra.mxu0 %v3010
        %3654 = vmatprep.subr.bf16.mxu0 %v3019
        %3655 = vmatpush1.bf16.msra.mxu0 %v3018
        %3656 = vmatprep.mubr.bf16.mxu0 %v1255
        %3657 = vmatmul.mubr.bf16.gmra.mrb[0].mxu0 %v1254
        %v3658 = vpop.f32.mrb[0].mxu0
        %v3659 = vadd.f32 %v3616, %v3658
        %v3660 = vpop.f32.mrb[0].mxu0
        %v3661 = vadd.f32 %v3618, %v3660
        %v3662 = vpop.f32.mrb[0].mxu0
        %v3663 = vadd.f32 %v3620, %v3662
        %v3664 = vpop.f32.mrb[0].mxu0
        %v3665 = vadd.f32 %v3622, %v3664
        %3666 = vdwg.mxu0
        %3667 = vmatprep.subr.bf16.mxu0 %v3027
        %3668 = vmatpush1.bf16.msra.mxu0 %v3026
        %3669 = vmatprep.subr.bf16.mxu0 %v3035
        %3670 = vmatpush1.bf16.msra.mxu0 %v3034
        %3671 = vmatprep.subr.bf16.mxu0 %v3043
        %3672 = vmatpush1.bf16.msra.mxu0 %v3042
        %3673 = vmatprep.subr.bf16.mxu0 %v3051
        %3674 = vmatpush1.bf16.msra.mxu0 %v3050
        %3675 = vmatprep.subr.bf16.mxu0 %v3059
        %3676 = vmatpush1.bf16.msra.mxu0 %v3058
        %3677 = vmatprep.subr.bf16.mxu0 %v3067
        %3678 = vmatpush1.bf16.msra.mxu0 %v3066
        %3679 = vmatprep.subr.bf16.mxu0 %v3075
        %3680 = vmatpush1.bf16.msra.mxu0 %v3074
        %3681 = vmatprep.subr.bf16.mxu0 %v3083
        %3682 = vmatpush1.bf16.msra.mxu0 %v3082
        %3683 = vmatprep.subr.bf16.mxu0 0
        %3684 = vmatpush1.bf16.msra.mxu0 0
        %3685 = vmatprep.subr.bf16.mxu0 0
        %3686 = vmatpush1.bf16.msra.mxu0 0
        %3687 = vmatprep.subr.bf16.mxu0 0
        %3688 = vmatpush1.bf16.msra.mxu0 0
        %3689 = vmatprep.subr.bf16.mxu0 0
        %3690 = vmatpush1.bf16.msra.mxu0 0
        %3691 = vmatprep.subr.bf16.mxu0 0
        %3692 = vmatpush1.bf16.msra.mxu0 0
        %3693 = vmatprep.subr.bf16.mxu0 0
        %3694 = vmatpush1.bf16.msra.mxu0 0
        %3695 = vmatprep.subr.bf16.mxu0 0
        %3696 = vmatpush1.bf16.msra.mxu0 0
        %3697 = vmatprep.subr.bf16.mxu0 0
        %3698 = vmatpush1.bf16.msra.mxu0 0
        %3699 = vmatprep.mubr.bf16.mxu0 0
        %3700 = vmatmul.mubr.bf16.gmra.mrb[0].mxu0 %v1256
        %v3701 = vpop.f32.mrb[0].mxu0
        %v3702 = vadd.f32 %v3659, %v3701
        %v3703 = vpop.f32.mrb[0].mxu0
        %v3704 = vadd.f32 %v3661, %v3703
        %v3705 = vpop.f32.mrb[0].mxu0
        %v3706 = vadd.f32 %v3663, %v3705
        %v3707 = vpop.f32.mrb[0].mxu0
        %v3708 = vadd.f32 %v3665, %v3707
        %3709 = vdwg.mxu0
        %3710 = vmatprep.subr.bf16.mxu0 %v2645
        %3711 = vmatpush1.bf16.msra.mxu0 %v2644
        %3712 = vmatprep.subr.bf16.mxu0 %v2653
        %3713 = vmatpush1.bf16.msra.mxu0 %v2652
        %3714 = vmatprep.subr.bf16.mxu0 %v2661
        %3715 = vmatpush1.bf16.msra.mxu0 %v2660
        %3716 = vmatprep.subr.bf16.mxu0 %v2669
        %3717 = vmatpush1.bf16.msra.mxu0 %v2668
        %3718 = vmatprep.subr.bf16.mxu0 %v2677
        %3719 = vmatpush1.bf16.msra.mxu0 %v2676
        %3720 = vmatprep.subr.bf16.mxu0 %v2685
        %3721 = vmatpush1.bf16.msra.mxu0 %v2684
        %3722 = vmatprep.subr.bf16.mxu0 %v2693
        %3723 = vmatpush1.bf16.msra.mxu0 %v2692
        %3724 = vmatprep.subr.bf16.mxu0 %v2701
        %3725 = vmatpush1.bf16.msra.mxu0 %v2700
        %3726 = vmatprep.subr.bf16.mxu0 %v2709
        %3727 = vmatpush1.bf16.msra.mxu0 %v2708
        %3728 = vmatprep.subr.bf16.mxu0 %v2717
        %3729 = vmatpush1.bf16.msra.mxu0 %v2716
        %3730 = vmatprep.subr.bf16.mxu0 %v2725
        %3731 = vmatpush1.bf16.msra.mxu0 %v2724
        %3732 = vmatprep.subr.bf16.mxu0 %v2733
        %3733 = vmatpush1.bf16.msra.mxu0 %v2732
        %3734 = vmatprep.subr.bf16.mxu0 %v2741
        %3735 = vmatpush1.bf16.msra.mxu0 %v2740
        %3736 = vmatprep.subr.bf16.mxu0 %v2749
        %3737 = vmatpush1.bf16.msra.mxu0 %v2748
        %3738 = vmatprep.subr.bf16.mxu0 %v2757
        %3739 = vmatpush1.bf16.msra.mxu0 %v2756
        %3740 = vmatprep.subr.bf16.mxu0 %v2765
        %3741 = vmatpush1.bf16.msra.mxu0 %v2764
        %3742 = vmatprep.mubr.bf16.mxu0 %v1251
        %3743 = vmatmul.mubr.bf16.gmra.mrb[0].mxu0 %v1250
        %v3744 = vpop.f32.mrb[0].mxu0
        %v3745 = vadd.f32 %v1269, %v3744
        %v3746 = vpop.f32.mrb[0].mxu0
        %v3747 = vadd.f32 %v1273, %v3746
        %v3748 = vpop.f32.mrb[0].mxu0
        %v3749 = vadd.f32 %v1269, %v3748
        %v3750 = vpop.f32.mrb[0].mxu0
        %v3751 = vadd.f32 %v1273, %v3750
        %3752 = vdwg.mxu0
        %3753 = vmatprep.subr.bf16.mxu0 %v2773
        %3754 = vmatpush1.bf16.msra.mxu0 %v2772
        %3755 = vmatprep.subr.bf16.mxu0 %v2781
        %3756 = vmatpush1.bf16.msra.mxu0 %v2780
        %3757 = vmatprep.subr.bf16.mxu0 %v2789
        %3758 = vmatpush1.bf16.msra.mxu0 %v2788
        %3759 = vmatprep.subr.bf16.mxu0 %v2797
        %3760 = vmatpush1.bf16.msra.mxu0 %v2796
        %3761 = vmatprep.subr.bf16.mxu0 %v2805
        %3762 = vmatpush1.bf16.msra.mxu0 %v2804
        %3763 = vmatprep.subr.bf16.mxu0 %v2813
        %3764 = vmatpush1.bf16.msra.mxu0 %v2812
        %3765 = vmatprep.subr.bf16.mxu0 %v2821
        %3766 = vmatpush1.bf16.msra.mxu0 %v2820
        %3767 = vmatprep.subr.bf16.mxu0 %v2829
        %3768 = vmatpush1.bf16.msra.mxu0 %v2828
        %3769 = vmatprep.subr.bf16.mxu0 %v2837
        %3770 = vmatpush1.bf16.msra.mxu0 %v2836
        %3771 = vmatprep.subr.bf16.mxu0 %v2845
        %3772 = vmatpush1.bf16.msra.mxu0 %v2844
        %3773 = vmatprep.subr.bf16.mxu0 %v2853
        %3774 = vmatpush1.bf16.msra.mxu0 %v2852
        %3775 = vmatprep.subr.bf16.mxu0 %v2861
        %3776 = vmatpush1.bf16.msra.mxu0 %v2860
        %3777 = vmatprep.subr.bf16.mxu0 %v2869
        %3778 = vmatpush1.bf16.msra.mxu0 %v2868
        %3779 = vmatprep.subr.bf16.mxu0 %v2877
        %3780 = vmatpush1.bf16.msra.mxu0 %v2876
        %3781 = vmatprep.subr.bf16.mxu0 %v2885
        %3782 = vmatpush1.bf16.msra.mxu0 %v2884
        %3783 = vmatprep.subr.bf16.mxu0 %v2893
        %3784 = vmatpush1.bf16.msra.mxu0 %v2892
        %3785 = vmatprep.mubr.bf16.mxu0 %v1253
        %3786 = vmatmul.mubr.bf16.gmra.mrb[0].mxu0 %v1252
        %v3787 = vpop.f32.mrb[0].mxu0
        %v3788 = vadd.f32 %v3745, %v3787
        %v3789 = vpop.f32.mrb[0].mxu0
        %v3790 = vadd.f32 %v3747, %v3789
        %v3791 = vpop.f32.mrb[0].mxu0
        %v3792 = vadd.f32 %v3749, %v3791
        %v3793 = vpop.f32.mrb[0].mxu0
        %v3794 = vadd.f32 %v3751, %v3793
        %3795 = vdwg.mxu0
        %3796 = vmatprep.subr.bf16.mxu0 %v2901
        %3797 = vmatpush1.bf16.msra.mxu0 %v2900
        %3798 = vmatprep.subr.bf16.mxu0 %v2909
        %3799 = vmatpush1.bf16.msra.mxu0 %v2908
        %3800 = vmatprep.subr.bf16.mxu0 %v2917
        %3801 = vmatpush1.bf16.msra.mxu0 %v2916
        %3802 = vmatprep.subr.bf16.mxu0 %v2925
        %3803 = vmatpush1.bf16.msra.mxu0 %v2924
        %3804 = vmatprep.subr.bf16.mxu0 %v2933
        %3805 = vmatpush1.bf16.msra.mxu0 %v2932
        %3806 = vmatprep.subr.bf16.mxu0 %v2941
        %3807 = vmatpush1.bf16.msra.mxu0 %v2940
        %3808 = vmatprep.subr.bf16.mxu0 %v2949
        %3809 = vmatpush1.bf16.msra.mxu0 %v2948
        %3810 = vmatprep.subr.bf16.mxu0 %v2957
        %3811 = vmatpush1.bf16.msra.mxu0 %v2956
        %3812 = vmatprep.subr.bf16.mxu0 %v2965
        %3813 = vmatpush1.bf16.msra.mxu0 %v2964
        %3814 = vmatprep.subr.bf16.mxu0 %v2973
        %3815 = vmatpush1.bf16.msra.mxu0 %v2972
        %3816 = vmatprep.subr.bf16.mxu0 %v2981
        %3817 = vmatpush1.bf16.msra.mxu0 %v2980
        %3818 = vmatprep.subr.bf16.mxu0 %v2989
        %3819 = vmatpush1.bf16.msra.mxu0 %v2988
        %3820 = vmatprep.subr.bf16.mxu0 %v2997
        %3821 = vmatpush1.bf16.msra.mxu0 %v2996
        %3822 = vmatprep.subr.bf16.mxu0 %v3005
        %3823 = vmatpush1.bf16.msra.mxu0 %v3004
        %3824 = vmatprep.subr.bf16.mxu0 %v3013
        %3825 = vmatpush1.bf16.msra.mxu0 %v3012
        %3826 = vmatprep.subr.bf16.mxu0 %v3021
        %3827 = vmatpush1.bf16.msra.mxu0 %v3020
        %3828 = vmatprep.mubr.bf16.mxu0 %v1255
        %3829 = vmatmul.mubr.bf16.gmra.mrb[0].mxu0 %v1254
        %v3830 = vpop.f32.mrb[0].mxu0
        %v3831 = vadd.f32 %v3788, %v3830
        %v3832 = vpop.f32.mrb[0].mxu0
        %v3833 = vadd.f32 %v3790, %v3832
        %v3834 = vpop.f32.mrb[0].mxu0
        %v3835 = vadd.f32 %v3792, %v3834
        %v3836 = vpop.f32.mrb[0].mxu0
        %v3837 = vadd.f32 %v3794, %v3836
        %3838 = vdwg.mxu0
        %3839 = vmatprep.subr.bf16.mxu0 %v3029
        %3840 = vmatpush1.bf16.msra.mxu0 %v3028
        %3841 = vmatprep.subr.bf16.mxu0 %v3037
        %3842 = vmatpush1.bf16.msra.mxu0 %v3036
        %3843 = vmatprep.subr.bf16.mxu0 %v3045
        %3844 = vmatpush1.bf16.msra.mxu0 %v3044
        %3845 = vmatprep.subr.bf16.mxu0 %v3053
        %3846 = vmatpush1.bf16.msra.mxu0 %v3052
        %3847 = vmatprep.subr.bf16.mxu0 %v3061
        %3848 = vmatpush1.bf16.msra.mxu0 %v3060
        %3849 = vmatprep.subr.bf16.mxu0 %v3069
        %3850 = vmatpush1.bf16.msra.mxu0 %v3068
        %3851 = vmatprep.subr.bf16.mxu0 %v3077
        %3852 = vmatpush1.bf16.msra.mxu0 %v3076
        %3853 = vmatprep.subr.bf16.mxu0 %v3085
        %3854 = vmatpush1.bf16.msra.mxu0 %v3084
        %3855 = vmatprep.subr.bf16.mxu0 0
        %3856 = vmatpush1.bf16.msra.mxu0 0
        %3857 = vmatprep.subr.bf16.mxu0 0
        %3858 = vmatpush1.bf16.msra.mxu0 0
        %3859 = vmatprep.subr.bf16.mxu0 0
        %3860 = vmatpush1.bf16.msra.mxu0 0
        %3861 = vmatprep.subr.bf16.mxu0 0
        %3862 = vmatpush1.bf16.msra.mxu0 0
        %3863 = vmatprep.subr.bf16.mxu0 0
        %3864 = vmatpush1.bf16.msra.mxu0 0
        %3865 = vmatprep.subr.bf16.mxu0 0
        %3866 = vmatpush1.bf16.msra.mxu0 0
        %3867 = vmatprep.subr.bf16.mxu0 0
        %3868 = vmatpush1.bf16.msra.mxu0 0
        %3869 = vmatprep.subr.bf16.mxu0 0
        %3870 = vmatpush1.bf16.msra.mxu0 0
        %3871 = vmatprep.mubr.bf16.mxu0 0
        %3872 = vmatmul.mubr.bf16.gmra.mrb[0].mxu0 %v1256
        %v3873 = vpop.f32.mrb[0].mxu0
        %v3874 = vadd.f32 %v3831, %v3873
        %v3875 = vpop.f32.mrb[0].mxu0
        %v3876 = vadd.f32 %v3833, %v3875
        %v3877 = vpop.f32.mrb[0].mxu0
        %v3878 = vadd.f32 %v3835, %v3877
        %v3879 = vpop.f32.mrb[0].mxu0
        %v3880 = vadd.f32 %v3837, %v3879
        %3881 = vdwg.mxu0
        %3882 = vmatprep.subr.bf16.mxu0 %v2647
        %3883 = vmatpush1.bf16.msra.mxu0 %v2646
        %3884 = vmatprep.subr.bf16.mxu0 %v2655
        %3885 = vmatpush1.bf16.msra.mxu0 %v2654
        %3886 = vmatprep.subr.bf16.mxu0 %v2663
        %3887 = vmatpush1.bf16.msra.mxu0 %v2662
        %3888 = vmatprep.subr.bf16.mxu0 %v2671
        %3889 = vmatpush1.bf16.msra.mxu0 %v2670
        %3890 = vmatprep.subr.bf16.mxu0 %v2679
        %3891 = vmatpush1.bf16.msra.mxu0 %v2678
        %3892 = vmatprep.subr.bf16.mxu0 %v2687
        %3893 = vmatpush1.bf16.msra.mxu0 %v2686
        %3894 = vmatprep.subr.bf16.mxu0 %v2695
        %3895 = vmatpush1.bf16.msra.mxu0 %v2694
        %3896 = vmatprep.subr.bf16.mxu0 %v2703
        %3897 = vmatpush1.bf16.msra.mxu0 %v2702
        %3898 = vmatprep.subr.bf16.mxu0 %v2711
        %3899 = vmatpush1.bf16.msra.mxu0 %v2710
        %3900 = vmatprep.subr.bf16.mxu0 %v2719
        %3901 = vmatpush1.bf16.msra.mxu0 %v2718
        %3902 = vmatprep.subr.bf16.mxu0 %v2727
        %3903 = vmatpush1.bf16.msra.mxu0 %v2726
        %3904 = vmatprep.subr.bf16.mxu0 %v2735
        %3905 = vmatpush1.bf16.msra.mxu0 %v2734
        %3906 = vmatprep.subr.bf16.mxu0 %v2743
        %3907 = vmatpush1.bf16.msra.mxu0 %v2742
        %3908 = vmatprep.subr.bf16.mxu0 %v2751
        %3909 = vmatpush1.bf16.msra.mxu0 %v2750
        %3910 = vmatprep.subr.bf16.mxu0 %v2759
        %3911 = vmatpush1.bf16.msra.mxu0 %v2758
        %3912 = vmatprep.subr.bf16.mxu0 %v2767
        %3913 = vmatpush1.bf16.msra.mxu0 %v2766
        %3914 = vmatprep.mubr.bf16.mxu0 %v1251
        %3915 = vmatmul.mubr.bf16.gmra.mrb[0].mxu0 %v1250
        %v3916 = vpop.f32.mrb[0].mxu0
        %v3917 = vadd.f32 %v1277, %v3916
        %v3918 = vpop.f32.mrb[0].mxu0
        %v3919 = vadd.f32 %v1281, %v3918
        %v3920 = vpop.f32.mrb[0].mxu0
        %v3921 = vadd.f32 %v1277, %v3920
        %v3922 = vpop.f32.mrb[0].mxu0
        %v3923 = vadd.f32 %v1281, %v3922
        %3924 = vdwg.mxu0
        %3925 = vmatprep.subr.bf16.mxu0 %v2775
        %3926 = vmatpush1.bf16.msra.mxu0 %v2774
        %3927 = vmatprep.subr.bf16.mxu0 %v2783
        %3928 = vmatpush1.bf16.msra.mxu0 %v2782
        %3929 = vmatprep.subr.bf16.mxu0 %v2791
        %3930 = vmatpush1.bf16.msra.mxu0 %v2790
        %3931 = vmatprep.subr.bf16.mxu0 %v2799
        %3932 = vmatpush1.bf16.msra.mxu0 %v2798
        %3933 = vmatprep.subr.bf16.mxu0 %v2807
        %3934 = vmatpush1.bf16.msra.mxu0 %v2806
        %3935 = vmatprep.subr.bf16.mxu0 %v2815
        %3936 = vmatpush1.bf16.msra.mxu0 %v2814
        %3937 = vmatprep.subr.bf16.mxu0 %v2823
        %3938 = vmatpush1.bf16.msra.mxu0 %v2822
        %3939 = vmatprep.subr.bf16.mxu0 %v2831
        %3940 = vmatpush1.bf16.msra.mxu0 %v2830
        %3941 = vmatprep.subr.bf16.mxu0 %v2839
        %3942 = vmatpush1.bf16.msra.mxu0 %v2838
        %3943 = vmatprep.subr.bf16.mxu0 %v2847
        %3944 = vmatpush1.bf16.msra.mxu0 %v2846
        %3945 = vmatprep.subr.bf16.mxu0 %v2855
        %3946 = vmatpush1.bf16.msra.mxu0 %v2854
        %3947 = vmatprep.subr.bf16.mxu0 %v2863
        %3948 = vmatpush1.bf16.msra.mxu0 %v2862
        %3949 = vmatprep.subr.bf16.mxu0 %v2871
        %3950 = vmatpush1.bf16.msra.mxu0 %v2870
        %3951 = vmatprep.subr.bf16.mxu0 %v2879
        %3952 = vmatpush1.bf16.msra.mxu0 %v2878
        %3953 = vmatprep.subr.bf16.mxu0 %v2887
        %3954 = vmatpush1.bf16.msra.mxu0 %v2886
        %3955 = vmatprep.subr.bf16.mxu0 %v2895
        %3956 = vmatpush1.bf16.msra.mxu0 %v2894
        %3957 = vmatprep.mubr.bf16.mxu0 %v1253
        %3958 = vmatmul.mubr.bf16.gmra.mrb[0].mxu0 %v1252
        %v3959 = vpop.f32.mrb[0].mxu0
        %v3960 = vadd.f32 %v3917, %v3959
        %v3961 = vpop.f32.mrb[0].mxu0
        %v3962 = vadd.f32 %v3919, %v3961
        %v3963 = vpop.f32.mrb[0].mxu0
        %v3964 = vadd.f32 %v3921, %v3963
        %v3965 = vpop.f32.mrb[0].mxu0
        %v3966 = vadd.f32 %v3923, %v3965
        %3967 = vdwg.mxu0
        %3968 = vmatprep.subr.bf16.mxu0 %v2903
        %3969 = vmatpush1.bf16.msra.mxu0 %v2902
        %3970 = vmatprep.subr.bf16.mxu0 %v2911
        %3971 = vmatpush1.bf16.msra.mxu0 %v2910
        %3972 = vmatprep.subr.bf16.mxu0 %v2919
        %3973 = vmatpush1.bf16.msra.mxu0 %v2918
        %3974 = vmatprep.subr.bf16.mxu0 %v2927
        %3975 = vmatpush1.bf16.msra.mxu0 %v2926
        %3976 = vmatprep.subr.bf16.mxu0 %v2935
        %3977 = vmatpush1.bf16.msra.mxu0 %v2934
        %3978 = vmatprep.subr.bf16.mxu0 %v2943
        %3979 = vmatpush1.bf16.msra.mxu0 %v2942
        %3980 = vmatprep.subr.bf16.mxu0 %v2951
        %3981 = vmatpush1.bf16.msra.mxu0 %v2950
        %3982 = vmatprep.subr.bf16.mxu0 %v2959
        %3983 = vmatpush1.bf16.msra.mxu0 %v2958
        %3984 = vmatprep.subr.bf16.mxu0 %v2967
        %3985 = vmatpush1.bf16.msra.mxu0 %v2966
        %3986 = vmatprep.subr.bf16.mxu0 %v2975
        %3987 = vmatpush1.bf16.msra.mxu0 %v2974
        %3988 = vmatprep.subr.bf16.mxu0 %v2983
        %3989 = vmatpush1.bf16.msra.mxu0 %v2982
        %3990 = vmatprep.subr.bf16.mxu0 %v2991
        %3991 = vmatpush1.bf16.msra.mxu0 %v2990
        %3992 = vmatprep.subr.bf16.mxu0 %v2999
        %3993 = vmatpush1.bf16.msra.mxu0 %v2998
        %3994 = vmatprep.subr.bf16.mxu0 %v3007
        %3995 = vmatpush1.bf16.msra.mxu0 %v3006
        %3996 = vmatprep.subr.bf16.mxu0 %v3015
        %3997 = vmatpush1.bf16.msra.mxu0 %v3014
        %3998 = vmatprep.subr.bf16.mxu0 %v3023
        %3999 = vmatpush1.bf16.msra.mxu0 %v3022
        %4000 = vmatprep.mubr.bf16.mxu0 %v1255
        %4001 = vmatmul.mubr.bf16.gmra.mrb[0].mxu0 %v1254
        %v4002 = vpop.f32.mrb[0].mxu0
        %v4003 = vadd.f32 %v3960, %v4002
        %v4004 = vpop.f32.mrb[0].mxu0
        %v4005 = vadd.f32 %v3962, %v4004
        %v4006 = vpop.f32.mrb[0].mxu0
        %v4007 = vadd.f32 %v3964, %v4006
        %v4008 = vpop.f32.mrb[0].mxu0
        %v4009 = vadd.f32 %v3966, %v4008
        %4010 = vdwg.mxu0
        %4011 = vmatprep.subr.bf16.mxu0 %v3031
        %4012 = vmatpush1.bf16.msra.mxu0 %v3030
        %4013 = vmatprep.subr.bf16.mxu0 %v3039
        %4014 = vmatpush1.bf16.msra.mxu0 %v3038
        %4015 = vmatprep.subr.bf16.mxu0 %v3047
        %4016 = vmatpush1.bf16.msra.mxu0 %v3046
        %4017 = vmatprep.subr.bf16.mxu0 %v3055
        %4018 = vmatpush1.bf16.msra.mxu0 %v3054
        %4019 = vmatprep.subr.bf16.mxu0 %v3063
        %4020 = vmatpush1.bf16.msra.mxu0 %v3062
        %4021 = vmatprep.subr.bf16.mxu0 %v3071
        %4022 = vmatpush1.bf16.msra.mxu0 %v3070
        %4023 = vmatprep.subr.bf16.mxu0 %v3079
        %4024 = vmatpush1.bf16.msra.mxu0 %v3078
        %4025 = vmatprep.subr.bf16.mxu0 %v3087
        %4026 = vmatpush1.bf16.msra.mxu0 %v3086
        %4027 = vmatprep.subr.bf16.mxu0 0
        %4028 = vmatpush1.bf16.msra.mxu0 0
        %4029 = vmatprep.subr.bf16.mxu0 0
        %4030 = vmatpush1.bf16.msra.mxu0 0
        %4031 = vmatprep.subr.bf16.mxu0 0
        %4032 = vmatpush1.bf16.msra.mxu0 0
        %4033 = vmatprep.subr.bf16.mxu0 0
        %4034 = vmatpush1.bf16.msra.mxu0 0
        %4035 = vmatprep.subr.bf16.mxu0 0
        %4036 = vmatpush1.bf16.msra.mxu0 0
        %4037 = vmatprep.subr.bf16.mxu0 0
        %4038 = vmatpush1.bf16.msra.mxu0 0
        %4039 = vmatprep.subr.bf16.mxu0 0
        %4040 = vmatpush1.bf16.msra.mxu0 0
        %4041 = vmatprep.subr.bf16.mxu0 0
        %4042 = vmatpush1.bf16.msra.mxu0 0
        %4043 = vmatprep.mubr.bf16.mxu0 0
        %4044 = vmatmul.mubr.bf16.gmra.mrb[0].mxu0 %v1256
        %v4045 = vpop.f32.mrb[0].mxu0
        %v4046 = vadd.f32 %v4003, %v4045
        %v4047 = vpop.f32.mrb[0].mxu0
        %v4048 = vadd.f32 %v4005, %v4047
        %v4049 = vpop.f32.mrb[0].mxu0
        %v4050 = vadd.f32 %v4007, %v4049
        %v4051 = vpop.f32.mrb[0].mxu0
        %v4052 = vadd.f32 %v4009, %v4051
        %4053 = vdwg.mxu0
        %4054 = vmatprep.subr.bf16.mxu0 %v2649
        %4055 = vmatpush1.bf16.msra.mxu0 %v2648
        %4056 = vmatprep.subr.bf16.mxu0 %v2657
        %4057 = vmatpush1.bf16.msra.mxu0 %v2656
        %4058 = vmatprep.subr.bf16.mxu0 %v2665
        %4059 = vmatpush1.bf16.msra.mxu0 %v2664
        %4060 = vmatprep.subr.bf16.mxu0 %v2673
        %4061 = vmatpush1.bf16.msra.mxu0 %v2672
        %4062 = vmatprep.subr.bf16.mxu0 %v2681
        %4063 = vmatpush1.bf16.msra.mxu0 %v2680
        %4064 = vmatprep.subr.bf16.mxu0 %v2689
        %4065 = vmatpush1.bf16.msra.mxu0 %v2688
        %4066 = vmatprep.subr.bf16.mxu0 %v2697
        %4067 = vmatpush1.bf16.msra.mxu0 %v2696
        %4068 = vmatprep.subr.bf16.mxu0 %v2705
        %4069 = vmatpush1.bf16.msra.mxu0 %v2704
        %4070 = vmatprep.subr.bf16.mxu0 %v2713
        %4071 = vmatpush1.bf16.msra.mxu0 %v2712
        %4072 = vmatprep.subr.bf16.mxu0 %v2721
        %4073 = vmatpush1.bf16.msra.mxu0 %v2720
        %4074 = vmatprep.subr.bf16.mxu0 %v2729
        %4075 = vmatpush1.bf16.msra.mxu0 %v2728
        %4076 = vmatprep.subr.bf16.mxu0 %v2737
        %4077 = vmatpush1.bf16.msra.mxu0 %v2736
        %4078 = vmatprep.subr.bf16.mxu0 %v2745
        %4079 = vmatpush1.bf16.msra.mxu0 %v2744
        %4080 = vmatprep.subr.bf16.mxu0 %v2753
        %4081 = vmatpush1.bf16.msra.mxu0 %v2752
        %4082 = vmatprep.subr.bf16.mxu0 %v2761
        %4083 = vmatpush1.bf16.msra.mxu0 %v2760
        %4084 = vmatprep.subr.bf16.mxu0 %v2769
        %4085 = vmatpush1.bf16.msra.mxu0 %v2768
        %4086 = vmatprep.mubr.bf16.mxu0 %v1251
        %4087 = vmatmul.mubr.bf16.gmra.mrb[0].mxu0 %v1250
        %v4088 = vpop.f32.mrb[0].mxu0
        %v4089 = vadd.f32 %v1285, %v4088
        %v4090 = vpop.f32.mrb[0].mxu0
        %v4091 = vadd.f32 %v1289, %v4090
        %v4092 = vpop.f32.mrb[0].mxu0
        %v4093 = vadd.f32 %v1285, %v4092
        %v4094 = vpop.f32.mrb[0].mxu0
        %v4095 = vadd.f32 %v1289, %v4094
        %4096 = vdwg.mxu0
        %4097 = vmatprep.subr.bf16.mxu0 %v2777
        %4098 = vmatpush1.bf16.msra.mxu0 %v2776
        %4099 = vmatprep.subr.bf16.mxu0 %v2785
        %4100 = vmatpush1.bf16.msra.mxu0 %v2784
        %4101 = vmatprep.subr.bf16.mxu0 %v2793
        %4102 = vmatpush1.bf16.msra.mxu0 %v2792
        %4103 = vmatprep.subr.bf16.mxu0 %v2801
        %4104 = vmatpush1.bf16.msra.mxu0 %v2800
        %4105 = vmatprep.subr.bf16.mxu0 %v2809
        %4106 = vmatpush1.bf16.msra.mxu0 %v2808
        %4107 = vmatprep.subr.bf16.mxu0 %v2817
        %4108 = vmatpush1.bf16.msra.mxu0 %v2816
        %4109 = vmatprep.subr.bf16.mxu0 %v2825
        %4110 = vmatpush1.bf16.msra.mxu0 %v2824
        %4111 = vmatprep.subr.bf16.mxu0 %v2833
        %4112 = vmatpush1.bf16.msra.mxu0 %v2832
        %4113 = vmatprep.subr.bf16.mxu0 %v2841
        %4114 = vmatpush1.bf16.msra.mxu0 %v2840
        %4115 = vmatprep.subr.bf16.mxu0 %v2849
        %4116 = vmatpush1.bf16.msra.mxu0 %v2848
        %4117 = vmatprep.subr.bf16.mxu0 %v2857
        %4118 = vmatpush1.bf16.msra.mxu0 %v2856
        %4119 = vmatprep.subr.bf16.mxu0 %v2865
        %4120 = vmatpush1.bf16.msra.mxu0 %v2864
        %4121 = vmatprep.subr.bf16.mxu0 %v2873
        %4122 = vmatpush1.bf16.msra.mxu0 %v2872
        %4123 = vmatprep.subr.bf16.mxu0 %v2881
        %4124 = vmatpush1.bf16.msra.mxu0 %v2880
        %4125 = vmatprep.subr.bf16.mxu0 %v2889
        %4126 = vmatpush1.bf16.msra.mxu0 %v2888
        %4127 = vmatprep.subr.bf16.mxu0 %v2897
        %4128 = vmatpush1.bf16.msra.mxu0 %v2896
        %4129 = vmatprep.mubr.bf16.mxu0 %v1253
        %4130 = vmatmul.mubr.bf16.gmra.mrb[0].mxu0 %v1252
        %v4131 = vpop.f32.mrb[0].mxu0
        %v4132 = vadd.f32 %v4089, %v4131
        %v4133 = vpop.f32.mrb[0].mxu0
        %v4134 = vadd.f32 %v4091, %v4133
        %v4135 = vpop.f32.mrb[0].mxu0
        %v4136 = vadd.f32 %v4093, %v4135
        %v4137 = vpop.f32.mrb[0].mxu0
        %v4138 = vadd.f32 %v4095, %v4137
        %4139 = vdwg.mxu0
        %4140 = vmatprep.subr.bf16.mxu0 %v2905
        %4141 = vmatpush1.bf16.msra.mxu0 %v2904
        %4142 = vmatprep.subr.bf16.mxu0 %v2913
        %4143 = vmatpush1.bf16.msra.mxu0 %v2912
        %4144 = vmatprep.subr.bf16.mxu0 %v2921
        %4145 = vmatpush1.bf16.msra.mxu0 %v2920
        %4146 = vmatprep.subr.bf16.mxu0 %v2929
        %4147 = vmatpush1.bf16.msra.mxu0 %v2928
        %4148 = vmatprep.subr.bf16.mxu0 %v2937
        %4149 = vmatpush1.bf16.msra.mxu0 %v2936
        %4150 = vmatprep.subr.bf16.mxu0 %v2945
        %4151 = vmatpush1.bf16.msra.mxu0 %v2944
        %4152 = vmatprep.subr.bf16.mxu0 %v2953
        %4153 = vmatpush1.bf16.msra.mxu0 %v2952
        %4154 = vmatprep.subr.bf16.mxu0 %v2961
        %4155 = vmatpush1.bf16.msra.mxu0 %v2960
        %4156 = vmatprep.subr.bf16.mxu0 %v2969
        %4157 = vmatpush1.bf16.msra.mxu0 %v2968
        %4158 = vmatprep.subr.bf16.mxu0 %v2977
        %4159 = vmatpush1.bf16.msra.mxu0 %v2976
        %4160 = vmatprep.subr.bf16.mxu0 %v2985
        %4161 = vmatpush1.bf16.msra.mxu0 %v2984
        %4162 = vmatprep.subr.bf16.mxu0 %v2993
        %4163 = vmatpush1.bf16.msra.mxu0 %v2992
        %4164 = vmatprep.subr.bf16.mxu0 %v3001
        %4165 = vmatpush1.bf16.msra.mxu0 %v3000
        %4166 = vmatprep.subr.bf16.mxu0 %v3009
        %4167 = vmatpush1.bf16.msra.mxu0 %v3008
        %4168 = vmatprep.subr.bf16.mxu0 %v3017
        %4169 = vmatpush1.bf16.msra.mxu0 %v3016
        %4170 = vmatprep.subr.bf16.mxu0 %v3025
        %4171 = vmatpush1.bf16.msra.mxu0 %v3024
        %4172 = vmatprep.mubr.bf16.mxu0 %v1255
        %4173 = vmatmul.mubr.bf16.gmra.mrb[0].mxu0 %v1254
        %v4174 = vpop.f32.mrb[0].mxu0
        %v4175 = vadd.f32 %v4132, %v4174
        %v4176 = vpop.f32.mrb[0].mxu0
        %v4177 = vadd.f32 %v4134, %v4176
        %v4178 = vpop.f32.mrb[0].mxu0
        %v4179 = vadd.f32 %v4136, %v4178
        %v4180 = vpop.f32.mrb[0].mxu0
        %v4181 = vadd.f32 %v4138, %v4180
        %4182 = vdwg.mxu0
        %4183 = vmatprep.subr.bf16.mxu0 %v3033
        %4184 = vmatpush1.bf16.msra.mxu0 %v3032
        %4185 = vmatprep.subr.bf16.mxu0 %v3041
        %4186 = vmatpush1.bf16.msra.mxu0 %v3040
        %4187 = vmatprep.subr.bf16.mxu0 %v3049
        %4188 = vmatpush1.bf16.msra.mxu0 %v3048
        %4189 = vmatprep.subr.bf16.mxu0 %v3057
        %4190 = vmatpush1.bf16.msra.mxu0 %v3056
        %4191 = vmatprep.subr.bf16.mxu0 %v3065
        %4192 = vmatpush1.bf16.msra.mxu0 %v3064
        %4193 = vmatprep.subr.bf16.mxu0 %v3073
        %4194 = vmatpush1.bf16.msra.mxu0 %v3072
        %4195 = vmatprep.subr.bf16.mxu0 %v3081
        %4196 = vmatpush1.bf16.msra.mxu0 %v3080
        %4197 = vmatprep.subr.bf16.mxu0 %v3089
        %4198 = vmatpush1.bf16.msra.mxu0 %v3088
        %4199 = vmatprep.subr.bf16.mxu0 0
        %4200 = vmatpush1.bf16.msra.mxu0 0
        %4201 = vmatprep.subr.bf16.mxu0 0
        %4202 = vmatpush1.bf16.msra.mxu0 0
        %4203 = vmatprep.subr.bf16.mxu0 0
        %4204 = vmatpush1.bf16.msra.mxu0 0
        %4205 = vmatprep.subr.bf16.mxu0 0
        %4206 = vmatpush1.bf16.msra.mxu0 0
        %4207 = vmatprep.subr.bf16.mxu0 0
        %4208 = vmatpush1.bf16.msra.mxu0 0
        %4209 = vmatprep.subr.bf16.mxu0 0
        %4210 = vmatpush1.bf16.msra.mxu0 0
        %4211 = vmatprep.subr.bf16.mxu0 0
        %4212 = vmatpush1.bf16.msra.mxu0 0
        %4213 = vmatprep.subr.bf16.mxu0 0
        %4214 = vmatpush1.bf16.msra.mxu0 0
        %4215 = vmatprep.mubr.bf16.mxu0 0
        %4216 = vmatmul.mubr.bf16.gmra.mrb[0].mxu0 %v1256
        %v4217 = vpop.f32.mrb[0].mxu0
        %v4218 = vadd.f32 %v4175, %v4217
        %v4219 = vpop.f32.mrb[0].mxu0
        %v4220 = vadd.f32 %v4177, %v4219
        %v4221 = vpop.f32.mrb[0].mxu0
        %v4222 = vadd.f32 %v4179, %v4221
        %v4223 = vpop.f32.mrb[0].mxu0
        %v4224 = vadd.f32 %v4181, %v4223
        %4225 = vdwg.mxu0
        %vm4226 = vcmp.gt.f32.partialorder %v3702, 0.0
        %vm4227 = vcmp.gt.f32.partialorder %v3704, 0.0
        %vm4228 = vcmp.gt.f32.partialorder %v3874, 0.0
        %vm4229 = vcmp.gt.f32.partialorder %v3876, 0.0
        %vm4230 = vcmp.gt.f32.partialorder %v4046, 0.0
        %vm4231 = vcmp.gt.f32.partialorder %v4048, 0.0
        %vm4232 = vcmp.gt.f32.partialorder %v4218, 0.0
        %vm4233 = vcmp.gt.f32.partialorder %v4220, 0.0
        %vm4234 = vcmp.gt.f32.partialorder %v3706, 0.0
        %vm4235 = vcmp.gt.f32.partialorder %v3708, 0.0
        %vm4236 = vcmp.gt.f32.partialorder %v3878, 0.0
        %vm4237 = vcmp.gt.f32.partialorder %v3880, 0.0
        %vm4238 = vcmp.gt.f32.partialorder %v4050, 0.0
        %vm4239 = vcmp.gt.f32.partialorder %v4052, 0.0
        %vm4240 = vcmp.gt.f32.partialorder %v4222, 0.0
        %vm4241 = vcmp.gt.f32.partialorder %v4224, 0.0
        %v4242 = vmul.f32 %v3702, 0.01
        %v4243 = vmul.f32 %v3704, 0.01
        %v4244 = vmul.f32 %v3874, 0.01
        %v4245 = vmul.f32 %v3876, 0.01
        %v4246 = vmul.f32 %v4046, 0.01
        %v4247 = vmul.f32 %v4048, 0.01
        %v4248 = vmul.f32 %v4218, 0.01
        %v4249 = vmul.f32 %v4220, 0.01
        %v4250 = vmul.f32 %v3706, 0.01
        %v4251 = vmul.f32 %v3708, 0.01
        %v4252 = vmul.f32 %v3878, 0.01
        %v4253 = vmul.f32 %v3880, 0.01
        %v4254 = vmul.f32 %v4050, 0.01
        %v4255 = vmul.f32 %v4052, 0.01
        %v4256 = vmul.f32 %v4222, 0.01
        %v4257 = vmul.f32 %v4224, 0.01
        %v4258 = vsel %vm4226, %v3702, %v4242
        %v4259 = vsel %vm4227, %v3704, %v4243
        %v4260 = vsel %vm4228, %v3874, %v4244
        %v4261 = vsel %vm4229, %v3876, %v4245
        %v4262 = vsel %vm4230, %v4046, %v4246
        %v4263 = vsel %vm4231, %v4048, %v4247
        %v4264 = vsel %vm4232, %v4218, %v4248
        %v4265 = vsel %vm4233, %v4220, %v4249
        %v4266 = vsel %vm4234, %v3706, %v4250
        %v4267 = vsel %vm4235, %v3708, %v4251
        %v4268 = vsel %vm4236, %v3878, %v4252
        %v4269 = vsel %vm4237, %v3880, %v4253
        %v4270 = vsel %vm4238, %v4050, %v4254
        %v4271 = vsel %vm4239, %v4052, %v4255
        %v4272 = vsel %vm4240, %v4222, %v4256
        %v4273 = vsel %vm4241, %v4224, %v4257
        %v4274 = vld [vmem:[#allocation8] sm:$0xff]
        %v4275 = vld [vmem:[#allocation8 + $0x8] sm:$0xff]
        %v4276 = vld [vmem:[#allocation8 + $0x10] sm:$0xff]
        %v4277 = vld [vmem:[#allocation8 + $0x18] sm:$0xff]
        %v4278 = vld [vmem:[#allocation8 + $0x20] sm:$0xff]
        %v4279 = vld [vmem:[#allocation8 + $0x28] sm:$0xff]
        %v4280 = vld [vmem:[#allocation8 + $0x30] sm:$0xff]
        %v4281 = vld [vmem:[#allocation8 + $0x38] sm:$0xff]
        %v4282 = vld [vmem:[#allocation8 + $0x40] sm:$0xff]
        %v4283 = vld [vmem:[#allocation8 + $0x48] sm:$0xff]
        %v4284 = vld [vmem:[#allocation8 + $0x50] sm:$0xff]
        %v4285 = vld [vmem:[#allocation8 + $0x58] sm:$0xff]
        %v4286 = vld [vmem:[#allocation8 + $0x60] sm:$0xff]
        %v4287 = vld [vmem:[#allocation8 + $0x68] sm:$0xff]
        %v4288 = vld [vmem:[#allocation8 + $0x70] sm:$0xff]
        %v4289 = vld [vmem:[#allocation8 + $0x78] sm:$0xff]
        %v4290 = vld [vmem:[#allocation8 + $0x80] sm:$0xff]
        %v4291 = vld [vmem:[#allocation8 + $0x88] sm:$0xff]
        %v4292 = vld [vmem:[#allocation8 + $0x90] sm:$0xff]
        %v4293 = vld [vmem:[#allocation8 + $0x98] sm:$0xff]
        %v4294 = vld [vmem:[#allocation8 + $0xa0] sm:$0xff]
        %v4295 = vld [vmem:[#allocation8 + $0xa8] sm:$0xff]
        %v4296 = vld [vmem:[#allocation8 + $0xb0] sm:$0xff]
        %v4297 = vld [vmem:[#allocation8 + $0xb8] sm:$0xff]
        %v4298 = vld [vmem:[#allocation8 + $0xc0] sm:$0xff]
        %v4299 = vld [vmem:[#allocation8 + $0xc8] sm:$0xff]
        %v4300 = vld [vmem:[#allocation8 + $0xd0] sm:$0xff]
        %v4301 = vld [vmem:[#allocation8 + $0xd8] sm:$0xff]
        %v4302 = vld [vmem:[#allocation8 + $0xe0] sm:$0xff]
        %v4303 = vld [vmem:[#allocation8 + $0xe8] sm:$0xff]
        %v4304 = vld [vmem:[#allocation8 + $0xf0] sm:$0xff]
        %v4305 = vld [vmem:[#allocation8 + $0xf8] sm:$0xff]
        %v4306 = vld [vmem:[#allocation8 + $0x100] sm:$0xff]
        %v4307 = vld [vmem:[#allocation8 + $0x108] sm:$0xff]
        %v4308 = vld [vmem:[#allocation8 + $0x110] sm:$0xff]
        %v4309 = vld [vmem:[#allocation8 + $0x118] sm:$0xff]
        %v4310 = vld [vmem:[#allocation8 + $0x120] sm:$0xff]
        %v4311 = vld [vmem:[#allocation8 + $0x128] sm:$0xff]
        %v4312 = vld [vmem:[#allocation8 + $0x130] sm:$0xff]
        %v4313 = vld [vmem:[#allocation8 + $0x138] sm:$0xff]
        %v4314 = vld [vmem:[#allocation8 + $0x140] sm:$0xff]
        %v4315 = vld [vmem:[#allocation8 + $0x148] sm:$0xff]
        %v4316 = vld [vmem:[#allocation8 + $0x150] sm:$0xff]
        %v4317 = vld [vmem:[#allocation8 + $0x158] sm:$0xff]
        %v4318 = vld [vmem:[#allocation8 + $0x160] sm:$0xff]
        %v4319 = vld [vmem:[#allocation8 + $0x168] sm:$0xff]
        %v4320 = vld [vmem:[#allocation8 + $0x170] sm:$0xff]
        %v4321 = vld [vmem:[#allocation8 + $0x178] sm:$0xff]
        %v4322 = vld [vmem:[#allocation8 + $0x180] sm:$0xff]
        %v4323 = vld [vmem:[#allocation8 + $0x188] sm:$0xff]
        %v4324 = vld [vmem:[#allocation8 + $0x190] sm:$0xff]
        %v4325 = vld [vmem:[#allocation8 + $0x198] sm:$0xff]
        %v4326 = vld [vmem:[#allocation8 + $0x1a0] sm:$0xff]
        %v4327 = vld [vmem:[#allocation8 + $0x1a8] sm:$0xff]
        %v4328 = vld [vmem:[#allocation8 + $0x1b0] sm:$0xff]
        %v4329 = vld [vmem:[#allocation8 + $0x1b8] sm:$0xff]
        %v4330 = vld [vmem:[#allocation8 + $0x1c0] sm:$0xff]
        %v4331 = vld [vmem:[#allocation8 + $0x1c8] sm:$0xff]
        %v4332 = vld [vmem:[#allocation8 + $0x1d0] sm:$0xff]
        %v4333 = vld [vmem:[#allocation8 + $0x1d8] sm:$0xff]
        %v4334 = vld [vmem:[#allocation8 + $0x1e0] sm:$0xff]
        %v4335 = vld [vmem:[#allocation8 + $0x1e8] sm:$0xff]
        %v4336 = vld [vmem:[#allocation8 + $0x1f0] sm:$0xff]
        %v4337 = vld [vmem:[#allocation8 + $0x1f8] sm:$0xff]
        %v4338 = vld [vmem:[#allocation8 + $0x200] sm:$0xff]
        %v4339 = vld [vmem:[#allocation8 + $0x208] sm:$0xff]
        %v4340 = vld [vmem:[#allocation8 + $0x210] sm:$0xff]
        %v4341 = vld [vmem:[#allocation8 + $0x218] sm:$0xff]
        %v4342 = vld [vmem:[#allocation8 + $0x220] sm:$0xff]
        %v4343 = vld [vmem:[#allocation8 + $0x228] sm:$0xff]
        %v4344 = vld [vmem:[#allocation8 + $0x230] sm:$0xff]
        %v4345 = vld [vmem:[#allocation8 + $0x238] sm:$0xff]
        %v4346 = vld [vmem:[#allocation8 + $0x240] sm:$0xff]
        %v4347 = vld [vmem:[#allocation8 + $0x248] sm:$0xff]
        %v4348 = vld [vmem:[#allocation8 + $0x250] sm:$0xff]
        %v4349 = vld [vmem:[#allocation8 + $0x258] sm:$0xff]
        %v4350 = vld [vmem:[#allocation8 + $0x260] sm:$0xff]
        %v4351 = vld [vmem:[#allocation8 + $0x268] sm:$0xff]
        %v4352 = vld [vmem:[#allocation8 + $0x270] sm:$0xff]
        %v4353 = vld [vmem:[#allocation8 + $0x278] sm:$0xff]
        %v4354 = vld [vmem:[#allocation8 + $0x280] sm:$0xff]
        %v4355 = vld [vmem:[#allocation8 + $0x288] sm:$0xff]
        %v4356 = vld [vmem:[#allocation8 + $0x290] sm:$0xff]
        %v4357 = vld [vmem:[#allocation8 + $0x298] sm:$0xff]
        %v4358 = vld [vmem:[#allocation8 + $0x2a0] sm:$0xff]
        %v4359 = vld [vmem:[#allocation8 + $0x2a8] sm:$0xff]
        %v4360 = vld [vmem:[#allocation8 + $0x2b0] sm:$0xff]
        %v4361 = vld [vmem:[#allocation8 + $0x2b8] sm:$0xff]
        %v4362 = vld [vmem:[#allocation8 + $0x2c0] sm:$0xff]
        %v4363 = vld [vmem:[#allocation8 + $0x2c8] sm:$0xff]
        %v4364 = vld [vmem:[#allocation8 + $0x2d0] sm:$0xff]
        %v4365 = vld [vmem:[#allocation8 + $0x2d8] sm:$0xff]
        %v4366 = vld [vmem:[#allocation8 + $0x2e0] sm:$0xff]
        %v4367 = vld [vmem:[#allocation8 + $0x2e8] sm:$0xff]
        %v4368 = vld [vmem:[#allocation8 + $0x2f0] sm:$0xff]
        %v4369 = vld [vmem:[#allocation8 + $0x2f8] sm:$0xff]
        %v4370 = vld [vmem:[#allocation8 + $0x300] sm:$0xff]
        %v4371 = vld [vmem:[#allocation8 + $0x308] sm:$0xff]
        %v4372 = vld [vmem:[#allocation8 + $0x310] sm:$0xff]
        %v4373 = vld [vmem:[#allocation8 + $0x318] sm:$0xff]
        %v4374 = vld [vmem:[#allocation8 + $0x320] sm:$0xff]
        %v4375 = vld [vmem:[#allocation8 + $0x328] sm:$0xff]
        %v4376 = vld [vmem:[#allocation8 + $0x330] sm:$0xff]
        %v4377 = vld [vmem:[#allocation8 + $0x338] sm:$0xff]
        %v4378 = vld [vmem:[#allocation8 + $0x340] sm:$0xff]
        %v4379 = vld [vmem:[#allocation8 + $0x348] sm:$0xff]
        %v4380 = vld [vmem:[#allocation8 + $0x350] sm:$0xff]
        %v4381 = vld [vmem:[#allocation8 + $0x358] sm:$0xff]
        %v4382 = vld [vmem:[#allocation8 + $0x360] sm:$0xff]
        %v4383 = vld [vmem:[#allocation8 + $0x368] sm:$0xff]
        %v4384 = vld [vmem:[#allocation8 + $0x370] sm:$0xff]
        %v4385 = vld [vmem:[#allocation8 + $0x378] sm:$0xff]
        %v4386 = vld [vmem:[#allocation8 + $0x380] sm:$0xff]
        %v4387 = vld [vmem:[#allocation8 + $0x388] sm:$0xff]
        %v4388 = vld [vmem:[#allocation8 + $0x390] sm:$0xff]
        %v4389 = vld [vmem:[#allocation8 + $0x398] sm:$0xff]
        %v4390 = vld [vmem:[#allocation8 + $0x3a0] sm:$0xff]
        %v4391 = vld [vmem:[#allocation8 + $0x3a8] sm:$0xff]
        %v4392 = vld [vmem:[#allocation8 + $0x3b0] sm:$0xff]
        %v4393 = vld [vmem:[#allocation8 + $0x3b8] sm:$0xff]
        %v4394 = vld [vmem:[#allocation8 + $0x3c0] sm:$0xff]
        %v4395 = vld [vmem:[#allocation8 + $0x3c8] sm:$0xff]
        %v4396 = vld [vmem:[#allocation8 + $0x3d0] sm:$0xff]
        %v4397 = vld [vmem:[#allocation8 + $0x3d8] sm:$0xff]
        %v4398 = vld [vmem:[#allocation8 + $0x3e0] sm:$0xff]
        %v4399 = vld [vmem:[#allocation8 + $0x3e8] sm:$0xff]
        %v4400 = vld [vmem:[#allocation8 + $0x3f0] sm:$0xff]
        %v4401 = vld [vmem:[#allocation8 + $0x3f8] sm:$0xff]
        %v4402 = vld [vmem:[#allocation8 + $0x400] sm:$0xff]
        %v4403 = vld [vmem:[#allocation8 + $0x408] sm:$0xff]
        %v4404 = vld [vmem:[#allocation8 + $0x410] sm:$0xff]
        %v4405 = vld [vmem:[#allocation8 + $0x418] sm:$0xff]
        %v4406 = vld [vmem:[#allocation8 + $0x420] sm:$0xff]
        %v4407 = vld [vmem:[#allocation8 + $0x428] sm:$0xff]
        %v4408 = vld [vmem:[#allocation8 + $0x430] sm:$0xff]
        %v4409 = vld [vmem:[#allocation8 + $0x438] sm:$0xff]
        %v4410 = vld [vmem:[#allocation8 + $0x440] sm:$0xff]
        %v4411 = vld [vmem:[#allocation8 + $0x448] sm:$0xff]
        %v4412 = vld [vmem:[#allocation8 + $0x450] sm:$0xff]
        %v4413 = vld [vmem:[#allocation8 + $0x458] sm:$0xff]
        %v4414 = vld [vmem:[#allocation8 + $0x460] sm:$0xff]
        %v4415 = vld [vmem:[#allocation8 + $0x468] sm:$0xff]
        %v4416 = vld [vmem:[#allocation8 + $0x470] sm:$0xff]
        %v4417 = vld [vmem:[#allocation8 + $0x478] sm:$0xff]
        %v4418 = vld [vmem:[#allocation8 + $0x480] sm:$0xff]
        %v4419 = vld [vmem:[#allocation8 + $0x488] sm:$0xff]
        %v4420 = vld [vmem:[#allocation8 + $0x490] sm:$0xff]
        %v4421 = vld [vmem:[#allocation8 + $0x498] sm:$0xff]
        %v4422 = vld [vmem:[#allocation8 + $0x4a0] sm:$0xff]
        %v4423 = vld [vmem:[#allocation8 + $0x4a8] sm:$0xff]
        %v4424 = vld [vmem:[#allocation8 + $0x4b0] sm:$0xff]
        %v4425 = vld [vmem:[#allocation8 + $0x4b8] sm:$0xff]
        %v4426 = vld [vmem:[#allocation8 + $0x4c0] sm:$0xff]
        %v4427 = vld [vmem:[#allocation8 + $0x4c8] sm:$0xff]
        %v4428 = vld [vmem:[#allocation8 + $0x4d0] sm:$0xff]
        %v4429 = vld [vmem:[#allocation8 + $0x4d8] sm:$0xff]
        %v4430 = vld [vmem:[#allocation8 + $0x4e0] sm:$0xff]
        %v4431 = vld [vmem:[#allocation8 + $0x4e8] sm:$0xff]
        %v4432 = vld [vmem:[#allocation8 + $0x4f0] sm:$0xff]
        %v4433 = vld [vmem:[#allocation8 + $0x4f8] sm:$0xff]
        %v4434 = vld [vmem:[#allocation8 + $0x500] sm:$0xff]
        %v4435 = vld [vmem:[#allocation8 + $0x508] sm:$0xff]
        %v4436 = vld [vmem:[#allocation8 + $0x510] sm:$0xff]
        %v4437 = vld [vmem:[#allocation8 + $0x518] sm:$0xff]
        %v4438 = vld [vmem:[#allocation8 + $0x520] sm:$0xff]
        %v4439 = vld [vmem:[#allocation8 + $0x528] sm:$0xff]
        %v4440 = vld [vmem:[#allocation8 + $0x530] sm:$0xff]
        %v4441 = vld [vmem:[#allocation8 + $0x538] sm:$0xff]
        %v4442 = vld [vmem:[#allocation8 + $0x540] sm:$0xff]
        %v4443 = vld [vmem:[#allocation8 + $0x548] sm:$0xff]
        %v4444 = vld [vmem:[#allocation8 + $0x550] sm:$0xff]
        %v4445 = vld [vmem:[#allocation8 + $0x558] sm:$0xff]
        %v4446 = vld [vmem:[#allocation8 + $0x560] sm:$0xff]
        %v4447 = vld [vmem:[#allocation8 + $0x568] sm:$0xff]
        %v4448 = vld [vmem:[#allocation8 + $0x570] sm:$0xff]
        %v4449 = vld [vmem:[#allocation8 + $0x578] sm:$0xff]
        %v4450 = vld [vmem:[#allocation8 + $0x580] sm:$0xff]
        %v4451 = vld [vmem:[#allocation8 + $0x588] sm:$0xff]
        %v4452 = vld [vmem:[#allocation8 + $0x590] sm:$0xff]
        %v4453 = vld [vmem:[#allocation8 + $0x598] sm:$0xff]
        %v4454 = vld [vmem:[#allocation8 + $0x5a0] sm:$0xff]
        %v4455 = vld [vmem:[#allocation8 + $0x5a8] sm:$0xff]
        %v4456 = vld [vmem:[#allocation8 + $0x5b0] sm:$0xff]
        %v4457 = vld [vmem:[#allocation8 + $0x5b8] sm:$0xff]
        %v4458 = vld [vmem:[#allocation8 + $0x5c0] sm:$0xff]
        %v4459 = vld [vmem:[#allocation8 + $0x5c8] sm:$0xff]
        %v4460 = vld [vmem:[#allocation8 + $0x5d0] sm:$0xff]
        %v4461 = vld [vmem:[#allocation8 + $0x5d8] sm:$0xff]
        %v4462 = vld [vmem:[#allocation8 + $0x5e0] sm:$0xff]
        %v4463 = vld [vmem:[#allocation8 + $0x5e8] sm:$0xff]
        %v4464 = vld [vmem:[#allocation8 + $0x5f0] sm:$0xff]
        %v4465 = vld [vmem:[#allocation8 + $0x5f8] sm:$0xff]
        %v4466 = vld [vmem:[#allocation8 + $0x600] sm:$0xff]
        %v4467 = vld [vmem:[#allocation8 + $0x608] sm:$0xff]
        %v4468 = vld [vmem:[#allocation8 + $0x610] sm:$0xff]
        %v4469 = vld [vmem:[#allocation8 + $0x618] sm:$0xff]
        %v4470 = vld [vmem:[#allocation8 + $0x620] sm:$0xff]
        %v4471 = vld [vmem:[#allocation8 + $0x628] sm:$0xff]
        %v4472 = vld [vmem:[#allocation8 + $0x630] sm:$0xff]
        %v4473 = vld [vmem:[#allocation8 + $0x638] sm:$0xff]
        %v4474 = vld [vmem:[#allocation8 + $0x640] sm:$0xff]
        %v4475 = vld [vmem:[#allocation8 + $0x648] sm:$0xff]
        %v4476 = vld [vmem:[#allocation8 + $0x650] sm:$0xff]
        %v4477 = vld [vmem:[#allocation8 + $0x658] sm:$0xff]
        %v4478 = vld [vmem:[#allocation8 + $0x660] sm:$0xff]
        %v4479 = vld [vmem:[#allocation8 + $0x668] sm:$0xff]
        %v4480 = vld [vmem:[#allocation8 + $0x670] sm:$0xff]
        %v4481 = vld [vmem:[#allocation8 + $0x678] sm:$0xff]
        %v4482 = vld [vmem:[#allocation8 + $0x680] sm:$0xff]
        %v4483 = vld [vmem:[#allocation8 + $0x688] sm:$0xff]
        %v4484 = vld [vmem:[#allocation8 + $0x690] sm:$0xff]
        %v4485 = vld [vmem:[#allocation8 + $0x698] sm:$0xff]
        %v4486 = vld [vmem:[#allocation8 + $0x6a0] sm:$0xff]
        %v4487 = vld [vmem:[#allocation8 + $0x6a8] sm:$0xff]
        %v4488 = vld [vmem:[#allocation8 + $0x6b0] sm:$0xff]
        %v4489 = vld [vmem:[#allocation8 + $0x6b8] sm:$0xff]
        %v4490 = vld [vmem:[#allocation8 + $0x6c0] sm:$0xff]
        %v4491 = vld [vmem:[#allocation8 + $0x6c8] sm:$0xff]
        %v4492 = vld [vmem:[#allocation8 + $0x6d0] sm:$0xff]
        %v4493 = vld [vmem:[#allocation8 + $0x6d8] sm:$0xff]
        %v4494 = vld [vmem:[#allocation8 + $0x6e0] sm:$0xff]
        %v4495 = vld [vmem:[#allocation8 + $0x6e8] sm:$0xff]
        %v4496 = vld [vmem:[#allocation8 + $0x6f0] sm:$0xff]
        %v4497 = vld [vmem:[#allocation8 + $0x6f8] sm:$0xff]
        %v4498 = vld [vmem:[#allocation8 + $0x700] sm:$0xff]
        %v4499 = vld [vmem:[#allocation8 + $0x708] sm:$0xff]
        %v4500 = vld [vmem:[#allocation8 + $0x710] sm:$0xff]
        %v4501 = vld [vmem:[#allocation8 + $0x718] sm:$0xff]
        %v4502 = vld [vmem:[#allocation8 + $0x720] sm:$0xff]
        %v4503 = vld [vmem:[#allocation8 + $0x728] sm:$0xff]
        %v4504 = vld [vmem:[#allocation8 + $0x730] sm:$0xff]
        %v4505 = vld [vmem:[#allocation8 + $0x738] sm:$0xff]
        %v4506 = vld [vmem:[#allocation8 + $0x740] sm:$0xff]
        %v4507 = vld [vmem:[#allocation8 + $0x748] sm:$0xff]
        %v4508 = vld [vmem:[#allocation8 + $0x750] sm:$0xff]
        %v4509 = vld [vmem:[#allocation8 + $0x758] sm:$0xff]
        %v4510 = vld [vmem:[#allocation8 + $0x760] sm:$0xff]
        %v4511 = vld [vmem:[#allocation8 + $0x768] sm:$0xff]
        %v4512 = vld [vmem:[#allocation8 + $0x770] sm:$0xff]
        %v4513 = vld [vmem:[#allocation8 + $0x778] sm:$0xff]
        %v4514 = vld [vmem:[#allocation8 + $0x780] sm:$0xff]
        %v4515 = vld [vmem:[#allocation8 + $0x788] sm:$0xff]
        %v4516 = vld [vmem:[#allocation8 + $0x790] sm:$0xff]
        %v4517 = vld [vmem:[#allocation8 + $0x798] sm:$0xff]
        %v4518 = vld [vmem:[#allocation8 + $0x7a0] sm:$0xff]
        %v4519 = vld [vmem:[#allocation8 + $0x7a8] sm:$0xff]
        %v4520 = vld [vmem:[#allocation8 + $0x7b0] sm:$0xff]
        %v4521 = vld [vmem:[#allocation8 + $0x7b8] sm:$0xff]
        %v4522 = vld [vmem:[#allocation8 + $0x7c0] sm:$0xff]
        %v4523 = vld [vmem:[#allocation8 + $0x7c8] sm:$0xff]
        %v4524 = vld [vmem:[#allocation8 + $0x7d0] sm:$0xff]
        %v4525 = vld [vmem:[#allocation8 + $0x7d8] sm:$0xff]
        %v4526 = vld [vmem:[#allocation8 + $0x7e0] sm:$0xff]
        %v4527 = vld [vmem:[#allocation8 + $0x7e8] sm:$0xff]
        %v4528 = vld [vmem:[#allocation8 + $0x7f0] sm:$0xff]
        %v4529 = vld [vmem:[#allocation8 + $0x7f8] sm:$0xff]
        %v4530 = vld [vmem:[#allocation10] sm:$0xf]
        %v4531 = vpack.c.bf16 %v4266, %v4258
        %v4532 = vpack.c.bf16 %v4267, %v4259
        %v4533 = vpack.c.bf16 %v4268, %v4260
        %v4534 = vpack.c.bf16 %v4269, %v4261
        %v4535 = vpack.c.bf16 %v4270, %v4262
        %v4536 = vpack.c.bf16 %v4271, %v4263
        %v4537 = vpack.c.bf16 %v4272, %v4264
        %v4538 = vpack.c.bf16 %v4273, %v4265
        %v4540 = vlaneseq
        %v4541 = vshrl.u32 %v4540, 7
        %v4542 = vsub.s32 0, %v4541
        %v4543 = vrot.slane %v4530, %v4542
        %v4544 = vlaneseq
        %v4545 = vshrl.u32 %v4544, 7
        %v4546 = vsub.s32 1, %v4545
        %v4547 = vrot.slane %v4530, %v4546
        %v4548 = vlaneseq
        %v4549 = vshrl.u32 %v4548, 7
        %v4550 = vsub.s32 2, %v4549
        %v4551 = vrot.slane %v4530, %v4550
        %v4552 = vlaneseq
        %v4553 = vshrl.u32 %v4552, 7
        %v4554 = vsub.s32 3, %v4553
        %v4555 = vrot.slane %v4530, %v4554
        %v4816 = vunpack.c.l.b16 %v4274
        %v4817 = vunpack.c.h.b16 %v4274
        %v4818 = vunpack.c.l.b16 %v4275
        %v4819 = vunpack.c.h.b16 %v4275
        %v4820 = vunpack.c.l.b16 %v4276
        %v4821 = vunpack.c.h.b16 %v4276
        %v4822 = vunpack.c.l.b16 %v4277
        %v4823 = vunpack.c.h.b16 %v4277
        %v4824 = vunpack.c.l.b16 %v4278
        %v4825 = vunpack.c.h.b16 %v4278
        %v4826 = vunpack.c.l.b16 %v4279
        %v4827 = vunpack.c.h.b16 %v4279
        %v4828 = vunpack.c.l.b16 %v4280
        %v4829 = vunpack.c.h.b16 %v4280
        %v4830 = vunpack.c.l.b16 %v4281
        %v4831 = vunpack.c.h.b16 %v4281
        %v4832 = vunpack.c.l.b16 %v4282
        %v4833 = vunpack.c.h.b16 %v4282
        %v4834 = vunpack.c.l.b16 %v4283
        %v4835 = vunpack.c.h.b16 %v4283
        %v4836 = vunpack.c.l.b16 %v4284
        %v4837 = vunpack.c.h.b16 %v4284
        %v4838 = vunpack.c.l.b16 %v4285
        %v4839 = vunpack.c.h.b16 %v4285
        %v4840 = vunpack.c.l.b16 %v4286
        %v4841 = vunpack.c.h.b16 %v4286
        %v4842 = vunpack.c.l.b16 %v4287
        %v4843 = vunpack.c.h.b16 %v4287
        %v4844 = vunpack.c.l.b16 %v4288
        %v4845 = vunpack.c.h.b16 %v4288
        %v4846 = vunpack.c.l.b16 %v4289
        %v4847 = vunpack.c.h.b16 %v4289
        %v4848 = vunpack.c.l.b16 %v4290
        %v4849 = vunpack.c.h.b16 %v4290
        %v4850 = vunpack.c.l.b16 %v4291
        %v4851 = vunpack.c.h.b16 %v4291
        %v4852 = vunpack.c.l.b16 %v4292
        %v4853 = vunpack.c.h.b16 %v4292
        %v4854 = vunpack.c.l.b16 %v4293
        %v4855 = vunpack.c.h.b16 %v4293
        %v4856 = vunpack.c.l.b16 %v4294
        %v4857 = vunpack.c.h.b16 %v4294
        %v4858 = vunpack.c.l.b16 %v4295
        %v4859 = vunpack.c.h.b16 %v4295
        %v4860 = vunpack.c.l.b16 %v4296
        %v4861 = vunpack.c.h.b16 %v4296
        %v4862 = vunpack.c.l.b16 %v4297
        %v4863 = vunpack.c.h.b16 %v4297
        %v4864 = vunpack.c.l.b16 %v4298
        %v4865 = vunpack.c.h.b16 %v4298
        %v4866 = vunpack.c.l.b16 %v4299
        %v4867 = vunpack.c.h.b16 %v4299
        %v4868 = vunpack.c.l.b16 %v4300
        %v4869 = vunpack.c.h.b16 %v4300
        %v4870 = vunpack.c.l.b16 %v4301
        %v4871 = vunpack.c.h.b16 %v4301
        %v4872 = vunpack.c.l.b16 %v4302
        %v4873 = vunpack.c.h.b16 %v4302
        %v4874 = vunpack.c.l.b16 %v4303
        %v4875 = vunpack.c.h.b16 %v4303
        %v4876 = vunpack.c.l.b16 %v4304
        %v4877 = vunpack.c.h.b16 %v4304
        %v4878 = vunpack.c.l.b16 %v4305
        %v4879 = vunpack.c.h.b16 %v4305
        %v4880 = vunpack.c.l.b16 %v4306
        %v4881 = vunpack.c.h.b16 %v4306
        %v4882 = vunpack.c.l.b16 %v4307
        %v4883 = vunpack.c.h.b16 %v4307
        %v4884 = vunpack.c.l.b16 %v4308
        %v4885 = vunpack.c.h.b16 %v4308
        %v4886 = vunpack.c.l.b16 %v4309
        %v4887 = vunpack.c.h.b16 %v4309
        %v4888 = vunpack.c.l.b16 %v4310
        %v4889 = vunpack.c.h.b16 %v4310
        %v4890 = vunpack.c.l.b16 %v4311
        %v4891 = vunpack.c.h.b16 %v4311
        %v4892 = vunpack.c.l.b16 %v4312
        %v4893 = vunpack.c.h.b16 %v4312
        %v4894 = vunpack.c.l.b16 %v4313
        %v4895 = vunpack.c.h.b16 %v4313
        %v4896 = vunpack.c.l.b16 %v4314
        %v4897 = vunpack.c.h.b16 %v4314
        %v4898 = vunpack.c.l.b16 %v4315
        %v4899 = vunpack.c.h.b16 %v4315
        %v4900 = vunpack.c.l.b16 %v4316
        %v4901 = vunpack.c.h.b16 %v4316
        %v4902 = vunpack.c.l.b16 %v4317
        %v4903 = vunpack.c.h.b16 %v4317
        %v4904 = vunpack.c.l.b16 %v4318
        %v4905 = vunpack.c.h.b16 %v4318
        %v4906 = vunpack.c.l.b16 %v4319
        %v4907 = vunpack.c.h.b16 %v4319
        %v4908 = vunpack.c.l.b16 %v4320
        %v4909 = vunpack.c.h.b16 %v4320
        %v4910 = vunpack.c.l.b16 %v4321
        %v4911 = vunpack.c.h.b16 %v4321
        %v4912 = vunpack.c.l.b16 %v4322
        %v4913 = vunpack.c.h.b16 %v4322
        %v4914 = vunpack.c.l.b16 %v4323
        %v4915 = vunpack.c.h.b16 %v4323
        %v4916 = vunpack.c.l.b16 %v4324
        %v4917 = vunpack.c.h.b16 %v4324
        %v4918 = vunpack.c.l.b16 %v4325
        %v4919 = vunpack.c.h.b16 %v4325
        %v4920 = vunpack.c.l.b16 %v4326
        %v4921 = vunpack.c.h.b16 %v4326
        %v4922 = vunpack.c.l.b16 %v4327
        %v4923 = vunpack.c.h.b16 %v4327
        %v4924 = vunpack.c.l.b16 %v4328
        %v4925 = vunpack.c.h.b16 %v4328
        %v4926 = vunpack.c.l.b16 %v4329
        %v4927 = vunpack.c.h.b16 %v4329
        %v4928 = vunpack.c.l.b16 %v4330
        %v4929 = vunpack.c.h.b16 %v4330
        %v4930 = vunpack.c.l.b16 %v4331
        %v4931 = vunpack.c.h.b16 %v4331
        %v4932 = vunpack.c.l.b16 %v4332
        %v4933 = vunpack.c.h.b16 %v4332
        %v4934 = vunpack.c.l.b16 %v4333
        %v4935 = vunpack.c.h.b16 %v4333
        %v4936 = vunpack.c.l.b16 %v4334
        %v4937 = vunpack.c.h.b16 %v4334
        %v4938 = vunpack.c.l.b16 %v4335
        %v4939 = vunpack.c.h.b16 %v4335
        %v4940 = vunpack.c.l.b16 %v4336
        %v4941 = vunpack.c.h.b16 %v4336
        %v4942 = vunpack.c.l.b16 %v4337
        %v4943 = vunpack.c.h.b16 %v4337
        %v4944 = vunpack.c.l.b16 %v4338
        %v4945 = vunpack.c.h.b16 %v4338
        %v4946 = vunpack.c.l.b16 %v4339
        %v4947 = vunpack.c.h.b16 %v4339
        %v4948 = vunpack.c.l.b16 %v4340
        %v4949 = vunpack.c.h.b16 %v4340
        %v4950 = vunpack.c.l.b16 %v4341
        %v4951 = vunpack.c.h.b16 %v4341
        %v4952 = vunpack.c.l.b16 %v4342
        %v4953 = vunpack.c.h.b16 %v4342
        %v4954 = vunpack.c.l.b16 %v4343
        %v4955 = vunpack.c.h.b16 %v4343
        %v4956 = vunpack.c.l.b16 %v4344
        %v4957 = vunpack.c.h.b16 %v4344
        %v4958 = vunpack.c.l.b16 %v4345
        %v4959 = vunpack.c.h.b16 %v4345
        %v4960 = vunpack.c.l.b16 %v4346
        %v4961 = vunpack.c.h.b16 %v4346
        %v4962 = vunpack.c.l.b16 %v4347
        %v4963 = vunpack.c.h.b16 %v4347
        %v4964 = vunpack.c.l.b16 %v4348
        %v4965 = vunpack.c.h.b16 %v4348
        %v4966 = vunpack.c.l.b16 %v4349
        %v4967 = vunpack.c.h.b16 %v4349
        %v4968 = vunpack.c.l.b16 %v4350
        %v4969 = vunpack.c.h.b16 %v4350
        %v4970 = vunpack.c.l.b16 %v4351
        %v4971 = vunpack.c.h.b16 %v4351
        %v4972 = vunpack.c.l.b16 %v4352
        %v4973 = vunpack.c.h.b16 %v4352
        %v4974 = vunpack.c.l.b16 %v4353
        %v4975 = vunpack.c.h.b16 %v4353
        %v4976 = vunpack.c.l.b16 %v4354
        %v4977 = vunpack.c.h.b16 %v4354
        %v4978 = vunpack.c.l.b16 %v4355
        %v4979 = vunpack.c.h.b16 %v4355
        %v4980 = vunpack.c.l.b16 %v4356
        %v4981 = vunpack.c.h.b16 %v4356
        %v4982 = vunpack.c.l.b16 %v4357
        %v4983 = vunpack.c.h.b16 %v4357
        %v4984 = vunpack.c.l.b16 %v4358
        %v4985 = vunpack.c.h.b16 %v4358
        %v4986 = vunpack.c.l.b16 %v4359
        %v4987 = vunpack.c.h.b16 %v4359
        %v4988 = vunpack.c.l.b16 %v4360
        %v4989 = vunpack.c.h.b16 %v4360
        %v4990 = vunpack.c.l.b16 %v4361
        %v4991 = vunpack.c.h.b16 %v4361
        %v4992 = vunpack.c.l.b16 %v4362
        %v4993 = vunpack.c.h.b16 %v4362
        %v4994 = vunpack.c.l.b16 %v4363
        %v4995 = vunpack.c.h.b16 %v4363
        %v4996 = vunpack.c.l.b16 %v4364
        %v4997 = vunpack.c.h.b16 %v4364
        %v4998 = vunpack.c.l.b16 %v4365
        %v4999 = vunpack.c.h.b16 %v4365
        %v5000 = vunpack.c.l.b16 %v4366
        %v5001 = vunpack.c.h.b16 %v4366
        %v5002 = vunpack.c.l.b16 %v4367
        %v5003 = vunpack.c.h.b16 %v4367
        %v5004 = vunpack.c.l.b16 %v4368
        %v5005 = vunpack.c.h.b16 %v4368
        %v5006 = vunpack.c.l.b16 %v4369
        %v5007 = vunpack.c.h.b16 %v4369
        %v5008 = vunpack.c.l.b16 %v4370
        %v5009 = vunpack.c.h.b16 %v4370
        %v5010 = vunpack.c.l.b16 %v4371
        %v5011 = vunpack.c.h.b16 %v4371
        %v5012 = vunpack.c.l.b16 %v4372
        %v5013 = vunpack.c.h.b16 %v4372
        %v5014 = vunpack.c.l.b16 %v4373
        %v5015 = vunpack.c.h.b16 %v4373
        %v5016 = vunpack.c.l.b16 %v4374
        %v5017 = vunpack.c.h.b16 %v4374
        %v5018 = vunpack.c.l.b16 %v4375
        %v5019 = vunpack.c.h.b16 %v4375
        %v5020 = vunpack.c.l.b16 %v4376
        %v5021 = vunpack.c.h.b16 %v4376
        %v5022 = vunpack.c.l.b16 %v4377
        %v5023 = vunpack.c.h.b16 %v4377
        %v5024 = vunpack.c.l.b16 %v4378
        %v5025 = vunpack.c.h.b16 %v4378
        %v5026 = vunpack.c.l.b16 %v4379
        %v5027 = vunpack.c.h.b16 %v4379
        %v5028 = vunpack.c.l.b16 %v4380
        %v5029 = vunpack.c.h.b16 %v4380
        %v5030 = vunpack.c.l.b16 %v4381
        %v5031 = vunpack.c.h.b16 %v4381
        %v5032 = vunpack.c.l.b16 %v4382
        %v5033 = vunpack.c.h.b16 %v4382
        %v5034 = vunpack.c.l.b16 %v4383
        %v5035 = vunpack.c.h.b16 %v4383
        %v5036 = vunpack.c.l.b16 %v4384
        %v5037 = vunpack.c.h.b16 %v4384
        %v5038 = vunpack.c.l.b16 %v4385
        %v5039 = vunpack.c.h.b16 %v4385
        %v5040 = vunpack.c.l.b16 %v4386
        %v5041 = vunpack.c.h.b16 %v4386
        %v5042 = vunpack.c.l.b16 %v4387
        %v5043 = vunpack.c.h.b16 %v4387
        %v5044 = vunpack.c.l.b16 %v4388
        %v5045 = vunpack.c.h.b16 %v4388
        %v5046 = vunpack.c.l.b16 %v4389
        %v5047 = vunpack.c.h.b16 %v4389
        %v5048 = vunpack.c.l.b16 %v4390
        %v5049 = vunpack.c.h.b16 %v4390
        %v5050 = vunpack.c.l.b16 %v4391
        %v5051 = vunpack.c.h.b16 %v4391
        %v5052 = vunpack.c.l.b16 %v4392
        %v5053 = vunpack.c.h.b16 %v4392
        %v5054 = vunpack.c.l.b16 %v4393
        %v5055 = vunpack.c.h.b16 %v4393
        %v5056 = vunpack.c.l.b16 %v4394
        %v5057 = vunpack.c.h.b16 %v4394
        %v5058 = vunpack.c.l.b16 %v4395
        %v5059 = vunpack.c.h.b16 %v4395
        %v5060 = vunpack.c.l.b16 %v4396
        %v5061 = vunpack.c.h.b16 %v4396
        %v5062 = vunpack.c.l.b16 %v4397
        %v5063 = vunpack.c.h.b16 %v4397
        %v5064 = vunpack.c.l.b16 %v4398
        %v5065 = vunpack.c.h.b16 %v4398
        %v5066 = vunpack.c.l.b16 %v4399
        %v5067 = vunpack.c.h.b16 %v4399
        %v5068 = vunpack.c.l.b16 %v4400
        %v5069 = vunpack.c.h.b16 %v4400
        %v5070 = vunpack.c.l.b16 %v4401
        %v5071 = vunpack.c.h.b16 %v4401
        %v5072 = vunpack.c.l.b16 %v4402
        %v5073 = vunpack.c.h.b16 %v4402
        %v5074 = vunpack.c.l.b16 %v4403
        %v5075 = vunpack.c.h.b16 %v4403
        %v5076 = vunpack.c.l.b16 %v4404
        %v5077 = vunpack.c.h.b16 %v4404
        %v5078 = vunpack.c.l.b16 %v4405
        %v5079 = vunpack.c.h.b16 %v4405
        %v5080 = vunpack.c.l.b16 %v4406
        %v5081 = vunpack.c.h.b16 %v4406
        %v5082 = vunpack.c.l.b16 %v4407
        %v5083 = vunpack.c.h.b16 %v4407
        %v5084 = vunpack.c.l.b16 %v4408
        %v5085 = vunpack.c.h.b16 %v4408
        %v5086 = vunpack.c.l.b16 %v4409
        %v5087 = vunpack.c.h.b16 %v4409
        %v5088 = vunpack.c.l.b16 %v4410
        %v5089 = vunpack.c.h.b16 %v4410
        %v5090 = vunpack.c.l.b16 %v4411
        %v5091 = vunpack.c.h.b16 %v4411
        %v5092 = vunpack.c.l.b16 %v4412
        %v5093 = vunpack.c.h.b16 %v4412
        %v5094 = vunpack.c.l.b16 %v4413
        %v5095 = vunpack.c.h.b16 %v4413
        %v5096 = vunpack.c.l.b16 %v4414
        %v5097 = vunpack.c.h.b16 %v4414
        %v5098 = vunpack.c.l.b16 %v4415
        %v5099 = vunpack.c.h.b16 %v4415
        %v5100 = vunpack.c.l.b16 %v4416
        %v5101 = vunpack.c.h.b16 %v4416
        %v5102 = vunpack.c.l.b16 %v4417
        %v5103 = vunpack.c.h.b16 %v4417
        %v5104 = vunpack.c.l.b16 %v4418
        %v5105 = vunpack.c.h.b16 %v4418
        %v5106 = vunpack.c.l.b16 %v4419
        %v5107 = vunpack.c.h.b16 %v4419
        %v5108 = vunpack.c.l.b16 %v4420
        %v5109 = vunpack.c.h.b16 %v4420
        %v5110 = vunpack.c.l.b16 %v4421
        %v5111 = vunpack.c.h.b16 %v4421
        %v5112 = vunpack.c.l.b16 %v4422
        %v5113 = vunpack.c.h.b16 %v4422
        %v5114 = vunpack.c.l.b16 %v4423
        %v5115 = vunpack.c.h.b16 %v4423
        %v5116 = vunpack.c.l.b16 %v4424
        %v5117 = vunpack.c.h.b16 %v4424
        %v5118 = vunpack.c.l.b16 %v4425
        %v5119 = vunpack.c.h.b16 %v4425
        %v5120 = vunpack.c.l.b16 %v4426
        %v5121 = vunpack.c.h.b16 %v4426
        %v5122 = vunpack.c.l.b16 %v4427
        %v5123 = vunpack.c.h.b16 %v4427
        %v5124 = vunpack.c.l.b16 %v4428
        %v5125 = vunpack.c.h.b16 %v4428
        %v5126 = vunpack.c.l.b16 %v4429
        %v5127 = vunpack.c.h.b16 %v4429
        %v5128 = vunpack.c.l.b16 %v4430
        %v5129 = vunpack.c.h.b16 %v4430
        %v5130 = vunpack.c.l.b16 %v4431
        %v5131 = vunpack.c.h.b16 %v4431
        %v5132 = vunpack.c.l.b16 %v4432
        %v5133 = vunpack.c.h.b16 %v4432
        %v5134 = vunpack.c.l.b16 %v4433
        %v5135 = vunpack.c.h.b16 %v4433
        %v5136 = vunpack.c.l.b16 %v4434
        %v5137 = vunpack.c.h.b16 %v4434
        %v5138 = vunpack.c.l.b16 %v4435
        %v5139 = vunpack.c.h.b16 %v4435
        %v5140 = vunpack.c.l.b16 %v4436
        %v5141 = vunpack.c.h.b16 %v4436
        %v5142 = vunpack.c.l.b16 %v4437
        %v5143 = vunpack.c.h.b16 %v4437
        %v5144 = vunpack.c.l.b16 %v4438
        %v5145 = vunpack.c.h.b16 %v4438
        %v5146 = vunpack.c.l.b16 %v4439
        %v5147 = vunpack.c.h.b16 %v4439
        %v5148 = vunpack.c.l.b16 %v4440
        %v5149 = vunpack.c.h.b16 %v4440
        %v5150 = vunpack.c.l.b16 %v4441
        %v5151 = vunpack.c.h.b16 %v4441
        %v5152 = vunpack.c.l.b16 %v4442
        %v5153 = vunpack.c.h.b16 %v4442
        %v5154 = vunpack.c.l.b16 %v4443
        %v5155 = vunpack.c.h.b16 %v4443
        %v5156 = vunpack.c.l.b16 %v4444
        %v5157 = vunpack.c.h.b16 %v4444
        %v5158 = vunpack.c.l.b16 %v4445
        %v5159 = vunpack.c.h.b16 %v4445
        %v5160 = vunpack.c.l.b16 %v4446
        %v5161 = vunpack.c.h.b16 %v4446
        %v5162 = vunpack.c.l.b16 %v4447
        %v5163 = vunpack.c.h.b16 %v4447
        %v5164 = vunpack.c.l.b16 %v4448
        %v5165 = vunpack.c.h.b16 %v4448
        %v5166 = vunpack.c.l.b16 %v4449
        %v5167 = vunpack.c.h.b16 %v4449
        %v5168 = vunpack.c.l.b16 %v4450
        %v5169 = vunpack.c.h.b16 %v4450
        %v5170 = vunpack.c.l.b16 %v4451
        %v5171 = vunpack.c.h.b16 %v4451
        %v5172 = vunpack.c.l.b16 %v4452
        %v5173 = vunpack.c.h.b16 %v4452
        %v5174 = vunpack.c.l.b16 %v4453
        %v5175 = vunpack.c.h.b16 %v4453
        %v5176 = vunpack.c.l.b16 %v4454
        %v5177 = vunpack.c.h.b16 %v4454
        %v5178 = vunpack.c.l.b16 %v4455
        %v5179 = vunpack.c.h.b16 %v4455
        %v5180 = vunpack.c.l.b16 %v4456
        %v5181 = vunpack.c.h.b16 %v4456
        %v5182 = vunpack.c.l.b16 %v4457
        %v5183 = vunpack.c.h.b16 %v4457
        %v5184 = vunpack.c.l.b16 %v4458
        %v5185 = vunpack.c.h.b16 %v4458
        %v5186 = vunpack.c.l.b16 %v4459
        %v5187 = vunpack.c.h.b16 %v4459
        %v5188 = vunpack.c.l.b16 %v4460
        %v5189 = vunpack.c.h.b16 %v4460
        %v5190 = vunpack.c.l.b16 %v4461
        %v5191 = vunpack.c.h.b16 %v4461
        %v5192 = vunpack.c.l.b16 %v4462
        %v5193 = vunpack.c.h.b16 %v4462
        %v5194 = vunpack.c.l.b16 %v4463
        %v5195 = vunpack.c.h.b16 %v4463
        %v5196 = vunpack.c.l.b16 %v4464
        %v5197 = vunpack.c.h.b16 %v4464
        %v5198 = vunpack.c.l.b16 %v4465
        %v5199 = vunpack.c.h.b16 %v4465
        %v5200 = vunpack.c.l.b16 %v4466
        %v5201 = vunpack.c.h.b16 %v4466
        %v5202 = vunpack.c.l.b16 %v4467
        %v5203 = vunpack.c.h.b16 %v4467
        %v5204 = vunpack.c.l.b16 %v4468
        %v5205 = vunpack.c.h.b16 %v4468
        %v5206 = vunpack.c.l.b16 %v4469
        %v5207 = vunpack.c.h.b16 %v4469
        %v5208 = vunpack.c.l.b16 %v4470
        %v5209 = vunpack.c.h.b16 %v4470
        %v5210 = vunpack.c.l.b16 %v4471
        %v5211 = vunpack.c.h.b16 %v4471
        %v5212 = vunpack.c.l.b16 %v4472
        %v5213 = vunpack.c.h.b16 %v4472
        %v5214 = vunpack.c.l.b16 %v4473
        %v5215 = vunpack.c.h.b16 %v4473
        %v5216 = vunpack.c.l.b16 %v4474
        %v5217 = vunpack.c.h.b16 %v4474
        %v5218 = vunpack.c.l.b16 %v4475
        %v5219 = vunpack.c.h.b16 %v4475
        %v5220 = vunpack.c.l.b16 %v4476
        %v5221 = vunpack.c.h.b16 %v4476
        %v5222 = vunpack.c.l.b16 %v4477
        %v5223 = vunpack.c.h.b16 %v4477
        %v5224 = vunpack.c.l.b16 %v4478
        %v5225 = vunpack.c.h.b16 %v4478
        %v5226 = vunpack.c.l.b16 %v4479
        %v5227 = vunpack.c.h.b16 %v4479
        %v5228 = vunpack.c.l.b16 %v4480
        %v5229 = vunpack.c.h.b16 %v4480
        %v5230 = vunpack.c.l.b16 %v4481
        %v5231 = vunpack.c.h.b16 %v4481
        %v5232 = vunpack.c.l.b16 %v4482
        %v5233 = vunpack.c.h.b16 %v4482
        %v5234 = vunpack.c.l.b16 %v4483
        %v5235 = vunpack.c.h.b16 %v4483
        %v5236 = vunpack.c.l.b16 %v4484
        %v5237 = vunpack.c.h.b16 %v4484
        %v5238 = vunpack.c.l.b16 %v4485
        %v5239 = vunpack.c.h.b16 %v4485
        %v5240 = vunpack.c.l.b16 %v4486
        %v5241 = vunpack.c.h.b16 %v4486
        %v5242 = vunpack.c.l.b16 %v4487
        %v5243 = vunpack.c.h.b16 %v4487
        %v5244 = vunpack.c.l.b16 %v4488
        %v5245 = vunpack.c.h.b16 %v4488
        %v5246 = vunpack.c.l.b16 %v4489
        %v5247 = vunpack.c.h.b16 %v4489
        %v5248 = vunpack.c.l.b16 %v4490
        %v5249 = vunpack.c.h.b16 %v4490
        %v5250 = vunpack.c.l.b16 %v4491
        %v5251 = vunpack.c.h.b16 %v4491
        %v5252 = vunpack.c.l.b16 %v4492
        %v5253 = vunpack.c.h.b16 %v4492
        %v5254 = vunpack.c.l.b16 %v4493
        %v5255 = vunpack.c.h.b16 %v4493
        %v5256 = vunpack.c.l.b16 %v4494
        %v5257 = vunpack.c.h.b16 %v4494
        %v5258 = vunpack.c.l.b16 %v4495
        %v5259 = vunpack.c.h.b16 %v4495
        %v5260 = vunpack.c.l.b16 %v4496
        %v5261 = vunpack.c.h.b16 %v4496
        %v5262 = vunpack.c.l.b16 %v4497
        %v5263 = vunpack.c.h.b16 %v4497
        %v5264 = vunpack.c.l.b16 %v4498
        %v5265 = vunpack.c.h.b16 %v4498
        %v5266 = vunpack.c.l.b16 %v4499
        %v5267 = vunpack.c.h.b16 %v4499
        %v5268 = vunpack.c.l.b16 %v4500
        %v5269 = vunpack.c.h.b16 %v4500
        %v5270 = vunpack.c.l.b16 %v4501
        %v5271 = vunpack.c.h.b16 %v4501
        %v5272 = vunpack.c.l.b16 %v4502
        %v5273 = vunpack.c.h.b16 %v4502
        %v5274 = vunpack.c.l.b16 %v4503
        %v5275 = vunpack.c.h.b16 %v4503
        %v5276 = vunpack.c.l.b16 %v4504
        %v5277 = vunpack.c.h.b16 %v4504
        %v5278 = vunpack.c.l.b16 %v4505
        %v5279 = vunpack.c.h.b16 %v4505
        %v5280 = vunpack.c.l.b16 %v4506
        %v5281 = vunpack.c.h.b16 %v4506
        %v5282 = vunpack.c.l.b16 %v4507
        %v5283 = vunpack.c.h.b16 %v4507
        %v5284 = vunpack.c.l.b16 %v4508
        %v5285 = vunpack.c.h.b16 %v4508
        %v5286 = vunpack.c.l.b16 %v4509
        %v5287 = vunpack.c.h.b16 %v4509
        %v5288 = vunpack.c.l.b16 %v4510
        %v5289 = vunpack.c.h.b16 %v4510
        %v5290 = vunpack.c.l.b16 %v4511
        %v5291 = vunpack.c.h.b16 %v4511
        %v5292 = vunpack.c.l.b16 %v4512
        %v5293 = vunpack.c.h.b16 %v4512
        %v5294 = vunpack.c.l.b16 %v4513
        %v5295 = vunpack.c.h.b16 %v4513
        %v5296 = vunpack.c.l.b16 %v4514
        %v5297 = vunpack.c.h.b16 %v4514
        %v5298 = vunpack.c.l.b16 %v4515
        %v5299 = vunpack.c.h.b16 %v4515
        %v5300 = vunpack.c.l.b16 %v4516
        %v5301 = vunpack.c.h.b16 %v4516
        %v5302 = vunpack.c.l.b16 %v4517
        %v5303 = vunpack.c.h.b16 %v4517
        %v5304 = vunpack.c.l.b16 %v4518
        %v5305 = vunpack.c.h.b16 %v4518
        %v5306 = vunpack.c.l.b16 %v4519
        %v5307 = vunpack.c.h.b16 %v4519
        %v5308 = vunpack.c.l.b16 %v4520
        %v5309 = vunpack.c.h.b16 %v4520
        %v5310 = vunpack.c.l.b16 %v4521
        %v5311 = vunpack.c.h.b16 %v4521
        %v5312 = vunpack.c.l.b16 %v4522
        %v5313 = vunpack.c.h.b16 %v4522
        %v5314 = vunpack.c.l.b16 %v4523
        %v5315 = vunpack.c.h.b16 %v4523
        %v5316 = vunpack.c.l.b16 %v4524
        %v5317 = vunpack.c.h.b16 %v4524
        %v5318 = vunpack.c.l.b16 %v4525
        %v5319 = vunpack.c.h.b16 %v4525
        %v5320 = vunpack.c.l.b16 %v4526
        %v5321 = vunpack.c.h.b16 %v4526
        %v5322 = vunpack.c.l.b16 %v4527
        %v5323 = vunpack.c.h.b16 %v4527
        %v5324 = vunpack.c.l.b16 %v4528
        %v5325 = vunpack.c.h.b16 %v4528
        %v5326 = vunpack.c.l.b16 %v4529
        %v5327 = vunpack.c.h.b16 %v4529
        %v5328 = vpack.c.b16 %v4820, %v4816
        %v5329 = vpack.c.b16 %v4821, %v4817
        %v5330 = vpack.c.b16 %v4822, %v4818
        %v5331 = vpack.c.b16 %v4823, %v4819
        %v5332 = vpack.c.b16 %v4828, %v4824
        %v5333 = vpack.c.b16 %v4829, %v4825
        %v5334 = vpack.c.b16 %v4830, %v4826
        %v5335 = vpack.c.b16 %v4831, %v4827
        %v5336 = vpack.c.b16 %v4836, %v4832
        %v5337 = vpack.c.b16 %v4837, %v4833
        %v5338 = vpack.c.b16 %v4838, %v4834
        %v5339 = vpack.c.b16 %v4839, %v4835
        %v5340 = vpack.c.b16 %v4844, %v4840
        %v5341 = vpack.c.b16 %v4845, %v4841
        %v5342 = vpack.c.b16 %v4846, %v4842
        %v5343 = vpack.c.b16 %v4847, %v4843
        %v5344 = vpack.c.b16 %v4852, %v4848
        %v5345 = vpack.c.b16 %v4853, %v4849
        %v5346 = vpack.c.b16 %v4854, %v4850
        %v5347 = vpack.c.b16 %v4855, %v4851
        %v5348 = vpack.c.b16 %v4860, %v4856
        %v5349 = vpack.c.b16 %v4861, %v4857
        %v5350 = vpack.c.b16 %v4862, %v4858
        %v5351 = vpack.c.b16 %v4863, %v4859
        %v5352 = vpack.c.b16 %v4868, %v4864
        %v5353 = vpack.c.b16 %v4869, %v4865
        %v5354 = vpack.c.b16 %v4870, %v4866
        %v5355 = vpack.c.b16 %v4871, %v4867
        %v5356 = vpack.c.b16 %v4876, %v4872
        %v5357 = vpack.c.b16 %v4877, %v4873
        %v5358 = vpack.c.b16 %v4878, %v4874
        %v5359 = vpack.c.b16 %v4879, %v4875
        %v5360 = vpack.c.b16 %v4884, %v4880
        %v5361 = vpack.c.b16 %v4885, %v4881
        %v5362 = vpack.c.b16 %v4886, %v4882
        %v5363 = vpack.c.b16 %v4887, %v4883
        %v5364 = vpack.c.b16 %v4892, %v4888
        %v5365 = vpack.c.b16 %v4893, %v4889
        %v5366 = vpack.c.b16 %v4894, %v4890
        %v5367 = vpack.c.b16 %v4895, %v4891
        %v5368 = vpack.c.b16 %v4900, %v4896
        %v5369 = vpack.c.b16 %v4901, %v4897
        %v5370 = vpack.c.b16 %v4902, %v4898
        %v5371 = vpack.c.b16 %v4903, %v4899
        %v5372 = vpack.c.b16 %v4908, %v4904
        %v5373 = vpack.c.b16 %v4909, %v4905
        %v5374 = vpack.c.b16 %v4910, %v4906
        %v5375 = vpack.c.b16 %v4911, %v4907
        %v5376 = vpack.c.b16 %v4916, %v4912
        %v5377 = vpack.c.b16 %v4917, %v4913
        %v5378 = vpack.c.b16 %v4918, %v4914
        %v5379 = vpack.c.b16 %v4919, %v4915
        %v5380 = vpack.c.b16 %v4924, %v4920
        %v5381 = vpack.c.b16 %v4925, %v4921
        %v5382 = vpack.c.b16 %v4926, %v4922
        %v5383 = vpack.c.b16 %v4927, %v4923
        %v5384 = vpack.c.b16 %v4932, %v4928
        %v5385 = vpack.c.b16 %v4933, %v4929
        %v5386 = vpack.c.b16 %v4934, %v4930
        %v5387 = vpack.c.b16 %v4935, %v4931
        %v5388 = vpack.c.b16 %v4940, %v4936
        %v5389 = vpack.c.b16 %v4941, %v4937
        %v5390 = vpack.c.b16 %v4942, %v4938
        %v5391 = vpack.c.b16 %v4943, %v4939
        %v5392 = vpack.c.b16 %v4948, %v4944
        %v5393 = vpack.c.b16 %v4949, %v4945
        %v5394 = vpack.c.b16 %v4950, %v4946
        %v5395 = vpack.c.b16 %v4951, %v4947
        %v5396 = vpack.c.b16 %v4956, %v4952
        %v5397 = vpack.c.b16 %v4957, %v4953
        %v5398 = vpack.c.b16 %v4958, %v4954
        %v5399 = vpack.c.b16 %v4959, %v4955
        %v5400 = vpack.c.b16 %v4964, %v4960
        %v5401 = vpack.c.b16 %v4965, %v4961
        %v5402 = vpack.c.b16 %v4966, %v4962
        %v5403 = vpack.c.b16 %v4967, %v4963
        %v5404 = vpack.c.b16 %v4972, %v4968
        %v5405 = vpack.c.b16 %v4973, %v4969
        %v5406 = vpack.c.b16 %v4974, %v4970
        %v5407 = vpack.c.b16 %v4975, %v4971
        %v5408 = vpack.c.b16 %v4980, %v4976
        %v5409 = vpack.c.b16 %v4981, %v4977
        %v5410 = vpack.c.b16 %v4982, %v4978
        %v5411 = vpack.c.b16 %v4983, %v4979
        %v5412 = vpack.c.b16 %v4988, %v4984
        %v5413 = vpack.c.b16 %v4989, %v4985
        %v5414 = vpack.c.b16 %v4990, %v4986
        %v5415 = vpack.c.b16 %v4991, %v4987
        %v5416 = vpack.c.b16 %v4996, %v4992
        %v5417 = vpack.c.b16 %v4997, %v4993
        %v5418 = vpack.c.b16 %v4998, %v4994
        %v5419 = vpack.c.b16 %v4999, %v4995
        %v5420 = vpack.c.b16 %v5004, %v5000
        %v5421 = vpack.c.b16 %v5005, %v5001
        %v5422 = vpack.c.b16 %v5006, %v5002
        %v5423 = vpack.c.b16 %v5007, %v5003
        %v5424 = vpack.c.b16 %v5012, %v5008
        %v5425 = vpack.c.b16 %v5013, %v5009
        %v5426 = vpack.c.b16 %v5014, %v5010
        %v5427 = vpack.c.b16 %v5015, %v5011
        %v5428 = vpack.c.b16 %v5020, %v5016
        %v5429 = vpack.c.b16 %v5021, %v5017
        %v5430 = vpack.c.b16 %v5022, %v5018
        %v5431 = vpack.c.b16 %v5023, %v5019
        %v5432 = vpack.c.b16 %v5028, %v5024
        %v5433 = vpack.c.b16 %v5029, %v5025
        %v5434 = vpack.c.b16 %v5030, %v5026
        %v5435 = vpack.c.b16 %v5031, %v5027
        %v5436 = vpack.c.b16 %v5036, %v5032
        %v5437 = vpack.c.b16 %v5037, %v5033
        %v5438 = vpack.c.b16 %v5038, %v5034
        %v5439 = vpack.c.b16 %v5039, %v5035
        %v5440 = vpack.c.b16 %v5044, %v5040
        %v5441 = vpack.c.b16 %v5045, %v5041
        %v5442 = vpack.c.b16 %v5046, %v5042
        %v5443 = vpack.c.b16 %v5047, %v5043
        %v5444 = vpack.c.b16 %v5052, %v5048
        %v5445 = vpack.c.b16 %v5053, %v5049
        %v5446 = vpack.c.b16 %v5054, %v5050
        %v5447 = vpack.c.b16 %v5055, %v5051
        %v5448 = vpack.c.b16 %v5060, %v5056
        %v5449 = vpack.c.b16 %v5061, %v5057
        %v5450 = vpack.c.b16 %v5062, %v5058
        %v5451 = vpack.c.b16 %v5063, %v5059
        %v5452 = vpack.c.b16 %v5068, %v5064
        %v5453 = vpack.c.b16 %v5069, %v5065
        %v5454 = vpack.c.b16 %v5070, %v5066
        %v5455 = vpack.c.b16 %v5071, %v5067
        %v5456 = vpack.c.b16 %v5076, %v5072
        %v5457 = vpack.c.b16 %v5077, %v5073
        %v5458 = vpack.c.b16 %v5078, %v5074
        %v5459 = vpack.c.b16 %v5079, %v5075
        %v5460 = vpack.c.b16 %v5084, %v5080
        %v5461 = vpack.c.b16 %v5085, %v5081
        %v5462 = vpack.c.b16 %v5086, %v5082
        %v5463 = vpack.c.b16 %v5087, %v5083
        %v5464 = vpack.c.b16 %v5092, %v5088
        %v5465 = vpack.c.b16 %v5093, %v5089
        %v5466 = vpack.c.b16 %v5094, %v5090
        %v5467 = vpack.c.b16 %v5095, %v5091
        %v5468 = vpack.c.b16 %v5100, %v5096
        %v5469 = vpack.c.b16 %v5101, %v5097
        %v5470 = vpack.c.b16 %v5102, %v5098
        %v5471 = vpack.c.b16 %v5103, %v5099
        %v5472 = vpack.c.b16 %v5108, %v5104
        %v5473 = vpack.c.b16 %v5109, %v5105
        %v5474 = vpack.c.b16 %v5110, %v5106
        %v5475 = vpack.c.b16 %v5111, %v5107
        %v5476 = vpack.c.b16 %v5116, %v5112
        %v5477 = vpack.c.b16 %v5117, %v5113
        %v5478 = vpack.c.b16 %v5118, %v5114
        %v5479 = vpack.c.b16 %v5119, %v5115
        %v5480 = vpack.c.b16 %v5124, %v5120
        %v5481 = vpack.c.b16 %v5125, %v5121
        %v5482 = vpack.c.b16 %v5126, %v5122
        %v5483 = vpack.c.b16 %v5127, %v5123
        %v5484 = vpack.c.b16 %v5132, %v5128
        %v5485 = vpack.c.b16 %v5133, %v5129
        %v5486 = vpack.c.b16 %v5134, %v5130
        %v5487 = vpack.c.b16 %v5135, %v5131
        %v5488 = vpack.c.b16 %v5140, %v5136
        %v5489 = vpack.c.b16 %v5141, %v5137
        %v5490 = vpack.c.b16 %v5142, %v5138
        %v5491 = vpack.c.b16 %v5143, %v5139
        %v5492 = vpack.c.b16 %v5148, %v5144
        %v5493 = vpack.c.b16 %v5149, %v5145
        %v5494 = vpack.c.b16 %v5150, %v5146
        %v5495 = vpack.c.b16 %v5151, %v5147
        %v5496 = vpack.c.b16 %v5156, %v5152
        %v5497 = vpack.c.b16 %v5157, %v5153
        %v5498 = vpack.c.b16 %v5158, %v5154
        %v5499 = vpack.c.b16 %v5159, %v5155
        %v5500 = vpack.c.b16 %v5164, %v5160
        %v5501 = vpack.c.b16 %v5165, %v5161
        %v5502 = vpack.c.b16 %v5166, %v5162
        %v5503 = vpack.c.b16 %v5167, %v5163
        %v5504 = vpack.c.b16 %v5172, %v5168
        %v5505 = vpack.c.b16 %v5173, %v5169
        %v5506 = vpack.c.b16 %v5174, %v5170
        %v5507 = vpack.c.b16 %v5175, %v5171
        %v5508 = vpack.c.b16 %v5180, %v5176
        %v5509 = vpack.c.b16 %v5181, %v5177
        %v5510 = vpack.c.b16 %v5182, %v5178
        %v5511 = vpack.c.b16 %v5183, %v5179
        %v5512 = vpack.c.b16 %v5188, %v5184
        %v5513 = vpack.c.b16 %v5189, %v5185
        %v5514 = vpack.c.b16 %v5190, %v5186
        %v5515 = vpack.c.b16 %v5191, %v5187
        %v5516 = vpack.c.b16 %v5196, %v5192
        %v5517 = vpack.c.b16 %v5197, %v5193
        %v5518 = vpack.c.b16 %v5198, %v5194
        %v5519 = vpack.c.b16 %v5199, %v5195
        %v5520 = vpack.c.b16 %v5204, %v5200
        %v5521 = vpack.c.b16 %v5205, %v5201
        %v5522 = vpack.c.b16 %v5206, %v5202
        %v5523 = vpack.c.b16 %v5207, %v5203
        %v5524 = vpack.c.b16 %v5212, %v5208
        %v5525 = vpack.c.b16 %v5213, %v5209
        %v5526 = vpack.c.b16 %v5214, %v5210
        %v5527 = vpack.c.b16 %v5215, %v5211
        %v5528 = vpack.c.b16 %v5220, %v5216
        %v5529 = vpack.c.b16 %v5221, %v5217
        %v5530 = vpack.c.b16 %v5222, %v5218
        %v5531 = vpack.c.b16 %v5223, %v5219
        %v5532 = vpack.c.b16 %v5228, %v5224
        %v5533 = vpack.c.b16 %v5229, %v5225
        %v5534 = vpack.c.b16 %v5230, %v5226
        %v5535 = vpack.c.b16 %v5231, %v5227
        %v5536 = vpack.c.b16 %v5236, %v5232
        %v5537 = vpack.c.b16 %v5237, %v5233
        %v5538 = vpack.c.b16 %v5238, %v5234
        %v5539 = vpack.c.b16 %v5239, %v5235
        %v5540 = vpack.c.b16 %v5244, %v5240
        %v5541 = vpack.c.b16 %v5245, %v5241
        %v5542 = vpack.c.b16 %v5246, %v5242
        %v5543 = vpack.c.b16 %v5247, %v5243
        %v5544 = vpack.c.b16 %v5252, %v5248
        %v5545 = vpack.c.b16 %v5253, %v5249
        %v5546 = vpack.c.b16 %v5254, %v5250
        %v5547 = vpack.c.b16 %v5255, %v5251
        %v5548 = vpack.c.b16 %v5260, %v5256
        %v5549 = vpack.c.b16 %v5261, %v5257
        %v5550 = vpack.c.b16 %v5262, %v5258
        %v5551 = vpack.c.b16 %v5263, %v5259
        %v5552 = vpack.c.b16 %v5268, %v5264
        %v5553 = vpack.c.b16 %v5269, %v5265
        %v5554 = vpack.c.b16 %v5270, %v5266
        %v5555 = vpack.c.b16 %v5271, %v5267
        %v5556 = vpack.c.b16 %v5276, %v5272
        %v5557 = vpack.c.b16 %v5277, %v5273
        %v5558 = vpack.c.b16 %v5278, %v5274
        %v5559 = vpack.c.b16 %v5279, %v5275
        %v5560 = vpack.c.b16 %v5284, %v5280
        %v5561 = vpack.c.b16 %v5285, %v5281
        %v5562 = vpack.c.b16 %v5286, %v5282
        %v5563 = vpack.c.b16 %v5287, %v5283
        %v5564 = vpack.c.b16 %v5292, %v5288
        %v5565 = vpack.c.b16 %v5293, %v5289
        %v5566 = vpack.c.b16 %v5294, %v5290
        %v5567 = vpack.c.b16 %v5295, %v5291
        %v5568 = vpack.c.b16 %v5300, %v5296
        %v5569 = vpack.c.b16 %v5301, %v5297
        %v5570 = vpack.c.b16 %v5302, %v5298
        %v5571 = vpack.c.b16 %v5303, %v5299
        %v5572 = vpack.c.b16 %v5308, %v5304
        %v5573 = vpack.c.b16 %v5309, %v5305
        %v5574 = vpack.c.b16 %v5310, %v5306
        %v5575 = vpack.c.b16 %v5311, %v5307
        %v5576 = vpack.c.b16 %v5316, %v5312
        %v5577 = vpack.c.b16 %v5317, %v5313
        %v5578 = vpack.c.b16 %v5318, %v5314
        %v5579 = vpack.c.b16 %v5319, %v5315
        %v5580 = vpack.c.b16 %v5324, %v5320
        %v5581 = vpack.c.b16 %v5325, %v5321
        %v5582 = vpack.c.b16 %v5326, %v5322
        %v5583 = vpack.c.b16 %v5327, %v5323
        %5840 = vmatprep.subr.bf16.mxu0 %v5329
        %5841 = vmatpush1.bf16.msra.mxu0 %v5328
        %5842 = vmatprep.subr.bf16.mxu0 %v5333
        %5843 = vmatpush1.bf16.msra.mxu0 %v5332
        %5844 = vmatprep.subr.bf16.mxu0 %v5337
        %5845 = vmatpush1.bf16.msra.mxu0 %v5336
        %5846 = vmatprep.subr.bf16.mxu0 %v5341
        %5847 = vmatpush1.bf16.msra.mxu0 %v5340
        %5848 = vmatprep.subr.bf16.mxu0 %v5345
        %5849 = vmatpush1.bf16.msra.mxu0 %v5344
        %5850 = vmatprep.subr.bf16.mxu0 %v5349
        %5851 = vmatpush1.bf16.msra.mxu0 %v5348
        %5852 = vmatprep.subr.bf16.mxu0 %v5353
        %5853 = vmatpush1.bf16.msra.mxu0 %v5352
        %5854 = vmatprep.subr.bf16.mxu0 %v5357
        %5855 = vmatpush1.bf16.msra.mxu0 %v5356
        %5856 = vmatprep.subr.bf16.mxu0 %v5361
        %5857 = vmatpush1.bf16.msra.mxu0 %v5360
        %5858 = vmatprep.subr.bf16.mxu0 %v5365
        %5859 = vmatpush1.bf16.msra.mxu0 %v5364
        %5860 = vmatprep.subr.bf16.mxu0 %v5369
        %5861 = vmatpush1.bf16.msra.mxu0 %v5368
        %5862 = vmatprep.subr.bf16.mxu0 %v5373
        %5863 = vmatpush1.bf16.msra.mxu0 %v5372
        %5864 = vmatprep.subr.bf16.mxu0 %v5377
        %5865 = vmatpush1.bf16.msra.mxu0 %v5376
        %5866 = vmatprep.subr.bf16.mxu0 %v5381
        %5867 = vmatpush1.bf16.msra.mxu0 %v5380
        %5868 = vmatprep.subr.bf16.mxu0 %v5385
        %5869 = vmatpush1.bf16.msra.mxu0 %v5384
        %5870 = vmatprep.subr.bf16.mxu0 %v5389
        %5871 = vmatpush1.bf16.msra.mxu0 %v5388
        %5872 = vmatprep.mubr.bf16.mxu0 %v4532
        %5873 = vmatmul.mubr.bf16.gmra.mrb[0].mxu0 %v4531
        %v5874 = vpop.f32.mrb[0].mxu0
        %v5875 = vadd.f32 %v4543, %v5874
        %v5876 = vpop.f32.mrb[0].mxu0
        %v5877 = vadd.f32 %v4547, %v5876
        %v5878 = vpop.f32.mrb[0].mxu0
        %v5879 = vadd.f32 %v4543, %v5878
        %v5880 = vpop.f32.mrb[0].mxu0
        %v5881 = vadd.f32 %v4547, %v5880
        %5882 = vdwg.mxu0
        %5883 = vmatprep.subr.bf16.mxu0 %v5393
        %5884 = vmatpush1.bf16.msra.mxu0 %v5392
        %5885 = vmatprep.subr.bf16.mxu0 %v5397
        %5886 = vmatpush1.bf16.msra.mxu0 %v5396
        %5887 = vmatprep.subr.bf16.mxu0 %v5401
        %5888 = vmatpush1.bf16.msra.mxu0 %v5400
        %5889 = vmatprep.subr.bf16.mxu0 %v5405
        %5890 = vmatpush1.bf16.msra.mxu0 %v5404
        %5891 = vmatprep.subr.bf16.mxu0 %v5409
        %5892 = vmatpush1.bf16.msra.mxu0 %v5408
        %5893 = vmatprep.subr.bf16.mxu0 %v5413
        %5894 = vmatpush1.bf16.msra.mxu0 %v5412
        %5895 = vmatprep.subr.bf16.mxu0 %v5417
        %5896 = vmatpush1.bf16.msra.mxu0 %v5416
        %5897 = vmatprep.subr.bf16.mxu0 %v5421
        %5898 = vmatpush1.bf16.msra.mxu0 %v5420
        %5899 = vmatprep.subr.bf16.mxu0 %v5425
        %5900 = vmatpush1.bf16.msra.mxu0 %v5424
        %5901 = vmatprep.subr.bf16.mxu0 %v5429
        %5902 = vmatpush1.bf16.msra.mxu0 %v5428
        %5903 = vmatprep.subr.bf16.mxu0 %v5433
        %5904 = vmatpush1.bf16.msra.mxu0 %v5432
        %5905 = vmatprep.subr.bf16.mxu0 %v5437
        %5906 = vmatpush1.bf16.msra.mxu0 %v5436
        %5907 = vmatprep.subr.bf16.mxu0 %v5441
        %5908 = vmatpush1.bf16.msra.mxu0 %v5440
        %5909 = vmatprep.subr.bf16.mxu0 %v5445
        %5910 = vmatpush1.bf16.msra.mxu0 %v5444
        %5911 = vmatprep.subr.bf16.mxu0 %v5449
        %5912 = vmatpush1.bf16.msra.mxu0 %v5448
        %5913 = vmatprep.subr.bf16.mxu0 %v5453
        %5914 = vmatpush1.bf16.msra.mxu0 %v5452
        %5915 = vmatprep.mubr.bf16.mxu0 %v4534
        %5916 = vmatmul.mubr.bf16.gmra.mrb[0].mxu0 %v4533
        %v5917 = vpop.f32.mrb[0].mxu0
        %v5918 = vadd.f32 %v5875, %v5917
        %v5919 = vpop.f32.mrb[0].mxu0
        %v5920 = vadd.f32 %v5877, %v5919
        %v5921 = vpop.f32.mrb[0].mxu0
        %v5922 = vadd.f32 %v5879, %v5921
        %v5923 = vpop.f32.mrb[0].mxu0
        %v5924 = vadd.f32 %v5881, %v5923
        %5925 = vdwg.mxu0
        %5926 = vmatprep.subr.bf16.mxu0 %v5457
        %5927 = vmatpush1.bf16.msra.mxu0 %v5456
        %5928 = vmatprep.subr.bf16.mxu0 %v5461
        %5929 = vmatpush1.bf16.msra.mxu0 %v5460
        %5930 = vmatprep.subr.bf16.mxu0 %v5465
        %5931 = vmatpush1.bf16.msra.mxu0 %v5464
        %5932 = vmatprep.subr.bf16.mxu0 %v5469
        %5933 = vmatpush1.bf16.msra.mxu0 %v5468
        %5934 = vmatprep.subr.bf16.mxu0 %v5473
        %5935 = vmatpush1.bf16.msra.mxu0 %v5472
        %5936 = vmatprep.subr.bf16.mxu0 %v5477
        %5937 = vmatpush1.bf16.msra.mxu0 %v5476
        %5938 = vmatprep.subr.bf16.mxu0 %v5481
        %5939 = vmatpush1.bf16.msra.mxu0 %v5480
        %5940 = vmatprep.subr.bf16.mxu0 %v5485
        %5941 = vmatpush1.bf16.msra.mxu0 %v5484
        %5942 = vmatprep.subr.bf16.mxu0 %v5489
        %5943 = vmatpush1.bf16.msra.mxu0 %v5488
        %5944 = vmatprep.subr.bf16.mxu0 %v5493
        %5945 = vmatpush1.bf16.msra.mxu0 %v5492
        %5946 = vmatprep.subr.bf16.mxu0 %v5497
        %5947 = vmatpush1.bf16.msra.mxu0 %v5496
        %5948 = vmatprep.subr.bf16.mxu0 %v5501
        %5949 = vmatpush1.bf16.msra.mxu0 %v5500
        %5950 = vmatprep.subr.bf16.mxu0 %v5505
        %5951 = vmatpush1.bf16.msra.mxu0 %v5504
        %5952 = vmatprep.subr.bf16.mxu0 %v5509
        %5953 = vmatpush1.bf16.msra.mxu0 %v5508
        %5954 = vmatprep.subr.bf16.mxu0 %v5513
        %5955 = vmatpush1.bf16.msra.mxu0 %v5512
        %5956 = vmatprep.subr.bf16.mxu0 %v5517
        %5957 = vmatpush1.bf16.msra.mxu0 %v5516
        %5958 = vmatprep.mubr.bf16.mxu0 %v4536
        %5959 = vmatmul.mubr.bf16.gmra.mrb[0].mxu0 %v4535
        %v5960 = vpop.f32.mrb[0].mxu0
        %v5961 = vadd.f32 %v5918, %v5960
        %v5962 = vpop.f32.mrb[0].mxu0
        %v5963 = vadd.f32 %v5920, %v5962
        %v5964 = vpop.f32.mrb[0].mxu0
        %v5965 = vadd.f32 %v5922, %v5964
        %v5966 = vpop.f32.mrb[0].mxu0
        %v5967 = vadd.f32 %v5924, %v5966
        %5968 = vdwg.mxu0
        %5969 = vmatprep.subr.bf16.mxu0 %v5521
        %5970 = vmatpush1.bf16.msra.mxu0 %v5520
        %5971 = vmatprep.subr.bf16.mxu0 %v5525
        %5972 = vmatpush1.bf16.msra.mxu0 %v5524
        %5973 = vmatprep.subr.bf16.mxu0 %v5529
        %5974 = vmatpush1.bf16.msra.mxu0 %v5528
        %5975 = vmatprep.subr.bf16.mxu0 %v5533
        %5976 = vmatpush1.bf16.msra.mxu0 %v5532
        %5977 = vmatprep.subr.bf16.mxu0 %v5537
        %5978 = vmatpush1.bf16.msra.mxu0 %v5536
        %5979 = vmatprep.subr.bf16.mxu0 %v5541
        %5980 = vmatpush1.bf16.msra.mxu0 %v5540
        %5981 = vmatprep.subr.bf16.mxu0 %v5545
        %5982 = vmatpush1.bf16.msra.mxu0 %v5544
        %5983 = vmatprep.subr.bf16.mxu0 %v5549
        %5984 = vmatpush1.bf16.msra.mxu0 %v5548
        %5985 = vmatprep.subr.bf16.mxu0 %v5553
        %5986 = vmatpush1.bf16.msra.mxu0 %v5552
        %5987 = vmatprep.subr.bf16.mxu0 %v5557
        %5988 = vmatpush1.bf16.msra.mxu0 %v5556
        %5989 = vmatprep.subr.bf16.mxu0 %v5561
        %5990 = vmatpush1.bf16.msra.mxu0 %v5560
        %5991 = vmatprep.subr.bf16.mxu0 %v5565
        %5992 = vmatpush1.bf16.msra.mxu0 %v5564
        %5993 = vmatprep.subr.bf16.mxu0 %v5569
        %5994 = vmatpush1.bf16.msra.mxu0 %v5568
        %5995 = vmatprep.subr.bf16.mxu0 %v5573
        %5996 = vmatpush1.bf16.msra.mxu0 %v5572
        %5997 = vmatprep.subr.bf16.mxu0 %v5577
        %5998 = vmatpush1.bf16.msra.mxu0 %v5576
        %5999 = vmatprep.subr.bf16.mxu0 %v5581
        %6000 = vmatpush1.bf16.msra.mxu0 %v5580
        %6001 = vmatprep.mubr.bf16.mxu0 %v4538
        %6002 = vmatmul.mubr.bf16.gmra.mrb[0].mxu0 %v4537
        %v6003 = vpop.f32.mrb[0].mxu0
        %v6004 = vadd.f32 %v5961, %v6003
        %v6005 = vpop.f32.mrb[0].mxu0
        %v6006 = vadd.f32 %v5963, %v6005
        %v6007 = vpop.f32.mrb[0].mxu0
        %v6008 = vadd.f32 %v5965, %v6007
        %v6009 = vpop.f32.mrb[0].mxu0
        %v6010 = vadd.f32 %v5967, %v6009
        %6011 = vdwg.mxu0
        %6012 = vmatprep.subr.bf16.mxu0 %v5331
        %6013 = vmatpush1.bf16.msra.mxu0 %v5330
        %6014 = vmatprep.subr.bf16.mxu0 %v5335
        %6015 = vmatpush1.bf16.msra.mxu0 %v5334
        %6016 = vmatprep.subr.bf16.mxu0 %v5339
        %6017 = vmatpush1.bf16.msra.mxu0 %v5338
        %6018 = vmatprep.subr.bf16.mxu0 %v5343
        %6019 = vmatpush1.bf16.msra.mxu0 %v5342
        %6020 = vmatprep.subr.bf16.mxu0 %v5347
        %6021 = vmatpush1.bf16.msra.mxu0 %v5346
        %6022 = vmatprep.subr.bf16.mxu0 %v5351
        %6023 = vmatpush1.bf16.msra.mxu0 %v5350
        %6024 = vmatprep.subr.bf16.mxu0 %v5355
        %6025 = vmatpush1.bf16.msra.mxu0 %v5354
        %6026 = vmatprep.subr.bf16.mxu0 %v5359
        %6027 = vmatpush1.bf16.msra.mxu0 %v5358
        %6028 = vmatprep.subr.bf16.mxu0 %v5363
        %6029 = vmatpush1.bf16.msra.mxu0 %v5362
        %6030 = vmatprep.subr.bf16.mxu0 %v5367
        %6031 = vmatpush1.bf16.msra.mxu0 %v5366
        %6032 = vmatprep.subr.bf16.mxu0 %v5371
        %6033 = vmatpush1.bf16.msra.mxu0 %v5370
        %6034 = vmatprep.subr.bf16.mxu0 %v5375
        %6035 = vmatpush1.bf16.msra.mxu0 %v5374
        %6036 = vmatprep.subr.bf16.mxu0 %v5379
        %6037 = vmatpush1.bf16.msra.mxu0 %v5378
        %6038 = vmatprep.subr.bf16.mxu0 %v5383
        %6039 = vmatpush1.bf16.msra.mxu0 %v5382
        %6040 = vmatprep.subr.bf16.mxu0 %v5387
        %6041 = vmatpush1.bf16.msra.mxu0 %v5386
        %6042 = vmatprep.subr.bf16.mxu0 %v5391
        %6043 = vmatpush1.bf16.msra.mxu0 %v5390
        %6044 = vmatprep.mubr.bf16.mxu0 %v4532
        %6045 = vmatmul.mubr.bf16.gmra.mrb[0].mxu0 %v4531
        %v6046 = vpop.f32.mrb[0].mxu0
        %v6047 = vadd.f32 %v4551, %v6046
        %v6048 = vpop.f32.mrb[0].mxu0
        %v6049 = vadd.f32 %v4555, %v6048
        %v6050 = vpop.f32.mrb[0].mxu0
        %v6051 = vadd.f32 %v4551, %v6050
        %v6052 = vpop.f32.mrb[0].mxu0
        %v6053 = vadd.f32 %v4555, %v6052
        %6054 = vdwg.mxu0
        %6055 = vmatprep.subr.bf16.mxu0 %v5395
        %6056 = vmatpush1.bf16.msra.mxu0 %v5394
        %6057 = vmatprep.subr.bf16.mxu0 %v5399
        %6058 = vmatpush1.bf16.msra.mxu0 %v5398
        %6059 = vmatprep.subr.bf16.mxu0 %v5403
        %6060 = vmatpush1.bf16.msra.mxu0 %v5402
        %6061 = vmatprep.subr.bf16.mxu0 %v5407
        %6062 = vmatpush1.bf16.msra.mxu0 %v5406
        %6063 = vmatprep.subr.bf16.mxu0 %v5411
        %6064 = vmatpush1.bf16.msra.mxu0 %v5410
        %6065 = vmatprep.subr.bf16.mxu0 %v5415
        %6066 = vmatpush1.bf16.msra.mxu0 %v5414
        %6067 = vmatprep.subr.bf16.mxu0 %v5419
        %6068 = vmatpush1.bf16.msra.mxu0 %v5418
        %6069 = vmatprep.subr.bf16.mxu0 %v5423
        %6070 = vmatpush1.bf16.msra.mxu0 %v5422
        %6071 = vmatprep.subr.bf16.mxu0 %v5427
        %6072 = vmatpush1.bf16.msra.mxu0 %v5426
        %6073 = vmatprep.subr.bf16.mxu0 %v5431
        %6074 = vmatpush1.bf16.msra.mxu0 %v5430
        %6075 = vmatprep.subr.bf16.mxu0 %v5435
        %6076 = vmatpush1.bf16.msra.mxu0 %v5434
        %6077 = vmatprep.subr.bf16.mxu0 %v5439
        %6078 = vmatpush1.bf16.msra.mxu0 %v5438
        %6079 = vmatprep.subr.bf16.mxu0 %v5443
        %6080 = vmatpush1.bf16.msra.mxu0 %v5442
        %6081 = vmatprep.subr.bf16.mxu0 %v5447
        %6082 = vmatpush1.bf16.msra.mxu0 %v5446
        %6083 = vmatprep.subr.bf16.mxu0 %v5451
        %6084 = vmatpush1.bf16.msra.mxu0 %v5450
        %6085 = vmatprep.subr.bf16.mxu0 %v5455
        %6086 = vmatpush1.bf16.msra.mxu0 %v5454
        %6087 = vmatprep.mubr.bf16.mxu0 %v4534
        %6088 = vmatmul.mubr.bf16.gmra.mrb[0].mxu0 %v4533
        %v6089 = vpop.f32.mrb[0].mxu0
        %v6090 = vadd.f32 %v6047, %v6089
        %v6091 = vpop.f32.mrb[0].mxu0
        %v6092 = vadd.f32 %v6049, %v6091
        %v6093 = vpop.f32.mrb[0].mxu0
        %v6094 = vadd.f32 %v6051, %v6093
        %v6095 = vpop.f32.mrb[0].mxu0
        %v6096 = vadd.f32 %v6053, %v6095
        %6097 = vdwg.mxu0
        %6098 = vmatprep.subr.bf16.mxu0 %v5459
        %6099 = vmatpush1.bf16.msra.mxu0 %v5458
        %6100 = vmatprep.subr.bf16.mxu0 %v5463
        %6101 = vmatpush1.bf16.msra.mxu0 %v5462
        %6102 = vmatprep.subr.bf16.mxu0 %v5467
        %6103 = vmatpush1.bf16.msra.mxu0 %v5466
        %6104 = vmatprep.subr.bf16.mxu0 %v5471
        %6105 = vmatpush1.bf16.msra.mxu0 %v5470
        %6106 = vmatprep.subr.bf16.mxu0 %v5475
        %6107 = vmatpush1.bf16.msra.mxu0 %v5474
        %6108 = vmatprep.subr.bf16.mxu0 %v5479
        %6109 = vmatpush1.bf16.msra.mxu0 %v5478
        %6110 = vmatprep.subr.bf16.mxu0 %v5483
        %6111 = vmatpush1.bf16.msra.mxu0 %v5482
        %6112 = vmatprep.subr.bf16.mxu0 %v5487
        %6113 = vmatpush1.bf16.msra.mxu0 %v5486
        %6114 = vmatprep.subr.bf16.mxu0 %v5491
        %6115 = vmatpush1.bf16.msra.mxu0 %v5490
        %6116 = vmatprep.subr.bf16.mxu0 %v5495
        %6117 = vmatpush1.bf16.msra.mxu0 %v5494
        %6118 = vmatprep.subr.bf16.mxu0 %v5499
        %6119 = vmatpush1.bf16.msra.mxu0 %v5498
        %6120 = vmatprep.subr.bf16.mxu0 %v5503
        %6121 = vmatpush1.bf16.msra.mxu0 %v5502
        %6122 = vmatprep.subr.bf16.mxu0 %v5507
        %6123 = vmatpush1.bf16.msra.mxu0 %v5506
        %6124 = vmatprep.subr.bf16.mxu0 %v5511
        %6125 = vmatpush1.bf16.msra.mxu0 %v5510
        %6126 = vmatprep.subr.bf16.mxu0 %v5515
        %6127 = vmatpush1.bf16.msra.mxu0 %v5514
        %6128 = vmatprep.subr.bf16.mxu0 %v5519
        %6129 = vmatpush1.bf16.msra.mxu0 %v5518
        %6130 = vmatprep.mubr.bf16.mxu0 %v4536
        %6131 = vmatmul.mubr.bf16.gmra.mrb[0].mxu0 %v4535
        %v6132 = vpop.f32.mrb[0].mxu0
        %v6133 = vadd.f32 %v6090, %v6132
        %v6134 = vpop.f32.mrb[0].mxu0
        %v6135 = vadd.f32 %v6092, %v6134
        %v6136 = vpop.f32.mrb[0].mxu0
        %v6137 = vadd.f32 %v6094, %v6136
        %v6138 = vpop.f32.mrb[0].mxu0
        %v6139 = vadd.f32 %v6096, %v6138
        %6140 = vdwg.mxu0
        %6141 = vmatprep.subr.bf16.mxu0 %v5523
        %6142 = vmatpush1.bf16.msra.mxu0 %v5522
        %6143 = vmatprep.subr.bf16.mxu0 %v5527
        %6144 = vmatpush1.bf16.msra.mxu0 %v5526
        %6145 = vmatprep.subr.bf16.mxu0 %v5531
        %6146 = vmatpush1.bf16.msra.mxu0 %v5530
        %6147 = vmatprep.subr.bf16.mxu0 %v5535
        %6148 = vmatpush1.bf16.msra.mxu0 %v5534
        %6149 = vmatprep.subr.bf16.mxu0 %v5539
        %6150 = vmatpush1.bf16.msra.mxu0 %v5538
        %6151 = vmatprep.subr.bf16.mxu0 %v5543
        %6152 = vmatpush1.bf16.msra.mxu0 %v5542
        %6153 = vmatprep.subr.bf16.mxu0 %v5547
        %6154 = vmatpush1.bf16.msra.mxu0 %v5546
        %6155 = vmatprep.subr.bf16.mxu0 %v5551
        %6156 = vmatpush1.bf16.msra.mxu0 %v5550
        %6157 = vmatprep.subr.bf16.mxu0 %v5555
        %6158 = vmatpush1.bf16.msra.mxu0 %v5554
        %6159 = vmatprep.subr.bf16.mxu0 %v5559
        %6160 = vmatpush1.bf16.msra.mxu0 %v5558
        %6161 = vmatprep.subr.bf16.mxu0 %v5563
        %6162 = vmatpush1.bf16.msra.mxu0 %v5562
        %6163 = vmatprep.subr.bf16.mxu0 %v5567
        %6164 = vmatpush1.bf16.msra.mxu0 %v5566
        %6165 = vmatprep.subr.bf16.mxu0 %v5571
        %6166 = vmatpush1.bf16.msra.mxu0 %v5570
        %6167 = vmatprep.subr.bf16.mxu0 %v5575
        %6168 = vmatpush1.bf16.msra.mxu0 %v5574
        %6169 = vmatprep.subr.bf16.mxu0 %v5579
        %6170 = vmatpush1.bf16.msra.mxu0 %v5578
        %6171 = vmatprep.subr.bf16.mxu0 %v5583
        %6172 = vmatpush1.bf16.msra.mxu0 %v5582
        %6173 = vmatprep.mubr.bf16.mxu0 %v4538
        %6174 = vmatmul.mubr.bf16.gmra.mrb[0].mxu0 %v4537
        %v6175 = vpop.f32.mrb[0].mxu0
        %v6176 = vadd.f32 %v6133, %v6175
        %v6177 = vpop.f32.mrb[0].mxu0
        %v6178 = vadd.f32 %v6135, %v6177
        %v6179 = vpop.f32.mrb[0].mxu0
        %v6180 = vadd.f32 %v6137, %v6179
        %v6181 = vpop.f32.mrb[0].mxu0
        %v6182 = vadd.f32 %v6139, %v6181
        %6183 = vdwg.mxu0
        %vm6184 = vcmp.gt.f32.partialorder %v6004, 0.0
        %vm6185 = vcmp.gt.f32.partialorder %v6006, 0.0
        %vm6186 = vcmp.gt.f32.partialorder %v6176, 0.0
        %vm6187 = vcmp.gt.f32.partialorder %v6178, 0.0
        %vm6188 = vcmp.gt.f32.partialorder %v6008, 0.0
        %vm6189 = vcmp.gt.f32.partialorder %v6010, 0.0
        %vm6190 = vcmp.gt.f32.partialorder %v6180, 0.0
        %vm6191 = vcmp.gt.f32.partialorder %v6182, 0.0
        %v6192 = vmul.f32 %v6004, 0.01
        %v6193 = vmul.f32 %v6006, 0.01
        %v6194 = vmul.f32 %v6176, 0.01
        %v6195 = vmul.f32 %v6178, 0.01
        %v6196 = vmul.f32 %v6008, 0.01
        %v6197 = vmul.f32 %v6010, 0.01
        %v6198 = vmul.f32 %v6180, 0.01
        %v6199 = vmul.f32 %v6182, 0.01
        %v6200 = vsel %vm6184, %v6004, %v6192
        %v6201 = vsel %vm6185, %v6006, %v6193
        %v6202 = vsel %vm6186, %v6176, %v6194
        %v6203 = vsel %vm6187, %v6178, %v6195
        %v6204 = vsel %vm6188, %v6008, %v6196
        %v6205 = vsel %vm6189, %v6010, %v6197
        %v6206 = vsel %vm6190, %v6180, %v6198
        %v6207 = vsel %vm6191, %v6182, %v6199
        %v6208 = vld [vmem:[#allocation11] sm:$0xff]
        %v6209 = vld [vmem:[#allocation11 + $0x8] sm:$0xff]
        %v6210 = vld [vmem:[#allocation11 + $0x10] sm:$0xff]
        %v6211 = vld [vmem:[#allocation11 + $0x18] sm:$0xff]
        %v6212 = vld [vmem:[#allocation11 + $0x20] sm:$0xff]
        %v6213 = vld [vmem:[#allocation11 + $0x28] sm:$0xff]
        %v6214 = vld [vmem:[#allocation11 + $0x30] sm:$0xff]
        %v6215 = vld [vmem:[#allocation11 + $0x38] sm:$0xff]
        %v6216 = vld [vmem:[#allocation11 + $0x40] sm:$0xff]
        %v6217 = vld [vmem:[#allocation11 + $0x48] sm:$0xff]
        %v6218 = vld [vmem:[#allocation11 + $0x50] sm:$0xff]
        %v6219 = vld [vmem:[#allocation11 + $0x58] sm:$0xff]
        %v6220 = vld [vmem:[#allocation11 + $0x60] sm:$0xff]
        %v6221 = vld [vmem:[#allocation11 + $0x68] sm:$0xff]
        %v6222 = vld [vmem:[#allocation11 + $0x70] sm:$0xff]
        %v6223 = vld [vmem:[#allocation11 + $0x78] sm:$0xff]
        %v6224 = vld [vmem:[#allocation11 + $0x80] sm:$0xff]
        %v6225 = vld [vmem:[#allocation11 + $0x88] sm:$0xff]
        %v6226 = vld [vmem:[#allocation11 + $0x90] sm:$0xff]
        %v6227 = vld [vmem:[#allocation11 + $0x98] sm:$0xff]
        %v6228 = vld [vmem:[#allocation11 + $0xa0] sm:$0xff]
        %v6229 = vld [vmem:[#allocation11 + $0xa8] sm:$0xff]
        %v6230 = vld [vmem:[#allocation11 + $0xb0] sm:$0xff]
        %v6231 = vld [vmem:[#allocation11 + $0xb8] sm:$0xff]
        %v6232 = vld [vmem:[#allocation11 + $0xc0] sm:$0xff]
        %v6233 = vld [vmem:[#allocation11 + $0xc8] sm:$0xff]
        %v6234 = vld [vmem:[#allocation11 + $0xd0] sm:$0xff]
        %v6235 = vld [vmem:[#allocation11 + $0xd8] sm:$0xff]
        %v6236 = vld [vmem:[#allocation11 + $0xe0] sm:$0xff]
        %v6237 = vld [vmem:[#allocation11 + $0xe8] sm:$0xff]
        %v6238 = vld [vmem:[#allocation11 + $0xf0] sm:$0xff]
        %v6239 = vld [vmem:[#allocation11 + $0xf8] sm:$0xff]
        %v6240 = vld [vmem:[#allocation11 + $0x100] sm:$0xff]
        %v6241 = vld [vmem:[#allocation11 + $0x108] sm:$0xff]
        %v6242 = vld [vmem:[#allocation11 + $0x110] sm:$0xff]
        %v6243 = vld [vmem:[#allocation11 + $0x118] sm:$0xff]
        %v6244 = vld [vmem:[#allocation11 + $0x120] sm:$0xff]
        %v6245 = vld [vmem:[#allocation11 + $0x128] sm:$0xff]
        %v6246 = vld [vmem:[#allocation11 + $0x130] sm:$0xff]
        %v6247 = vld [vmem:[#allocation11 + $0x138] sm:$0xff]
        %v6248 = vld [vmem:[#allocation11 + $0x140] sm:$0xff]
        %v6249 = vld [vmem:[#allocation11 + $0x148] sm:$0xff]
        %v6250 = vld [vmem:[#allocation11 + $0x150] sm:$0xff]
        %v6251 = vld [vmem:[#allocation11 + $0x158] sm:$0xff]
        %v6252 = vld [vmem:[#allocation11 + $0x160] sm:$0xff]
        %v6253 = vld [vmem:[#allocation11 + $0x168] sm:$0xff]
        %v6254 = vld [vmem:[#allocation11 + $0x170] sm:$0xff]
        %v6255 = vld [vmem:[#allocation11 + $0x178] sm:$0xff]
        %v6256 = vld [vmem:[#allocation11 + $0x180] sm:$0xff]
        %v6257 = vld [vmem:[#allocation11 + $0x188] sm:$0xff]
        %v6258 = vld [vmem:[#allocation11 + $0x190] sm:$0xff]
        %v6259 = vld [vmem:[#allocation11 + $0x198] sm:$0xff]
        %v6260 = vld [vmem:[#allocation11 + $0x1a0] sm:$0xff]
        %v6261 = vld [vmem:[#allocation11 + $0x1a8] sm:$0xff]
        %v6262 = vld [vmem:[#allocation11 + $0x1b0] sm:$0xff]
        %v6263 = vld [vmem:[#allocation11 + $0x1b8] sm:$0xff]
        %v6264 = vld [vmem:[#allocation11 + $0x1c0] sm:$0xff]
        %v6265 = vld [vmem:[#allocation11 + $0x1c8] sm:$0xff]
        %v6266 = vld [vmem:[#allocation11 + $0x1d0] sm:$0xff]
        %v6267 = vld [vmem:[#allocation11 + $0x1d8] sm:$0xff]
        %v6268 = vld [vmem:[#allocation11 + $0x1e0] sm:$0xff]
        %v6269 = vld [vmem:[#allocation11 + $0x1e8] sm:$0xff]
        %v6270 = vld [vmem:[#allocation11 + $0x1f0] sm:$0xff]
        %v6271 = vld [vmem:[#allocation11 + $0x1f8] sm:$0xff]
        %v6272 = vld [vmem:[#allocation13] sm:$0x3]
        %v6273 = vpack.c.bf16 %v6204, %v6200
        %v6274 = vpack.c.bf16 %v6205, %v6201
        %v6275 = vpack.c.bf16 %v6206, %v6202
        %v6276 = vpack.c.bf16 %v6207, %v6203
        %v6278 = vlaneseq
        %v6279 = vshrl.u32 %v6278, 7
        %v6280 = vsub.s32 0, %v6279
        %v6281 = vrot.slane %v6272, %v6280
        %v6282 = vlaneseq
        %v6283 = vshrl.u32 %v6282, 7
        %v6284 = vsub.s32 1, %v6283
        %v6285 = vrot.slane %v6272, %v6284
        %v6352 = vunpack.c.l.b16 %v6208
        %v6353 = vunpack.c.h.b16 %v6208
        %v6354 = vunpack.c.l.b16 %v6209
        %v6355 = vunpack.c.h.b16 %v6209
        %v6356 = vunpack.c.l.b16 %v6210
        %v6357 = vunpack.c.h.b16 %v6210
        %v6358 = vunpack.c.l.b16 %v6211
        %v6359 = vunpack.c.h.b16 %v6211
        %v6360 = vunpack.c.l.b16 %v6212
        %v6361 = vunpack.c.h.b16 %v6212
        %v6362 = vunpack.c.l.b16 %v6213
        %v6363 = vunpack.c.h.b16 %v6213
        %v6364 = vunpack.c.l.b16 %v6214
        %v6365 = vunpack.c.h.b16 %v6214
        %v6366 = vunpack.c.l.b16 %v6215
        %v6367 = vunpack.c.h.b16 %v6215
        %v6368 = vunpack.c.l.b16 %v6216
        %v6369 = vunpack.c.h.b16 %v6216
        %v6370 = vunpack.c.l.b16 %v6217
        %v6371 = vunpack.c.h.b16 %v6217
        %v6372 = vunpack.c.l.b16 %v6218
        %v6373 = vunpack.c.h.b16 %v6218
        %v6374 = vunpack.c.l.b16 %v6219
        %v6375 = vunpack.c.h.b16 %v6219
        %v6376 = vunpack.c.l.b16 %v6220
        %v6377 = vunpack.c.h.b16 %v6220
        %v6378 = vunpack.c.l.b16 %v6221
        %v6379 = vunpack.c.h.b16 %v6221
        %v6380 = vunpack.c.l.b16 %v6222
        %v6381 = vunpack.c.h.b16 %v6222
        %v6382 = vunpack.c.l.b16 %v6223
        %v6383 = vunpack.c.h.b16 %v6223
        %v6384 = vunpack.c.l.b16 %v6224
        %v6385 = vunpack.c.h.b16 %v6224
        %v6386 = vunpack.c.l.b16 %v6225
        %v6387 = vunpack.c.h.b16 %v6225
        %v6388 = vunpack.c.l.b16 %v6226
        %v6389 = vunpack.c.h.b16 %v6226
        %v6390 = vunpack.c.l.b16 %v6227
        %v6391 = vunpack.c.h.b16 %v6227
        %v6392 = vunpack.c.l.b16 %v6228
        %v6393 = vunpack.c.h.b16 %v6228
        %v6394 = vunpack.c.l.b16 %v6229
        %v6395 = vunpack.c.h.b16 %v6229
        %v6396 = vunpack.c.l.b16 %v6230
        %v6397 = vunpack.c.h.b16 %v6230
        %v6398 = vunpack.c.l.b16 %v6231
        %v6399 = vunpack.c.h.b16 %v6231
        %v6400 = vunpack.c.l.b16 %v6232
        %v6401 = vunpack.c.h.b16 %v6232
        %v6402 = vunpack.c.l.b16 %v6233
        %v6403 = vunpack.c.h.b16 %v6233
        %v6404 = vunpack.c.l.b16 %v6234
        %v6405 = vunpack.c.h.b16 %v6234
        %v6406 = vunpack.c.l.b16 %v6235
        %v6407 = vunpack.c.h.b16 %v6235
        %v6408 = vunpack.c.l.b16 %v6236
        %v6409 = vunpack.c.h.b16 %v6236
        %v6410 = vunpack.c.l.b16 %v6237
        %v6411 = vunpack.c.h.b16 %v6237
        %v6412 = vunpack.c.l.b16 %v6238
        %v6413 = vunpack.c.h.b16 %v6238
        %v6414 = vunpack.c.l.b16 %v6239
        %v6415 = vunpack.c.h.b16 %v6239
        %v6416 = vunpack.c.l.b16 %v6240
        %v6417 = vunpack.c.h.b16 %v6240
        %v6418 = vunpack.c.l.b16 %v6241
        %v6419 = vunpack.c.h.b16 %v6241
        %v6420 = vunpack.c.l.b16 %v6242
        %v6421 = vunpack.c.h.b16 %v6242
        %v6422 = vunpack.c.l.b16 %v6243
        %v6423 = vunpack.c.h.b16 %v6243
        %v6424 = vunpack.c.l.b16 %v6244
        %v6425 = vunpack.c.h.b16 %v6244
        %v6426 = vunpack.c.l.b16 %v6245
        %v6427 = vunpack.c.h.b16 %v6245
        %v6428 = vunpack.c.l.b16 %v6246
        %v6429 = vunpack.c.h.b16 %v6246
        %v6430 = vunpack.c.l.b16 %v6247
        %v6431 = vunpack.c.h.b16 %v6247
        %v6432 = vunpack.c.l.b16 %v6248
        %v6433 = vunpack.c.h.b16 %v6248
        %v6434 = vunpack.c.l.b16 %v6249
        %v6435 = vunpack.c.h.b16 %v6249
        %v6436 = vunpack.c.l.b16 %v6250
        %v6437 = vunpack.c.h.b16 %v6250
        %v6438 = vunpack.c.l.b16 %v6251
        %v6439 = vunpack.c.h.b16 %v6251
        %v6440 = vunpack.c.l.b16 %v6252
        %v6441 = vunpack.c.h.b16 %v6252
        %v6442 = vunpack.c.l.b16 %v6253
        %v6443 = vunpack.c.h.b16 %v6253
        %v6444 = vunpack.c.l.b16 %v6254
        %v6445 = vunpack.c.h.b16 %v6254
        %v6446 = vunpack.c.l.b16 %v6255
        %v6447 = vunpack.c.h.b16 %v6255
        %v6448 = vunpack.c.l.b16 %v6256
        %v6449 = vunpack.c.h.b16 %v6256
        %v6450 = vunpack.c.l.b16 %v6257
        %v6451 = vunpack.c.h.b16 %v6257
        %v6452 = vunpack.c.l.b16 %v6258
        %v6453 = vunpack.c.h.b16 %v6258
        %v6454 = vunpack.c.l.b16 %v6259
        %v6455 = vunpack.c.h.b16 %v6259
        %v6456 = vunpack.c.l.b16 %v6260
        %v6457 = vunpack.c.h.b16 %v6260
        %v6458 = vunpack.c.l.b16 %v6261
        %v6459 = vunpack.c.h.b16 %v6261
        %v6460 = vunpack.c.l.b16 %v6262
        %v6461 = vunpack.c.h.b16 %v6262
        %v6462 = vunpack.c.l.b16 %v6263
        %v6463 = vunpack.c.h.b16 %v6263
        %v6464 = vunpack.c.l.b16 %v6264
        %v6465 = vunpack.c.h.b16 %v6264
        %v6466 = vunpack.c.l.b16 %v6265
        %v6467 = vunpack.c.h.b16 %v6265
        %v6468 = vunpack.c.l.b16 %v6266
        %v6469 = vunpack.c.h.b16 %v6266
        %v6470 = vunpack.c.l.b16 %v6267
        %v6471 = vunpack.c.h.b16 %v6267
        %v6472 = vunpack.c.l.b16 %v6268
        %v6473 = vunpack.c.h.b16 %v6268
        %v6474 = vunpack.c.l.b16 %v6269
        %v6475 = vunpack.c.h.b16 %v6269
        %v6476 = vunpack.c.l.b16 %v6270
        %v6477 = vunpack.c.h.b16 %v6270
        %v6478 = vunpack.c.l.b16 %v6271
        %v6479 = vunpack.c.h.b16 %v6271
        %v6480 = vpack.c.b16 %v6354, %v6352
        %v6481 = vpack.c.b16 %v6355, %v6353
        %v6482 = vpack.c.b16 %v6358, %v6356
        %v6483 = vpack.c.b16 %v6359, %v6357
        %v6484 = vpack.c.b16 %v6362, %v6360
        %v6485 = vpack.c.b16 %v6363, %v6361
        %v6486 = vpack.c.b16 %v6366, %v6364
        %v6487 = vpack.c.b16 %v6367, %v6365
        %v6488 = vpack.c.b16 %v6370, %v6368
        %v6489 = vpack.c.b16 %v6371, %v6369
        %v6490 = vpack.c.b16 %v6374, %v6372
        %v6491 = vpack.c.b16 %v6375, %v6373
        %v6492 = vpack.c.b16 %v6378, %v6376
        %v6493 = vpack.c.b16 %v6379, %v6377
        %v6494 = vpack.c.b16 %v6382, %v6380
        %v6495 = vpack.c.b16 %v6383, %v6381
        %v6496 = vpack.c.b16 %v6386, %v6384
        %v6497 = vpack.c.b16 %v6387, %v6385
        %v6498 = vpack.c.b16 %v6390, %v6388
        %v6499 = vpack.c.b16 %v6391, %v6389
        %v6500 = vpack.c.b16 %v6394, %v6392
        %v6501 = vpack.c.b16 %v6395, %v6393
        %v6502 = vpack.c.b16 %v6398, %v6396
        %v6503 = vpack.c.b16 %v6399, %v6397
        %v6504 = vpack.c.b16 %v6402, %v6400
        %v6505 = vpack.c.b16 %v6403, %v6401
        %v6506 = vpack.c.b16 %v6406, %v6404
        %v6507 = vpack.c.b16 %v6407, %v6405
        %v6508 = vpack.c.b16 %v6410, %v6408
        %v6509 = vpack.c.b16 %v6411, %v6409
        %v6510 = vpack.c.b16 %v6414, %v6412
        %v6511 = vpack.c.b16 %v6415, %v6413
        %v6512 = vpack.c.b16 %v6418, %v6416
        %v6513 = vpack.c.b16 %v6419, %v6417
        %v6514 = vpack.c.b16 %v6422, %v6420
        %v6515 = vpack.c.b16 %v6423, %v6421
        %v6516 = vpack.c.b16 %v6426, %v6424
        %v6517 = vpack.c.b16 %v6427, %v6425
        %v6518 = vpack.c.b16 %v6430, %v6428
        %v6519 = vpack.c.b16 %v6431, %v6429
        %v6520 = vpack.c.b16 %v6434, %v6432
        %v6521 = vpack.c.b16 %v6435, %v6433
        %v6522 = vpack.c.b16 %v6438, %v6436
        %v6523 = vpack.c.b16 %v6439, %v6437
        %v6524 = vpack.c.b16 %v6442, %v6440
        %v6525 = vpack.c.b16 %v6443, %v6441
        %v6526 = vpack.c.b16 %v6446, %v6444
        %v6527 = vpack.c.b16 %v6447, %v6445
        %v6528 = vpack.c.b16 %v6450, %v6448
        %v6529 = vpack.c.b16 %v6451, %v6449
        %v6530 = vpack.c.b16 %v6454, %v6452
        %v6531 = vpack.c.b16 %v6455, %v6453
        %v6532 = vpack.c.b16 %v6458, %v6456
        %v6533 = vpack.c.b16 %v6459, %v6457
        %v6534 = vpack.c.b16 %v6462, %v6460
        %v6535 = vpack.c.b16 %v6463, %v6461
        %v6536 = vpack.c.b16 %v6466, %v6464
        %v6537 = vpack.c.b16 %v6467, %v6465
        %v6538 = vpack.c.b16 %v6470, %v6468
        %v6539 = vpack.c.b16 %v6471, %v6469
        %v6540 = vpack.c.b16 %v6474, %v6472
        %v6541 = vpack.c.b16 %v6475, %v6473
        %v6542 = vpack.c.b16 %v6478, %v6476
        %v6543 = vpack.c.b16 %v6479, %v6477
        %6608 = vmatprep.subr.bf16.mxu0 %v6481
        %6609 = vmatpush1.bf16.msra.mxu0 %v6480
        %6610 = vmatprep.subr.bf16.mxu0 %v6483
        %6611 = vmatpush1.bf16.msra.mxu0 %v6482
        %6612 = vmatprep.subr.bf16.mxu0 %v6485
        %6613 = vmatpush1.bf16.msra.mxu0 %v6484
        %6614 = vmatprep.subr.bf16.mxu0 %v6487
        %6615 = vmatpush1.bf16.msra.mxu0 %v6486
        %6616 = vmatprep.subr.bf16.mxu0 %v6489
        %6617 = vmatpush1.bf16.msra.mxu0 %v6488
        %6618 = vmatprep.subr.bf16.mxu0 %v6491
        %6619 = vmatpush1.bf16.msra.mxu0 %v6490
        %6620 = vmatprep.subr.bf16.mxu0 %v6493
        %6621 = vmatpush1.bf16.msra.mxu0 %v6492
        %6622 = vmatprep.subr.bf16.mxu0 %v6495
        %6623 = vmatpush1.bf16.msra.mxu0 %v6494
        %6624 = vmatprep.subr.bf16.mxu0 %v6497
        %6625 = vmatpush1.bf16.msra.mxu0 %v6496
        %6626 = vmatprep.subr.bf16.mxu0 %v6499
        %6627 = vmatpush1.bf16.msra.mxu0 %v6498
        %6628 = vmatprep.subr.bf16.mxu0 %v6501
        %6629 = vmatpush1.bf16.msra.mxu0 %v6500
        %6630 = vmatprep.subr.bf16.mxu0 %v6503
        %6631 = vmatpush1.bf16.msra.mxu0 %v6502
        %6632 = vmatprep.subr.bf16.mxu0 %v6505
        %6633 = vmatpush1.bf16.msra.mxu0 %v6504
        %6634 = vmatprep.subr.bf16.mxu0 %v6507
        %6635 = vmatpush1.bf16.msra.mxu0 %v6506
        %6636 = vmatprep.subr.bf16.mxu0 %v6509
        %6637 = vmatpush1.bf16.msra.mxu0 %v6508
        %6638 = vmatprep.subr.bf16.mxu0 %v6511
        %6639 = vmatpush1.bf16.msra.mxu0 %v6510
        %6640 = vmatprep.mubr.bf16.mxu0 %v6274
        %6641 = vmatmul.mubr.bf16.gmra.mrb[0].mxu0 %v6273
        %v6642 = vpop.f32.mrb[0].mxu0
        %v6643 = vadd.f32 %v6281, %v6642
        %v6644 = vpop.f32.mrb[0].mxu0
        %v6645 = vadd.f32 %v6285, %v6644
        %v6646 = vpop.f32.mrb[0].mxu0
        %v6647 = vadd.f32 %v6281, %v6646
        %v6648 = vpop.f32.mrb[0].mxu0
        %v6649 = vadd.f32 %v6285, %v6648
        %6650 = vdwg.mxu0
        %6651 = vmatprep.subr.bf16.mxu0 %v6513
        %6652 = vmatpush1.bf16.msra.mxu0 %v6512
        %6653 = vmatprep.subr.bf16.mxu0 %v6515
        %6654 = vmatpush1.bf16.msra.mxu0 %v6514
        %6655 = vmatprep.subr.bf16.mxu0 %v6517
        %6656 = vmatpush1.bf16.msra.mxu0 %v6516
        %6657 = vmatprep.subr.bf16.mxu0 %v6519
        %6658 = vmatpush1.bf16.msra.mxu0 %v6518
        %6659 = vmatprep.subr.bf16.mxu0 %v6521
        %6660 = vmatpush1.bf16.msra.mxu0 %v6520
        %6661 = vmatprep.subr.bf16.mxu0 %v6523
        %6662 = vmatpush1.bf16.msra.mxu0 %v6522
        %6663 = vmatprep.subr.bf16.mxu0 %v6525
        %6664 = vmatpush1.bf16.msra.mxu0 %v6524
        %6665 = vmatprep.subr.bf16.mxu0 %v6527
        %6666 = vmatpush1.bf16.msra.mxu0 %v6526
        %6667 = vmatprep.subr.bf16.mxu0 %v6529
        %6668 = vmatpush1.bf16.msra.mxu0 %v6528
        %6669 = vmatprep.subr.bf16.mxu0 %v6531
        %6670 = vmatpush1.bf16.msra.mxu0 %v6530
        %6671 = vmatprep.subr.bf16.mxu0 %v6533
        %6672 = vmatpush1.bf16.msra.mxu0 %v6532
        %6673 = vmatprep.subr.bf16.mxu0 %v6535
        %6674 = vmatpush1.bf16.msra.mxu0 %v6534
        %6675 = vmatprep.subr.bf16.mxu0 %v6537
        %6676 = vmatpush1.bf16.msra.mxu0 %v6536
        %6677 = vmatprep.subr.bf16.mxu0 %v6539
        %6678 = vmatpush1.bf16.msra.mxu0 %v6538
        %6679 = vmatprep.subr.bf16.mxu0 %v6541
        %6680 = vmatpush1.bf16.msra.mxu0 %v6540
        %6681 = vmatprep.subr.bf16.mxu0 %v6543
        %6682 = vmatpush1.bf16.msra.mxu0 %v6542
        %6683 = vmatprep.mubr.bf16.mxu0 %v6276
        %6684 = vmatmul.mubr.bf16.gmra.mrb[0].mxu0 %v6275
        %v6685 = vpop.f32.mrb[0].mxu0
        %v6686 = vadd.f32 %v6643, %v6685
        %v6687 = vpop.f32.mrb[0].mxu0
        %v6688 = vadd.f32 %v6645, %v6687
        %v6689 = vpop.f32.mrb[0].mxu0
        %v6690 = vadd.f32 %v6647, %v6689
        %v6691 = vpop.f32.mrb[0].mxu0
        %v6692 = vadd.f32 %v6649, %v6691
        %6693 = vdwg.mxu0
        %vm6694 = vcmp.gt.f32.partialorder %v6686, 0.0
        %vm6695 = vcmp.gt.f32.partialorder %v6688, 0.0
        %vm6696 = vcmp.gt.f32.partialorder %v6690, 0.0
        %vm6697 = vcmp.gt.f32.partialorder %v6692, 0.0
        %v6698 = vmul.f32 %v6686, 0.01
        %v6699 = vmul.f32 %v6688, 0.01
        %v6700 = vmul.f32 %v6690, 0.01
        %v6701 = vmul.f32 %v6692, 0.01
        %v6702 = vsel %vm6694, %v6686, %v6698
        %v6703 = vsel %vm6695, %v6688, %v6699
        %v6704 = vsel %vm6696, %v6690, %v6700
        %v6705 = vsel %vm6697, %v6692, %v6701
        %v6706 = vld [vmem:[#allocation14] sm:$0xf]
        %v6707 = vld [vmem:[#allocation14 + $0x4] sm:$0xf]
        %v6708 = vld [vmem:[#allocation14 + $0x8] sm:$0xf]
        %v6709 = vld [vmem:[#allocation14 + $0xc] sm:$0xf]
        %v6710 = vld [vmem:[#allocation14 + $0x10] sm:$0xf]
        %v6711 = vld [vmem:[#allocation14 + $0x14] sm:$0xf]
        %v6712 = vld [vmem:[#allocation14 + $0x18] sm:$0xf]
        %v6713 = vld [vmem:[#allocation14 + $0x1c] sm:$0xf]
        %v6714 = vld [vmem:[#allocation14 + $0x20] sm:$0xf]
        %v6715 = vld [vmem:[#allocation14 + $0x24] sm:$0xf]
        %v6716 = vld [vmem:[#allocation14 + $0x28] sm:$0xf]
        %v6717 = vld [vmem:[#allocation14 + $0x2c] sm:$0xf]
        %v6718 = vld [vmem:[#allocation14 + $0x30] sm:$0xf]
        %v6719 = vld [vmem:[#allocation14 + $0x34] sm:$0xf]
        %v6720 = vld [vmem:[#allocation14 + $0x38] sm:$0xf]
        %v6721 = vld [vmem:[#allocation14 + $0x3c] sm:$0xf]
        %v6722 = vld [vmem:[#allocation14 + $0x40] sm:$0xf]
        %v6723 = vld [vmem:[#allocation14 + $0x44] sm:$0xf]
        %v6724 = vld [vmem:[#allocation14 + $0x48] sm:$0xf]
        %v6725 = vld [vmem:[#allocation14 + $0x4c] sm:$0xf]
        %v6726 = vld [vmem:[#allocation14 + $0x50] sm:$0xf]
        %v6727 = vld [vmem:[#allocation14 + $0x54] sm:$0xf]
        %v6728 = vld [vmem:[#allocation14 + $0x58] sm:$0xf]
        %v6729 = vld [vmem:[#allocation14 + $0x5c] sm:$0xf]
        %v6730 = vld [vmem:[#allocation14 + $0x60] sm:$0xf]
        %v6731 = vld [vmem:[#allocation14 + $0x64] sm:$0xf]
        %v6732 = vld [vmem:[#allocation14 + $0x68] sm:$0xf]
        %v6733 = vld [vmem:[#allocation14 + $0x6c] sm:$0xf]
        %v6734 = vld [vmem:[#allocation14 + $0x70] sm:$0xf]
        %v6735 = vld [vmem:[#allocation14 + $0x74] sm:$0xf]
        %v6736 = vld [vmem:[#allocation14 + $0x78] sm:$0xf]
        %v6737 = vld [vmem:[#allocation14 + $0x7c] sm:$0xf]
        %v6738 = vld [vmem:[#allocation16] sm:$0x1]
        %v6739 = vpack.c.bf16 %v6704, %v6702
        %v6740 = vpack.c.bf16 %v6705, %v6703
        %v6742 = vlaneseq
        %v6743 = vshrl.u32 %v6742, 7
        %v6744 = vsub.s32 0, %v6743
        %v6745 = vrot.slane %v6738, %v6744
        %v6779 = vunpack.c.l.b16 %v6706
        %v6780 = vunpack.c.l.b16 %v6707
        %v6781 = vunpack.c.l.b16 %v6708
        %v6782 = vunpack.c.l.b16 %v6709
        %v6783 = vunpack.c.l.b16 %v6710
        %v6784 = vunpack.c.l.b16 %v6711
        %v6785 = vunpack.c.l.b16 %v6712
        %v6786 = vunpack.c.l.b16 %v6713
        %v6787 = vunpack.c.l.b16 %v6714
        %v6788 = vunpack.c.l.b16 %v6715
        %v6789 = vunpack.c.l.b16 %v6716
        %v6790 = vunpack.c.l.b16 %v6717
        %v6791 = vunpack.c.l.b16 %v6718
        %v6792 = vunpack.c.l.b16 %v6719
        %v6793 = vunpack.c.l.b16 %v6720
        %v6794 = vunpack.c.l.b16 %v6721
        %v6795 = vunpack.c.l.b16 %v6722
        %v6796 = vunpack.c.l.b16 %v6723
        %v6797 = vunpack.c.l.b16 %v6724
        %v6798 = vunpack.c.l.b16 %v6725
        %v6799 = vunpack.c.l.b16 %v6726
        %v6800 = vunpack.c.l.b16 %v6727
        %v6801 = vunpack.c.l.b16 %v6728
        %v6802 = vunpack.c.l.b16 %v6729
        %v6803 = vunpack.c.l.b16 %v6730
        %v6804 = vunpack.c.l.b16 %v6731
        %v6805 = vunpack.c.l.b16 %v6732
        %v6806 = vunpack.c.l.b16 %v6733
        %v6807 = vunpack.c.l.b16 %v6734
        %v6808 = vunpack.c.l.b16 %v6735
        %v6809 = vunpack.c.l.b16 %v6736
        %v6810 = vunpack.c.l.b16 %v6737
        %v6811 = vpack.c.b16 %v6780, %v6779
        %v6812 = vpack.c.b16 %v6782, %v6781
        %v6813 = vpack.c.b16 %v6784, %v6783
        %v6814 = vpack.c.b16 %v6786, %v6785
        %v6815 = vpack.c.b16 %v6788, %v6787
        %v6816 = vpack.c.b16 %v6790, %v6789
        %v6817 = vpack.c.b16 %v6792, %v6791
        %v6818 = vpack.c.b16 %v6794, %v6793
        %v6819 = vpack.c.b16 %v6796, %v6795
        %v6820 = vpack.c.b16 %v6798, %v6797
        %v6821 = vpack.c.b16 %v6800, %v6799
        %v6822 = vpack.c.b16 %v6802, %v6801
        %v6823 = vpack.c.b16 %v6804, %v6803
        %v6824 = vpack.c.b16 %v6806, %v6805
        %v6825 = vpack.c.b16 %v6808, %v6807
        %v6826 = vpack.c.b16 %v6810, %v6809
        %6843 = vmatprep.subr.bf16.mxu0 0
        %6844 = vmatpush1.bf16.msra.mxu0 %v6811
        %6845 = vmatprep.subr.bf16.mxu0 0
        %6846 = vmatpush1.bf16.msra.mxu0 %v6812
        %6847 = vmatprep.subr.bf16.mxu0 0
        %6848 = vmatpush1.bf16.msra.mxu0 %v6813
        %6849 = vmatprep.subr.bf16.mxu0 0
        %6850 = vmatpush1.bf16.msra.mxu0 %v6814
        %6851 = vmatprep.subr.bf16.mxu0 0
        %6852 = vmatpush1.bf16.msra.mxu0 %v6815
        %6853 = vmatprep.subr.bf16.mxu0 0
        %6854 = vmatpush1.bf16.msra.mxu0 %v6816
        %6855 = vmatprep.subr.bf16.mxu0 0
        %6856 = vmatpush1.bf16.msra.mxu0 %v6817
        %6857 = vmatprep.subr.bf16.mxu0 0
        %6858 = vmatpush1.bf16.msra.mxu0 %v6818
        %6859 = vmatprep.subr.bf16.mxu0 0
        %6860 = vmatpush1.bf16.msra.mxu0 %v6819
        %6861 = vmatprep.subr.bf16.mxu0 0
        %6862 = vmatpush1.bf16.msra.mxu0 %v6820
        %6863 = vmatprep.subr.bf16.mxu0 0
        %6864 = vmatpush1.bf16.msra.mxu0 %v6821
        %6865 = vmatprep.subr.bf16.mxu0 0
        %6866 = vmatpush1.bf16.msra.mxu0 %v6822
        %6867 = vmatprep.subr.bf16.mxu0 0
        %6868 = vmatpush1.bf16.msra.mxu0 %v6823
        %6869 = vmatprep.subr.bf16.mxu0 0
        %6870 = vmatpush1.bf16.msra.mxu0 %v6824
        %6871 = vmatprep.subr.bf16.mxu0 0
        %6872 = vmatpush1.bf16.msra.mxu0 %v6825
        %6873 = vmatprep.subr.bf16.mxu0 0
        %6874 = vmatpush1.bf16.msra.mxu0 %v6826
        %6875 = vmatprep.mubr.bf16.mxu0 %v6740
        %6876 = vmatmul.mubr.bf16.gmra.mrb[0].mxu0 %v6739
        %v6877 = vpop.f32.mrb[0].mxu0
        %v6878 = vadd.f32 %v6745, %v6877
        %v6879 = vpop.f32.mrb[0].mxu0
        %v6880 = vpop.f32.mrb[0].mxu0
        %v6881 = vadd.f32 %v6745, %v6880
        %v6882 = vpop.f32.mrb[0].mxu0
        %6883 = vdwg.mxu0
        %v6884 = vld [vmem:[#allocation17] sm:$0xff]
        %v6885 = vld [vmem:[#allocation17 + $0x8] sm:$0xff]
        %v6886 = vld [vmem:[#allocation17 + $0x10] sm:$0xff]
        %v6887 = vld [vmem:[#allocation17 + $0x18] sm:$0xff]
        %v6888 = vld [vmem:[#allocation17 + $0x20] sm:$0xff]
        %v6889 = vld [vmem:[#allocation17 + $0x28] sm:$0xff]
        %v6890 = vld [vmem:[#allocation17 + $0x30] sm:$0xff]
        %v6891 = vld [vmem:[#allocation17 + $0x38] sm:$0xff]
        %v6892 = vld [vmem:[#allocation17 + $0x40] sm:$0xff]
        %v6893 = vld [vmem:[#allocation17 + $0x48] sm:$0xff]
        %v6894 = vld [vmem:[#allocation17 + $0x50] sm:$0xff]
        %v6895 = vld [vmem:[#allocation17 + $0x58] sm:$0xff]
        %v6896 = vld [vmem:[#allocation17 + $0x60] sm:$0xff]
        %v6897 = vld [vmem:[#allocation17 + $0x68] sm:$0xff]
        %v6898 = vld [vmem:[#allocation17 + $0x70] sm:$0xff]
        %v6899 = vld [vmem:[#allocation17 + $0x78] sm:$0xff]
        %v6900 = vld [vmem:[#allocation19] sm:$0x3]
        %v6901 = vpack.c.bf16 %v6881, %v6878
        %v6903 = vlaneseq
        %v6904 = vshrl.u32 %v6903, 7
        %v6905 = vsub.s32 0, %v6904
        %v6906 = vrot.slane %v6900, %v6905
        %v6907 = vlaneseq
        %v6908 = vshrl.u32 %v6907, 7
        %v6909 = vsub.s32 1, %v6908
        %v6910 = vrot.slane %v6900, %v6909
        %v6929 = vunpack.c.l.b16 %v6884
        %v6930 = vunpack.c.h.b16 %v6884
        %v6931 = vunpack.c.l.b16 %v6885
        %v6932 = vunpack.c.h.b16 %v6885
        %v6933 = vunpack.c.l.b16 %v6886
        %v6934 = vunpack.c.h.b16 %v6886
        %v6935 = vunpack.c.l.b16 %v6887
        %v6936 = vunpack.c.h.b16 %v6887
        %v6937 = vunpack.c.l.b16 %v6888
        %v6938 = vunpack.c.h.b16 %v6888
        %v6939 = vunpack.c.l.b16 %v6889
        %v6940 = vunpack.c.h.b16 %v6889
        %v6941 = vunpack.c.l.b16 %v6890
        %v6942 = vunpack.c.h.b16 %v6890
        %v6943 = vunpack.c.l.b16 %v6891
        %v6944 = vunpack.c.h.b16 %v6891
        %v6945 = vunpack.c.l.b16 %v6892
        %v6946 = vunpack.c.h.b16 %v6892
        %v6947 = vunpack.c.l.b16 %v6893
        %v6948 = vunpack.c.h.b16 %v6893
        %v6949 = vunpack.c.l.b16 %v6894
        %v6950 = vunpack.c.h.b16 %v6894
        %v6951 = vunpack.c.l.b16 %v6895
        %v6952 = vunpack.c.h.b16 %v6895
        %v6953 = vunpack.c.l.b16 %v6896
        %v6954 = vunpack.c.h.b16 %v6896
        %v6955 = vunpack.c.l.b16 %v6897
        %v6956 = vunpack.c.h.b16 %v6897
        %v6957 = vunpack.c.l.b16 %v6898
        %v6958 = vunpack.c.h.b16 %v6898
        %v6959 = vunpack.c.l.b16 %v6899
        %v6960 = vunpack.c.h.b16 %v6899
        %v6961 = vpack.c.b16 %v6931, %v6929
        %v6962 = vpack.c.b16 %v6932, %v6930
        %v6963 = vpack.c.b16 %v6935, %v6933
        %v6964 = vpack.c.b16 %v6936, %v6934
        %v6965 = vpack.c.b16 %v6939, %v6937
        %v6966 = vpack.c.b16 %v6940, %v6938
        %v6967 = vpack.c.b16 %v6943, %v6941
        %v6968 = vpack.c.b16 %v6944, %v6942
        %v6969 = vpack.c.b16 %v6947, %v6945
        %v6970 = vpack.c.b16 %v6948, %v6946
        %v6971 = vpack.c.b16 %v6951, %v6949
        %v6972 = vpack.c.b16 %v6952, %v6950
        %v6973 = vpack.c.b16 %v6955, %v6953
        %v6974 = vpack.c.b16 %v6956, %v6954
        %v6975 = vpack.c.b16 %v6959, %v6957
        %v6976 = vpack.c.b16 %v6960, %v6958
        %6993 = vmatprep.subr.bf16.mxu0 %v6962
        %6994 = vmatpush1.bf16.msra.mxu0 %v6961
        %6995 = vmatprep.subr.bf16.mxu0 %v6964
        %6996 = vmatpush1.bf16.msra.mxu0 %v6963
        %6997 = vmatprep.subr.bf16.mxu0 %v6966
        %6998 = vmatpush1.bf16.msra.mxu0 %v6965
        %6999 = vmatprep.subr.bf16.mxu0 %v6968
        %7000 = vmatpush1.bf16.msra.mxu0 %v6967
        %7001 = vmatprep.subr.bf16.mxu0 %v6970
        %7002 = vmatpush1.bf16.msra.mxu0 %v6969
        %7003 = vmatprep.subr.bf16.mxu0 %v6972
        %7004 = vmatpush1.bf16.msra.mxu0 %v6971
        %7005 = vmatprep.subr.bf16.mxu0 %v6974
        %7006 = vmatpush1.bf16.msra.mxu0 %v6973
        %7007 = vmatprep.subr.bf16.mxu0 %v6976
        %7008 = vmatpush1.bf16.msra.mxu0 %v6975
        %7009 = vmatprep.subr.bf16.mxu0 0
        %7010 = vmatpush1.bf16.msra.mxu0 0
        %7011 = vmatprep.subr.bf16.mxu0 0
        %7012 = vmatpush1.bf16.msra.mxu0 0
        %7013 = vmatprep.subr.bf16.mxu0 0
        %7014 = vmatpush1.bf16.msra.mxu0 0
        %7015 = vmatprep.subr.bf16.mxu0 0
        %7016 = vmatpush1.bf16.msra.mxu0 0
        %7017 = vmatprep.subr.bf16.mxu0 0
        %7018 = vmatpush1.bf16.msra.mxu0 0
        %7019 = vmatprep.subr.bf16.mxu0 0
        %7020 = vmatpush1.bf16.msra.mxu0 0
        %7021 = vmatprep.subr.bf16.mxu0 0
        %7022 = vmatpush1.bf16.msra.mxu0 0
        %7023 = vmatprep.subr.bf16.mxu0 0
        %7024 = vmatpush1.bf16.msra.mxu0 0
        %7025 = vmatprep.mubr.bf16.mxu0 0
        %7026 = vmatmul.mubr.bf16.gmra.mrb[0].mxu0 %v6901
        %v7027 = vpop.f32.mrb[0].mxu0
        %v7028 = vadd.f32 %v6906, %v7027
        %v7029 = vpop.f32.mrb[0].mxu0
        %v7030 = vadd.f32 %v6910, %v7029
        %v7031 = vpop.f32.mrb[0].mxu0
        %v7032 = vadd.f32 %v6906, %v7031
        %v7033 = vpop.f32.mrb[0].mxu0
        %v7034 = vadd.f32 %v6910, %v7033
        %7035 = vdwg.mxu0
        %vm7036 = vcmp.gt.f32.partialorder %v7028, 0.0
        %vm7037 = vcmp.gt.f32.partialorder %v7030, 0.0
        %vm7038 = vcmp.gt.f32.partialorder %v7032, 0.0
        %vm7039 = vcmp.gt.f32.partialorder %v7034, 0.0
        %v7040 = vmul.f32 %v7028, 0.01
        %v7041 = vmul.f32 %v7030, 0.01
        %v7042 = vmul.f32 %v7032, 0.01
        %v7043 = vmul.f32 %v7034, 0.01
        %v7044 = vsel %vm7036, %v7028, %v7040
        %v7045 = vsel %vm7037, %v7030, %v7041
        %v7046 = vsel %vm7038, %v7032, %v7042
        %v7047 = vsel %vm7039, %v7034, %v7043
        %v7048 = vld [vmem:[#allocation20] sm:$0xff]
        %v7049 = vld [vmem:[#allocation20 + $0x8] sm:$0xff]
        %v7050 = vld [vmem:[#allocation20 + $0x10] sm:$0xff]
        %v7051 = vld [vmem:[#allocation20 + $0x18] sm:$0xff]
        %v7052 = vld [vmem:[#allocation20 + $0x20] sm:$0xff]
        %v7053 = vld [vmem:[#allocation20 + $0x28] sm:$0xff]
        %v7054 = vld [vmem:[#allocation20 + $0x30] sm:$0xff]
        %v7055 = vld [vmem:[#allocation20 + $0x38] sm:$0xff]
        %v7056 = vld [vmem:[#allocation20 + $0x40] sm:$0xff]
        %v7057 = vld [vmem:[#allocation20 + $0x48] sm:$0xff]
        %v7058 = vld [vmem:[#allocation20 + $0x50] sm:$0xff]
        %v7059 = vld [vmem:[#allocation20 + $0x58] sm:$0xff]
        %v7060 = vld [vmem:[#allocation20 + $0x60] sm:$0xff]
        %v7061 = vld [vmem:[#allocation20 + $0x68] sm:$0xff]
        %v7062 = vld [vmem:[#allocation20 + $0x70] sm:$0xff]
        %v7063 = vld [vmem:[#allocation20 + $0x78] sm:$0xff]
        %v7064 = vld [vmem:[#allocation20 + $0x80] sm:$0xff]
        %v7065 = vld [vmem:[#allocation20 + $0x88] sm:$0xff]
        %v7066 = vld [vmem:[#allocation20 + $0x90] sm:$0xff]
        %v7067 = vld [vmem:[#allocation20 + $0x98] sm:$0xff]
        %v7068 = vld [vmem:[#allocation20 + $0xa0] sm:$0xff]
        %v7069 = vld [vmem:[#allocation20 + $0xa8] sm:$0xff]
        %v7070 = vld [vmem:[#allocation20 + $0xb0] sm:$0xff]
        %v7071 = vld [vmem:[#allocation20 + $0xb8] sm:$0xff]
        %v7072 = vld [vmem:[#allocation20 + $0xc0] sm:$0xff]
        %v7073 = vld [vmem:[#allocation20 + $0xc8] sm:$0xff]
        %v7074 = vld [vmem:[#allocation20 + $0xd0] sm:$0xff]
        %v7075 = vld [vmem:[#allocation20 + $0xd8] sm:$0xff]
        %v7076 = vld [vmem:[#allocation20 + $0xe0] sm:$0xff]
        %v7077 = vld [vmem:[#allocation20 + $0xe8] sm:$0xff]
        %v7078 = vld [vmem:[#allocation20 + $0xf0] sm:$0xff]
        %v7079 = vld [vmem:[#allocation20 + $0xf8] sm:$0xff]
        %v7080 = vld [vmem:[#allocation20 + $0x100] sm:$0xff]
        %v7081 = vld [vmem:[#allocation20 + $0x108] sm:$0xff]
        %v7082 = vld [vmem:[#allocation20 + $0x110] sm:$0xff]
        %v7083 = vld [vmem:[#allocation20 + $0x118] sm:$0xff]
        %v7084 = vld [vmem:[#allocation20 + $0x120] sm:$0xff]
        %v7085 = vld [vmem:[#allocation20 + $0x128] sm:$0xff]
        %v7086 = vld [vmem:[#allocation20 + $0x130] sm:$0xff]
        %v7087 = vld [vmem:[#allocation20 + $0x138] sm:$0xff]
        %v7088 = vld [vmem:[#allocation20 + $0x140] sm:$0xff]
        %v7089 = vld [vmem:[#allocation20 + $0x148] sm:$0xff]
        %v7090 = vld [vmem:[#allocation20 + $0x150] sm:$0xff]
        %v7091 = vld [vmem:[#allocation20 + $0x158] sm:$0xff]
        %v7092 = vld [vmem:[#allocation20 + $0x160] sm:$0xff]
        %v7093 = vld [vmem:[#allocation20 + $0x168] sm:$0xff]
        %v7094 = vld [vmem:[#allocation20 + $0x170] sm:$0xff]
        %v7095 = vld [vmem:[#allocation20 + $0x178] sm:$0xff]
        %v7096 = vld [vmem:[#allocation20 + $0x180] sm:$0xff]
        %v7097 = vld [vmem:[#allocation20 + $0x188] sm:$0xff]
        %v7098 = vld [vmem:[#allocation20 + $0x190] sm:$0xff]
        %v7099 = vld [vmem:[#allocation20 + $0x198] sm:$0xff]
        %v7100 = vld [vmem:[#allocation20 + $0x1a0] sm:$0xff]
        %v7101 = vld [vmem:[#allocation20 + $0x1a8] sm:$0xff]
        %v7102 = vld [vmem:[#allocation20 + $0x1b0] sm:$0xff]
        %v7103 = vld [vmem:[#allocation20 + $0x1b8] sm:$0xff]
        %v7104 = vld [vmem:[#allocation20 + $0x1c0] sm:$0xff]
        %v7105 = vld [vmem:[#allocation20 + $0x1c8] sm:$0xff]
        %v7106 = vld [vmem:[#allocation20 + $0x1d0] sm:$0xff]
        %v7107 = vld [vmem:[#allocation20 + $0x1d8] sm:$0xff]
        %v7108 = vld [vmem:[#allocation20 + $0x1e0] sm:$0xff]
        %v7109 = vld [vmem:[#allocation20 + $0x1e8] sm:$0xff]
        %v7110 = vld [vmem:[#allocation20 + $0x1f0] sm:$0xff]
        %v7111 = vld [vmem:[#allocation20 + $0x1f8] sm:$0xff]
        %v7112 = vld [vmem:[#allocation22] sm:$0xf]
        %v7113 = vpack.c.bf16 %v7046, %v7044
        %v7114 = vpack.c.bf16 %v7047, %v7045
        %v7116 = vlaneseq
        %v7117 = vshrl.u32 %v7116, 7
        %v7118 = vsub.s32 0, %v7117
        %v7119 = vrot.slane %v7112, %v7118
        %v7120 = vlaneseq
        %v7121 = vshrl.u32 %v7120, 7
        %v7122 = vsub.s32 1, %v7121
        %v7123 = vrot.slane %v7112, %v7122
        %v7124 = vlaneseq
        %v7125 = vshrl.u32 %v7124, 7
        %v7126 = vsub.s32 2, %v7125
        %v7127 = vrot.slane %v7112, %v7126
        %v7128 = vlaneseq
        %v7129 = vshrl.u32 %v7128, 7
        %v7130 = vsub.s32 3, %v7129
        %v7131 = vrot.slane %v7112, %v7130
        %v7200 = vunpack.c.l.b16 %v7048
        %v7201 = vunpack.c.h.b16 %v7048
        %v7202 = vunpack.c.l.b16 %v7049
        %v7203 = vunpack.c.h.b16 %v7049
        %v7204 = vunpack.c.l.b16 %v7050
        %v7205 = vunpack.c.h.b16 %v7050
        %v7206 = vunpack.c.l.b16 %v7051
        %v7207 = vunpack.c.h.b16 %v7051
        %v7208 = vunpack.c.l.b16 %v7052
        %v7209 = vunpack.c.h.b16 %v7052
        %v7210 = vunpack.c.l.b16 %v7053
        %v7211 = vunpack.c.h.b16 %v7053
        %v7212 = vunpack.c.l.b16 %v7054
        %v7213 = vunpack.c.h.b16 %v7054
        %v7214 = vunpack.c.l.b16 %v7055
        %v7215 = vunpack.c.h.b16 %v7055
        %v7216 = vunpack.c.l.b16 %v7056
        %v7217 = vunpack.c.h.b16 %v7056
        %v7218 = vunpack.c.l.b16 %v7057
        %v7219 = vunpack.c.h.b16 %v7057
        %v7220 = vunpack.c.l.b16 %v7058
        %v7221 = vunpack.c.h.b16 %v7058
        %v7222 = vunpack.c.l.b16 %v7059
        %v7223 = vunpack.c.h.b16 %v7059
        %v7224 = vunpack.c.l.b16 %v7060
        %v7225 = vunpack.c.h.b16 %v7060
        %v7226 = vunpack.c.l.b16 %v7061
        %v7227 = vunpack.c.h.b16 %v7061
        %v7228 = vunpack.c.l.b16 %v7062
        %v7229 = vunpack.c.h.b16 %v7062
        %v7230 = vunpack.c.l.b16 %v7063
        %v7231 = vunpack.c.h.b16 %v7063
        %v7232 = vunpack.c.l.b16 %v7064
        %v7233 = vunpack.c.h.b16 %v7064
        %v7234 = vunpack.c.l.b16 %v7065
        %v7235 = vunpack.c.h.b16 %v7065
        %v7236 = vunpack.c.l.b16 %v7066
        %v7237 = vunpack.c.h.b16 %v7066
        %v7238 = vunpack.c.l.b16 %v7067
        %v7239 = vunpack.c.h.b16 %v7067
        %v7240 = vunpack.c.l.b16 %v7068
        %v7241 = vunpack.c.h.b16 %v7068
        %v7242 = vunpack.c.l.b16 %v7069
        %v7243 = vunpack.c.h.b16 %v7069
        %v7244 = vunpack.c.l.b16 %v7070
        %v7245 = vunpack.c.h.b16 %v7070
        %v7246 = vunpack.c.l.b16 %v7071
        %v7247 = vunpack.c.h.b16 %v7071
        %v7248 = vunpack.c.l.b16 %v7072
        %v7249 = vunpack.c.h.b16 %v7072
        %v7250 = vunpack.c.l.b16 %v7073
        %v7251 = vunpack.c.h.b16 %v7073
        %v7252 = vunpack.c.l.b16 %v7074
        %v7253 = vunpack.c.h.b16 %v7074
        %v7254 = vunpack.c.l.b16 %v7075
        %v7255 = vunpack.c.h.b16 %v7075
        %v7256 = vunpack.c.l.b16 %v7076
        %v7257 = vunpack.c.h.b16 %v7076
        %v7258 = vunpack.c.l.b16 %v7077
        %v7259 = vunpack.c.h.b16 %v7077
        %v7260 = vunpack.c.l.b16 %v7078
        %v7261 = vunpack.c.h.b16 %v7078
        %v7262 = vunpack.c.l.b16 %v7079
        %v7263 = vunpack.c.h.b16 %v7079
        %v7264 = vunpack.c.l.b16 %v7080
        %v7265 = vunpack.c.h.b16 %v7080
        %v7266 = vunpack.c.l.b16 %v7081
        %v7267 = vunpack.c.h.b16 %v7081
        %v7268 = vunpack.c.l.b16 %v7082
        %v7269 = vunpack.c.h.b16 %v7082
        %v7270 = vunpack.c.l.b16 %v7083
        %v7271 = vunpack.c.h.b16 %v7083
        %v7272 = vunpack.c.l.b16 %v7084
        %v7273 = vunpack.c.h.b16 %v7084
        %v7274 = vunpack.c.l.b16 %v7085
        %v7275 = vunpack.c.h.b16 %v7085
        %v7276 = vunpack.c.l.b16 %v7086
        %v7277 = vunpack.c.h.b16 %v7086
        %v7278 = vunpack.c.l.b16 %v7087
        %v7279 = vunpack.c.h.b16 %v7087
        %v7280 = vunpack.c.l.b16 %v7088
        %v7281 = vunpack.c.h.b16 %v7088
        %v7282 = vunpack.c.l.b16 %v7089
        %v7283 = vunpack.c.h.b16 %v7089
        %v7284 = vunpack.c.l.b16 %v7090
        %v7285 = vunpack.c.h.b16 %v7090
        %v7286 = vunpack.c.l.b16 %v7091
        %v7287 = vunpack.c.h.b16 %v7091
        %v7288 = vunpack.c.l.b16 %v7092
        %v7289 = vunpack.c.h.b16 %v7092
        %v7290 = vunpack.c.l.b16 %v7093
        %v7291 = vunpack.c.h.b16 %v7093
        %v7292 = vunpack.c.l.b16 %v7094
        %v7293 = vunpack.c.h.b16 %v7094
        %v7294 = vunpack.c.l.b16 %v7095
        %v7295 = vunpack.c.h.b16 %v7095
        %v7296 = vunpack.c.l.b16 %v7096
        %v7297 = vunpack.c.h.b16 %v7096
        %v7298 = vunpack.c.l.b16 %v7097
        %v7299 = vunpack.c.h.b16 %v7097
        %v7300 = vunpack.c.l.b16 %v7098
        %v7301 = vunpack.c.h.b16 %v7098
        %v7302 = vunpack.c.l.b16 %v7099
        %v7303 = vunpack.c.h.b16 %v7099
        %v7304 = vunpack.c.l.b16 %v7100
        %v7305 = vunpack.c.h.b16 %v7100
        %v7306 = vunpack.c.l.b16 %v7101
        %v7307 = vunpack.c.h.b16 %v7101
        %v7308 = vunpack.c.l.b16 %v7102
        %v7309 = vunpack.c.h.b16 %v7102
        %v7310 = vunpack.c.l.b16 %v7103
        %v7311 = vunpack.c.h.b16 %v7103
        %v7312 = vunpack.c.l.b16 %v7104
        %v7313 = vunpack.c.h.b16 %v7104
        %v7314 = vunpack.c.l.b16 %v7105
        %v7315 = vunpack.c.h.b16 %v7105
        %v7316 = vunpack.c.l.b16 %v7106
        %v7317 = vunpack.c.h.b16 %v7106
        %v7318 = vunpack.c.l.b16 %v7107
        %v7319 = vunpack.c.h.b16 %v7107
        %v7320 = vunpack.c.l.b16 %v7108
        %v7321 = vunpack.c.h.b16 %v7108
        %v7322 = vunpack.c.l.b16 %v7109
        %v7323 = vunpack.c.h.b16 %v7109
        %v7324 = vunpack.c.l.b16 %v7110
        %v7325 = vunpack.c.h.b16 %v7110
        %v7326 = vunpack.c.l.b16 %v7111
        %v7327 = vunpack.c.h.b16 %v7111
        %v7328 = vpack.c.b16 %v7204, %v7200
        %v7329 = vpack.c.b16 %v7205, %v7201
        %v7330 = vpack.c.b16 %v7206, %v7202
        %v7331 = vpack.c.b16 %v7207, %v7203
        %v7332 = vpack.c.b16 %v7212, %v7208
        %v7333 = vpack.c.b16 %v7213, %v7209
        %v7334 = vpack.c.b16 %v7214, %v7210
        %v7335 = vpack.c.b16 %v7215, %v7211
        %v7336 = vpack.c.b16 %v7220, %v7216
        %v7337 = vpack.c.b16 %v7221, %v7217
        %v7338 = vpack.c.b16 %v7222, %v7218
        %v7339 = vpack.c.b16 %v7223, %v7219
        %v7340 = vpack.c.b16 %v7228, %v7224
        %v7341 = vpack.c.b16 %v7229, %v7225
        %v7342 = vpack.c.b16 %v7230, %v7226
        %v7343 = vpack.c.b16 %v7231, %v7227
        %v7344 = vpack.c.b16 %v7236, %v7232
        %v7345 = vpack.c.b16 %v7237, %v7233
        %v7346 = vpack.c.b16 %v7238, %v7234
        %v7347 = vpack.c.b16 %v7239, %v7235
        %v7348 = vpack.c.b16 %v7244, %v7240
        %v7349 = vpack.c.b16 %v7245, %v7241
        %v7350 = vpack.c.b16 %v7246, %v7242
        %v7351 = vpack.c.b16 %v7247, %v7243
        %v7352 = vpack.c.b16 %v7252, %v7248
        %v7353 = vpack.c.b16 %v7253, %v7249
        %v7354 = vpack.c.b16 %v7254, %v7250
        %v7355 = vpack.c.b16 %v7255, %v7251
        %v7356 = vpack.c.b16 %v7260, %v7256
        %v7357 = vpack.c.b16 %v7261, %v7257
        %v7358 = vpack.c.b16 %v7262, %v7258
        %v7359 = vpack.c.b16 %v7263, %v7259
        %v7360 = vpack.c.b16 %v7268, %v7264
        %v7361 = vpack.c.b16 %v7269, %v7265
        %v7362 = vpack.c.b16 %v7270, %v7266
        %v7363 = vpack.c.b16 %v7271, %v7267
        %v7364 = vpack.c.b16 %v7276, %v7272
        %v7365 = vpack.c.b16 %v7277, %v7273
        %v7366 = vpack.c.b16 %v7278, %v7274
        %v7367 = vpack.c.b16 %v7279, %v7275
        %v7368 = vpack.c.b16 %v7284, %v7280
        %v7369 = vpack.c.b16 %v7285, %v7281
        %v7370 = vpack.c.b16 %v7286, %v7282
        %v7371 = vpack.c.b16 %v7287, %v7283
        %v7372 = vpack.c.b16 %v7292, %v7288
        %v7373 = vpack.c.b16 %v7293, %v7289
        %v7374 = vpack.c.b16 %v7294, %v7290
        %v7375 = vpack.c.b16 %v7295, %v7291
        %v7376 = vpack.c.b16 %v7300, %v7296
        %v7377 = vpack.c.b16 %v7301, %v7297
        %v7378 = vpack.c.b16 %v7302, %v7298
        %v7379 = vpack.c.b16 %v7303, %v7299
        %v7380 = vpack.c.b16 %v7308, %v7304
        %v7381 = vpack.c.b16 %v7309, %v7305
        %v7382 = vpack.c.b16 %v7310, %v7306
        %v7383 = vpack.c.b16 %v7311, %v7307
        %v7384 = vpack.c.b16 %v7316, %v7312
        %v7385 = vpack.c.b16 %v7317, %v7313
        %v7386 = vpack.c.b16 %v7318, %v7314
        %v7387 = vpack.c.b16 %v7319, %v7315
        %v7388 = vpack.c.b16 %v7324, %v7320
        %v7389 = vpack.c.b16 %v7325, %v7321
        %v7390 = vpack.c.b16 %v7326, %v7322
        %v7391 = vpack.c.b16 %v7327, %v7323
        %7456 = vmatprep.subr.bf16.mxu0 %v7329
        %7457 = vmatpush1.bf16.msra.mxu0 %v7328
        %7458 = vmatprep.subr.bf16.mxu0 %v7333
        %7459 = vmatpush1.bf16.msra.mxu0 %v7332
        %7460 = vmatprep.subr.bf16.mxu0 %v7337
        %7461 = vmatpush1.bf16.msra.mxu0 %v7336
        %7462 = vmatprep.subr.bf16.mxu0 %v7341
        %7463 = vmatpush1.bf16.msra.mxu0 %v7340
        %7464 = vmatprep.subr.bf16.mxu0 %v7345
        %7465 = vmatpush1.bf16.msra.mxu0 %v7344
        %7466 = vmatprep.subr.bf16.mxu0 %v7349
        %7467 = vmatpush1.bf16.msra.mxu0 %v7348
        %7468 = vmatprep.subr.bf16.mxu0 %v7353
        %7469 = vmatpush1.bf16.msra.mxu0 %v7352
        %7470 = vmatprep.subr.bf16.mxu0 %v7357
        %7471 = vmatpush1.bf16.msra.mxu0 %v7356
        %7472 = vmatprep.subr.bf16.mxu0 %v7361
        %7473 = vmatpush1.bf16.msra.mxu0 %v7360
        %7474 = vmatprep.subr.bf16.mxu0 %v7365
        %7475 = vmatpush1.bf16.msra.mxu0 %v7364
        %7476 = vmatprep.subr.bf16.mxu0 %v7369
        %7477 = vmatpush1.bf16.msra.mxu0 %v7368
        %7478 = vmatprep.subr.bf16.mxu0 %v7373
        %7479 = vmatpush1.bf16.msra.mxu0 %v7372
        %7480 = vmatprep.subr.bf16.mxu0 %v7377
        %7481 = vmatpush1.bf16.msra.mxu0 %v7376
        %7482 = vmatprep.subr.bf16.mxu0 %v7381
        %7483 = vmatpush1.bf16.msra.mxu0 %v7380
        %7484 = vmatprep.subr.bf16.mxu0 %v7385
        %7485 = vmatpush1.bf16.msra.mxu0 %v7384
        %7486 = vmatprep.subr.bf16.mxu0 %v7389
        %7487 = vmatpush1.bf16.msra.mxu0 %v7388
        %7488 = vmatprep.mubr.bf16.mxu0 %v7114
        %7489 = vmatmul.mubr.bf16.gmra.mrb[0].mxu0 %v7113
        %v7490 = vpop.f32.mrb[0].mxu0
        %v7491 = vadd.f32 %v7119, %v7490
        %v7492 = vpop.f32.mrb[0].mxu0
        %v7493 = vadd.f32 %v7123, %v7492
        %v7494 = vpop.f32.mrb[0].mxu0
        %v7495 = vadd.f32 %v7119, %v7494
        %v7496 = vpop.f32.mrb[0].mxu0
        %v7497 = vadd.f32 %v7123, %v7496
        %7498 = vdwg.mxu0
        %7499 = vmatprep.subr.bf16.mxu0 %v7331
        %7500 = vmatpush1.bf16.msra.mxu0 %v7330
        %7501 = vmatprep.subr.bf16.mxu0 %v7335
        %7502 = vmatpush1.bf16.msra.mxu0 %v7334
        %7503 = vmatprep.subr.bf16.mxu0 %v7339
        %7504 = vmatpush1.bf16.msra.mxu0 %v7338
        %7505 = vmatprep.subr.bf16.mxu0 %v7343
        %7506 = vmatpush1.bf16.msra.mxu0 %v7342
        %7507 = vmatprep.subr.bf16.mxu0 %v7347
        %7508 = vmatpush1.bf16.msra.mxu0 %v7346
        %7509 = vmatprep.subr.bf16.mxu0 %v7351
        %7510 = vmatpush1.bf16.msra.mxu0 %v7350
        %7511 = vmatprep.subr.bf16.mxu0 %v7355
        %7512 = vmatpush1.bf16.msra.mxu0 %v7354
        %7513 = vmatprep.subr.bf16.mxu0 %v7359
        %7514 = vmatpush1.bf16.msra.mxu0 %v7358
        %7515 = vmatprep.subr.bf16.mxu0 %v7363
        %7516 = vmatpush1.bf16.msra.mxu0 %v7362
        %7517 = vmatprep.subr.bf16.mxu0 %v7367
        %7518 = vmatpush1.bf16.msra.mxu0 %v7366
        %7519 = vmatprep.subr.bf16.mxu0 %v7371
        %7520 = vmatpush1.bf16.msra.mxu0 %v7370
        %7521 = vmatprep.subr.bf16.mxu0 %v7375
        %7522 = vmatpush1.bf16.msra.mxu0 %v7374
        %7523 = vmatprep.subr.bf16.mxu0 %v7379
        %7524 = vmatpush1.bf16.msra.mxu0 %v7378
        %7525 = vmatprep.subr.bf16.mxu0 %v7383
        %7526 = vmatpush1.bf16.msra.mxu0 %v7382
        %7527 = vmatprep.subr.bf16.mxu0 %v7387
        %7528 = vmatpush1.bf16.msra.mxu0 %v7386
        %7529 = vmatprep.subr.bf16.mxu0 %v7391
        %7530 = vmatpush1.bf16.msra.mxu0 %v7390
        %7531 = vmatprep.mubr.bf16.mxu0 %v7114
        %7532 = vmatmul.mubr.bf16.gmra.mrb[0].mxu0 %v7113
        %v7533 = vpop.f32.mrb[0].mxu0
        %v7534 = vadd.f32 %v7127, %v7533
        %v7535 = vpop.f32.mrb[0].mxu0
        %v7536 = vadd.f32 %v7131, %v7535
        %v7537 = vpop.f32.mrb[0].mxu0
        %v7538 = vadd.f32 %v7127, %v7537
        %v7539 = vpop.f32.mrb[0].mxu0
        %v7540 = vadd.f32 %v7131, %v7539
        %7541 = vdwg.mxu0
        %vm7542 = vcmp.gt.f32.partialorder %v7491, 0.0
        %vm7543 = vcmp.gt.f32.partialorder %v7493, 0.0
        %vm7544 = vcmp.gt.f32.partialorder %v7534, 0.0
        %vm7545 = vcmp.gt.f32.partialorder %v7536, 0.0
        %vm7546 = vcmp.gt.f32.partialorder %v7495, 0.0
        %vm7547 = vcmp.gt.f32.partialorder %v7497, 0.0
        %vm7548 = vcmp.gt.f32.partialorder %v7538, 0.0
        %vm7549 = vcmp.gt.f32.partialorder %v7540, 0.0
        %v7550 = vmul.f32 %v7491, 0.01
        %v7551 = vmul.f32 %v7493, 0.01
        %v7552 = vmul.f32 %v7534, 0.01
        %v7553 = vmul.f32 %v7536, 0.01
        %v7554 = vmul.f32 %v7495, 0.01
        %v7555 = vmul.f32 %v7497, 0.01
        %v7556 = vmul.f32 %v7538, 0.01
        %v7557 = vmul.f32 %v7540, 0.01
        %v7558 = vsel %vm7542, %v7491, %v7550
        %v7559 = vsel %vm7543, %v7493, %v7551
        %v7560 = vsel %vm7544, %v7534, %v7552
        %v7561 = vsel %vm7545, %v7536, %v7553
        %v7562 = vsel %vm7546, %v7495, %v7554
        %v7563 = vsel %vm7547, %v7497, %v7555
        %v7564 = vsel %vm7548, %v7538, %v7556
        %v7565 = vsel %vm7549, %v7540, %v7557
        %v7566 = vld [vmem:[#allocation23] sm:$0xff]
        %v7567 = vld [vmem:[#allocation23 + $0x8] sm:$0xff]
        %v7568 = vld [vmem:[#allocation23 + $0x10] sm:$0xff]
        %v7569 = vld [vmem:[#allocation23 + $0x18] sm:$0xff]
        %v7570 = vld [vmem:[#allocation23 + $0x20] sm:$0xff]
        %v7571 = vld [vmem:[#allocation23 + $0x28] sm:$0xff]
        %v7572 = vld [vmem:[#allocation23 + $0x30] sm:$0xff]
        %v7573 = vld [vmem:[#allocation23 + $0x38] sm:$0xff]
        %v7574 = vld [vmem:[#allocation23 + $0x40] sm:$0xff]
        %v7575 = vld [vmem:[#allocation23 + $0x48] sm:$0xff]
        %v7576 = vld [vmem:[#allocation23 + $0x50] sm:$0xff]
        %v7577 = vld [vmem:[#allocation23 + $0x58] sm:$0xff]
        %v7578 = vld [vmem:[#allocation23 + $0x60] sm:$0xff]
        %v7579 = vld [vmem:[#allocation23 + $0x68] sm:$0xff]
        %v7580 = vld [vmem:[#allocation23 + $0x70] sm:$0xff]
        %v7581 = vld [vmem:[#allocation23 + $0x78] sm:$0xff]
        %v7582 = vld [vmem:[#allocation23 + $0x80] sm:$0xff]
        %v7583 = vld [vmem:[#allocation23 + $0x88] sm:$0xff]
        %v7584 = vld [vmem:[#allocation23 + $0x90] sm:$0xff]
        %v7585 = vld [vmem:[#allocation23 + $0x98] sm:$0xff]
        %v7586 = vld [vmem:[#allocation23 + $0xa0] sm:$0xff]
        %v7587 = vld [vmem:[#allocation23 + $0xa8] sm:$0xff]
        %v7588 = vld [vmem:[#allocation23 + $0xb0] sm:$0xff]
        %v7589 = vld [vmem:[#allocation23 + $0xb8] sm:$0xff]
        %v7590 = vld [vmem:[#allocation23 + $0xc0] sm:$0xff]
        %v7591 = vld [vmem:[#allocation23 + $0xc8] sm:$0xff]
        %v7592 = vld [vmem:[#allocation23 + $0xd0] sm:$0xff]
        %v7593 = vld [vmem:[#allocation23 + $0xd8] sm:$0xff]
        %v7594 = vld [vmem:[#allocation23 + $0xe0] sm:$0xff]
        %v7595 = vld [vmem:[#allocation23 + $0xe8] sm:$0xff]
        %v7596 = vld [vmem:[#allocation23 + $0xf0] sm:$0xff]
        %v7597 = vld [vmem:[#allocation23 + $0xf8] sm:$0xff]
        %v7598 = vld [vmem:[#allocation23 + $0x100] sm:$0xff]
        %v7599 = vld [vmem:[#allocation23 + $0x108] sm:$0xff]
        %v7600 = vld [vmem:[#allocation23 + $0x110] sm:$0xff]
        %v7601 = vld [vmem:[#allocation23 + $0x118] sm:$0xff]
        %v7602 = vld [vmem:[#allocation23 + $0x120] sm:$0xff]
        %v7603 = vld [vmem:[#allocation23 + $0x128] sm:$0xff]
        %v7604 = vld [vmem:[#allocation23 + $0x130] sm:$0xff]
        %v7605 = vld [vmem:[#allocation23 + $0x138] sm:$0xff]
        %v7606 = vld [vmem:[#allocation23 + $0x140] sm:$0xff]
        %v7607 = vld [vmem:[#allocation23 + $0x148] sm:$0xff]
        %v7608 = vld [vmem:[#allocation23 + $0x150] sm:$0xff]
        %v7609 = vld [vmem:[#allocation23 + $0x158] sm:$0xff]
        %v7610 = vld [vmem:[#allocation23 + $0x160] sm:$0xff]
        %v7611 = vld [vmem:[#allocation23 + $0x168] sm:$0xff]
        %v7612 = vld [vmem:[#allocation23 + $0x170] sm:$0xff]
        %v7613 = vld [vmem:[#allocation23 + $0x178] sm:$0xff]
        %v7614 = vld [vmem:[#allocation23 + $0x180] sm:$0xff]
        %v7615 = vld [vmem:[#allocation23 + $0x188] sm:$0xff]
        %v7616 = vld [vmem:[#allocation23 + $0x190] sm:$0xff]
        %v7617 = vld [vmem:[#allocation23 + $0x198] sm:$0xff]
        %v7618 = vld [vmem:[#allocation23 + $0x1a0] sm:$0xff]
        %v7619 = vld [vmem:[#allocation23 + $0x1a8] sm:$0xff]
        %v7620 = vld [vmem:[#allocation23 + $0x1b0] sm:$0xff]
        %v7621 = vld [vmem:[#allocation23 + $0x1b8] sm:$0xff]
        %v7622 = vld [vmem:[#allocation23 + $0x1c0] sm:$0xff]
        %v7623 = vld [vmem:[#allocation23 + $0x1c8] sm:$0xff]
        %v7624 = vld [vmem:[#allocation23 + $0x1d0] sm:$0xff]
        %v7625 = vld [vmem:[#allocation23 + $0x1d8] sm:$0xff]
        %v7626 = vld [vmem:[#allocation23 + $0x1e0] sm:$0xff]
        %v7627 = vld [vmem:[#allocation23 + $0x1e8] sm:$0xff]
        %v7628 = vld [vmem:[#allocation23 + $0x1f0] sm:$0xff]
        %v7629 = vld [vmem:[#allocation23 + $0x1f8] sm:$0xff]
        %v7630 = vld [vmem:[#allocation23 + $0x200] sm:$0xff]
        %v7631 = vld [vmem:[#allocation23 + $0x208] sm:$0xff]
        %v7632 = vld [vmem:[#allocation23 + $0x210] sm:$0xff]
        %v7633 = vld [vmem:[#allocation23 + $0x218] sm:$0xff]
        %v7634 = vld [vmem:[#allocation23 + $0x220] sm:$0xff]
        %v7635 = vld [vmem:[#allocation23 + $0x228] sm:$0xff]
        %v7636 = vld [vmem:[#allocation23 + $0x230] sm:$0xff]
        %v7637 = vld [vmem:[#allocation23 + $0x238] sm:$0xff]
        %v7638 = vld [vmem:[#allocation23 + $0x240] sm:$0xff]
        %v7639 = vld [vmem:[#allocation23 + $0x248] sm:$0xff]
        %v7640 = vld [vmem:[#allocation23 + $0x250] sm:$0xff]
        %v7641 = vld [vmem:[#allocation23 + $0x258] sm:$0xff]
        %v7642 = vld [vmem:[#allocation23 + $0x260] sm:$0xff]
        %v7643 = vld [vmem:[#allocation23 + $0x268] sm:$0xff]
        %v7644 = vld [vmem:[#allocation23 + $0x270] sm:$0xff]
        %v7645 = vld [vmem:[#allocation23 + $0x278] sm:$0xff]
        %v7646 = vld [vmem:[#allocation23 + $0x280] sm:$0xff]
        %v7647 = vld [vmem:[#allocation23 + $0x288] sm:$0xff]
        %v7648 = vld [vmem:[#allocation23 + $0x290] sm:$0xff]
        %v7649 = vld [vmem:[#allocation23 + $0x298] sm:$0xff]
        %v7650 = vld [vmem:[#allocation23 + $0x2a0] sm:$0xff]
        %v7651 = vld [vmem:[#allocation23 + $0x2a8] sm:$0xff]
        %v7652 = vld [vmem:[#allocation23 + $0x2b0] sm:$0xff]
        %v7653 = vld [vmem:[#allocation23 + $0x2b8] sm:$0xff]
        %v7654 = vld [vmem:[#allocation23 + $0x2c0] sm:$0xff]
        %v7655 = vld [vmem:[#allocation23 + $0x2c8] sm:$0xff]
        %v7656 = vld [vmem:[#allocation23 + $0x2d0] sm:$0xff]
        %v7657 = vld [vmem:[#allocation23 + $0x2d8] sm:$0xff]
        %v7658 = vld [vmem:[#allocation23 + $0x2e0] sm:$0xff]
        %v7659 = vld [vmem:[#allocation23 + $0x2e8] sm:$0xff]
        %v7660 = vld [vmem:[#allocation23 + $0x2f0] sm:$0xff]
        %v7661 = vld [vmem:[#allocation23 + $0x2f8] sm:$0xff]
        %v7662 = vld [vmem:[#allocation23 + $0x300] sm:$0xff]
        %v7663 = vld [vmem:[#allocation23 + $0x308] sm:$0xff]
        %v7664 = vld [vmem:[#allocation23 + $0x310] sm:$0xff]
        %v7665 = vld [vmem:[#allocation23 + $0x318] sm:$0xff]
        %v7666 = vld [vmem:[#allocation23 + $0x320] sm:$0xff]
        %v7667 = vld [vmem:[#allocation23 + $0x328] sm:$0xff]
        %v7668 = vld [vmem:[#allocation23 + $0x330] sm:$0xff]
        %v7669 = vld [vmem:[#allocation23 + $0x338] sm:$0xff]
        %v7670 = vld [vmem:[#allocation23 + $0x340] sm:$0xff]
        %v7671 = vld [vmem:[#allocation23 + $0x348] sm:$0xff]
        %v7672 = vld [vmem:[#allocation23 + $0x350] sm:$0xff]
        %v7673 = vld [vmem:[#allocation23 + $0x358] sm:$0xff]
        %v7674 = vld [vmem:[#allocation23 + $0x360] sm:$0xff]
        %v7675 = vld [vmem:[#allocation23 + $0x368] sm:$0xff]
        %v7676 = vld [vmem:[#allocation23 + $0x370] sm:$0xff]
        %v7677 = vld [vmem:[#allocation23 + $0x378] sm:$0xff]
        %v7678 = vld [vmem:[#allocation23 + $0x380] sm:$0xff]
        %v7679 = vld [vmem:[#allocation23 + $0x388] sm:$0xff]
        %v7680 = vld [vmem:[#allocation23 + $0x390] sm:$0xff]
        %v7681 = vld [vmem:[#allocation23 + $0x398] sm:$0xff]
        %v7682 = vld [vmem:[#allocation23 + $0x3a0] sm:$0xff]
        %v7683 = vld [vmem:[#allocation23 + $0x3a8] sm:$0xff]
        %v7684 = vld [vmem:[#allocation23 + $0x3b0] sm:$0xff]
        %v7685 = vld [vmem:[#allocation23 + $0x3b8] sm:$0xff]
        %v7686 = vld [vmem:[#allocation23 + $0x3c0] sm:$0xff]
        %v7687 = vld [vmem:[#allocation23 + $0x3c8] sm:$0xff]
        %v7688 = vld [vmem:[#allocation23 + $0x3d0] sm:$0xff]
        %v7689 = vld [vmem:[#allocation23 + $0x3d8] sm:$0xff]
        %v7690 = vld [vmem:[#allocation23 + $0x3e0] sm:$0xff]
        %v7691 = vld [vmem:[#allocation23 + $0x3e8] sm:$0xff]
        %v7692 = vld [vmem:[#allocation23 + $0x3f0] sm:$0xff]
        %v7693 = vld [vmem:[#allocation23 + $0x3f8] sm:$0xff]
        %v7694 = vld [vmem:[#allocation23 + $0x400] sm:$0xff]
        %v7695 = vld [vmem:[#allocation23 + $0x408] sm:$0xff]
        %v7696 = vld [vmem:[#allocation23 + $0x410] sm:$0xff]
        %v7697 = vld [vmem:[#allocation23 + $0x418] sm:$0xff]
        %v7698 = vld [vmem:[#allocation23 + $0x420] sm:$0xff]
        %v7699 = vld [vmem:[#allocation23 + $0x428] sm:$0xff]
        %v7700 = vld [vmem:[#allocation23 + $0x430] sm:$0xff]
        %v7701 = vld [vmem:[#allocation23 + $0x438] sm:$0xff]
        %v7702 = vld [vmem:[#allocation23 + $0x440] sm:$0xff]
        %v7703 = vld [vmem:[#allocation23 + $0x448] sm:$0xff]
        %v7704 = vld [vmem:[#allocation23 + $0x450] sm:$0xff]
        %v7705 = vld [vmem:[#allocation23 + $0x458] sm:$0xff]
        %v7706 = vld [vmem:[#allocation23 + $0x460] sm:$0xff]
        %v7707 = vld [vmem:[#allocation23 + $0x468] sm:$0xff]
        %v7708 = vld [vmem:[#allocation23 + $0x470] sm:$0xff]
        %v7709 = vld [vmem:[#allocation23 + $0x478] sm:$0xff]
        %v7710 = vld [vmem:[#allocation23 + $0x480] sm:$0xff]
        %v7711 = vld [vmem:[#allocation23 + $0x488] sm:$0xff]
        %v7712 = vld [vmem:[#allocation23 + $0x490] sm:$0xff]
        %v7713 = vld [vmem:[#allocation23 + $0x498] sm:$0xff]
        %v7714 = vld [vmem:[#allocation23 + $0x4a0] sm:$0xff]
        %v7715 = vld [vmem:[#allocation23 + $0x4a8] sm:$0xff]
        %v7716 = vld [vmem:[#allocation23 + $0x4b0] sm:$0xff]
        %v7717 = vld [vmem:[#allocation23 + $0x4b8] sm:$0xff]
        %v7718 = vld [vmem:[#allocation23 + $0x4c0] sm:$0xff]
        %v7719 = vld [vmem:[#allocation23 + $0x4c8] sm:$0xff]
        %v7720 = vld [vmem:[#allocation23 + $0x4d0] sm:$0xff]
        %v7721 = vld [vmem:[#allocation23 + $0x4d8] sm:$0xff]
        %v7722 = vld [vmem:[#allocation23 + $0x4e0] sm:$0xff]
        %v7723 = vld [vmem:[#allocation23 + $0x4e8] sm:$0xff]
        %v7724 = vld [vmem:[#allocation23 + $0x4f0] sm:$0xff]
        %v7725 = vld [vmem:[#allocation23 + $0x4f8] sm:$0xff]
        %v7726 = vld [vmem:[#allocation23 + $0x500] sm:$0xff]
        %v7727 = vld [vmem:[#allocation23 + $0x508] sm:$0xff]
        %v7728 = vld [vmem:[#allocation23 + $0x510] sm:$0xff]
        %v7729 = vld [vmem:[#allocation23 + $0x518] sm:$0xff]
        %v7730 = vld [vmem:[#allocation23 + $0x520] sm:$0xff]
        %v7731 = vld [vmem:[#allocation23 + $0x528] sm:$0xff]
        %v7732 = vld [vmem:[#allocation23 + $0x530] sm:$0xff]
        %v7733 = vld [vmem:[#allocation23 + $0x538] sm:$0xff]
        %v7734 = vld [vmem:[#allocation23 + $0x540] sm:$0xff]
        %v7735 = vld [vmem:[#allocation23 + $0x548] sm:$0xff]
        %v7736 = vld [vmem:[#allocation23 + $0x550] sm:$0xff]
        %v7737 = vld [vmem:[#allocation23 + $0x558] sm:$0xff]
        %v7738 = vld [vmem:[#allocation23 + $0x560] sm:$0xff]
        %v7739 = vld [vmem:[#allocation23 + $0x568] sm:$0xff]
        %v7740 = vld [vmem:[#allocation23 + $0x570] sm:$0xff]
        %v7741 = vld [vmem:[#allocation23 + $0x578] sm:$0xff]
        %v7742 = vld [vmem:[#allocation23 + $0x580] sm:$0xff]
        %v7743 = vld [vmem:[#allocation23 + $0x588] sm:$0xff]
        %v7744 = vld [vmem:[#allocation23 + $0x590] sm:$0xff]
        %v7745 = vld [vmem:[#allocation23 + $0x598] sm:$0xff]
        %v7746 = vld [vmem:[#allocation23 + $0x5a0] sm:$0xff]
        %v7747 = vld [vmem:[#allocation23 + $0x5a8] sm:$0xff]
        %v7748 = vld [vmem:[#allocation23 + $0x5b0] sm:$0xff]
        %v7749 = vld [vmem:[#allocation23 + $0x5b8] sm:$0xff]
        %v7750 = vld [vmem:[#allocation23 + $0x5c0] sm:$0xff]
        %v7751 = vld [vmem:[#allocation23 + $0x5c8] sm:$0xff]
        %v7752 = vld [vmem:[#allocation23 + $0x5d0] sm:$0xff]
        %v7753 = vld [vmem:[#allocation23 + $0x5d8] sm:$0xff]
        %v7754 = vld [vmem:[#allocation23 + $0x5e0] sm:$0xff]
        %v7755 = vld [vmem:[#allocation23 + $0x5e8] sm:$0xff]
        %v7756 = vld [vmem:[#allocation23 + $0x5f0] sm:$0xff]
        %v7757 = vld [vmem:[#allocation23 + $0x5f8] sm:$0xff]
        %v7758 = vld [vmem:[#allocation23 + $0x600] sm:$0xff]
        %v7759 = vld [vmem:[#allocation23 + $0x608] sm:$0xff]
        %v7760 = vld [vmem:[#allocation23 + $0x610] sm:$0xff]
        %v7761 = vld [vmem:[#allocation23 + $0x618] sm:$0xff]
        %v7762 = vld [vmem:[#allocation23 + $0x620] sm:$0xff]
        %v7763 = vld [vmem:[#allocation23 + $0x628] sm:$0xff]
        %v7764 = vld [vmem:[#allocation23 + $0x630] sm:$0xff]
        %v7765 = vld [vmem:[#allocation23 + $0x638] sm:$0xff]
        %v7766 = vld [vmem:[#allocation23 + $0x640] sm:$0xff]
        %v7767 = vld [vmem:[#allocation23 + $0x648] sm:$0xff]
        %v7768 = vld [vmem:[#allocation23 + $0x650] sm:$0xff]
        %v7769 = vld [vmem:[#allocation23 + $0x658] sm:$0xff]
        %v7770 = vld [vmem:[#allocation23 + $0x660] sm:$0xff]
        %v7771 = vld [vmem:[#allocation23 + $0x668] sm:$0xff]
        %v7772 = vld [vmem:[#allocation23 + $0x670] sm:$0xff]
        %v7773 = vld [vmem:[#allocation23 + $0x678] sm:$0xff]
        %v7774 = vld [vmem:[#allocation23 + $0x680] sm:$0xff]
        %v7775 = vld [vmem:[#allocation23 + $0x688] sm:$0xff]
        %v7776 = vld [vmem:[#allocation23 + $0x690] sm:$0xff]
        %v7777 = vld [vmem:[#allocation23 + $0x698] sm:$0xff]
        %v7778 = vld [vmem:[#allocation23 + $0x6a0] sm:$0xff]
        %v7779 = vld [vmem:[#allocation23 + $0x6a8] sm:$0xff]
        %v7780 = vld [vmem:[#allocation23 + $0x6b0] sm:$0xff]
        %v7781 = vld [vmem:[#allocation23 + $0x6b8] sm:$0xff]
        %v7782 = vld [vmem:[#allocation23 + $0x6c0] sm:$0xff]
        %v7783 = vld [vmem:[#allocation23 + $0x6c8] sm:$0xff]
        %v7784 = vld [vmem:[#allocation23 + $0x6d0] sm:$0xff]
        %v7785 = vld [vmem:[#allocation23 + $0x6d8] sm:$0xff]
        %v7786 = vld [vmem:[#allocation23 + $0x6e0] sm:$0xff]
        %v7787 = vld [vmem:[#allocation23 + $0x6e8] sm:$0xff]
        %v7788 = vld [vmem:[#allocation23 + $0x6f0] sm:$0xff]
        %v7789 = vld [vmem:[#allocation23 + $0x6f8] sm:$0xff]
        %v7790 = vld [vmem:[#allocation23 + $0x700] sm:$0xff]
        %v7791 = vld [vmem:[#allocation23 + $0x708] sm:$0xff]
        %v7792 = vld [vmem:[#allocation23 + $0x710] sm:$0xff]
        %v7793 = vld [vmem:[#allocation23 + $0x718] sm:$0xff]
        %v7794 = vld [vmem:[#allocation23 + $0x720] sm:$0xff]
        %v7795 = vld [vmem:[#allocation23 + $0x728] sm:$0xff]
        %v7796 = vld [vmem:[#allocation23 + $0x730] sm:$0xff]
        %v7797 = vld [vmem:[#allocation23 + $0x738] sm:$0xff]
        %v7798 = vld [vmem:[#allocation23 + $0x740] sm:$0xff]
        %v7799 = vld [vmem:[#allocation23 + $0x748] sm:$0xff]
        %v7800 = vld [vmem:[#allocation23 + $0x750] sm:$0xff]
        %v7801 = vld [vmem:[#allocation23 + $0x758] sm:$0xff]
        %v7802 = vld [vmem:[#allocation23 + $0x760] sm:$0xff]
        %v7803 = vld [vmem:[#allocation23 + $0x768] sm:$0xff]
        %v7804 = vld [vmem:[#allocation23 + $0x770] sm:$0xff]
        %v7805 = vld [vmem:[#allocation23 + $0x778] sm:$0xff]
        %v7806 = vld [vmem:[#allocation23 + $0x780] sm:$0xff]
        %v7807 = vld [vmem:[#allocation23 + $0x788] sm:$0xff]
        %v7808 = vld [vmem:[#allocation23 + $0x790] sm:$0xff]
        %v7809 = vld [vmem:[#allocation23 + $0x798] sm:$0xff]
        %v7810 = vld [vmem:[#allocation23 + $0x7a0] sm:$0xff]
        %v7811 = vld [vmem:[#allocation23 + $0x7a8] sm:$0xff]
        %v7812 = vld [vmem:[#allocation23 + $0x7b0] sm:$0xff]
        %v7813 = vld [vmem:[#allocation23 + $0x7b8] sm:$0xff]
        %v7814 = vld [vmem:[#allocation23 + $0x7c0] sm:$0xff]
        %v7815 = vld [vmem:[#allocation23 + $0x7c8] sm:$0xff]
        %v7816 = vld [vmem:[#allocation23 + $0x7d0] sm:$0xff]
        %v7817 = vld [vmem:[#allocation23 + $0x7d8] sm:$0xff]
        %v7818 = vld [vmem:[#allocation23 + $0x7e0] sm:$0xff]
        %v7819 = vld [vmem:[#allocation23 + $0x7e8] sm:$0xff]
        %v7820 = vld [vmem:[#allocation23 + $0x7f0] sm:$0xff]
        %v7821 = vld [vmem:[#allocation23 + $0x7f8] sm:$0xff]
        %v7822 = vld [vmem:[#allocation25] sm:$0xff]
        %v7823 = vpack.c.bf16 %v7562, %v7558
        %v7824 = vpack.c.bf16 %v7563, %v7559
        %v7825 = vpack.c.bf16 %v7564, %v7560
        %v7826 = vpack.c.bf16 %v7565, %v7561
        %v7828 = vlaneseq
        %v7829 = vshrl.u32 %v7828, 7
        %v7830 = vsub.s32 0, %v7829
        %v7831 = vrot.slane %v7822, %v7830
        %v7832 = vlaneseq
        %v7833 = vshrl.u32 %v7832, 7
        %v7834 = vsub.s32 1, %v7833
        %v7835 = vrot.slane %v7822, %v7834
        %v7836 = vlaneseq
        %v7837 = vshrl.u32 %v7836, 7
        %v7838 = vsub.s32 2, %v7837
        %v7839 = vrot.slane %v7822, %v7838
        %v7840 = vlaneseq
        %v7841 = vshrl.u32 %v7840, 7
        %v7842 = vsub.s32 3, %v7841
        %v7843 = vrot.slane %v7822, %v7842
        %v7844 = vlaneseq
        %v7845 = vshrl.u32 %v7844, 7
        %v7846 = vsub.s32 4, %v7845
        %v7847 = vrot.slane %v7822, %v7846
        %v7848 = vlaneseq
        %v7849 = vshrl.u32 %v7848, 7
        %v7850 = vsub.s32 5, %v7849
        %v7851 = vrot.slane %v7822, %v7850
        %v7852 = vlaneseq
        %v7853 = vshrl.u32 %v7852, 7
        %v7854 = vsub.s32 6, %v7853
        %v7855 = vrot.slane %v7822, %v7854
        %v7856 = vlaneseq
        %v7857 = vshrl.u32 %v7856, 7
        %v7858 = vsub.s32 7, %v7857
        %v7859 = vrot.slane %v7822, %v7858
        %v8124 = vunpack.c.l.b16 %v7566
        %v8125 = vunpack.c.h.b16 %v7566
        %v8126 = vunpack.c.l.b16 %v7567
        %v8127 = vunpack.c.h.b16 %v7567
        %v8128 = vunpack.c.l.b16 %v7568
        %v8129 = vunpack.c.h.b16 %v7568
        %v8130 = vunpack.c.l.b16 %v7569
        %v8131 = vunpack.c.h.b16 %v7569
        %v8132 = vunpack.c.l.b16 %v7570
        %v8133 = vunpack.c.h.b16 %v7570
        %v8134 = vunpack.c.l.b16 %v7571
        %v8135 = vunpack.c.h.b16 %v7571
        %v8136 = vunpack.c.l.b16 %v7572
        %v8137 = vunpack.c.h.b16 %v7572
        %v8138 = vunpack.c.l.b16 %v7573
        %v8139 = vunpack.c.h.b16 %v7573
        %v8140 = vunpack.c.l.b16 %v7574
        %v8141 = vunpack.c.h.b16 %v7574
        %v8142 = vunpack.c.l.b16 %v7575
        %v8143 = vunpack.c.h.b16 %v7575
        %v8144 = vunpack.c.l.b16 %v7576
        %v8145 = vunpack.c.h.b16 %v7576
        %v8146 = vunpack.c.l.b16 %v7577
        %v8147 = vunpack.c.h.b16 %v7577
        %v8148 = vunpack.c.l.b16 %v7578
        %v8149 = vunpack.c.h.b16 %v7578
        %v8150 = vunpack.c.l.b16 %v7579
        %v8151 = vunpack.c.h.b16 %v7579
        %v8152 = vunpack.c.l.b16 %v7580
        %v8153 = vunpack.c.h.b16 %v7580
        %v8154 = vunpack.c.l.b16 %v7581
        %v8155 = vunpack.c.h.b16 %v7581
        %v8156 = vunpack.c.l.b16 %v7582
        %v8157 = vunpack.c.h.b16 %v7582
        %v8158 = vunpack.c.l.b16 %v7583
        %v8159 = vunpack.c.h.b16 %v7583
        %v8160 = vunpack.c.l.b16 %v7584
        %v8161 = vunpack.c.h.b16 %v7584
        %v8162 = vunpack.c.l.b16 %v7585
        %v8163 = vunpack.c.h.b16 %v7585
        %v8164 = vunpack.c.l.b16 %v7586
        %v8165 = vunpack.c.h.b16 %v7586
        %v8166 = vunpack.c.l.b16 %v7587
        %v8167 = vunpack.c.h.b16 %v7587
        %v8168 = vunpack.c.l.b16 %v7588
        %v8169 = vunpack.c.h.b16 %v7588
        %v8170 = vunpack.c.l.b16 %v7589
        %v8171 = vunpack.c.h.b16 %v7589
        %v8172 = vunpack.c.l.b16 %v7590
        %v8173 = vunpack.c.h.b16 %v7590
        %v8174 = vunpack.c.l.b16 %v7591
        %v8175 = vunpack.c.h.b16 %v7591
        %v8176 = vunpack.c.l.b16 %v7592
        %v8177 = vunpack.c.h.b16 %v7592
        %v8178 = vunpack.c.l.b16 %v7593
        %v8179 = vunpack.c.h.b16 %v7593
        %v8180 = vunpack.c.l.b16 %v7594
        %v8181 = vunpack.c.h.b16 %v7594
        %v8182 = vunpack.c.l.b16 %v7595
        %v8183 = vunpack.c.h.b16 %v7595
        %v8184 = vunpack.c.l.b16 %v7596
        %v8185 = vunpack.c.h.b16 %v7596
        %v8186 = vunpack.c.l.b16 %v7597
        %v8187 = vunpack.c.h.b16 %v7597
        %v8188 = vunpack.c.l.b16 %v7598
        %v8189 = vunpack.c.h.b16 %v7598
        %v8190 = vunpack.c.l.b16 %v7599
        %v8191 = vunpack.c.h.b16 %v7599
        %v8192 = vunpack.c.l.b16 %v7600
        %v8193 = vunpack.c.h.b16 %v7600
        %v8194 = vunpack.c.l.b16 %v7601
        %v8195 = vunpack.c.h.b16 %v7601
        %v8196 = vunpack.c.l.b16 %v7602
        %v8197 = vunpack.c.h.b16 %v7602
        %v8198 = vunpack.c.l.b16 %v7603
        %v8199 = vunpack.c.h.b16 %v7603
        %v8200 = vunpack.c.l.b16 %v7604
        %v8201 = vunpack.c.h.b16 %v7604
        %v8202 = vunpack.c.l.b16 %v7605
        %v8203 = vunpack.c.h.b16 %v7605
        %v8204 = vunpack.c.l.b16 %v7606
        %v8205 = vunpack.c.h.b16 %v7606
        %v8206 = vunpack.c.l.b16 %v7607
        %v8207 = vunpack.c.h.b16 %v7607
        %v8208 = vunpack.c.l.b16 %v7608
        %v8209 = vunpack.c.h.b16 %v7608
        %v8210 = vunpack.c.l.b16 %v7609
        %v8211 = vunpack.c.h.b16 %v7609
        %v8212 = vunpack.c.l.b16 %v7610
        %v8213 = vunpack.c.h.b16 %v7610
        %v8214 = vunpack.c.l.b16 %v7611
        %v8215 = vunpack.c.h.b16 %v7611
        %v8216 = vunpack.c.l.b16 %v7612
        %v8217 = vunpack.c.h.b16 %v7612
        %v8218 = vunpack.c.l.b16 %v7613
        %v8219 = vunpack.c.h.b16 %v7613
        %v8220 = vunpack.c.l.b16 %v7614
        %v8221 = vunpack.c.h.b16 %v7614
        %v8222 = vunpack.c.l.b16 %v7615
        %v8223 = vunpack.c.h.b16 %v7615
        %v8224 = vunpack.c.l.b16 %v7616
        %v8225 = vunpack.c.h.b16 %v7616
        %v8226 = vunpack.c.l.b16 %v7617
        %v8227 = vunpack.c.h.b16 %v7617
        %v8228 = vunpack.c.l.b16 %v7618
        %v8229 = vunpack.c.h.b16 %v7618
        %v8230 = vunpack.c.l.b16 %v7619
        %v8231 = vunpack.c.h.b16 %v7619
        %v8232 = vunpack.c.l.b16 %v7620
        %v8233 = vunpack.c.h.b16 %v7620
        %v8234 = vunpack.c.l.b16 %v7621
        %v8235 = vunpack.c.h.b16 %v7621
        %v8236 = vunpack.c.l.b16 %v7622
        %v8237 = vunpack.c.h.b16 %v7622
        %v8238 = vunpack.c.l.b16 %v7623
        %v8239 = vunpack.c.h.b16 %v7623
        %v8240 = vunpack.c.l.b16 %v7624
        %v8241 = vunpack.c.h.b16 %v7624
        %v8242 = vunpack.c.l.b16 %v7625
        %v8243 = vunpack.c.h.b16 %v7625
        %v8244 = vunpack.c.l.b16 %v7626
        %v8245 = vunpack.c.h.b16 %v7626
        %v8246 = vunpack.c.l.b16 %v7627
        %v8247 = vunpack.c.h.b16 %v7627
        %v8248 = vunpack.c.l.b16 %v7628
        %v8249 = vunpack.c.h.b16 %v7628
        %v8250 = vunpack.c.l.b16 %v7629
        %v8251 = vunpack.c.h.b16 %v7629
        %v8252 = vunpack.c.l.b16 %v7630
        %v8253 = vunpack.c.h.b16 %v7630
        %v8254 = vunpack.c.l.b16 %v7631
        %v8255 = vunpack.c.h.b16 %v7631
        %v8256 = vunpack.c.l.b16 %v7632
        %v8257 = vunpack.c.h.b16 %v7632
        %v8258 = vunpack.c.l.b16 %v7633
        %v8259 = vunpack.c.h.b16 %v7633
        %v8260 = vunpack.c.l.b16 %v7634
        %v8261 = vunpack.c.h.b16 %v7634
        %v8262 = vunpack.c.l.b16 %v7635
        %v8263 = vunpack.c.h.b16 %v7635
        %v8264 = vunpack.c.l.b16 %v7636
        %v8265 = vunpack.c.h.b16 %v7636
        %v8266 = vunpack.c.l.b16 %v7637
        %v8267 = vunpack.c.h.b16 %v7637
        %v8268 = vunpack.c.l.b16 %v7638
        %v8269 = vunpack.c.h.b16 %v7638
        %v8270 = vunpack.c.l.b16 %v7639
        %v8271 = vunpack.c.h.b16 %v7639
        %v8272 = vunpack.c.l.b16 %v7640
        %v8273 = vunpack.c.h.b16 %v7640
        %v8274 = vunpack.c.l.b16 %v7641
        %v8275 = vunpack.c.h.b16 %v7641
        %v8276 = vunpack.c.l.b16 %v7642
        %v8277 = vunpack.c.h.b16 %v7642
        %v8278 = vunpack.c.l.b16 %v7643
        %v8279 = vunpack.c.h.b16 %v7643
        %v8280 = vunpack.c.l.b16 %v7644
        %v8281 = vunpack.c.h.b16 %v7644
        %v8282 = vunpack.c.l.b16 %v7645
        %v8283 = vunpack.c.h.b16 %v7645
        %v8284 = vunpack.c.l.b16 %v7646
        %v8285 = vunpack.c.h.b16 %v7646
        %v8286 = vunpack.c.l.b16 %v7647
        %v8287 = vunpack.c.h.b16 %v7647
        %v8288 = vunpack.c.l.b16 %v7648
        %v8289 = vunpack.c.h.b16 %v7648
        %v8290 = vunpack.c.l.b16 %v7649
        %v8291 = vunpack.c.h.b16 %v7649
        %v8292 = vunpack.c.l.b16 %v7650
        %v8293 = vunpack.c.h.b16 %v7650
        %v8294 = vunpack.c.l.b16 %v7651
        %v8295 = vunpack.c.h.b16 %v7651
        %v8296 = vunpack.c.l.b16 %v7652
        %v8297 = vunpack.c.h.b16 %v7652
        %v8298 = vunpack.c.l.b16 %v7653
        %v8299 = vunpack.c.h.b16 %v7653
        %v8300 = vunpack.c.l.b16 %v7654
        %v8301 = vunpack.c.h.b16 %v7654
        %v8302 = vunpack.c.l.b16 %v7655
        %v8303 = vunpack.c.h.b16 %v7655
        %v8304 = vunpack.c.l.b16 %v7656
        %v8305 = vunpack.c.h.b16 %v7656
        %v8306 = vunpack.c.l.b16 %v7657
        %v8307 = vunpack.c.h.b16 %v7657
        %v8308 = vunpack.c.l.b16 %v7658
        %v8309 = vunpack.c.h.b16 %v7658
        %v8310 = vunpack.c.l.b16 %v7659
        %v8311 = vunpack.c.h.b16 %v7659
        %v8312 = vunpack.c.l.b16 %v7660
        %v8313 = vunpack.c.h.b16 %v7660
        %v8314 = vunpack.c.l.b16 %v7661
        %v8315 = vunpack.c.h.b16 %v7661
        %v8316 = vunpack.c.l.b16 %v7662
        %v8317 = vunpack.c.h.b16 %v7662
        %v8318 = vunpack.c.l.b16 %v7663
        %v8319 = vunpack.c.h.b16 %v7663
        %v8320 = vunpack.c.l.b16 %v7664
        %v8321 = vunpack.c.h.b16 %v7664
        %v8322 = vunpack.c.l.b16 %v7665
        %v8323 = vunpack.c.h.b16 %v7665
        %v8324 = vunpack.c.l.b16 %v7666
        %v8325 = vunpack.c.h.b16 %v7666
        %v8326 = vunpack.c.l.b16 %v7667
        %v8327 = vunpack.c.h.b16 %v7667
        %v8328 = vunpack.c.l.b16 %v7668
        %v8329 = vunpack.c.h.b16 %v7668
        %v8330 = vunpack.c.l.b16 %v7669
        %v8331 = vunpack.c.h.b16 %v7669
        %v8332 = vunpack.c.l.b16 %v7670
        %v8333 = vunpack.c.h.b16 %v7670
        %v8334 = vunpack.c.l.b16 %v7671
        %v8335 = vunpack.c.h.b16 %v7671
        %v8336 = vunpack.c.l.b16 %v7672
        %v8337 = vunpack.c.h.b16 %v7672
        %v8338 = vunpack.c.l.b16 %v7673
        %v8339 = vunpack.c.h.b16 %v7673
        %v8340 = vunpack.c.l.b16 %v7674
        %v8341 = vunpack.c.h.b16 %v7674
        %v8342 = vunpack.c.l.b16 %v7675
        %v8343 = vunpack.c.h.b16 %v7675
        %v8344 = vunpack.c.l.b16 %v7676
        %v8345 = vunpack.c.h.b16 %v7676
        %v8346 = vunpack.c.l.b16 %v7677
        %v8347 = vunpack.c.h.b16 %v7677
        %v8348 = vunpack.c.l.b16 %v7678
        %v8349 = vunpack.c.h.b16 %v7678
        %v8350 = vunpack.c.l.b16 %v7679
        %v8351 = vunpack.c.h.b16 %v7679
        %v8352 = vunpack.c.l.b16 %v7680
        %v8353 = vunpack.c.h.b16 %v7680
        %v8354 = vunpack.c.l.b16 %v7681
        %v8355 = vunpack.c.h.b16 %v7681
        %v8356 = vunpack.c.l.b16 %v7682
        %v8357 = vunpack.c.h.b16 %v7682
        %v8358 = vunpack.c.l.b16 %v7683
        %v8359 = vunpack.c.h.b16 %v7683
        %v8360 = vunpack.c.l.b16 %v7684
        %v8361 = vunpack.c.h.b16 %v7684
        %v8362 = vunpack.c.l.b16 %v7685
        %v8363 = vunpack.c.h.b16 %v7685
        %v8364 = vunpack.c.l.b16 %v7686
        %v8365 = vunpack.c.h.b16 %v7686
        %v8366 = vunpack.c.l.b16 %v7687
        %v8367 = vunpack.c.h.b16 %v7687
        %v8368 = vunpack.c.l.b16 %v7688
        %v8369 = vunpack.c.h.b16 %v7688
        %v8370 = vunpack.c.l.b16 %v7689
        %v8371 = vunpack.c.h.b16 %v7689
        %v8372 = vunpack.c.l.b16 %v7690
        %v8373 = vunpack.c.h.b16 %v7690
        %v8374 = vunpack.c.l.b16 %v7691
        %v8375 = vunpack.c.h.b16 %v7691
        %v8376 = vunpack.c.l.b16 %v7692
        %v8377 = vunpack.c.h.b16 %v7692
        %v8378 = vunpack.c.l.b16 %v7693
        %v8379 = vunpack.c.h.b16 %v7693
        %v8380 = vunpack.c.l.b16 %v7694
        %v8381 = vunpack.c.h.b16 %v7694
        %v8382 = vunpack.c.l.b16 %v7695
        %v8383 = vunpack.c.h.b16 %v7695
        %v8384 = vunpack.c.l.b16 %v7696
        %v8385 = vunpack.c.h.b16 %v7696
        %v8386 = vunpack.c.l.b16 %v7697
        %v8387 = vunpack.c.h.b16 %v7697
        %v8388 = vunpack.c.l.b16 %v7698
        %v8389 = vunpack.c.h.b16 %v7698
        %v8390 = vunpack.c.l.b16 %v7699
        %v8391 = vunpack.c.h.b16 %v7699
        %v8392 = vunpack.c.l.b16 %v7700
        %v8393 = vunpack.c.h.b16 %v7700
        %v8394 = vunpack.c.l.b16 %v7701
        %v8395 = vunpack.c.h.b16 %v7701
        %v8396 = vunpack.c.l.b16 %v7702
        %v8397 = vunpack.c.h.b16 %v7702
        %v8398 = vunpack.c.l.b16 %v7703
        %v8399 = vunpack.c.h.b16 %v7703
        %v8400 = vunpack.c.l.b16 %v7704
        %v8401 = vunpack.c.h.b16 %v7704
        %v8402 = vunpack.c.l.b16 %v7705
        %v8403 = vunpack.c.h.b16 %v7705
        %v8404 = vunpack.c.l.b16 %v7706
        %v8405 = vunpack.c.h.b16 %v7706
        %v8406 = vunpack.c.l.b16 %v7707
        %v8407 = vunpack.c.h.b16 %v7707
        %v8408 = vunpack.c.l.b16 %v7708
        %v8409 = vunpack.c.h.b16 %v7708
        %v8410 = vunpack.c.l.b16 %v7709
        %v8411 = vunpack.c.h.b16 %v7709
        %v8412 = vunpack.c.l.b16 %v7710
        %v8413 = vunpack.c.h.b16 %v7710
        %v8414 = vunpack.c.l.b16 %v7711
        %v8415 = vunpack.c.h.b16 %v7711
        %v8416 = vunpack.c.l.b16 %v7712
        %v8417 = vunpack.c.h.b16 %v7712
        %v8418 = vunpack.c.l.b16 %v7713
        %v8419 = vunpack.c.h.b16 %v7713
        %v8420 = vunpack.c.l.b16 %v7714
        %v8421 = vunpack.c.h.b16 %v7714
        %v8422 = vunpack.c.l.b16 %v7715
        %v8423 = vunpack.c.h.b16 %v7715
        %v8424 = vunpack.c.l.b16 %v7716
        %v8425 = vunpack.c.h.b16 %v7716
        %v8426 = vunpack.c.l.b16 %v7717
        %v8427 = vunpack.c.h.b16 %v7717
        %v8428 = vunpack.c.l.b16 %v7718
        %v8429 = vunpack.c.h.b16 %v7718
        %v8430 = vunpack.c.l.b16 %v7719
        %v8431 = vunpack.c.h.b16 %v7719
        %v8432 = vunpack.c.l.b16 %v7720
        %v8433 = vunpack.c.h.b16 %v7720
        %v8434 = vunpack.c.l.b16 %v7721
        %v8435 = vunpack.c.h.b16 %v7721
        %v8436 = vunpack.c.l.b16 %v7722
        %v8437 = vunpack.c.h.b16 %v7722
        %v8438 = vunpack.c.l.b16 %v7723
        %v8439 = vunpack.c.h.b16 %v7723
        %v8440 = vunpack.c.l.b16 %v7724
        %v8441 = vunpack.c.h.b16 %v7724
        %v8442 = vunpack.c.l.b16 %v7725
        %v8443 = vunpack.c.h.b16 %v7725
        %v8444 = vunpack.c.l.b16 %v7726
        %v8445 = vunpack.c.h.b16 %v7726
        %v8446 = vunpack.c.l.b16 %v7727
        %v8447 = vunpack.c.h.b16 %v7727
        %v8448 = vunpack.c.l.b16 %v7728
        %v8449 = vunpack.c.h.b16 %v7728
        %v8450 = vunpack.c.l.b16 %v7729
        %v8451 = vunpack.c.h.b16 %v7729
        %v8452 = vunpack.c.l.b16 %v7730
        %v8453 = vunpack.c.h.b16 %v7730
        %v8454 = vunpack.c.l.b16 %v7731
        %v8455 = vunpack.c.h.b16 %v7731
        %v8456 = vunpack.c.l.b16 %v7732
        %v8457 = vunpack.c.h.b16 %v7732
        %v8458 = vunpack.c.l.b16 %v7733
        %v8459 = vunpack.c.h.b16 %v7733
        %v8460 = vunpack.c.l.b16 %v7734
        %v8461 = vunpack.c.h.b16 %v7734
        %v8462 = vunpack.c.l.b16 %v7735
        %v8463 = vunpack.c.h.b16 %v7735
        %v8464 = vunpack.c.l.b16 %v7736
        %v8465 = vunpack.c.h.b16 %v7736
        %v8466 = vunpack.c.l.b16 %v7737
        %v8467 = vunpack.c.h.b16 %v7737
        %v8468 = vunpack.c.l.b16 %v7738
        %v8469 = vunpack.c.h.b16 %v7738
        %v8470 = vunpack.c.l.b16 %v7739
        %v8471 = vunpack.c.h.b16 %v7739
        %v8472 = vunpack.c.l.b16 %v7740
        %v8473 = vunpack.c.h.b16 %v7740
        %v8474 = vunpack.c.l.b16 %v7741
        %v8475 = vunpack.c.h.b16 %v7741
        %v8476 = vunpack.c.l.b16 %v7742
        %v8477 = vunpack.c.h.b16 %v7742
        %v8478 = vunpack.c.l.b16 %v7743
        %v8479 = vunpack.c.h.b16 %v7743
        %v8480 = vunpack.c.l.b16 %v7744
        %v8481 = vunpack.c.h.b16 %v7744
        %v8482 = vunpack.c.l.b16 %v7745
        %v8483 = vunpack.c.h.b16 %v7745
        %v8484 = vunpack.c.l.b16 %v7746
        %v8485 = vunpack.c.h.b16 %v7746
        %v8486 = vunpack.c.l.b16 %v7747
        %v8487 = vunpack.c.h.b16 %v7747
        %v8488 = vunpack.c.l.b16 %v7748
        %v8489 = vunpack.c.h.b16 %v7748
        %v8490 = vunpack.c.l.b16 %v7749
        %v8491 = vunpack.c.h.b16 %v7749
        %v8492 = vunpack.c.l.b16 %v7750
        %v8493 = vunpack.c.h.b16 %v7750
        %v8494 = vunpack.c.l.b16 %v7751
        %v8495 = vunpack.c.h.b16 %v7751
        %v8496 = vunpack.c.l.b16 %v7752
        %v8497 = vunpack.c.h.b16 %v7752
        %v8498 = vunpack.c.l.b16 %v7753
        %v8499 = vunpack.c.h.b16 %v7753
        %v8500 = vunpack.c.l.b16 %v7754
        %v8501 = vunpack.c.h.b16 %v7754
        %v8502 = vunpack.c.l.b16 %v7755
        %v8503 = vunpack.c.h.b16 %v7755
        %v8504 = vunpack.c.l.b16 %v7756
        %v8505 = vunpack.c.h.b16 %v7756
        %v8506 = vunpack.c.l.b16 %v7757
        %v8507 = vunpack.c.h.b16 %v7757
        %v8508 = vunpack.c.l.b16 %v7758
        %v8509 = vunpack.c.h.b16 %v7758
        %v8510 = vunpack.c.l.b16 %v7759
        %v8511 = vunpack.c.h.b16 %v7759
        %v8512 = vunpack.c.l.b16 %v7760
        %v8513 = vunpack.c.h.b16 %v7760
        %v8514 = vunpack.c.l.b16 %v7761
        %v8515 = vunpack.c.h.b16 %v7761
        %v8516 = vunpack.c.l.b16 %v7762
        %v8517 = vunpack.c.h.b16 %v7762
        %v8518 = vunpack.c.l.b16 %v7763
        %v8519 = vunpack.c.h.b16 %v7763
        %v8520 = vunpack.c.l.b16 %v7764
        %v8521 = vunpack.c.h.b16 %v7764
        %v8522 = vunpack.c.l.b16 %v7765
        %v8523 = vunpack.c.h.b16 %v7765
        %v8524 = vunpack.c.l.b16 %v7766
        %v8525 = vunpack.c.h.b16 %v7766
        %v8526 = vunpack.c.l.b16 %v7767
        %v8527 = vunpack.c.h.b16 %v7767
        %v8528 = vunpack.c.l.b16 %v7768
        %v8529 = vunpack.c.h.b16 %v7768
        %v8530 = vunpack.c.l.b16 %v7769
        %v8531 = vunpack.c.h.b16 %v7769
        %v8532 = vunpack.c.l.b16 %v7770
        %v8533 = vunpack.c.h.b16 %v7770
        %v8534 = vunpack.c.l.b16 %v7771
        %v8535 = vunpack.c.h.b16 %v7771
        %v8536 = vunpack.c.l.b16 %v7772
        %v8537 = vunpack.c.h.b16 %v7772
        %v8538 = vunpack.c.l.b16 %v7773
        %v8539 = vunpack.c.h.b16 %v7773
        %v8540 = vunpack.c.l.b16 %v7774
        %v8541 = vunpack.c.h.b16 %v7774
        %v8542 = vunpack.c.l.b16 %v7775
        %v8543 = vunpack.c.h.b16 %v7775
        %v8544 = vunpack.c.l.b16 %v7776
        %v8545 = vunpack.c.h.b16 %v7776
        %v8546 = vunpack.c.l.b16 %v7777
        %v8547 = vunpack.c.h.b16 %v7777
        %v8548 = vunpack.c.l.b16 %v7778
        %v8549 = vunpack.c.h.b16 %v7778
        %v8550 = vunpack.c.l.b16 %v7779
        %v8551 = vunpack.c.h.b16 %v7779
        %v8552 = vunpack.c.l.b16 %v7780
        %v8553 = vunpack.c.h.b16 %v7780
        %v8554 = vunpack.c.l.b16 %v7781
        %v8555 = vunpack.c.h.b16 %v7781
        %v8556 = vunpack.c.l.b16 %v7782
        %v8557 = vunpack.c.h.b16 %v7782
        %v8558 = vunpack.c.l.b16 %v7783
        %v8559 = vunpack.c.h.b16 %v7783
        %v8560 = vunpack.c.l.b16 %v7784
        %v8561 = vunpack.c.h.b16 %v7784
        %v8562 = vunpack.c.l.b16 %v7785
        %v8563 = vunpack.c.h.b16 %v7785
        %v8564 = vunpack.c.l.b16 %v7786
        %v8565 = vunpack.c.h.b16 %v7786
        %v8566 = vunpack.c.l.b16 %v7787
        %v8567 = vunpack.c.h.b16 %v7787
        %v8568 = vunpack.c.l.b16 %v7788
        %v8569 = vunpack.c.h.b16 %v7788
        %v8570 = vunpack.c.l.b16 %v7789
        %v8571 = vunpack.c.h.b16 %v7789
        %v8572 = vunpack.c.l.b16 %v7790
        %v8573 = vunpack.c.h.b16 %v7790
        %v8574 = vunpack.c.l.b16 %v7791
        %v8575 = vunpack.c.h.b16 %v7791
        %v8576 = vunpack.c.l.b16 %v7792
        %v8577 = vunpack.c.h.b16 %v7792
        %v8578 = vunpack.c.l.b16 %v7793
        %v8579 = vunpack.c.h.b16 %v7793
        %v8580 = vunpack.c.l.b16 %v7794
        %v8581 = vunpack.c.h.b16 %v7794
        %v8582 = vunpack.c.l.b16 %v7795
        %v8583 = vunpack.c.h.b16 %v7795
        %v8584 = vunpack.c.l.b16 %v7796
        %v8585 = vunpack.c.h.b16 %v7796
        %v8586 = vunpack.c.l.b16 %v7797
        %v8587 = vunpack.c.h.b16 %v7797
        %v8588 = vunpack.c.l.b16 %v7798
        %v8589 = vunpack.c.h.b16 %v7798
        %v8590 = vunpack.c.l.b16 %v7799
        %v8591 = vunpack.c.h.b16 %v7799
        %v8592 = vunpack.c.l.b16 %v7800
        %v8593 = vunpack.c.h.b16 %v7800
        %v8594 = vunpack.c.l.b16 %v7801
        %v8595 = vunpack.c.h.b16 %v7801
        %v8596 = vunpack.c.l.b16 %v7802
        %v8597 = vunpack.c.h.b16 %v7802
        %v8598 = vunpack.c.l.b16 %v7803
        %v8599 = vunpack.c.h.b16 %v7803
        %v8600 = vunpack.c.l.b16 %v7804
        %v8601 = vunpack.c.h.b16 %v7804
        %v8602 = vunpack.c.l.b16 %v7805
        %v8603 = vunpack.c.h.b16 %v7805
        %v8604 = vunpack.c.l.b16 %v7806
        %v8605 = vunpack.c.h.b16 %v7806
        %v8606 = vunpack.c.l.b16 %v7807
        %v8607 = vunpack.c.h.b16 %v7807
        %v8608 = vunpack.c.l.b16 %v7808
        %v8609 = vunpack.c.h.b16 %v7808
        %v8610 = vunpack.c.l.b16 %v7809
        %v8611 = vunpack.c.h.b16 %v7809
        %v8612 = vunpack.c.l.b16 %v7810
        %v8613 = vunpack.c.h.b16 %v7810
        %v8614 = vunpack.c.l.b16 %v7811
        %v8615 = vunpack.c.h.b16 %v7811
        %v8616 = vunpack.c.l.b16 %v7812
        %v8617 = vunpack.c.h.b16 %v7812
        %v8618 = vunpack.c.l.b16 %v7813
        %v8619 = vunpack.c.h.b16 %v7813
        %v8620 = vunpack.c.l.b16 %v7814
        %v8621 = vunpack.c.h.b16 %v7814
        %v8622 = vunpack.c.l.b16 %v7815
        %v8623 = vunpack.c.h.b16 %v7815
        %v8624 = vunpack.c.l.b16 %v7816
        %v8625 = vunpack.c.h.b16 %v7816
        %v8626 = vunpack.c.l.b16 %v7817
        %v8627 = vunpack.c.h.b16 %v7817
        %v8628 = vunpack.c.l.b16 %v7818
        %v8629 = vunpack.c.h.b16 %v7818
        %v8630 = vunpack.c.l.b16 %v7819
        %v8631 = vunpack.c.h.b16 %v7819
        %v8632 = vunpack.c.l.b16 %v7820
        %v8633 = vunpack.c.h.b16 %v7820
        %v8634 = vunpack.c.l.b16 %v7821
        %v8635 = vunpack.c.h.b16 %v7821
        %v8636 = vpack.c.b16 %v8132, %v8124
        %v8637 = vpack.c.b16 %v8133, %v8125
        %v8638 = vpack.c.b16 %v8134, %v8126
        %v8639 = vpack.c.b16 %v8135, %v8127
        %v8640 = vpack.c.b16 %v8136, %v8128
        %v8641 = vpack.c.b16 %v8137, %v8129
        %v8642 = vpack.c.b16 %v8138, %v8130
        %v8643 = vpack.c.b16 %v8139, %v8131
        %v8644 = vpack.c.b16 %v8148, %v8140
        %v8645 = vpack.c.b16 %v8149, %v8141
        %v8646 = vpack.c.b16 %v8150, %v8142
        %v8647 = vpack.c.b16 %v8151, %v8143
        %v8648 = vpack.c.b16 %v8152, %v8144
        %v8649 = vpack.c.b16 %v8153, %v8145
        %v8650 = vpack.c.b16 %v8154, %v8146
        %v8651 = vpack.c.b16 %v8155, %v8147
        %v8652 = vpack.c.b16 %v8164, %v8156
        %v8653 = vpack.c.b16 %v8165, %v8157
        %v8654 = vpack.c.b16 %v8166, %v8158
        %v8655 = vpack.c.b16 %v8167, %v8159
        %v8656 = vpack.c.b16 %v8168, %v8160
        %v8657 = vpack.c.b16 %v8169, %v8161
        %v8658 = vpack.c.b16 %v8170, %v8162
        %v8659 = vpack.c.b16 %v8171, %v8163
        %v8660 = vpack.c.b16 %v8180, %v8172
        %v8661 = vpack.c.b16 %v8181, %v8173
        %v8662 = vpack.c.b16 %v8182, %v8174
        %v8663 = vpack.c.b16 %v8183, %v8175
        %v8664 = vpack.c.b16 %v8184, %v8176
        %v8665 = vpack.c.b16 %v8185, %v8177
        %v8666 = vpack.c.b16 %v8186, %v8178
        %v8667 = vpack.c.b16 %v8187, %v8179
        %v8668 = vpack.c.b16 %v8196, %v8188
        %v8669 = vpack.c.b16 %v8197, %v8189
        %v8670 = vpack.c.b16 %v8198, %v8190
        %v8671 = vpack.c.b16 %v8199, %v8191
        %v8672 = vpack.c.b16 %v8200, %v8192
        %v8673 = vpack.c.b16 %v8201, %v8193
        %v8674 = vpack.c.b16 %v8202, %v8194
        %v8675 = vpack.c.b16 %v8203, %v8195
        %v8676 = vpack.c.b16 %v8212, %v8204
        %v8677 = vpack.c.b16 %v8213, %v8205
        %v8678 = vpack.c.b16 %v8214, %v8206
        %v8679 = vpack.c.b16 %v8215, %v8207
        %v8680 = vpack.c.b16 %v8216, %v8208
        %v8681 = vpack.c.b16 %v8217, %v8209
        %v8682 = vpack.c.b16 %v8218, %v8210
        %v8683 = vpack.c.b16 %v8219, %v8211
        %v8684 = vpack.c.b16 %v8228, %v8220
        %v8685 = vpack.c.b16 %v8229, %v8221
        %v8686 = vpack.c.b16 %v8230, %v8222
        %v8687 = vpack.c.b16 %v8231, %v8223
        %v8688 = vpack.c.b16 %v8232, %v8224
        %v8689 = vpack.c.b16 %v8233, %v8225
        %v8690 = vpack.c.b16 %v8234, %v8226
        %v8691 = vpack.c.b16 %v8235, %v8227
        %v8692 = vpack.c.b16 %v8244, %v8236
        %v8693 = vpack.c.b16 %v8245, %v8237
        %v8694 = vpack.c.b16 %v8246, %v8238
        %v8695 = vpack.c.b16 %v8247, %v8239
        %v8696 = vpack.c.b16 %v8248, %v8240
        %v8697 = vpack.c.b16 %v8249, %v8241
        %v8698 = vpack.c.b16 %v8250, %v8242
        %v8699 = vpack.c.b16 %v8251, %v8243
        %v8700 = vpack.c.b16 %v8260, %v8252
        %v8701 = vpack.c.b16 %v8261, %v8253
        %v8702 = vpack.c.b16 %v8262, %v8254
        %v8703 = vpack.c.b16 %v8263, %v8255
        %v8704 = vpack.c.b16 %v8264, %v8256
        %v8705 = vpack.c.b16 %v8265, %v8257
        %v8706 = vpack.c.b16 %v8266, %v8258
        %v8707 = vpack.c.b16 %v8267, %v8259
        %v8708 = vpack.c.b16 %v8276, %v8268
        %v8709 = vpack.c.b16 %v8277, %v8269
        %v8710 = vpack.c.b16 %v8278, %v8270
        %v8711 = vpack.c.b16 %v8279, %v8271
        %v8712 = vpack.c.b16 %v8280, %v8272
        %v8713 = vpack.c.b16 %v8281, %v8273
        %v8714 = vpack.c.b16 %v8282, %v8274
        %v8715 = vpack.c.b16 %v8283, %v8275
        %v8716 = vpack.c.b16 %v8292, %v8284
        %v8717 = vpack.c.b16 %v8293, %v8285
        %v8718 = vpack.c.b16 %v8294, %v8286
        %v8719 = vpack.c.b16 %v8295, %v8287
        %v8720 = vpack.c.b16 %v8296, %v8288
        %v8721 = vpack.c.b16 %v8297, %v8289
        %v8722 = vpack.c.b16 %v8298, %v8290
        %v8723 = vpack.c.b16 %v8299, %v8291
        %v8724 = vpack.c.b16 %v8308, %v8300
        %v8725 = vpack.c.b16 %v8309, %v8301
        %v8726 = vpack.c.b16 %v8310, %v8302
        %v8727 = vpack.c.b16 %v8311, %v8303
        %v8728 = vpack.c.b16 %v8312, %v8304
        %v8729 = vpack.c.b16 %v8313, %v8305
        %v8730 = vpack.c.b16 %v8314, %v8306
        %v8731 = vpack.c.b16 %v8315, %v8307
        %v8732 = vpack.c.b16 %v8324, %v8316
        %v8733 = vpack.c.b16 %v8325, %v8317
        %v8734 = vpack.c.b16 %v8326, %v8318
        %v8735 = vpack.c.b16 %v8327, %v8319
        %v8736 = vpack.c.b16 %v8328, %v8320
        %v8737 = vpack.c.b16 %v8329, %v8321
        %v8738 = vpack.c.b16 %v8330, %v8322
        %v8739 = vpack.c.b16 %v8331, %v8323
        %v8740 = vpack.c.b16 %v8340, %v8332
        %v8741 = vpack.c.b16 %v8341, %v8333
        %v8742 = vpack.c.b16 %v8342, %v8334
        %v8743 = vpack.c.b16 %v8343, %v8335
        %v8744 = vpack.c.b16 %v8344, %v8336
        %v8745 = vpack.c.b16 %v8345, %v8337
        %v8746 = vpack.c.b16 %v8346, %v8338
        %v8747 = vpack.c.b16 %v8347, %v8339
        %v8748 = vpack.c.b16 %v8356, %v8348
        %v8749 = vpack.c.b16 %v8357, %v8349
        %v8750 = vpack.c.b16 %v8358, %v8350
        %v8751 = vpack.c.b16 %v8359, %v8351
        %v8752 = vpack.c.b16 %v8360, %v8352
        %v8753 = vpack.c.b16 %v8361, %v8353
        %v8754 = vpack.c.b16 %v8362, %v8354
        %v8755 = vpack.c.b16 %v8363, %v8355
        %v8756 = vpack.c.b16 %v8372, %v8364
        %v8757 = vpack.c.b16 %v8373, %v8365
        %v8758 = vpack.c.b16 %v8374, %v8366
        %v8759 = vpack.c.b16 %v8375, %v8367
        %v8760 = vpack.c.b16 %v8376, %v8368
        %v8761 = vpack.c.b16 %v8377, %v8369
        %v8762 = vpack.c.b16 %v8378, %v8370
        %v8763 = vpack.c.b16 %v8379, %v8371
        %v8764 = vpack.c.b16 %v8388, %v8380
        %v8765 = vpack.c.b16 %v8389, %v8381
        %v8766 = vpack.c.b16 %v8390, %v8382
        %v8767 = vpack.c.b16 %v8391, %v8383
        %v8768 = vpack.c.b16 %v8392, %v8384
        %v8769 = vpack.c.b16 %v8393, %v8385
        %v8770 = vpack.c.b16 %v8394, %v8386
        %v8771 = vpack.c.b16 %v8395, %v8387
        %v8772 = vpack.c.b16 %v8404, %v8396
        %v8773 = vpack.c.b16 %v8405, %v8397
        %v8774 = vpack.c.b16 %v8406, %v8398
        %v8775 = vpack.c.b16 %v8407, %v8399
        %v8776 = vpack.c.b16 %v8408, %v8400
        %v8777 = vpack.c.b16 %v8409, %v8401
        %v8778 = vpack.c.b16 %v8410, %v8402
        %v8779 = vpack.c.b16 %v8411, %v8403
        %v8780 = vpack.c.b16 %v8420, %v8412
        %v8781 = vpack.c.b16 %v8421, %v8413
        %v8782 = vpack.c.b16 %v8422, %v8414
        %v8783 = vpack.c.b16 %v8423, %v8415
        %v8784 = vpack.c.b16 %v8424, %v8416
        %v8785 = vpack.c.b16 %v8425, %v8417
        %v8786 = vpack.c.b16 %v8426, %v8418
        %v8787 = vpack.c.b16 %v8427, %v8419
        %v8788 = vpack.c.b16 %v8436, %v8428
        %v8789 = vpack.c.b16 %v8437, %v8429
        %v8790 = vpack.c.b16 %v8438, %v8430
        %v8791 = vpack.c.b16 %v8439, %v8431
        %v8792 = vpack.c.b16 %v8440, %v8432
        %v8793 = vpack.c.b16 %v8441, %v8433
        %v8794 = vpack.c.b16 %v8442, %v8434
        %v8795 = vpack.c.b16 %v8443, %v8435
        %v8796 = vpack.c.b16 %v8452, %v8444
        %v8797 = vpack.c.b16 %v8453, %v8445
        %v8798 = vpack.c.b16 %v8454, %v8446
        %v8799 = vpack.c.b16 %v8455, %v8447
        %v8800 = vpack.c.b16 %v8456, %v8448
        %v8801 = vpack.c.b16 %v8457, %v8449
        %v8802 = vpack.c.b16 %v8458, %v8450
        %v8803 = vpack.c.b16 %v8459, %v8451
        %v8804 = vpack.c.b16 %v8468, %v8460
        %v8805 = vpack.c.b16 %v8469, %v8461
        %v8806 = vpack.c.b16 %v8470, %v8462
        %v8807 = vpack.c.b16 %v8471, %v8463
        %v8808 = vpack.c.b16 %v8472, %v8464
        %v8809 = vpack.c.b16 %v8473, %v8465
        %v8810 = vpack.c.b16 %v8474, %v8466
        %v8811 = vpack.c.b16 %v8475, %v8467
        %v8812 = vpack.c.b16 %v8484, %v8476
        %v8813 = vpack.c.b16 %v8485, %v8477
        %v8814 = vpack.c.b16 %v8486, %v8478
        %v8815 = vpack.c.b16 %v8487, %v8479
        %v8816 = vpack.c.b16 %v8488, %v8480
        %v8817 = vpack.c.b16 %v8489, %v8481
        %v8818 = vpack.c.b16 %v8490, %v8482
        %v8819 = vpack.c.b16 %v8491, %v8483
        %v8820 = vpack.c.b16 %v8500, %v8492
        %v8821 = vpack.c.b16 %v8501, %v8493
        %v8822 = vpack.c.b16 %v8502, %v8494
        %v8823 = vpack.c.b16 %v8503, %v8495
        %v8824 = vpack.c.b16 %v8504, %v8496
        %v8825 = vpack.c.b16 %v8505, %v8497
        %v8826 = vpack.c.b16 %v8506, %v8498
        %v8827 = vpack.c.b16 %v8507, %v8499
        %v8828 = vpack.c.b16 %v8516, %v8508
        %v8829 = vpack.c.b16 %v8517, %v8509
        %v8830 = vpack.c.b16 %v8518, %v8510
        %v8831 = vpack.c.b16 %v8519, %v8511
        %v8832 = vpack.c.b16 %v8520, %v8512
        %v8833 = vpack.c.b16 %v8521, %v8513
        %v8834 = vpack.c.b16 %v8522, %v8514
        %v8835 = vpack.c.b16 %v8523, %v8515
        %v8836 = vpack.c.b16 %v8532, %v8524
        %v8837 = vpack.c.b16 %v8533, %v8525
        %v8838 = vpack.c.b16 %v8534, %v8526
        %v8839 = vpack.c.b16 %v8535, %v8527
        %v8840 = vpack.c.b16 %v8536, %v8528
        %v8841 = vpack.c.b16 %v8537, %v8529
        %v8842 = vpack.c.b16 %v8538, %v8530
        %v8843 = vpack.c.b16 %v8539, %v8531
        %v8844 = vpack.c.b16 %v8548, %v8540
        %v8845 = vpack.c.b16 %v8549, %v8541
        %v8846 = vpack.c.b16 %v8550, %v8542
        %v8847 = vpack.c.b16 %v8551, %v8543
        %v8848 = vpack.c.b16 %v8552, %v8544
        %v8849 = vpack.c.b16 %v8553, %v8545
        %v8850 = vpack.c.b16 %v8554, %v8546
        %v8851 = vpack.c.b16 %v8555, %v8547
        %v8852 = vpack.c.b16 %v8564, %v8556
        %v8853 = vpack.c.b16 %v8565, %v8557
        %v8854 = vpack.c.b16 %v8566, %v8558
        %v8855 = vpack.c.b16 %v8567, %v8559
        %v8856 = vpack.c.b16 %v8568, %v8560
        %v8857 = vpack.c.b16 %v8569, %v8561
        %v8858 = vpack.c.b16 %v8570, %v8562
        %v8859 = vpack.c.b16 %v8571, %v8563
        %v8860 = vpack.c.b16 %v8580, %v8572
        %v8861 = vpack.c.b16 %v8581, %v8573
        %v8862 = vpack.c.b16 %v8582, %v8574
        %v8863 = vpack.c.b16 %v8583, %v8575
        %v8864 = vpack.c.b16 %v8584, %v8576
        %v8865 = vpack.c.b16 %v8585, %v8577
        %v8866 = vpack.c.b16 %v8586, %v8578
        %v8867 = vpack.c.b16 %v8587, %v8579
        %v8868 = vpack.c.b16 %v8596, %v8588
        %v8869 = vpack.c.b16 %v8597, %v8589
        %v8870 = vpack.c.b16 %v8598, %v8590
        %v8871 = vpack.c.b16 %v8599, %v8591
        %v8872 = vpack.c.b16 %v8600, %v8592
        %v8873 = vpack.c.b16 %v8601, %v8593
        %v8874 = vpack.c.b16 %v8602, %v8594
        %v8875 = vpack.c.b16 %v8603, %v8595
        %v8876 = vpack.c.b16 %v8612, %v8604
        %v8877 = vpack.c.b16 %v8613, %v8605
        %v8878 = vpack.c.b16 %v8614, %v8606
        %v8879 = vpack.c.b16 %v8615, %v8607
        %v8880 = vpack.c.b16 %v8616, %v8608
        %v8881 = vpack.c.b16 %v8617, %v8609
        %v8882 = vpack.c.b16 %v8618, %v8610
        %v8883 = vpack.c.b16 %v8619, %v8611
        %v8884 = vpack.c.b16 %v8628, %v8620
        %v8885 = vpack.c.b16 %v8629, %v8621
        %v8886 = vpack.c.b16 %v8630, %v8622
        %v8887 = vpack.c.b16 %v8631, %v8623
        %v8888 = vpack.c.b16 %v8632, %v8624
        %v8889 = vpack.c.b16 %v8633, %v8625
        %v8890 = vpack.c.b16 %v8634, %v8626
        %v8891 = vpack.c.b16 %v8635, %v8627
        %9148 = vmatprep.subr.bf16.mxu0 %v8637
        %9149 = vmatpush1.bf16.msra.mxu0 %v8636
        %9150 = vmatprep.subr.bf16.mxu0 %v8645
        %9151 = vmatpush1.bf16.msra.mxu0 %v8644
        %9152 = vmatprep.subr.bf16.mxu0 %v8653
        %9153 = vmatpush1.bf16.msra.mxu0 %v8652
        %9154 = vmatprep.subr.bf16.mxu0 %v8661
        %9155 = vmatpush1.bf16.msra.mxu0 %v8660
        %9156 = vmatprep.subr.bf16.mxu0 %v8669
        %9157 = vmatpush1.bf16.msra.mxu0 %v8668
        %9158 = vmatprep.subr.bf16.mxu0 %v8677
        %9159 = vmatpush1.bf16.msra.mxu0 %v8676
        %9160 = vmatprep.subr.bf16.mxu0 %v8685
        %9161 = vmatpush1.bf16.msra.mxu0 %v8684
        %9162 = vmatprep.subr.bf16.mxu0 %v8693
        %9163 = vmatpush1.bf16.msra.mxu0 %v8692
        %9164 = vmatprep.subr.bf16.mxu0 %v8701
        %9165 = vmatpush1.bf16.msra.mxu0 %v8700
        %9166 = vmatprep.subr.bf16.mxu0 %v8709
        %9167 = vmatpush1.bf16.msra.mxu0 %v8708
        %9168 = vmatprep.subr.bf16.mxu0 %v8717
        %9169 = vmatpush1.bf16.msra.mxu0 %v8716
        %9170 = vmatprep.subr.bf16.mxu0 %v8725
        %9171 = vmatpush1.bf16.msra.mxu0 %v8724
        %9172 = vmatprep.subr.bf16.mxu0 %v8733
        %9173 = vmatpush1.bf16.msra.mxu0 %v8732
        %9174 = vmatprep.subr.bf16.mxu0 %v8741
        %9175 = vmatpush1.bf16.msra.mxu0 %v8740
        %9176 = vmatprep.subr.bf16.mxu0 %v8749
        %9177 = vmatpush1.bf16.msra.mxu0 %v8748
        %9178 = vmatprep.subr.bf16.mxu0 %v8757
        %9179 = vmatpush1.bf16.msra.mxu0 %v8756
        %9180 = vmatprep.mubr.bf16.mxu0 %v7824
        %9181 = vmatmul.mubr.bf16.gmra.mrb[0].mxu0 %v7823
        %v9182 = vpop.f32.mrb[0].mxu0
        %v9183 = vadd.f32 %v7831, %v9182
        %v9184 = vpop.f32.mrb[0].mxu0
        %v9185 = vadd.f32 %v7835, %v9184
        %v9186 = vpop.f32.mrb[0].mxu0
        %v9187 = vadd.f32 %v7831, %v9186
        %v9188 = vpop.f32.mrb[0].mxu0
        %v9189 = vadd.f32 %v7835, %v9188
        %9190 = vdwg.mxu0
        %9191 = vmatprep.subr.bf16.mxu0 %v8765
        %9192 = vmatpush1.bf16.msra.mxu0 %v8764
        %9193 = vmatprep.subr.bf16.mxu0 %v8773
        %9194 = vmatpush1.bf16.msra.mxu0 %v8772
        %9195 = vmatprep.subr.bf16.mxu0 %v8781
        %9196 = vmatpush1.bf16.msra.mxu0 %v8780
        %9197 = vmatprep.subr.bf16.mxu0 %v8789
        %9198 = vmatpush1.bf16.msra.mxu0 %v8788
        %9199 = vmatprep.subr.bf16.mxu0 %v8797
        %9200 = vmatpush1.bf16.msra.mxu0 %v8796
        %9201 = vmatprep.subr.bf16.mxu0 %v8805
        %9202 = vmatpush1.bf16.msra.mxu0 %v8804
        %9203 = vmatprep.subr.bf16.mxu0 %v8813
        %9204 = vmatpush1.bf16.msra.mxu0 %v8812
        %9205 = vmatprep.subr.bf16.mxu0 %v8821
        %9206 = vmatpush1.bf16.msra.mxu0 %v8820
        %9207 = vmatprep.subr.bf16.mxu0 %v8829
        %9208 = vmatpush1.bf16.msra.mxu0 %v8828
        %9209 = vmatprep.subr.bf16.mxu0 %v8837
        %9210 = vmatpush1.bf16.msra.mxu0 %v8836
        %9211 = vmatprep.subr.bf16.mxu0 %v8845
        %9212 = vmatpush1.bf16.msra.mxu0 %v8844
        %9213 = vmatprep.subr.bf16.mxu0 %v8853
        %9214 = vmatpush1.bf16.msra.mxu0 %v8852
        %9215 = vmatprep.subr.bf16.mxu0 %v8861
        %9216 = vmatpush1.bf16.msra.mxu0 %v8860
        %9217 = vmatprep.subr.bf16.mxu0 %v8869
        %9218 = vmatpush1.bf16.msra.mxu0 %v8868
        %9219 = vmatprep.subr.bf16.mxu0 %v8877
        %9220 = vmatpush1.bf16.msra.mxu0 %v8876
        %9221 = vmatprep.subr.bf16.mxu0 %v8885
        %9222 = vmatpush1.bf16.msra.mxu0 %v8884
        %9223 = vmatprep.mubr.bf16.mxu0 %v7826
        %9224 = vmatmul.mubr.bf16.gmra.mrb[0].mxu0 %v7825
        %v9225 = vpop.f32.mrb[0].mxu0
        %v9226 = vadd.f32 %v9183, %v9225
        %v9227 = vpop.f32.mrb[0].mxu0
        %v9228 = vadd.f32 %v9185, %v9227
        %v9229 = vpop.f32.mrb[0].mxu0
        %v9230 = vadd.f32 %v9187, %v9229
        %v9231 = vpop.f32.mrb[0].mxu0
        %v9232 = vadd.f32 %v9189, %v9231
        %9233 = vdwg.mxu0
        %9234 = vmatprep.subr.bf16.mxu0 %v8639
        %9235 = vmatpush1.bf16.msra.mxu0 %v8638
        %9236 = vmatprep.subr.bf16.mxu0 %v8647
        %9237 = vmatpush1.bf16.msra.mxu0 %v8646
        %9238 = vmatprep.subr.bf16.mxu0 %v8655
        %9239 = vmatpush1.bf16.msra.mxu0 %v8654
        %9240 = vmatprep.subr.bf16.mxu0 %v8663
        %9241 = vmatpush1.bf16.msra.mxu0 %v8662
        %9242 = vmatprep.subr.bf16.mxu0 %v8671
        %9243 = vmatpush1.bf16.msra.mxu0 %v8670
        %9244 = vmatprep.subr.bf16.mxu0 %v8679
        %9245 = vmatpush1.bf16.msra.mxu0 %v8678
        %9246 = vmatprep.subr.bf16.mxu0 %v8687
        %9247 = vmatpush1.bf16.msra.mxu0 %v8686
        %9248 = vmatprep.subr.bf16.mxu0 %v8695
        %9249 = vmatpush1.bf16.msra.mxu0 %v8694
        %9250 = vmatprep.subr.bf16.mxu0 %v8703
        %9251 = vmatpush1.bf16.msra.mxu0 %v8702
        %9252 = vmatprep.subr.bf16.mxu0 %v8711
        %9253 = vmatpush1.bf16.msra.mxu0 %v8710
        %9254 = vmatprep.subr.bf16.mxu0 %v8719
        %9255 = vmatpush1.bf16.msra.mxu0 %v8718
        %9256 = vmatprep.subr.bf16.mxu0 %v8727
        %9257 = vmatpush1.bf16.msra.mxu0 %v8726
        %9258 = vmatprep.subr.bf16.mxu0 %v8735
        %9259 = vmatpush1.bf16.msra.mxu0 %v8734
        %9260 = vmatprep.subr.bf16.mxu0 %v8743
        %9261 = vmatpush1.bf16.msra.mxu0 %v8742
        %9262 = vmatprep.subr.bf16.mxu0 %v8751
        %9263 = vmatpush1.bf16.msra.mxu0 %v8750
        %9264 = vmatprep.subr.bf16.mxu0 %v8759
        %9265 = vmatpush1.bf16.msra.mxu0 %v8758
        %9266 = vmatprep.mubr.bf16.mxu0 %v7824
        %9267 = vmatmul.mubr.bf16.gmra.mrb[0].mxu0 %v7823
        %v9268 = vpop.f32.mrb[0].mxu0
        %v9269 = vadd.f32 %v7839, %v9268
        %v9270 = vpop.f32.mrb[0].mxu0
        %v9271 = vadd.f32 %v7843, %v9270
        %v9272 = vpop.f32.mrb[0].mxu0
        %v9273 = vadd.f32 %v7839, %v9272
        %v9274 = vpop.f32.mrb[0].mxu0
        %v9275 = vadd.f32 %v7843, %v9274
        %9276 = vdwg.mxu0
        %9277 = vmatprep.subr.bf16.mxu0 %v8767
        %9278 = vmatpush1.bf16.msra.mxu0 %v8766
        %9279 = vmatprep.subr.bf16.mxu0 %v8775
        %9280 = vmatpush1.bf16.msra.mxu0 %v8774
        %9281 = vmatprep.subr.bf16.mxu0 %v8783
        %9282 = vmatpush1.bf16.msra.mxu0 %v8782
        %9283 = vmatprep.subr.bf16.mxu0 %v8791
        %9284 = vmatpush1.bf16.msra.mxu0 %v8790
        %9285 = vmatprep.subr.bf16.mxu0 %v8799
        %9286 = vmatpush1.bf16.msra.mxu0 %v8798
        %9287 = vmatprep.subr.bf16.mxu0 %v8807
        %9288 = vmatpush1.bf16.msra.mxu0 %v8806
        %9289 = vmatprep.subr.bf16.mxu0 %v8815
        %9290 = vmatpush1.bf16.msra.mxu0 %v8814
        %9291 = vmatprep.subr.bf16.mxu0 %v8823
        %9292 = vmatpush1.bf16.msra.mxu0 %v8822
        %9293 = vmatprep.subr.bf16.mxu0 %v8831
        %9294 = vmatpush1.bf16.msra.mxu0 %v8830
        %9295 = vmatprep.subr.bf16.mxu0 %v8839
        %9296 = vmatpush1.bf16.msra.mxu0 %v8838
        %9297 = vmatprep.subr.bf16.mxu0 %v8847
        %9298 = vmatpush1.bf16.msra.mxu0 %v8846
        %9299 = vmatprep.subr.bf16.mxu0 %v8855
        %9300 = vmatpush1.bf16.msra.mxu0 %v8854
        %9301 = vmatprep.subr.bf16.mxu0 %v8863
        %9302 = vmatpush1.bf16.msra.mxu0 %v8862
        %9303 = vmatprep.subr.bf16.mxu0 %v8871
        %9304 = vmatpush1.bf16.msra.mxu0 %v8870
        %9305 = vmatprep.subr.bf16.mxu0 %v8879
        %9306 = vmatpush1.bf16.msra.mxu0 %v8878
        %9307 = vmatprep.subr.bf16.mxu0 %v8887
        %9308 = vmatpush1.bf16.msra.mxu0 %v8886
        %9309 = vmatprep.mubr.bf16.mxu0 %v7826
        %9310 = vmatmul.mubr.bf16.gmra.mrb[0].mxu0 %v7825
        %v9311 = vpop.f32.mrb[0].mxu0
        %v9312 = vadd.f32 %v9269, %v9311
        %v9313 = vpop.f32.mrb[0].mxu0
        %v9314 = vadd.f32 %v9271, %v9313
        %v9315 = vpop.f32.mrb[0].mxu0
        %v9316 = vadd.f32 %v9273, %v9315
        %v9317 = vpop.f32.mrb[0].mxu0
        %v9318 = vadd.f32 %v9275, %v9317
        %9319 = vdwg.mxu0
        %9320 = vmatprep.subr.bf16.mxu0 %v8641
        %9321 = vmatpush1.bf16.msra.mxu0 %v8640
        %9322 = vmatprep.subr.bf16.mxu0 %v8649
        %9323 = vmatpush1.bf16.msra.mxu0 %v8648
        %9324 = vmatprep.subr.bf16.mxu0 %v8657
        %9325 = vmatpush1.bf16.msra.mxu0 %v8656
        %9326 = vmatprep.subr.bf16.mxu0 %v8665
        %9327 = vmatpush1.bf16.msra.mxu0 %v8664
        %9328 = vmatprep.subr.bf16.mxu0 %v8673
        %9329 = vmatpush1.bf16.msra.mxu0 %v8672
        %9330 = vmatprep.subr.bf16.mxu0 %v8681
        %9331 = vmatpush1.bf16.msra.mxu0 %v8680
        %9332 = vmatprep.subr.bf16.mxu0 %v8689
        %9333 = vmatpush1.bf16.msra.mxu0 %v8688
        %9334 = vmatprep.subr.bf16.mxu0 %v8697
        %9335 = vmatpush1.bf16.msra.mxu0 %v8696
        %9336 = vmatprep.subr.bf16.mxu0 %v8705
        %9337 = vmatpush1.bf16.msra.mxu0 %v8704
        %9338 = vmatprep.subr.bf16.mxu0 %v8713
        %9339 = vmatpush1.bf16.msra.mxu0 %v8712
        %9340 = vmatprep.subr.bf16.mxu0 %v8721
        %9341 = vmatpush1.bf16.msra.mxu0 %v8720
        %9342 = vmatprep.subr.bf16.mxu0 %v8729
        %9343 = vmatpush1.bf16.msra.mxu0 %v8728
        %9344 = vmatprep.subr.bf16.mxu0 %v8737
        %9345 = vmatpush1.bf16.msra.mxu0 %v8736
        %9346 = vmatprep.subr.bf16.mxu0 %v8745
        %9347 = vmatpush1.bf16.msra.mxu0 %v8744
        %9348 = vmatprep.subr.bf16.mxu0 %v8753
        %9349 = vmatpush1.bf16.msra.mxu0 %v8752
        %9350 = vmatprep.subr.bf16.mxu0 %v8761
        %9351 = vmatpush1.bf16.msra.mxu0 %v8760
        %9352 = vmatprep.mubr.bf16.mxu0 %v7824
        %9353 = vmatmul.mubr.bf16.gmra.mrb[0].mxu0 %v7823
        %v9354 = vpop.f32.mrb[0].mxu0
        %v9355 = vadd.f32 %v7847, %v9354
        %v9356 = vpop.f32.mrb[0].mxu0
        %v9357 = vadd.f32 %v7851, %v9356
        %v9358 = vpop.f32.mrb[0].mxu0
        %v9359 = vadd.f32 %v7847, %v9358
        %v9360 = vpop.f32.mrb[0].mxu0
        %v9361 = vadd.f32 %v7851, %v9360
        %9362 = vdwg.mxu0
        %9363 = vmatprep.subr.bf16.mxu0 %v8769
        %9364 = vmatpush1.bf16.msra.mxu0 %v8768
        %9365 = vmatprep.subr.bf16.mxu0 %v8777
        %9366 = vmatpush1.bf16.msra.mxu0 %v8776
        %9367 = vmatprep.subr.bf16.mxu0 %v8785
        %9368 = vmatpush1.bf16.msra.mxu0 %v8784
        %9369 = vmatprep.subr.bf16.mxu0 %v8793
        %9370 = vmatpush1.bf16.msra.mxu0 %v8792
        %9371 = vmatprep.subr.bf16.mxu0 %v8801
        %9372 = vmatpush1.bf16.msra.mxu0 %v8800
        %9373 = vmatprep.subr.bf16.mxu0 %v8809
        %9374 = vmatpush1.bf16.msra.mxu0 %v8808
        %9375 = vmatprep.subr.bf16.mxu0 %v8817
        %9376 = vmatpush1.bf16.msra.mxu0 %v8816
        %9377 = vmatprep.subr.bf16.mxu0 %v8825
        %9378 = vmatpush1.bf16.msra.mxu0 %v8824
        %9379 = vmatprep.subr.bf16.mxu0 %v8833
        %9380 = vmatpush1.bf16.msra.mxu0 %v8832
        %9381 = vmatprep.subr.bf16.mxu0 %v8841
        %9382 = vmatpush1.bf16.msra.mxu0 %v8840
        %9383 = vmatprep.subr.bf16.mxu0 %v8849
        %9384 = vmatpush1.bf16.msra.mxu0 %v8848
        %9385 = vmatprep.subr.bf16.mxu0 %v8857
        %9386 = vmatpush1.bf16.msra.mxu0 %v8856
        %9387 = vmatprep.subr.bf16.mxu0 %v8865
        %9388 = vmatpush1.bf16.msra.mxu0 %v8864
        %9389 = vmatprep.subr.bf16.mxu0 %v8873
        %9390 = vmatpush1.bf16.msra.mxu0 %v8872
        %9391 = vmatprep.subr.bf16.mxu0 %v8881
        %9392 = vmatpush1.bf16.msra.mxu0 %v8880
        %9393 = vmatprep.subr.bf16.mxu0 %v8889
        %9394 = vmatpush1.bf16.msra.mxu0 %v8888
        %9395 = vmatprep.mubr.bf16.mxu0 %v7826
        %9396 = vmatmul.mubr.bf16.gmra.mrb[0].mxu0 %v7825
        %v9397 = vpop.f32.mrb[0].mxu0
        %v9398 = vadd.f32 %v9355, %v9397
        %v9399 = vpop.f32.mrb[0].mxu0
        %v9400 = vadd.f32 %v9357, %v9399
        %v9401 = vpop.f32.mrb[0].mxu0
        %v9402 = vadd.f32 %v9359, %v9401
        %v9403 = vpop.f32.mrb[0].mxu0
        %v9404 = vadd.f32 %v9361, %v9403
        %9405 = vdwg.mxu0
        %9406 = vmatprep.subr.bf16.mxu0 %v8643
        %9407 = vmatpush1.bf16.msra.mxu0 %v8642
        %9408 = vmatprep.subr.bf16.mxu0 %v8651
        %9409 = vmatpush1.bf16.msra.mxu0 %v8650
        %9410 = vmatprep.subr.bf16.mxu0 %v8659
        %9411 = vmatpush1.bf16.msra.mxu0 %v8658
        %9412 = vmatprep.subr.bf16.mxu0 %v8667
        %9413 = vmatpush1.bf16.msra.mxu0 %v8666
        %9414 = vmatprep.subr.bf16.mxu0 %v8675
        %9415 = vmatpush1.bf16.msra.mxu0 %v8674
        %9416 = vmatprep.subr.bf16.mxu0 %v8683
        %9417 = vmatpush1.bf16.msra.mxu0 %v8682
        %9418 = vmatprep.subr.bf16.mxu0 %v8691
        %9419 = vmatpush1.bf16.msra.mxu0 %v8690
        %9420 = vmatprep.subr.bf16.mxu0 %v8699
        %9421 = vmatpush1.bf16.msra.mxu0 %v8698
        %9422 = vmatprep.subr.bf16.mxu0 %v8707
        %9423 = vmatpush1.bf16.msra.mxu0 %v8706
        %9424 = vmatprep.subr.bf16.mxu0 %v8715
        %9425 = vmatpush1.bf16.msra.mxu0 %v8714
        %9426 = vmatprep.subr.bf16.mxu0 %v8723
        %9427 = vmatpush1.bf16.msra.mxu0 %v8722
        %9428 = vmatprep.subr.bf16.mxu0 %v8731
        %9429 = vmatpush1.bf16.msra.mxu0 %v8730
        %9430 = vmatprep.subr.bf16.mxu0 %v8739
        %9431 = vmatpush1.bf16.msra.mxu0 %v8738
        %9432 = vmatprep.subr.bf16.mxu0 %v8747
        %9433 = vmatpush1.bf16.msra.mxu0 %v8746
        %9434 = vmatprep.subr.bf16.mxu0 %v8755
        %9435 = vmatpush1.bf16.msra.mxu0 %v8754
        %9436 = vmatprep.subr.bf16.mxu0 %v8763
        %9437 = vmatpush1.bf16.msra.mxu0 %v8762
        %9438 = vmatprep.mubr.bf16.mxu0 %v7824
        %9439 = vmatmul.mubr.bf16.gmra.mrb[0].mxu0 %v7823
        %v9440 = vpop.f32.mrb[0].mxu0
        %v9441 = vadd.f32 %v7855, %v9440
        %v9442 = vpop.f32.mrb[0].mxu0
        %v9443 = vadd.f32 %v7859, %v9442
        %v9444 = vpop.f32.mrb[0].mxu0
        %v9445 = vadd.f32 %v7855, %v9444
        %v9446 = vpop.f32.mrb[0].mxu0
        %v9447 = vadd.f32 %v7859, %v9446
        %9448 = vdwg.mxu0
        %9449 = vmatprep.subr.bf16.mxu0 %v8771
        %9450 = vmatpush1.bf16.msra.mxu0 %v8770
        %9451 = vmatprep.subr.bf16.mxu0 %v8779
        %9452 = vmatpush1.bf16.msra.mxu0 %v8778
        %9453 = vmatprep.subr.bf16.mxu0 %v8787
        %9454 = vmatpush1.bf16.msra.mxu0 %v8786
        %9455 = vmatprep.subr.bf16.mxu0 %v8795
        %9456 = vmatpush1.bf16.msra.mxu0 %v8794
        %9457 = vmatprep.subr.bf16.mxu0 %v8803
        %9458 = vmatpush1.bf16.msra.mxu0 %v8802
        %9459 = vmatprep.subr.bf16.mxu0 %v8811
        %9460 = vmatpush1.bf16.msra.mxu0 %v8810
        %9461 = vmatprep.subr.bf16.mxu0 %v8819
        %9462 = vmatpush1.bf16.msra.mxu0 %v8818
        %9463 = vmatprep.subr.bf16.mxu0 %v8827
        %9464 = vmatpush1.bf16.msra.mxu0 %v8826
        %9465 = vmatprep.subr.bf16.mxu0 %v8835
        %9466 = vmatpush1.bf16.msra.mxu0 %v8834
        %9467 = vmatprep.subr.bf16.mxu0 %v8843
        %9468 = vmatpush1.bf16.msra.mxu0 %v8842
        %9469 = vmatprep.subr.bf16.mxu0 %v8851
        %9470 = vmatpush1.bf16.msra.mxu0 %v8850
        %9471 = vmatprep.subr.bf16.mxu0 %v8859
        %9472 = vmatpush1.bf16.msra.mxu0 %v8858
        %9473 = vmatprep.subr.bf16.mxu0 %v8867
        %9474 = vmatpush1.bf16.msra.mxu0 %v8866
        %9475 = vmatprep.subr.bf16.mxu0 %v8875
        %9476 = vmatpush1.bf16.msra.mxu0 %v8874
        %9477 = vmatprep.subr.bf16.mxu0 %v8883
        %9478 = vmatpush1.bf16.msra.mxu0 %v8882
        %9479 = vmatprep.subr.bf16.mxu0 %v8891
        %9480 = vmatpush1.bf16.msra.mxu0 %v8890
        %9481 = vmatprep.mubr.bf16.mxu0 %v7826
        %9482 = vmatmul.mubr.bf16.gmra.mrb[0].mxu0 %v7825
        %v9483 = vpop.f32.mrb[0].mxu0
        %v9484 = vadd.f32 %v9441, %v9483
        %v9485 = vpop.f32.mrb[0].mxu0
        %v9486 = vadd.f32 %v9443, %v9485
        %v9487 = vpop.f32.mrb[0].mxu0
        %v9488 = vadd.f32 %v9445, %v9487
        %v9489 = vpop.f32.mrb[0].mxu0
        %v9490 = vadd.f32 %v9447, %v9489
        %9491 = vdwg.mxu0
        %vm9492 = vcmp.gt.f32.partialorder %v9226, 0.0
        %vm9493 = vcmp.gt.f32.partialorder %v9228, 0.0
        %vm9494 = vcmp.gt.f32.partialorder %v9312, 0.0
        %vm9495 = vcmp.gt.f32.partialorder %v9314, 0.0
        %vm9496 = vcmp.gt.f32.partialorder %v9398, 0.0
        %vm9497 = vcmp.gt.f32.partialorder %v9400, 0.0
        %vm9498 = vcmp.gt.f32.partialorder %v9484, 0.0
        %vm9499 = vcmp.gt.f32.partialorder %v9486, 0.0
        %vm9500 = vcmp.gt.f32.partialorder %v9230, 0.0
        %vm9501 = vcmp.gt.f32.partialorder %v9232, 0.0
        %vm9502 = vcmp.gt.f32.partialorder %v9316, 0.0
        %vm9503 = vcmp.gt.f32.partialorder %v9318, 0.0
        %vm9504 = vcmp.gt.f32.partialorder %v9402, 0.0
        %vm9505 = vcmp.gt.f32.partialorder %v9404, 0.0
        %vm9506 = vcmp.gt.f32.partialorder %v9488, 0.0
        %vm9507 = vcmp.gt.f32.partialorder %v9490, 0.0
        %v9508 = vmul.f32 %v9226, 0.01
        %v9509 = vmul.f32 %v9228, 0.01
        %v9510 = vmul.f32 %v9312, 0.01
        %v9511 = vmul.f32 %v9314, 0.01
        %v9512 = vmul.f32 %v9398, 0.01
        %v9513 = vmul.f32 %v9400, 0.01
        %v9514 = vmul.f32 %v9484, 0.01
        %v9515 = vmul.f32 %v9486, 0.01
        %v9516 = vmul.f32 %v9230, 0.01
        %v9517 = vmul.f32 %v9232, 0.01
        %v9518 = vmul.f32 %v9316, 0.01
        %v9519 = vmul.f32 %v9318, 0.01
        %v9520 = vmul.f32 %v9402, 0.01
        %v9521 = vmul.f32 %v9404, 0.01
        %v9522 = vmul.f32 %v9488, 0.01
        %v9523 = vmul.f32 %v9490, 0.01
        %v9524 = vsel %vm9492, %v9226, %v9508
        %v9525 = vsel %vm9493, %v9228, %v9509
        %v9526 = vsel %vm9494, %v9312, %v9510
        %v9527 = vsel %vm9495, %v9314, %v9511
        %v9528 = vsel %vm9496, %v9398, %v9512
        %v9529 = vsel %vm9497, %v9400, %v9513
        %v9530 = vsel %vm9498, %v9484, %v9514
        %v9531 = vsel %vm9499, %v9486, %v9515
        %v9532 = vsel %vm9500, %v9230, %v9516
        %v9533 = vsel %vm9501, %v9232, %v9517
        %v9534 = vsel %vm9502, %v9316, %v9518
        %v9535 = vsel %vm9503, %v9318, %v9519
        %v9536 = vsel %vm9504, %v9402, %v9520
        %v9537 = vsel %vm9505, %v9404, %v9521
        %v9538 = vsel %vm9506, %v9488, %v9522
        %v9539 = vsel %vm9507, %v9490, %v9523
        %v9540 = vld [vmem:[#allocation26] sm:$0xff]
        %v9541 = vld [vmem:[#allocation26 + $0x8] sm:$0xff]
        %v9542 = vld [vmem:[#allocation26 + $0x10] sm:$0xff]
        %v9543 = vld [vmem:[#allocation26 + $0x18] sm:$0xf]
        %v9544 = vld [vmem:[#allocation26 + $0x1c] sm:$0xff]
        %v9545 = vld [vmem:[#allocation26 + $0x24] sm:$0xff]
        %v9546 = vld [vmem:[#allocation26 + $0x2c] sm:$0xff]
        %v9547 = vld [vmem:[#allocation26 + $0x34] sm:$0xf]
        %v9548 = vld [vmem:[#allocation26 + $0x38] sm:$0xff]
        %v9549 = vld [vmem:[#allocation26 + $0x40] sm:$0xff]
        %v9550 = vld [vmem:[#allocation26 + $0x48] sm:$0xff]
        %v9551 = vld [vmem:[#allocation26 + $0x50] sm:$0xf]
        %v9552 = vld [vmem:[#allocation26 + $0x54] sm:$0xff]
        %v9553 = vld [vmem:[#allocation26 + $0x5c] sm:$0xff]
        %v9554 = vld [vmem:[#allocation26 + $0x64] sm:$0xff]
        %v9555 = vld [vmem:[#allocation26 + $0x6c] sm:$0xf]
        %v9556 = vld [vmem:[#allocation26 + $0x70] sm:$0xff]
        %v9557 = vld [vmem:[#allocation26 + $0x78] sm:$0xff]
        %v9558 = vld [vmem:[#allocation26 + $0x80] sm:$0xff]
        %v9559 = vld [vmem:[#allocation26 + $0x88] sm:$0xf]
        %v9560 = vld [vmem:[#allocation26 + $0x8c] sm:$0xff]
        %v9561 = vld [vmem:[#allocation26 + $0x94] sm:$0xff]
        %v9562 = vld [vmem:[#allocation26 + $0x9c] sm:$0xff]
        %v9563 = vld [vmem:[#allocation26 + $0xa4] sm:$0xf]
        %v9564 = vld [vmem:[#allocation26 + $0xa8] sm:$0xff]
        %v9565 = vld [vmem:[#allocation26 + $0xb0] sm:$0xff]
        %v9566 = vld [vmem:[#allocation26 + $0xb8] sm:$0xff]
        %v9567 = vld [vmem:[#allocation26 + $0xc0] sm:$0xf]
        %v9568 = vld [vmem:[#allocation26 + $0xc4] sm:$0xff]
        %v9569 = vld [vmem:[#allocation26 + $0xcc] sm:$0xff]
        %v9570 = vld [vmem:[#allocation26 + $0xd4] sm:$0xff]
        %v9571 = vld [vmem:[#allocation26 + $0xdc] sm:$0xf]
        %v9572 = vld [vmem:[#allocation26 + $0xe0] sm:$0xff]
        %v9573 = vld [vmem:[#allocation26 + $0xe8] sm:$0xff]
        %v9574 = vld [vmem:[#allocation26 + $0xf0] sm:$0xff]
        %v9575 = vld [vmem:[#allocation26 + $0xf8] sm:$0xf]
        %v9576 = vld [vmem:[#allocation26 + $0xfc] sm:$0xff]
        %v9577 = vld [vmem:[#allocation26 + $0x104] sm:$0xff]
        %v9578 = vld [vmem:[#allocation26 + $0x10c] sm:$0xff]
        %v9579 = vld [vmem:[#allocation26 + $0x114] sm:$0xf]
        %v9580 = vld [vmem:[#allocation26 + $0x118] sm:$0xff]
        %v9581 = vld [vmem:[#allocation26 + $0x120] sm:$0xff]
        %v9582 = vld [vmem:[#allocation26 + $0x128] sm:$0xff]
        %v9583 = vld [vmem:[#allocation26 + $0x130] sm:$0xf]
        %v9584 = vld [vmem:[#allocation26 + $0x134] sm:$0xff]
        %v9585 = vld [vmem:[#allocation26 + $0x13c] sm:$0xff]
        %v9586 = vld [vmem:[#allocation26 + $0x144] sm:$0xff]
        %v9587 = vld [vmem:[#allocation26 + $0x14c] sm:$0xf]
        %v9588 = vld [vmem:[#allocation26 + $0x150] sm:$0xff]
        %v9589 = vld [vmem:[#allocation26 + $0x158] sm:$0xff]
        %v9590 = vld [vmem:[#allocation26 + $0x160] sm:$0xff]
        %v9591 = vld [vmem:[#allocation26 + $0x168] sm:$0xf]
        %v9592 = vld [vmem:[#allocation26 + $0x16c] sm:$0xff]
        %v9593 = vld [vmem:[#allocation26 + $0x174] sm:$0xff]
        %v9594 = vld [vmem:[#allocation26 + $0x17c] sm:$0xff]
        %v9595 = vld [vmem:[#allocation26 + $0x184] sm:$0xf]
        %v9596 = vld [vmem:[#allocation26 + $0x188] sm:$0xff]
        %v9597 = vld [vmem:[#allocation26 + $0x190] sm:$0xff]
        %v9598 = vld [vmem:[#allocation26 + $0x198] sm:$0xff]
        %v9599 = vld [vmem:[#allocation26 + $0x1a0] sm:$0xf]
        %v9600 = vld [vmem:[#allocation26 + $0x1a4] sm:$0xff]
        %v9601 = vld [vmem:[#allocation26 + $0x1ac] sm:$0xff]
        %v9602 = vld [vmem:[#allocation26 + $0x1b4] sm:$0xff]
        %v9603 = vld [vmem:[#allocation26 + $0x1bc] sm:$0xf]
        %v9604 = vld [vmem:[#allocation26 + $0x1c0] sm:$0xff]
        %v9605 = vld [vmem:[#allocation26 + $0x1c8] sm:$0xff]
        %v9606 = vld [vmem:[#allocation26 + $0x1d0] sm:$0xff]
        %v9607 = vld [vmem:[#allocation26 + $0x1d8] sm:$0xf]
        %v9608 = vld [vmem:[#allocation26 + $0x1dc] sm:$0xff]
        %v9609 = vld [vmem:[#allocation26 + $0x1e4] sm:$0xff]
        %v9610 = vld [vmem:[#allocation26 + $0x1ec] sm:$0xff]
        %v9611 = vld [vmem:[#allocation26 + $0x1f4] sm:$0xf]
        %v9612 = vld [vmem:[#allocation26 + $0x1f8] sm:$0xff]
        %v9613 = vld [vmem:[#allocation26 + $0x200] sm:$0xff]
        %v9614 = vld [vmem:[#allocation26 + $0x208] sm:$0xff]
        %v9615 = vld [vmem:[#allocation26 + $0x210] sm:$0xf]
        %v9616 = vld [vmem:[#allocation26 + $0x214] sm:$0xff]
        %v9617 = vld [vmem:[#allocation26 + $0x21c] sm:$0xff]
        %v9618 = vld [vmem:[#allocation26 + $0x224] sm:$0xff]
        %v9619 = vld [vmem:[#allocation26 + $0x22c] sm:$0xf]
        %v9620 = vld [vmem:[#allocation26 + $0x230] sm:$0xff]
        %v9621 = vld [vmem:[#allocation26 + $0x238] sm:$0xff]
        %v9622 = vld [vmem:[#allocation26 + $0x240] sm:$0xff]
        %v9623 = vld [vmem:[#allocation26 + $0x248] sm:$0xf]
        %v9624 = vld [vmem:[#allocation26 + $0x24c] sm:$0xff]
        %v9625 = vld [vmem:[#allocation26 + $0x254] sm:$0xff]
        %v9626 = vld [vmem:[#allocation26 + $0x25c] sm:$0xff]
        %v9627 = vld [vmem:[#allocation26 + $0x264] sm:$0xf]
        %v9628 = vld [vmem:[#allocation26 + $0x268] sm:$0xff]
        %v9629 = vld [vmem:[#allocation26 + $0x270] sm:$0xff]
        %v9630 = vld [vmem:[#allocation26 + $0x278] sm:$0xff]
        %v9631 = vld [vmem:[#allocation26 + $0x280] sm:$0xf]
        %v9632 = vld [vmem:[#allocation26 + $0x284] sm:$0xff]
        %v9633 = vld [vmem:[#allocation26 + $0x28c] sm:$0xff]
        %v9634 = vld [vmem:[#allocation26 + $0x294] sm:$0xff]
        %v9635 = vld [vmem:[#allocation26 + $0x29c] sm:$0xf]
        %v9636 = vld [vmem:[#allocation26 + $0x2a0] sm:$0xff]
        %v9637 = vld [vmem:[#allocation26 + $0x2a8] sm:$0xff]
        %v9638 = vld [vmem:[#allocation26 + $0x2b0] sm:$0xff]
        %v9639 = vld [vmem:[#allocation26 + $0x2b8] sm:$0xf]
        %v9640 = vld [vmem:[#allocation26 + $0x2bc] sm:$0xff]
        %v9641 = vld [vmem:[#allocation26 + $0x2c4] sm:$0xff]
        %v9642 = vld [vmem:[#allocation26 + $0x2cc] sm:$0xff]
        %v9643 = vld [vmem:[#allocation26 + $0x2d4] sm:$0xf]
        %v9644 = vld [vmem:[#allocation26 + $0x2d8] sm:$0xff]
        %v9645 = vld [vmem:[#allocation26 + $0x2e0] sm:$0xff]
        %v9646 = vld [vmem:[#allocation26 + $0x2e8] sm:$0xff]
        %v9647 = vld [vmem:[#allocation26 + $0x2f0] sm:$0xf]
        %v9648 = vld [vmem:[#allocation26 + $0x2f4] sm:$0xff]
        %v9649 = vld [vmem:[#allocation26 + $0x2fc] sm:$0xff]
        %v9650 = vld [vmem:[#allocation26 + $0x304] sm:$0xff]
        %v9651 = vld [vmem:[#allocation26 + $0x30c] sm:$0xf]
        %v9652 = vld [vmem:[#allocation26 + $0x310] sm:$0xff]
        %v9653 = vld [vmem:[#allocation26 + $0x318] sm:$0xff]
        %v9654 = vld [vmem:[#allocation26 + $0x320] sm:$0xff]
        %v9655 = vld [vmem:[#allocation26 + $0x328] sm:$0xf]
        %v9656 = vld [vmem:[#allocation26 + $0x32c] sm:$0xff]
        %v9657 = vld [vmem:[#allocation26 + $0x334] sm:$0xff]
        %v9658 = vld [vmem:[#allocation26 + $0x33c] sm:$0xff]
        %v9659 = vld [vmem:[#allocation26 + $0x344] sm:$0xf]
        %v9660 = vld [vmem:[#allocation26 + $0x348] sm:$0xff]
        %v9661 = vld [vmem:[#allocation26 + $0x350] sm:$0xff]
        %v9662 = vld [vmem:[#allocation26 + $0x358] sm:$0xff]
        %v9663 = vld [vmem:[#allocation26 + $0x360] sm:$0xf]
        %v9664 = vld [vmem:[#allocation26 + $0x364] sm:$0xff]
        %v9665 = vld [vmem:[#allocation26 + $0x36c] sm:$0xff]
        %v9666 = vld [vmem:[#allocation26 + $0x374] sm:$0xff]
        %v9667 = vld [vmem:[#allocation26 + $0x37c] sm:$0xf]
        %v9668 = vld [vmem:[#allocation26 + $0x380] sm:$0xff]
        %v9669 = vld [vmem:[#allocation26 + $0x388] sm:$0xff]
        %v9670 = vld [vmem:[#allocation26 + $0x390] sm:$0xff]
        %v9671 = vld [vmem:[#allocation26 + $0x398] sm:$0xf]
        %v9672 = vld [vmem:[#allocation26 + $0x39c] sm:$0xff]
        %v9673 = vld [vmem:[#allocation26 + $0x3a4] sm:$0xff]
        %v9674 = vld [vmem:[#allocation26 + $0x3ac] sm:$0xff]
        %v9675 = vld [vmem:[#allocation26 + $0x3b4] sm:$0xf]
        %v9676 = vld [vmem:[#allocation26 + $0x3b8] sm:$0xff]
        %v9677 = vld [vmem:[#allocation26 + $0x3c0] sm:$0xff]
        %v9678 = vld [vmem:[#allocation26 + $0x3c8] sm:$0xff]
        %v9679 = vld [vmem:[#allocation26 + $0x3d0] sm:$0xf]
        %v9680 = vld [vmem:[#allocation26 + $0x3d4] sm:$0xff]
        %v9681 = vld [vmem:[#allocation26 + $0x3dc] sm:$0xff]
        %v9682 = vld [vmem:[#allocation26 + $0x3e4] sm:$0xff]
        %v9683 = vld [vmem:[#allocation26 + $0x3ec] sm:$0xf]
        %v9684 = vld [vmem:[#allocation26 + $0x3f0] sm:$0xff]
        %v9685 = vld [vmem:[#allocation26 + $0x3f8] sm:$0xff]
        %v9686 = vld [vmem:[#allocation26 + $0x400] sm:$0xff]
        %v9687 = vld [vmem:[#allocation26 + $0x408] sm:$0xf]
        %v9688 = vld [vmem:[#allocation26 + $0x40c] sm:$0xff]
        %v9689 = vld [vmem:[#allocation26 + $0x414] sm:$0xff]
        %v9690 = vld [vmem:[#allocation26 + $0x41c] sm:$0xff]
        %v9691 = vld [vmem:[#allocation26 + $0x424] sm:$0xf]
        %v9692 = vld [vmem:[#allocation26 + $0x428] sm:$0xff]
        %v9693 = vld [vmem:[#allocation26 + $0x430] sm:$0xff]
        %v9694 = vld [vmem:[#allocation26 + $0x438] sm:$0xff]
        %v9695 = vld [vmem:[#allocation26 + $0x440] sm:$0xf]
        %v9696 = vld [vmem:[#allocation26 + $0x444] sm:$0xff]
        %v9697 = vld [vmem:[#allocation26 + $0x44c] sm:$0xff]
        %v9698 = vld [vmem:[#allocation26 + $0x454] sm:$0xff]
        %v9699 = vld [vmem:[#allocation26 + $0x45c] sm:$0xf]
        %v9700 = vld [vmem:[#allocation26 + $0x460] sm:$0xff]
        %v9701 = vld [vmem:[#allocation26 + $0x468] sm:$0xff]
        %v9702 = vld [vmem:[#allocation26 + $0x470] sm:$0xff]
        %v9703 = vld [vmem:[#allocation26 + $0x478] sm:$0xf]
        %v9704 = vld [vmem:[#allocation26 + $0x47c] sm:$0xff]
        %v9705 = vld [vmem:[#allocation26 + $0x484] sm:$0xff]
        %v9706 = vld [vmem:[#allocation26 + $0x48c] sm:$0xff]
        %v9707 = vld [vmem:[#allocation26 + $0x494] sm:$0xf]
        %v9708 = vld [vmem:[#allocation26 + $0x498] sm:$0xff]
        %v9709 = vld [vmem:[#allocation26 + $0x4a0] sm:$0xff]
        %v9710 = vld [vmem:[#allocation26 + $0x4a8] sm:$0xff]
        %v9711 = vld [vmem:[#allocation26 + $0x4b0] sm:$0xf]
        %v9712 = vld [vmem:[#allocation26 + $0x4b4] sm:$0xff]
        %v9713 = vld [vmem:[#allocation26 + $0x4bc] sm:$0xff]
        %v9714 = vld [vmem:[#allocation26 + $0x4c4] sm:$0xff]
        %v9715 = vld [vmem:[#allocation26 + $0x4cc] sm:$0xf]
        %v9716 = vld [vmem:[#allocation26 + $0x4d0] sm:$0xff]
        %v9717 = vld [vmem:[#allocation26 + $0x4d8] sm:$0xff]
        %v9718 = vld [vmem:[#allocation26 + $0x4e0] sm:$0xff]
        %v9719 = vld [vmem:[#allocation26 + $0x4e8] sm:$0xf]
        %v9720 = vld [vmem:[#allocation26 + $0x4ec] sm:$0xff]
        %v9721 = vld [vmem:[#allocation26 + $0x4f4] sm:$0xff]
        %v9722 = vld [vmem:[#allocation26 + $0x4fc] sm:$0xff]
        %v9723 = vld [vmem:[#allocation26 + $0x504] sm:$0xf]
        %v9724 = vld [vmem:[#allocation26 + $0x508] sm:$0xff]
        %v9725 = vld [vmem:[#allocation26 + $0x510] sm:$0xff]
        %v9726 = vld [vmem:[#allocation26 + $0x518] sm:$0xff]
        %v9727 = vld [vmem:[#allocation26 + $0x520] sm:$0xf]
        %v9728 = vld [vmem:[#allocation26 + $0x524] sm:$0xff]
        %v9729 = vld [vmem:[#allocation26 + $0x52c] sm:$0xff]
        %v9730 = vld [vmem:[#allocation26 + $0x534] sm:$0xff]
        %v9731 = vld [vmem:[#allocation26 + $0x53c] sm:$0xf]
        %v9732 = vld [vmem:[#allocation26 + $0x540] sm:$0xff]
        %v9733 = vld [vmem:[#allocation26 + $0x548] sm:$0xff]
        %v9734 = vld [vmem:[#allocation26 + $0x550] sm:$0xff]
        %v9735 = vld [vmem:[#allocation26 + $0x558] sm:$0xf]
        %v9736 = vld [vmem:[#allocation26 + $0x55c] sm:$0xff]
        %v9737 = vld [vmem:[#allocation26 + $0x564] sm:$0xff]
        %v9738 = vld [vmem:[#allocation26 + $0x56c] sm:$0xff]
        %v9739 = vld [vmem:[#allocation26 + $0x574] sm:$0xf]
        %v9740 = vld [vmem:[#allocation26 + $0x578] sm:$0xff]
        %v9741 = vld [vmem:[#allocation26 + $0x580] sm:$0xff]
        %v9742 = vld [vmem:[#allocation26 + $0x588] sm:$0xff]
        %v9743 = vld [vmem:[#allocation26 + $0x590] sm:$0xf]
        %v9744 = vld [vmem:[#allocation26 + $0x594] sm:$0xff]
        %v9745 = vld [vmem:[#allocation26 + $0x59c] sm:$0xff]
        %v9746 = vld [vmem:[#allocation26 + $0x5a4] sm:$0xff]
        %v9747 = vld [vmem:[#allocation26 + $0x5ac] sm:$0xf]
        %v9748 = vld [vmem:[#allocation26 + $0x5b0] sm:$0xff]
        %v9749 = vld [vmem:[#allocation26 + $0x5b8] sm:$0xff]
        %v9750 = vld [vmem:[#allocation26 + $0x5c0] sm:$0xff]
        %v9751 = vld [vmem:[#allocation26 + $0x5c8] sm:$0xf]
        %v9752 = vld [vmem:[#allocation26 + $0x5cc] sm:$0xff]
        %v9753 = vld [vmem:[#allocation26 + $0x5d4] sm:$0xff]
        %v9754 = vld [vmem:[#allocation26 + $0x5dc] sm:$0xff]
        %v9755 = vld [vmem:[#allocation26 + $0x5e4] sm:$0xf]
        %v9756 = vld [vmem:[#allocation26 + $0x5e8] sm:$0xff]
        %v9757 = vld [vmem:[#allocation26 + $0x5f0] sm:$0xff]
        %v9758 = vld [vmem:[#allocation26 + $0x5f8] sm:$0xff]
        %v9759 = vld [vmem:[#allocation26 + $0x600] sm:$0xf]
        %v9760 = vld [vmem:[#allocation26 + $0x604] sm:$0xff]
        %v9761 = vld [vmem:[#allocation26 + $0x60c] sm:$0xff]
        %v9762 = vld [vmem:[#allocation26 + $0x614] sm:$0xff]
        %v9763 = vld [vmem:[#allocation26 + $0x61c] sm:$0xf]
        %v9764 = vld [vmem:[#allocation26 + $0x620] sm:$0xff]
        %v9765 = vld [vmem:[#allocation26 + $0x628] sm:$0xff]
        %v9766 = vld [vmem:[#allocation26 + $0x630] sm:$0xff]
        %v9767 = vld [vmem:[#allocation26 + $0x638] sm:$0xf]
        %v9768 = vld [vmem:[#allocation26 + $0x63c] sm:$0xff]
        %v9769 = vld [vmem:[#allocation26 + $0x644] sm:$0xff]
        %v9770 = vld [vmem:[#allocation26 + $0x64c] sm:$0xff]
        %v9771 = vld [vmem:[#allocation26 + $0x654] sm:$0xf]
        %v9772 = vld [vmem:[#allocation26 + $0x658] sm:$0xff]
        %v9773 = vld [vmem:[#allocation26 + $0x660] sm:$0xff]
        %v9774 = vld [vmem:[#allocation26 + $0x668] sm:$0xff]
        %v9775 = vld [vmem:[#allocation26 + $0x670] sm:$0xf]
        %v9776 = vld [vmem:[#allocation26 + $0x674] sm:$0xff]
        %v9777 = vld [vmem:[#allocation26 + $0x67c] sm:$0xff]
        %v9778 = vld [vmem:[#allocation26 + $0x684] sm:$0xff]
        %v9779 = vld [vmem:[#allocation26 + $0x68c] sm:$0xf]
        %v9780 = vld [vmem:[#allocation26 + $0x690] sm:$0xff]
        %v9781 = vld [vmem:[#allocation26 + $0x698] sm:$0xff]
        %v9782 = vld [vmem:[#allocation26 + $0x6a0] sm:$0xff]
        %v9783 = vld [vmem:[#allocation26 + $0x6a8] sm:$0xf]
        %v9784 = vld [vmem:[#allocation26 + $0x6ac] sm:$0xff]
        %v9785 = vld [vmem:[#allocation26 + $0x6b4] sm:$0xff]
        %v9786 = vld [vmem:[#allocation26 + $0x6bc] sm:$0xff]
        %v9787 = vld [vmem:[#allocation26 + $0x6c4] sm:$0xf]
        %v9788 = vld [vmem:[#allocation26 + $0x6c8] sm:$0xff]
        %v9789 = vld [vmem:[#allocation26 + $0x6d0] sm:$0xff]
        %v9790 = vld [vmem:[#allocation26 + $0x6d8] sm:$0xff]
        %v9791 = vld [vmem:[#allocation26 + $0x6e0] sm:$0xf]
        %v9792 = vld [vmem:[#allocation26 + $0x6e4] sm:$0xff]
        %v9793 = vld [vmem:[#allocation26 + $0x6ec] sm:$0xff]
        %v9794 = vld [vmem:[#allocation26 + $0x6f4] sm:$0xff]
        %v9795 = vld [vmem:[#allocation26 + $0x6fc] sm:$0xf]
        %v9796 = vld [vmem:[#allocation26 + $0x700] sm:$0xff]
        %v9797 = vld [vmem:[#allocation26 + $0x708] sm:$0xff]
        %v9798 = vld [vmem:[#allocation26 + $0x710] sm:$0xff]
        %v9799 = vld [vmem:[#allocation26 + $0x718] sm:$0xf]
        %v9800 = vld [vmem:[#allocation26 + $0x71c] sm:$0xff]
        %v9801 = vld [vmem:[#allocation26 + $0x724] sm:$0xff]
        %v9802 = vld [vmem:[#allocation26 + $0x72c] sm:$0xff]
        %v9803 = vld [vmem:[#allocation26 + $0x734] sm:$0xf]
        %v9804 = vld [vmem:[#allocation26 + $0x738] sm:$0xff]
        %v9805 = vld [vmem:[#allocation26 + $0x740] sm:$0xff]
        %v9806 = vld [vmem:[#allocation26 + $0x748] sm:$0xff]
        %v9807 = vld [vmem:[#allocation26 + $0x750] sm:$0xf]
        %v9808 = vld [vmem:[#allocation26 + $0x754] sm:$0xff]
        %v9809 = vld [vmem:[#allocation26 + $0x75c] sm:$0xff]
        %v9810 = vld [vmem:[#allocation26 + $0x764] sm:$0xff]
        %v9811 = vld [vmem:[#allocation26 + $0x76c] sm:$0xf]
        %v9812 = vld [vmem:[#allocation26 + $0x770] sm:$0xff]
        %v9813 = vld [vmem:[#allocation26 + $0x778] sm:$0xff]
        %v9814 = vld [vmem:[#allocation26 + $0x780] sm:$0xff]
        %v9815 = vld [vmem:[#allocation26 + $0x788] sm:$0xf]
        %v9816 = vld [vmem:[#allocation26 + $0x78c] sm:$0xff]
        %v9817 = vld [vmem:[#allocation26 + $0x794] sm:$0xff]
        %v9818 = vld [vmem:[#allocation26 + $0x79c] sm:$0xff]
        %v9819 = vld [vmem:[#allocation26 + $0x7a4] sm:$0xf]
        %v9820 = vld [vmem:[#allocation26 + $0x7a8] sm:$0xff]
        %v9821 = vld [vmem:[#allocation26 + $0x7b0] sm:$0xff]
        %v9822 = vld [vmem:[#allocation26 + $0x7b8] sm:$0xff]
        %v9823 = vld [vmem:[#allocation26 + $0x7c0] sm:$0xf]
        %v9824 = vld [vmem:[#allocation26 + $0x7c4] sm:$0xff]
        %v9825 = vld [vmem:[#allocation26 + $0x7cc] sm:$0xff]
        %v9826 = vld [vmem:[#allocation26 + $0x7d4] sm:$0xff]
        %v9827 = vld [vmem:[#allocation26 + $0x7dc] sm:$0xf]
        %v9828 = vld [vmem:[#allocation26 + $0x7e0] sm:$0xff]
        %v9829 = vld [vmem:[#allocation26 + $0x7e8] sm:$0xff]
        %v9830 = vld [vmem:[#allocation26 + $0x7f0] sm:$0xff]
        %v9831 = vld [vmem:[#allocation26 + $0x7f8] sm:$0xf]
        %v9832 = vld [vmem:[#allocation26 + $0x7fc] sm:$0xff]
        %v9833 = vld [vmem:[#allocation26 + $0x804] sm:$0xff]
        %v9834 = vld [vmem:[#allocation26 + $0x80c] sm:$0xff]
        %v9835 = vld [vmem:[#allocation26 + $0x814] sm:$0xf]
        %v9836 = vld [vmem:[#allocation26 + $0x818] sm:$0xff]
        %v9837 = vld [vmem:[#allocation26 + $0x820] sm:$0xff]
        %v9838 = vld [vmem:[#allocation26 + $0x828] sm:$0xff]
        %v9839 = vld [vmem:[#allocation26 + $0x830] sm:$0xf]
        %v9840 = vld [vmem:[#allocation26 + $0x834] sm:$0xff]
        %v9841 = vld [vmem:[#allocation26 + $0x83c] sm:$0xff]
        %v9842 = vld [vmem:[#allocation26 + $0x844] sm:$0xff]
        %v9843 = vld [vmem:[#allocation26 + $0x84c] sm:$0xf]
        %v9844 = vld [vmem:[#allocation26 + $0x850] sm:$0xff]
        %v9845 = vld [vmem:[#allocation26 + $0x858] sm:$0xff]
        %v9846 = vld [vmem:[#allocation26 + $0x860] sm:$0xff]
        %v9847 = vld [vmem:[#allocation26 + $0x868] sm:$0xf]
        %v9848 = vld [vmem:[#allocation26 + $0x86c] sm:$0xff]
        %v9849 = vld [vmem:[#allocation26 + $0x874] sm:$0xff]
        %v9850 = vld [vmem:[#allocation26 + $0x87c] sm:$0xff]
        %v9851 = vld [vmem:[#allocation26 + $0x884] sm:$0xf]
        %v9852 = vld [vmem:[#allocation26 + $0x888] sm:$0xff]
        %v9853 = vld [vmem:[#allocation26 + $0x890] sm:$0xff]
        %v9854 = vld [vmem:[#allocation26 + $0x898] sm:$0xff]
        %v9855 = vld [vmem:[#allocation26 + $0x8a0] sm:$0xf]
        %v9856 = vld [vmem:[#allocation26 + $0x8a4] sm:$0xff]
        %v9857 = vld [vmem:[#allocation26 + $0x8ac] sm:$0xff]
        %v9858 = vld [vmem:[#allocation26 + $0x8b4] sm:$0xff]
        %v9859 = vld [vmem:[#allocation26 + $0x8bc] sm:$0xf]
        %v9860 = vld [vmem:[#allocation26 + $0x8c0] sm:$0xff]
        %v9861 = vld [vmem:[#allocation26 + $0x8c8] sm:$0xff]
        %v9862 = vld [vmem:[#allocation26 + $0x8d0] sm:$0xff]
        %v9863 = vld [vmem:[#allocation26 + $0x8d8] sm:$0xf]
        %v9864 = vld [vmem:[#allocation26 + $0x8dc] sm:$0xff]
        %v9865 = vld [vmem:[#allocation26 + $0x8e4] sm:$0xff]
        %v9866 = vld [vmem:[#allocation26 + $0x8ec] sm:$0xff]
        %v9867 = vld [vmem:[#allocation26 + $0x8f4] sm:$0xf]
        %v9868 = vld [vmem:[#allocation26 + $0x8f8] sm:$0xff]
        %v9869 = vld [vmem:[#allocation26 + $0x900] sm:$0xff]
        %v9870 = vld [vmem:[#allocation26 + $0x908] sm:$0xff]
        %v9871 = vld [vmem:[#allocation26 + $0x910] sm:$0xf]
        %v9872 = vld [vmem:[#allocation26 + $0x914] sm:$0xff]
        %v9873 = vld [vmem:[#allocation26 + $0x91c] sm:$0xff]
        %v9874 = vld [vmem:[#allocation26 + $0x924] sm:$0xff]
        %v9875 = vld [vmem:[#allocation26 + $0x92c] sm:$0xf]
        %v9876 = vld [vmem:[#allocation26 + $0x930] sm:$0xff]
        %v9877 = vld [vmem:[#allocation26 + $0x938] sm:$0xff]
        %v9878 = vld [vmem:[#allocation26 + $0x940] sm:$0xff]
        %v9879 = vld [vmem:[#allocation26 + $0x948] sm:$0xf]
        %v9880 = vld [vmem:[#allocation26 + $0x94c] sm:$0xff]
        %v9881 = vld [vmem:[#allocation26 + $0x954] sm:$0xff]
        %v9882 = vld [vmem:[#allocation26 + $0x95c] sm:$0xff]
        %v9883 = vld [vmem:[#allocation26 + $0x964] sm:$0xf]
        %v9884 = vld [vmem:[#allocation26 + $0x968] sm:$0xff]
        %v9885 = vld [vmem:[#allocation26 + $0x970] sm:$0xff]
        %v9886 = vld [vmem:[#allocation26 + $0x978] sm:$0xff]
        %v9887 = vld [vmem:[#allocation26 + $0x980] sm:$0xf]
        %v9888 = vld [vmem:[#allocation26 + $0x984] sm:$0xff]
        %v9889 = vld [vmem:[#allocation26 + $0x98c] sm:$0xff]
        %v9890 = vld [vmem:[#allocation26 + $0x994] sm:$0xff]
        %v9891 = vld [vmem:[#allocation26 + $0x99c] sm:$0xf]
        %v9892 = vld [vmem:[#allocation26 + $0x9a0] sm:$0xff]
        %v9893 = vld [vmem:[#allocation26 + $0x9a8] sm:$0xff]
        %v9894 = vld [vmem:[#allocation26 + $0x9b0] sm:$0xff]
        %v9895 = vld [vmem:[#allocation26 + $0x9b8] sm:$0xf]
        %v9896 = vld [vmem:[#allocation26 + $0x9bc] sm:$0xff]
        %v9897 = vld [vmem:[#allocation26 + $0x9c4] sm:$0xff]
        %v9898 = vld [vmem:[#allocation26 + $0x9cc] sm:$0xff]
        %v9899 = vld [vmem:[#allocation26 + $0x9d4] sm:$0xf]
        %v9900 = vld [vmem:[#allocation26 + $0x9d8] sm:$0xff]
        %v9901 = vld [vmem:[#allocation26 + $0x9e0] sm:$0xff]
        %v9902 = vld [vmem:[#allocation26 + $0x9e8] sm:$0xff]
        %v9903 = vld [vmem:[#allocation26 + $0x9f0] sm:$0xf]
        %v9904 = vld [vmem:[#allocation26 + $0x9f4] sm:$0xff]
        %v9905 = vld [vmem:[#allocation26 + $0x9fc] sm:$0xff]
        %v9906 = vld [vmem:[#allocation26 + $0xa04] sm:$0xff]
        %v9907 = vld [vmem:[#allocation26 + $0xa0c] sm:$0xf]
        %v9908 = vld [vmem:[#allocation26 + $0xa10] sm:$0xff]
        %v9909 = vld [vmem:[#allocation26 + $0xa18] sm:$0xff]
        %v9910 = vld [vmem:[#allocation26 + $0xa20] sm:$0xff]
        %v9911 = vld [vmem:[#allocation26 + $0xa28] sm:$0xf]
        %v9912 = vld [vmem:[#allocation26 + $0xa2c] sm:$0xff]
        %v9913 = vld [vmem:[#allocation26 + $0xa34] sm:$0xff]
        %v9914 = vld [vmem:[#allocation26 + $0xa3c] sm:$0xff]
        %v9915 = vld [vmem:[#allocation26 + $0xa44] sm:$0xf]
        %v9916 = vld [vmem:[#allocation26 + $0xa48] sm:$0xff]
        %v9917 = vld [vmem:[#allocation26 + $0xa50] sm:$0xff]
        %v9918 = vld [vmem:[#allocation26 + $0xa58] sm:$0xff]
        %v9919 = vld [vmem:[#allocation26 + $0xa60] sm:$0xf]
        %v9920 = vld [vmem:[#allocation26 + $0xa64] sm:$0xff]
        %v9921 = vld [vmem:[#allocation26 + $0xa6c] sm:$0xff]
        %v9922 = vld [vmem:[#allocation26 + $0xa74] sm:$0xff]
        %v9923 = vld [vmem:[#allocation26 + $0xa7c] sm:$0xf]
        %v9924 = vld [vmem:[#allocation26 + $0xa80] sm:$0xff]
        %v9925 = vld [vmem:[#allocation26 + $0xa88] sm:$0xff]
        %v9926 = vld [vmem:[#allocation26 + $0xa90] sm:$0xff]
        %v9927 = vld [vmem:[#allocation26 + $0xa98] sm:$0xf]
        %v9928 = vld [vmem:[#allocation26 + $0xa9c] sm:$0xff]
        %v9929 = vld [vmem:[#allocation26 + $0xaa4] sm:$0xff]
        %v9930 = vld [vmem:[#allocation26 + $0xaac] sm:$0xff]
        %v9931 = vld [vmem:[#allocation26 + $0xab4] sm:$0xf]
        %v9932 = vld [vmem:[#allocation26 + $0xab8] sm:$0xff]
        %v9933 = vld [vmem:[#allocation26 + $0xac0] sm:$0xff]
        %v9934 = vld [vmem:[#allocation26 + $0xac8] sm:$0xff]
        %v9935 = vld [vmem:[#allocation26 + $0xad0] sm:$0xf]
        %v9936 = vld [vmem:[#allocation26 + $0xad4] sm:$0xff]
        %v9937 = vld [vmem:[#allocation26 + $0xadc] sm:$0xff]
        %v9938 = vld [vmem:[#allocation26 + $0xae4] sm:$0xff]
        %v9939 = vld [vmem:[#allocation26 + $0xaec] sm:$0xf]
        %v9940 = vld [vmem:[#allocation26 + $0xaf0] sm:$0xff]
        %v9941 = vld [vmem:[#allocation26 + $0xaf8] sm:$0xff]
        %v9942 = vld [vmem:[#allocation26 + $0xb00] sm:$0xff]
        %v9943 = vld [vmem:[#allocation26 + $0xb08] sm:$0xf]
        %v9944 = vld [vmem:[#allocation26 + $0xb0c] sm:$0xff]
        %v9945 = vld [vmem:[#allocation26 + $0xb14] sm:$0xff]
        %v9946 = vld [vmem:[#allocation26 + $0xb1c] sm:$0xff]
        %v9947 = vld [vmem:[#allocation26 + $0xb24] sm:$0xf]
        %v9948 = vld [vmem:[#allocation26 + $0xb28] sm:$0xff]
        %v9949 = vld [vmem:[#allocation26 + $0xb30] sm:$0xff]
        %v9950 = vld [vmem:[#allocation26 + $0xb38] sm:$0xff]
        %v9951 = vld [vmem:[#allocation26 + $0xb40] sm:$0xf]
        %v9952 = vld [vmem:[#allocation26 + $0xb44] sm:$0xff]
        %v9953 = vld [vmem:[#allocation26 + $0xb4c] sm:$0xff]
        %v9954 = vld [vmem:[#allocation26 + $0xb54] sm:$0xff]
        %v9955 = vld [vmem:[#allocation26 + $0xb5c] sm:$0xf]
        %v9956 = vld [vmem:[#allocation26 + $0xb60] sm:$0xff]
        %v9957 = vld [vmem:[#allocation26 + $0xb68] sm:$0xff]
        %v9958 = vld [vmem:[#allocation26 + $0xb70] sm:$0xff]
        %v9959 = vld [vmem:[#allocation26 + $0xb78] sm:$0xf]
        %v9960 = vld [vmem:[#allocation26 + $0xb7c] sm:$0xff]
        %v9961 = vld [vmem:[#allocation26 + $0xb84] sm:$0xff]
        %v9962 = vld [vmem:[#allocation26 + $0xb8c] sm:$0xff]
        %v9963 = vld [vmem:[#allocation26 + $0xb94] sm:$0xf]
        %v9964 = vld [vmem:[#allocation26 + $0xb98] sm:$0xff]
        %v9965 = vld [vmem:[#allocation26 + $0xba0] sm:$0xff]
        %v9966 = vld [vmem:[#allocation26 + $0xba8] sm:$0xff]
        %v9967 = vld [vmem:[#allocation26 + $0xbb0] sm:$0xf]
        %v9968 = vld [vmem:[#allocation26 + $0xbb4] sm:$0xff]
        %v9969 = vld [vmem:[#allocation26 + $0xbbc] sm:$0xff]
        %v9970 = vld [vmem:[#allocation26 + $0xbc4] sm:$0xff]
        %v9971 = vld [vmem:[#allocation26 + $0xbcc] sm:$0xf]
        %v9972 = vld [vmem:[#allocation26 + $0xbd0] sm:$0xff]
        %v9973 = vld [vmem:[#allocation26 + $0xbd8] sm:$0xff]
        %v9974 = vld [vmem:[#allocation26 + $0xbe0] sm:$0xff]
        %v9975 = vld [vmem:[#allocation26 + $0xbe8] sm:$0xf]
        %v9976 = vld [vmem:[#allocation26 + $0xbec] sm:$0xff]
        %v9977 = vld [vmem:[#allocation26 + $0xbf4] sm:$0xff]
        %v9978 = vld [vmem:[#allocation26 + $0xbfc] sm:$0xff]
        %v9979 = vld [vmem:[#allocation26 + $0xc04] sm:$0xf]
        %v9980 = vld [vmem:[#allocation26 + $0xc08] sm:$0xff]
        %v9981 = vld [vmem:[#allocation26 + $0xc10] sm:$0xff]
        %v9982 = vld [vmem:[#allocation26 + $0xc18] sm:$0xff]
        %v9983 = vld [vmem:[#allocation26 + $0xc20] sm:$0xf]
        %v9984 = vld [vmem:[#allocation26 + $0xc24] sm:$0xff]
        %v9985 = vld [vmem:[#allocation26 + $0xc2c] sm:$0xff]
        %v9986 = vld [vmem:[#allocation26 + $0xc34] sm:$0xff]
        %v9987 = vld [vmem:[#allocation26 + $0xc3c] sm:$0xf]
        %v9988 = vld [vmem:[#allocation26 + $0xc40] sm:$0xff]
        %v9989 = vld [vmem:[#allocation26 + $0xc48] sm:$0xff]
        %v9990 = vld [vmem:[#allocation26 + $0xc50] sm:$0xff]
        %v9991 = vld [vmem:[#allocation26 + $0xc58] sm:$0xf]
        %v9992 = vld [vmem:[#allocation26 + $0xc5c] sm:$0xff]
        %v9993 = vld [vmem:[#allocation26 + $0xc64] sm:$0xff]
        %v9994 = vld [vmem:[#allocation26 + $0xc6c] sm:$0xff]
        %v9995 = vld [vmem:[#allocation26 + $0xc74] sm:$0xf]
        %v9996 = vld [vmem:[#allocation26 + $0xc78] sm:$0xff]
        %v9997 = vld [vmem:[#allocation26 + $0xc80] sm:$0xff]
        %v9998 = vld [vmem:[#allocation26 + $0xc88] sm:$0xff]
        %v9999 = vld [vmem:[#allocation26 + $0xc90] sm:$0xf]
        %v10000 = vld [vmem:[#allocation26 + $0xc94] sm:$0xff]
        %v10001 = vld [vmem:[#allocation26 + $0xc9c] sm:$0xff]
        %v10002 = vld [vmem:[#allocation26 + $0xca4] sm:$0xff]
        %v10003 = vld [vmem:[#allocation26 + $0xcac] sm:$0xf]
        %v10004 = vld [vmem:[#allocation26 + $0xcb0] sm:$0xff]
        %v10005 = vld [vmem:[#allocation26 + $0xcb8] sm:$0xff]
        %v10006 = vld [vmem:[#allocation26 + $0xcc0] sm:$0xff]
        %v10007 = vld [vmem:[#allocation26 + $0xcc8] sm:$0xf]
        %v10008 = vld [vmem:[#allocation26 + $0xccc] sm:$0xff]
        %v10009 = vld [vmem:[#allocation26 + $0xcd4] sm:$0xff]
        %v10010 = vld [vmem:[#allocation26 + $0xcdc] sm:$0xff]
        %v10011 = vld [vmem:[#allocation26 + $0xce4] sm:$0xf]
        %v10012 = vld [vmem:[#allocation26 + $0xce8] sm:$0xff]
        %v10013 = vld [vmem:[#allocation26 + $0xcf0] sm:$0xff]
        %v10014 = vld [vmem:[#allocation26 + $0xcf8] sm:$0xff]
        %v10015 = vld [vmem:[#allocation26 + $0xd00] sm:$0xf]
        %v10016 = vld [vmem:[#allocation26 + $0xd04] sm:$0xff]
        %v10017 = vld [vmem:[#allocation26 + $0xd0c] sm:$0xff]
        %v10018 = vld [vmem:[#allocation26 + $0xd14] sm:$0xff]
        %v10019 = vld [vmem:[#allocation26 + $0xd1c] sm:$0xf]
        %v10020 = vld [vmem:[#allocation26 + $0xd20] sm:$0xff]
        %v10021 = vld [vmem:[#allocation26 + $0xd28] sm:$0xff]
        %v10022 = vld [vmem:[#allocation26 + $0xd30] sm:$0xff]
        %v10023 = vld [vmem:[#allocation26 + $0xd38] sm:$0xf]
        %v10024 = vld [vmem:[#allocation26 + $0xd3c] sm:$0xff]
        %v10025 = vld [vmem:[#allocation26 + $0xd44] sm:$0xff]
        %v10026 = vld [vmem:[#allocation26 + $0xd4c] sm:$0xff]
        %v10027 = vld [vmem:[#allocation26 + $0xd54] sm:$0xf]
        %v10028 = vld [vmem:[#allocation26 + $0xd58] sm:$0xff]
        %v10029 = vld [vmem:[#allocation26 + $0xd60] sm:$0xff]
        %v10030 = vld [vmem:[#allocation26 + $0xd68] sm:$0xff]
        %v10031 = vld [vmem:[#allocation26 + $0xd70] sm:$0xf]
        %v10032 = vld [vmem:[#allocation26 + $0xd74] sm:$0xff]
        %v10033 = vld [vmem:[#allocation26 + $0xd7c] sm:$0xff]
        %v10034 = vld [vmem:[#allocation26 + $0xd84] sm:$0xff]
        %v10035 = vld [vmem:[#allocation26 + $0xd8c] sm:$0xf]
        %v10036 = vld [vmem:[#allocation26 + $0xd90] sm:$0xff]
        %v10037 = vld [vmem:[#allocation26 + $0xd98] sm:$0xff]
        %v10038 = vld [vmem:[#allocation26 + $0xda0] sm:$0xff]
        %v10039 = vld [vmem:[#allocation26 + $0xda8] sm:$0xf]
        %v10040 = vld [vmem:[#allocation26 + $0xdac] sm:$0xff]
        %v10041 = vld [vmem:[#allocation26 + $0xdb4] sm:$0xff]
        %v10042 = vld [vmem:[#allocation26 + $0xdbc] sm:$0xff]
        %v10043 = vld [vmem:[#allocation26 + $0xdc4] sm:$0xf]
        %v10044 = vld [vmem:[#allocation26 + $0xdc8] sm:$0xff]
        %v10045 = vld [vmem:[#allocation26 + $0xdd0] sm:$0xff]
        %v10046 = vld [vmem:[#allocation26 + $0xdd8] sm:$0xff]
        %v10047 = vld [vmem:[#allocation26 + $0xde0] sm:$0xf]
        %v10048 = vld [vmem:[#allocation26 + $0xde4] sm:$0xff]
        %v10049 = vld [vmem:[#allocation26 + $0xdec] sm:$0xff]
        %v10050 = vld [vmem:[#allocation26 + $0xdf4] sm:$0xff]
        %v10051 = vld [vmem:[#allocation26 + $0xdfc] sm:$0xf]
        %v10052 = vld [vmem:[#allocation28] sm:$0xff]
        %v10053 = vpack.c.bf16 %v9532, %v9524
        %v10054 = vpack.c.bf16 %v9533, %v9525
        %v10055 = vpack.c.bf16 %v9534, %v9526
        %v10056 = vpack.c.bf16 %v9535, %v9527
        %v10057 = vpack.c.bf16 %v9536, %v9528
        %v10058 = vpack.c.bf16 %v9537, %v9529
        %v10059 = vpack.c.bf16 %v9538, %v9530
        %v10060 = vpack.c.bf16 %v9539, %v9531
        %v10062 = vlaneseq
        %v10063 = vshrl.u32 %v10062, 7
        %v10064 = vsub.s32 0, %v10063
        %v10065 = vrot.slane %v10052, %v10064
        %v10066 = vlaneseq
        %v10067 = vshrl.u32 %v10066, 7
        %v10068 = vsub.s32 1, %v10067
        %v10069 = vrot.slane %v10052, %v10068
        %v10070 = vlaneseq
        %v10071 = vshrl.u32 %v10070, 7
        %v10072 = vsub.s32 2, %v10071
        %v10073 = vrot.slane %v10052, %v10072
        %v10074 = vlaneseq
        %v10075 = vshrl.u32 %v10074, 7
        %v10076 = vsub.s32 3, %v10075
        %v10077 = vrot.slane %v10052, %v10076
        %v10078 = vlaneseq
        %v10079 = vshrl.u32 %v10078, 7
        %v10080 = vsub.s32 4, %v10079
        %v10081 = vrot.slane %v10052, %v10080
        %v10082 = vlaneseq
        %v10083 = vshrl.u32 %v10082, 7
        %v10084 = vsub.s32 5, %v10083
        %v10085 = vrot.slane %v10052, %v10084
        %v10086 = vlaneseq
        %v10087 = vshrl.u32 %v10086, 7
        %v10088 = vsub.s32 6, %v10087
        %v10089 = vrot.slane %v10052, %v10088
        %v10609 = vunpack.c.l.b16 %v9540
        %v10610 = vunpack.c.h.b16 %v9540
        %v10611 = vunpack.c.l.b16 %v9541
        %v10612 = vunpack.c.h.b16 %v9541
        %v10613 = vunpack.c.l.b16 %v9542
        %v10614 = vunpack.c.h.b16 %v9542
        %v10615 = vunpack.c.l.b16 %v9543
        %v10616 = vunpack.c.l.b16 %v9544
        %v10617 = vunpack.c.h.b16 %v9544
        %v10618 = vunpack.c.l.b16 %v9545
        %v10619 = vunpack.c.h.b16 %v9545
        %v10620 = vunpack.c.l.b16 %v9546
        %v10621 = vunpack.c.h.b16 %v9546
        %v10622 = vunpack.c.l.b16 %v9547
        %v10623 = vunpack.c.l.b16 %v9548
        %v10624 = vunpack.c.h.b16 %v9548
        %v10625 = vunpack.c.l.b16 %v9549
        %v10626 = vunpack.c.h.b16 %v9549
        %v10627 = vunpack.c.l.b16 %v9550
        %v10628 = vunpack.c.h.b16 %v9550
        %v10629 = vunpack.c.l.b16 %v9551
        %v10630 = vunpack.c.l.b16 %v9552
        %v10631 = vunpack.c.h.b16 %v9552
        %v10632 = vunpack.c.l.b16 %v9553
        %v10633 = vunpack.c.h.b16 %v9553
        %v10634 = vunpack.c.l.b16 %v9554
        %v10635 = vunpack.c.h.b16 %v9554
        %v10636 = vunpack.c.l.b16 %v9555
        %v10637 = vunpack.c.l.b16 %v9556
        %v10638 = vunpack.c.h.b16 %v9556
        %v10639 = vunpack.c.l.b16 %v9557
        %v10640 = vunpack.c.h.b16 %v9557
        %v10641 = vunpack.c.l.b16 %v9558
        %v10642 = vunpack.c.h.b16 %v9558
        %v10643 = vunpack.c.l.b16 %v9559
        %v10644 = vunpack.c.l.b16 %v9560
        %v10645 = vunpack.c.h.b16 %v9560
        %v10646 = vunpack.c.l.b16 %v9561
        %v10647 = vunpack.c.h.b16 %v9561
        %v10648 = vunpack.c.l.b16 %v9562
        %v10649 = vunpack.c.h.b16 %v9562
        %v10650 = vunpack.c.l.b16 %v9563
        %v10651 = vunpack.c.l.b16 %v9564
        %v10652 = vunpack.c.h.b16 %v9564
        %v10653 = vunpack.c.l.b16 %v9565
        %v10654 = vunpack.c.h.b16 %v9565
        %v10655 = vunpack.c.l.b16 %v9566
        %v10656 = vunpack.c.h.b16 %v9566
        %v10657 = vunpack.c.l.b16 %v9567
        %v10658 = vunpack.c.l.b16 %v9568
        %v10659 = vunpack.c.h.b16 %v9568
        %v10660 = vunpack.c.l.b16 %v9569
        %v10661 = vunpack.c.h.b16 %v9569
        %v10662 = vunpack.c.l.b16 %v9570
        %v10663 = vunpack.c.h.b16 %v9570
        %v10664 = vunpack.c.l.b16 %v9571
        %v10665 = vunpack.c.l.b16 %v9572
        %v10666 = vunpack.c.h.b16 %v9572
        %v10667 = vunpack.c.l.b16 %v9573
        %v10668 = vunpack.c.h.b16 %v9573
        %v10669 = vunpack.c.l.b16 %v9574
        %v10670 = vunpack.c.h.b16 %v9574
        %v10671 = vunpack.c.l.b16 %v9575
        %v10672 = vunpack.c.l.b16 %v9576
        %v10673 = vunpack.c.h.b16 %v9576
        %v10674 = vunpack.c.l.b16 %v9577
        %v10675 = vunpack.c.h.b16 %v9577
        %v10676 = vunpack.c.l.b16 %v9578
        %v10677 = vunpack.c.h.b16 %v9578
        %v10678 = vunpack.c.l.b16 %v9579
        %v10679 = vunpack.c.l.b16 %v9580
        %v10680 = vunpack.c.h.b16 %v9580
        %v10681 = vunpack.c.l.b16 %v9581
        %v10682 = vunpack.c.h.b16 %v9581
        %v10683 = vunpack.c.l.b16 %v9582
        %v10684 = vunpack.c.h.b16 %v9582
        %v10685 = vunpack.c.l.b16 %v9583
        %v10686 = vunpack.c.l.b16 %v9584
        %v10687 = vunpack.c.h.b16 %v9584
        %v10688 = vunpack.c.l.b16 %v9585
        %v10689 = vunpack.c.h.b16 %v9585
        %v10690 = vunpack.c.l.b16 %v9586
        %v10691 = vunpack.c.h.b16 %v9586
        %v10692 = vunpack.c.l.b16 %v9587
        %v10693 = vunpack.c.l.b16 %v9588
        %v10694 = vunpack.c.h.b16 %v9588
        %v10695 = vunpack.c.l.b16 %v9589
        %v10696 = vunpack.c.h.b16 %v9589
        %v10697 = vunpack.c.l.b16 %v9590
        %v10698 = vunpack.c.h.b16 %v9590
        %v10699 = vunpack.c.l.b16 %v9591
        %v10700 = vunpack.c.l.b16 %v9592
        %v10701 = vunpack.c.h.b16 %v9592
        %v10702 = vunpack.c.l.b16 %v9593
        %v10703 = vunpack.c.h.b16 %v9593
        %v10704 = vunpack.c.l.b16 %v9594
        %v10705 = vunpack.c.h.b16 %v9594
        %v10706 = vunpack.c.l.b16 %v9595
        %v10707 = vunpack.c.l.b16 %v9596
        %v10708 = vunpack.c.h.b16 %v9596
        %v10709 = vunpack.c.l.b16 %v9597
        %v10710 = vunpack.c.h.b16 %v9597
        %v10711 = vunpack.c.l.b16 %v9598
        %v10712 = vunpack.c.h.b16 %v9598
        %v10713 = vunpack.c.l.b16 %v9599
        %v10714 = vunpack.c.l.b16 %v9600
        %v10715 = vunpack.c.h.b16 %v9600
        %v10716 = vunpack.c.l.b16 %v9601
        %v10717 = vunpack.c.h.b16 %v9601
        %v10718 = vunpack.c.l.b16 %v9602
        %v10719 = vunpack.c.h.b16 %v9602
        %v10720 = vunpack.c.l.b16 %v9603
        %v10721 = vunpack.c.l.b16 %v9604
        %v10722 = vunpack.c.h.b16 %v9604
        %v10723 = vunpack.c.l.b16 %v9605
        %v10724 = vunpack.c.h.b16 %v9605
        %v10725 = vunpack.c.l.b16 %v9606
        %v10726 = vunpack.c.h.b16 %v9606
        %v10727 = vunpack.c.l.b16 %v9607
        %v10728 = vunpack.c.l.b16 %v9608
        %v10729 = vunpack.c.h.b16 %v9608
        %v10730 = vunpack.c.l.b16 %v9609
        %v10731 = vunpack.c.h.b16 %v9609
        %v10732 = vunpack.c.l.b16 %v9610
        %v10733 = vunpack.c.h.b16 %v9610
        %v10734 = vunpack.c.l.b16 %v9611
        %v10735 = vunpack.c.l.b16 %v9612
        %v10736 = vunpack.c.h.b16 %v9612
        %v10737 = vunpack.c.l.b16 %v9613
        %v10738 = vunpack.c.h.b16 %v9613
        %v10739 = vunpack.c.l.b16 %v9614
        %v10740 = vunpack.c.h.b16 %v9614
        %v10741 = vunpack.c.l.b16 %v9615
        %v10742 = vunpack.c.l.b16 %v9616
        %v10743 = vunpack.c.h.b16 %v9616
        %v10744 = vunpack.c.l.b16 %v9617
        %v10745 = vunpack.c.h.b16 %v9617
        %v10746 = vunpack.c.l.b16 %v9618
        %v10747 = vunpack.c.h.b16 %v9618
        %v10748 = vunpack.c.l.b16 %v9619
        %v10749 = vunpack.c.l.b16 %v9620
        %v10750 = vunpack.c.h.b16 %v9620
        %v10751 = vunpack.c.l.b16 %v9621
        %v10752 = vunpack.c.h.b16 %v9621
        %v10753 = vunpack.c.l.b16 %v9622
        %v10754 = vunpack.c.h.b16 %v9622
        %v10755 = vunpack.c.l.b16 %v9623
        %v10756 = vunpack.c.l.b16 %v9624
        %v10757 = vunpack.c.h.b16 %v9624
        %v10758 = vunpack.c.l.b16 %v9625
        %v10759 = vunpack.c.h.b16 %v9625
        %v10760 = vunpack.c.l.b16 %v9626
        %v10761 = vunpack.c.h.b16 %v9626
        %v10762 = vunpack.c.l.b16 %v9627
        %v10763 = vunpack.c.l.b16 %v9628
        %v10764 = vunpack.c.h.b16 %v9628
        %v10765 = vunpack.c.l.b16 %v9629
        %v10766 = vunpack.c.h.b16 %v9629
        %v10767 = vunpack.c.l.b16 %v9630
        %v10768 = vunpack.c.h.b16 %v9630
        %v10769 = vunpack.c.l.b16 %v9631
        %v10770 = vunpack.c.l.b16 %v9632
        %v10771 = vunpack.c.h.b16 %v9632
        %v10772 = vunpack.c.l.b16 %v9633
        %v10773 = vunpack.c.h.b16 %v9633
        %v10774 = vunpack.c.l.b16 %v9634
        %v10775 = vunpack.c.h.b16 %v9634
        %v10776 = vunpack.c.l.b16 %v9635
        %v10777 = vunpack.c.l.b16 %v9636
        %v10778 = vunpack.c.h.b16 %v9636
        %v10779 = vunpack.c.l.b16 %v9637
        %v10780 = vunpack.c.h.b16 %v9637
        %v10781 = vunpack.c.l.b16 %v9638
        %v10782 = vunpack.c.h.b16 %v9638
        %v10783 = vunpack.c.l.b16 %v9639
        %v10784 = vunpack.c.l.b16 %v9640
        %v10785 = vunpack.c.h.b16 %v9640
        %v10786 = vunpack.c.l.b16 %v9641
        %v10787 = vunpack.c.h.b16 %v9641
        %v10788 = vunpack.c.l.b16 %v9642
        %v10789 = vunpack.c.h.b16 %v9642
        %v10790 = vunpack.c.l.b16 %v9643
        %v10791 = vunpack.c.l.b16 %v9644
        %v10792 = vunpack.c.h.b16 %v9644
        %v10793 = vunpack.c.l.b16 %v9645
        %v10794 = vunpack.c.h.b16 %v9645
        %v10795 = vunpack.c.l.b16 %v9646
        %v10796 = vunpack.c.h.b16 %v9646
        %v10797 = vunpack.c.l.b16 %v9647
        %v10798 = vunpack.c.l.b16 %v9648
        %v10799 = vunpack.c.h.b16 %v9648
        %v10800 = vunpack.c.l.b16 %v9649
        %v10801 = vunpack.c.h.b16 %v9649
        %v10802 = vunpack.c.l.b16 %v9650
        %v10803 = vunpack.c.h.b16 %v9650
        %v10804 = vunpack.c.l.b16 %v9651
        %v10805 = vunpack.c.l.b16 %v9652
        %v10806 = vunpack.c.h.b16 %v9652
        %v10807 = vunpack.c.l.b16 %v9653
        %v10808 = vunpack.c.h.b16 %v9653
        %v10809 = vunpack.c.l.b16 %v9654
        %v10810 = vunpack.c.h.b16 %v9654
        %v10811 = vunpack.c.l.b16 %v9655
        %v10812 = vunpack.c.l.b16 %v9656
        %v10813 = vunpack.c.h.b16 %v9656
        %v10814 = vunpack.c.l.b16 %v9657
        %v10815 = vunpack.c.h.b16 %v9657
        %v10816 = vunpack.c.l.b16 %v9658
        %v10817 = vunpack.c.h.b16 %v9658
        %v10818 = vunpack.c.l.b16 %v9659
        %v10819 = vunpack.c.l.b16 %v9660
        %v10820 = vunpack.c.h.b16 %v9660
        %v10821 = vunpack.c.l.b16 %v9661
        %v10822 = vunpack.c.h.b16 %v9661
        %v10823 = vunpack.c.l.b16 %v9662
        %v10824 = vunpack.c.h.b16 %v9662
        %v10825 = vunpack.c.l.b16 %v9663
        %v10826 = vunpack.c.l.b16 %v9664
        %v10827 = vunpack.c.h.b16 %v9664
        %v10828 = vunpack.c.l.b16 %v9665
        %v10829 = vunpack.c.h.b16 %v9665
        %v10830 = vunpack.c.l.b16 %v9666
        %v10831 = vunpack.c.h.b16 %v9666
        %v10832 = vunpack.c.l.b16 %v9667
        %v10833 = vunpack.c.l.b16 %v9668
        %v10834 = vunpack.c.h.b16 %v9668
        %v10835 = vunpack.c.l.b16 %v9669
        %v10836 = vunpack.c.h.b16 %v9669
        %v10837 = vunpack.c.l.b16 %v9670
        %v10838 = vunpack.c.h.b16 %v9670
        %v10839 = vunpack.c.l.b16 %v9671
        %v10840 = vunpack.c.l.b16 %v9672
        %v10841 = vunpack.c.h.b16 %v9672
        %v10842 = vunpack.c.l.b16 %v9673
        %v10843 = vunpack.c.h.b16 %v9673
        %v10844 = vunpack.c.l.b16 %v9674
        %v10845 = vunpack.c.h.b16 %v9674
        %v10846 = vunpack.c.l.b16 %v9675
        %v10847 = vunpack.c.l.b16 %v9676
        %v10848 = vunpack.c.h.b16 %v9676
        %v10849 = vunpack.c.l.b16 %v9677
        %v10850 = vunpack.c.h.b16 %v9677
        %v10851 = vunpack.c.l.b16 %v9678
        %v10852 = vunpack.c.h.b16 %v9678
        %v10853 = vunpack.c.l.b16 %v9679
        %v10854 = vunpack.c.l.b16 %v9680
        %v10855 = vunpack.c.h.b16 %v9680
        %v10856 = vunpack.c.l.b16 %v9681
        %v10857 = vunpack.c.h.b16 %v9681
        %v10858 = vunpack.c.l.b16 %v9682
        %v10859 = vunpack.c.h.b16 %v9682
        %v10860 = vunpack.c.l.b16 %v9683
        %v10861 = vunpack.c.l.b16 %v9684
        %v10862 = vunpack.c.h.b16 %v9684
        %v10863 = vunpack.c.l.b16 %v9685
        %v10864 = vunpack.c.h.b16 %v9685
        %v10865 = vunpack.c.l.b16 %v9686
        %v10866 = vunpack.c.h.b16 %v9686
        %v10867 = vunpack.c.l.b16 %v9687
        %v10868 = vunpack.c.l.b16 %v9688
        %v10869 = vunpack.c.h.b16 %v9688
        %v10870 = vunpack.c.l.b16 %v9689
        %v10871 = vunpack.c.h.b16 %v9689
        %v10872 = vunpack.c.l.b16 %v9690
        %v10873 = vunpack.c.h.b16 %v9690
        %v10874 = vunpack.c.l.b16 %v9691
        %v10875 = vunpack.c.l.b16 %v9692
        %v10876 = vunpack.c.h.b16 %v9692
        %v10877 = vunpack.c.l.b16 %v9693
        %v10878 = vunpack.c.h.b16 %v9693
        %v10879 = vunpack.c.l.b16 %v9694
        %v10880 = vunpack.c.h.b16 %v9694
        %v10881 = vunpack.c.l.b16 %v9695
        %v10882 = vunpack.c.l.b16 %v9696
        %v10883 = vunpack.c.h.b16 %v9696
        %v10884 = vunpack.c.l.b16 %v9697
        %v10885 = vunpack.c.h.b16 %v9697
        %v10886 = vunpack.c.l.b16 %v9698
        %v10887 = vunpack.c.h.b16 %v9698
        %v10888 = vunpack.c.l.b16 %v9699
        %v10889 = vunpack.c.l.b16 %v9700
        %v10890 = vunpack.c.h.b16 %v9700
        %v10891 = vunpack.c.l.b16 %v9701
        %v10892 = vunpack.c.h.b16 %v9701
        %v10893 = vunpack.c.l.b16 %v9702
        %v10894 = vunpack.c.h.b16 %v9702
        %v10895 = vunpack.c.l.b16 %v9703
        %v10896 = vunpack.c.l.b16 %v9704
        %v10897 = vunpack.c.h.b16 %v9704
        %v10898 = vunpack.c.l.b16 %v9705
        %v10899 = vunpack.c.h.b16 %v9705
        %v10900 = vunpack.c.l.b16 %v9706
        %v10901 = vunpack.c.h.b16 %v9706
        %v10902 = vunpack.c.l.b16 %v9707
        %v10903 = vunpack.c.l.b16 %v9708
        %v10904 = vunpack.c.h.b16 %v9708
        %v10905 = vunpack.c.l.b16 %v9709
        %v10906 = vunpack.c.h.b16 %v9709
        %v10907 = vunpack.c.l.b16 %v9710
        %v10908 = vunpack.c.h.b16 %v9710
        %v10909 = vunpack.c.l.b16 %v9711
        %v10910 = vunpack.c.l.b16 %v9712
        %v10911 = vunpack.c.h.b16 %v9712
        %v10912 = vunpack.c.l.b16 %v9713
        %v10913 = vunpack.c.h.b16 %v9713
        %v10914 = vunpack.c.l.b16 %v9714
        %v10915 = vunpack.c.h.b16 %v9714
        %v10916 = vunpack.c.l.b16 %v9715
        %v10917 = vunpack.c.l.b16 %v9716
        %v10918 = vunpack.c.h.b16 %v9716
        %v10919 = vunpack.c.l.b16 %v9717
        %v10920 = vunpack.c.h.b16 %v9717
        %v10921 = vunpack.c.l.b16 %v9718
        %v10922 = vunpack.c.h.b16 %v9718
        %v10923 = vunpack.c.l.b16 %v9719
        %v10924 = vunpack.c.l.b16 %v9720
        %v10925 = vunpack.c.h.b16 %v9720
        %v10926 = vunpack.c.l.b16 %v9721
        %v10927 = vunpack.c.h.b16 %v9721
        %v10928 = vunpack.c.l.b16 %v9722
        %v10929 = vunpack.c.h.b16 %v9722
        %v10930 = vunpack.c.l.b16 %v9723
        %v10931 = vunpack.c.l.b16 %v9724
        %v10932 = vunpack.c.h.b16 %v9724
        %v10933 = vunpack.c.l.b16 %v9725
        %v10934 = vunpack.c.h.b16 %v9725
        %v10935 = vunpack.c.l.b16 %v9726
        %v10936 = vunpack.c.h.b16 %v9726
        %v10937 = vunpack.c.l.b16 %v9727
        %v10938 = vunpack.c.l.b16 %v9728
        %v10939 = vunpack.c.h.b16 %v9728
        %v10940 = vunpack.c.l.b16 %v9729
        %v10941 = vunpack.c.h.b16 %v9729
        %v10942 = vunpack.c.l.b16 %v9730
        %v10943 = vunpack.c.h.b16 %v9730
        %v10944 = vunpack.c.l.b16 %v9731
        %v10945 = vunpack.c.l.b16 %v9732
        %v10946 = vunpack.c.h.b16 %v9732
        %v10947 = vunpack.c.l.b16 %v9733
        %v10948 = vunpack.c.h.b16 %v9733
        %v10949 = vunpack.c.l.b16 %v9734
        %v10950 = vunpack.c.h.b16 %v9734
        %v10951 = vunpack.c.l.b16 %v9735
        %v10952 = vunpack.c.l.b16 %v9736
        %v10953 = vunpack.c.h.b16 %v9736
        %v10954 = vunpack.c.l.b16 %v9737
        %v10955 = vunpack.c.h.b16 %v9737
        %v10956 = vunpack.c.l.b16 %v9738
        %v10957 = vunpack.c.h.b16 %v9738
        %v10958 = vunpack.c.l.b16 %v9739
        %v10959 = vunpack.c.l.b16 %v9740
        %v10960 = vunpack.c.h.b16 %v9740
        %v10961 = vunpack.c.l.b16 %v9741
        %v10962 = vunpack.c.h.b16 %v9741
        %v10963 = vunpack.c.l.b16 %v9742
        %v10964 = vunpack.c.h.b16 %v9742
        %v10965 = vunpack.c.l.b16 %v9743
        %v10966 = vunpack.c.l.b16 %v9744
        %v10967 = vunpack.c.h.b16 %v9744
        %v10968 = vunpack.c.l.b16 %v9745
        %v10969 = vunpack.c.h.b16 %v9745
        %v10970 = vunpack.c.l.b16 %v9746
        %v10971 = vunpack.c.h.b16 %v9746
        %v10972 = vunpack.c.l.b16 %v9747
        %v10973 = vunpack.c.l.b16 %v9748
        %v10974 = vunpack.c.h.b16 %v9748
        %v10975 = vunpack.c.l.b16 %v9749
        %v10976 = vunpack.c.h.b16 %v9749
        %v10977 = vunpack.c.l.b16 %v9750
        %v10978 = vunpack.c.h.b16 %v9750
        %v10979 = vunpack.c.l.b16 %v9751
        %v10980 = vunpack.c.l.b16 %v9752
        %v10981 = vunpack.c.h.b16 %v9752
        %v10982 = vunpack.c.l.b16 %v9753
        %v10983 = vunpack.c.h.b16 %v9753
        %v10984 = vunpack.c.l.b16 %v9754
        %v10985 = vunpack.c.h.b16 %v9754
        %v10986 = vunpack.c.l.b16 %v9755
        %v10987 = vunpack.c.l.b16 %v9756
        %v10988 = vunpack.c.h.b16 %v9756
        %v10989 = vunpack.c.l.b16 %v9757
        %v10990 = vunpack.c.h.b16 %v9757
        %v10991 = vunpack.c.l.b16 %v9758
        %v10992 = vunpack.c.h.b16 %v9758
        %v10993 = vunpack.c.l.b16 %v9759
        %v10994 = vunpack.c.l.b16 %v9760
        %v10995 = vunpack.c.h.b16 %v9760
        %v10996 = vunpack.c.l.b16 %v9761
        %v10997 = vunpack.c.h.b16 %v9761
        %v10998 = vunpack.c.l.b16 %v9762
        %v10999 = vunpack.c.h.b16 %v9762
        %v11000 = vunpack.c.l.b16 %v9763
        %v11001 = vunpack.c.l.b16 %v9764
        %v11002 = vunpack.c.h.b16 %v9764
        %v11003 = vunpack.c.l.b16 %v9765
        %v11004 = vunpack.c.h.b16 %v9765
        %v11005 = vunpack.c.l.b16 %v9766
        %v11006 = vunpack.c.h.b16 %v9766
        %v11007 = vunpack.c.l.b16 %v9767
        %v11008 = vunpack.c.l.b16 %v9768
        %v11009 = vunpack.c.h.b16 %v9768
        %v11010 = vunpack.c.l.b16 %v9769
        %v11011 = vunpack.c.h.b16 %v9769
        %v11012 = vunpack.c.l.b16 %v9770
        %v11013 = vunpack.c.h.b16 %v9770
        %v11014 = vunpack.c.l.b16 %v9771
        %v11015 = vunpack.c.l.b16 %v9772
        %v11016 = vunpack.c.h.b16 %v9772
        %v11017 = vunpack.c.l.b16 %v9773
        %v11018 = vunpack.c.h.b16 %v9773
        %v11019 = vunpack.c.l.b16 %v9774
        %v11020 = vunpack.c.h.b16 %v9774
        %v11021 = vunpack.c.l.b16 %v9775
        %v11022 = vunpack.c.l.b16 %v9776
        %v11023 = vunpack.c.h.b16 %v9776
        %v11024 = vunpack.c.l.b16 %v9777
        %v11025 = vunpack.c.h.b16 %v9777
        %v11026 = vunpack.c.l.b16 %v9778
        %v11027 = vunpack.c.h.b16 %v9778
        %v11028 = vunpack.c.l.b16 %v9779
        %v11029 = vunpack.c.l.b16 %v9780
        %v11030 = vunpack.c.h.b16 %v9780
        %v11031 = vunpack.c.l.b16 %v9781
        %v11032 = vunpack.c.h.b16 %v9781
        %v11033 = vunpack.c.l.b16 %v9782
        %v11034 = vunpack.c.h.b16 %v9782
        %v11035 = vunpack.c.l.b16 %v9783
        %v11036 = vunpack.c.l.b16 %v9784
        %v11037 = vunpack.c.h.b16 %v9784
        %v11038 = vunpack.c.l.b16 %v9785
        %v11039 = vunpack.c.h.b16 %v9785
        %v11040 = vunpack.c.l.b16 %v9786
        %v11041 = vunpack.c.h.b16 %v9786
        %v11042 = vunpack.c.l.b16 %v9787
        %v11043 = vunpack.c.l.b16 %v9788
        %v11044 = vunpack.c.h.b16 %v9788
        %v11045 = vunpack.c.l.b16 %v9789
        %v11046 = vunpack.c.h.b16 %v9789
        %v11047 = vunpack.c.l.b16 %v9790
        %v11048 = vunpack.c.h.b16 %v9790
        %v11049 = vunpack.c.l.b16 %v9791
        %v11050 = vunpack.c.l.b16 %v9792
        %v11051 = vunpack.c.h.b16 %v9792
        %v11052 = vunpack.c.l.b16 %v9793
        %v11053 = vunpack.c.h.b16 %v9793
        %v11054 = vunpack.c.l.b16 %v9794
        %v11055 = vunpack.c.h.b16 %v9794
        %v11056 = vunpack.c.l.b16 %v9795
        %v11057 = vunpack.c.l.b16 %v9796
        %v11058 = vunpack.c.h.b16 %v9796
        %v11059 = vunpack.c.l.b16 %v9797
        %v11060 = vunpack.c.h.b16 %v9797
        %v11061 = vunpack.c.l.b16 %v9798
        %v11062 = vunpack.c.h.b16 %v9798
        %v11063 = vunpack.c.l.b16 %v9799
        %v11064 = vunpack.c.l.b16 %v9800
        %v11065 = vunpack.c.h.b16 %v9800
        %v11066 = vunpack.c.l.b16 %v9801
        %v11067 = vunpack.c.h.b16 %v9801
        %v11068 = vunpack.c.l.b16 %v9802
        %v11069 = vunpack.c.h.b16 %v9802
        %v11070 = vunpack.c.l.b16 %v9803
        %v11071 = vunpack.c.l.b16 %v9804
        %v11072 = vunpack.c.h.b16 %v9804
        %v11073 = vunpack.c.l.b16 %v9805
        %v11074 = vunpack.c.h.b16 %v9805
        %v11075 = vunpack.c.l.b16 %v9806
        %v11076 = vunpack.c.h.b16 %v9806
        %v11077 = vunpack.c.l.b16 %v9807
        %v11078 = vunpack.c.l.b16 %v9808
        %v11079 = vunpack.c.h.b16 %v9808
        %v11080 = vunpack.c.l.b16 %v9809
        %v11081 = vunpack.c.h.b16 %v9809
        %v11082 = vunpack.c.l.b16 %v9810
        %v11083 = vunpack.c.h.b16 %v9810
        %v11084 = vunpack.c.l.b16 %v9811
        %v11085 = vunpack.c.l.b16 %v9812
        %v11086 = vunpack.c.h.b16 %v9812
        %v11087 = vunpack.c.l.b16 %v9813
        %v11088 = vunpack.c.h.b16 %v9813
        %v11089 = vunpack.c.l.b16 %v9814
        %v11090 = vunpack.c.h.b16 %v9814
        %v11091 = vunpack.c.l.b16 %v9815
        %v11092 = vunpack.c.l.b16 %v9816
        %v11093 = vunpack.c.h.b16 %v9816
        %v11094 = vunpack.c.l.b16 %v9817
        %v11095 = vunpack.c.h.b16 %v9817
        %v11096 = vunpack.c.l.b16 %v9818
        %v11097 = vunpack.c.h.b16 %v9818
        %v11098 = vunpack.c.l.b16 %v9819
        %v11099 = vunpack.c.l.b16 %v9820
        %v11100 = vunpack.c.h.b16 %v9820
        %v11101 = vunpack.c.l.b16 %v9821
        %v11102 = vunpack.c.h.b16 %v9821
        %v11103 = vunpack.c.l.b16 %v9822
        %v11104 = vunpack.c.h.b16 %v9822
        %v11105 = vunpack.c.l.b16 %v9823
        %v11106 = vunpack.c.l.b16 %v9824
        %v11107 = vunpack.c.h.b16 %v9824
        %v11108 = vunpack.c.l.b16 %v9825
        %v11109 = vunpack.c.h.b16 %v9825
        %v11110 = vunpack.c.l.b16 %v9826
        %v11111 = vunpack.c.h.b16 %v9826
        %v11112 = vunpack.c.l.b16 %v9827
        %v11113 = vunpack.c.l.b16 %v9828
        %v11114 = vunpack.c.h.b16 %v9828
        %v11115 = vunpack.c.l.b16 %v9829
        %v11116 = vunpack.c.h.b16 %v9829
        %v11117 = vunpack.c.l.b16 %v9830
        %v11118 = vunpack.c.h.b16 %v9830
        %v11119 = vunpack.c.l.b16 %v9831
        %v11120 = vunpack.c.l.b16 %v9832
        %v11121 = vunpack.c.h.b16 %v9832
        %v11122 = vunpack.c.l.b16 %v9833
        %v11123 = vunpack.c.h.b16 %v9833
        %v11124 = vunpack.c.l.b16 %v9834
        %v11125 = vunpack.c.h.b16 %v9834
        %v11126 = vunpack.c.l.b16 %v9835
        %v11127 = vunpack.c.l.b16 %v9836
        %v11128 = vunpack.c.h.b16 %v9836
        %v11129 = vunpack.c.l.b16 %v9837
        %v11130 = vunpack.c.h.b16 %v9837
        %v11131 = vunpack.c.l.b16 %v9838
        %v11132 = vunpack.c.h.b16 %v9838
        %v11133 = vunpack.c.l.b16 %v9839
        %v11134 = vunpack.c.l.b16 %v9840
        %v11135 = vunpack.c.h.b16 %v9840
        %v11136 = vunpack.c.l.b16 %v9841
        %v11137 = vunpack.c.h.b16 %v9841
        %v11138 = vunpack.c.l.b16 %v9842
        %v11139 = vunpack.c.h.b16 %v9842
        %v11140 = vunpack.c.l.b16 %v9843
        %v11141 = vunpack.c.l.b16 %v9844
        %v11142 = vunpack.c.h.b16 %v9844
        %v11143 = vunpack.c.l.b16 %v9845
        %v11144 = vunpack.c.h.b16 %v9845
        %v11145 = vunpack.c.l.b16 %v9846
        %v11146 = vunpack.c.h.b16 %v9846
        %v11147 = vunpack.c.l.b16 %v9847
        %v11148 = vunpack.c.l.b16 %v9848
        %v11149 = vunpack.c.h.b16 %v9848
        %v11150 = vunpack.c.l.b16 %v9849
        %v11151 = vunpack.c.h.b16 %v9849
        %v11152 = vunpack.c.l.b16 %v9850
        %v11153 = vunpack.c.h.b16 %v9850
        %v11154 = vunpack.c.l.b16 %v9851
        %v11155 = vunpack.c.l.b16 %v9852
        %v11156 = vunpack.c.h.b16 %v9852
        %v11157 = vunpack.c.l.b16 %v9853
        %v11158 = vunpack.c.h.b16 %v9853
        %v11159 = vunpack.c.l.b16 %v9854
        %v11160 = vunpack.c.h.b16 %v9854
        %v11161 = vunpack.c.l.b16 %v9855
        %v11162 = vunpack.c.l.b16 %v9856
        %v11163 = vunpack.c.h.b16 %v9856
        %v11164 = vunpack.c.l.b16 %v9857
        %v11165 = vunpack.c.h.b16 %v9857
        %v11166 = vunpack.c.l.b16 %v9858
        %v11167 = vunpack.c.h.b16 %v9858
        %v11168 = vunpack.c.l.b16 %v9859
        %v11169 = vunpack.c.l.b16 %v9860
        %v11170 = vunpack.c.h.b16 %v9860
        %v11171 = vunpack.c.l.b16 %v9861
        %v11172 = vunpack.c.h.b16 %v9861
        %v11173 = vunpack.c.l.b16 %v9862
        %v11174 = vunpack.c.h.b16 %v9862
        %v11175 = vunpack.c.l.b16 %v9863
        %v11176 = vunpack.c.l.b16 %v9864
        %v11177 = vunpack.c.h.b16 %v9864
        %v11178 = vunpack.c.l.b16 %v9865
        %v11179 = vunpack.c.h.b16 %v9865
        %v11180 = vunpack.c.l.b16 %v9866
        %v11181 = vunpack.c.h.b16 %v9866
        %v11182 = vunpack.c.l.b16 %v9867
        %v11183 = vunpack.c.l.b16 %v9868
        %v11184 = vunpack.c.h.b16 %v9868
        %v11185 = vunpack.c.l.b16 %v9869
        %v11186 = vunpack.c.h.b16 %v9869
        %v11187 = vunpack.c.l.b16 %v9870
        %v11188 = vunpack.c.h.b16 %v9870
        %v11189 = vunpack.c.l.b16 %v9871
        %v11190 = vunpack.c.l.b16 %v9872
        %v11191 = vunpack.c.h.b16 %v9872
        %v11192 = vunpack.c.l.b16 %v9873
        %v11193 = vunpack.c.h.b16 %v9873
        %v11194 = vunpack.c.l.b16 %v9874
        %v11195 = vunpack.c.h.b16 %v9874
        %v11196 = vunpack.c.l.b16 %v9875
        %v11197 = vunpack.c.l.b16 %v9876
        %v11198 = vunpack.c.h.b16 %v9876
        %v11199 = vunpack.c.l.b16 %v9877
        %v11200 = vunpack.c.h.b16 %v9877
        %v11201 = vunpack.c.l.b16 %v9878
        %v11202 = vunpack.c.h.b16 %v9878
        %v11203 = vunpack.c.l.b16 %v9879
        %v11204 = vunpack.c.l.b16 %v9880
        %v11205 = vunpack.c.h.b16 %v9880
        %v11206 = vunpack.c.l.b16 %v9881
        %v11207 = vunpack.c.h.b16 %v9881
        %v11208 = vunpack.c.l.b16 %v9882
        %v11209 = vunpack.c.h.b16 %v9882
        %v11210 = vunpack.c.l.b16 %v9883
        %v11211 = vunpack.c.l.b16 %v9884
        %v11212 = vunpack.c.h.b16 %v9884
        %v11213 = vunpack.c.l.b16 %v9885
        %v11214 = vunpack.c.h.b16 %v9885
        %v11215 = vunpack.c.l.b16 %v9886
        %v11216 = vunpack.c.h.b16 %v9886
        %v11217 = vunpack.c.l.b16 %v9887
        %v11218 = vunpack.c.l.b16 %v9888
        %v11219 = vunpack.c.h.b16 %v9888
        %v11220 = vunpack.c.l.b16 %v9889
        %v11221 = vunpack.c.h.b16 %v9889
        %v11222 = vunpack.c.l.b16 %v9890
        %v11223 = vunpack.c.h.b16 %v9890
        %v11224 = vunpack.c.l.b16 %v9891
        %v11225 = vunpack.c.l.b16 %v9892
        %v11226 = vunpack.c.h.b16 %v9892
        %v11227 = vunpack.c.l.b16 %v9893
        %v11228 = vunpack.c.h.b16 %v9893
        %v11229 = vunpack.c.l.b16 %v9894
        %v11230 = vunpack.c.h.b16 %v9894
        %v11231 = vunpack.c.l.b16 %v9895
        %v11232 = vunpack.c.l.b16 %v9896
        %v11233 = vunpack.c.h.b16 %v9896
        %v11234 = vunpack.c.l.b16 %v9897
        %v11235 = vunpack.c.h.b16 %v9897
        %v11236 = vunpack.c.l.b16 %v9898
        %v11237 = vunpack.c.h.b16 %v9898
        %v11238 = vunpack.c.l.b16 %v9899
        %v11239 = vunpack.c.l.b16 %v9900
        %v11240 = vunpack.c.h.b16 %v9900
        %v11241 = vunpack.c.l.b16 %v9901
        %v11242 = vunpack.c.h.b16 %v9901
        %v11243 = vunpack.c.l.b16 %v9902
        %v11244 = vunpack.c.h.b16 %v9902
        %v11245 = vunpack.c.l.b16 %v9903
        %v11246 = vunpack.c.l.b16 %v9904
        %v11247 = vunpack.c.h.b16 %v9904
        %v11248 = vunpack.c.l.b16 %v9905
        %v11249 = vunpack.c.h.b16 %v9905
        %v11250 = vunpack.c.l.b16 %v9906
        %v11251 = vunpack.c.h.b16 %v9906
        %v11252 = vunpack.c.l.b16 %v9907
        %v11253 = vunpack.c.l.b16 %v9908
        %v11254 = vunpack.c.h.b16 %v9908
        %v11255 = vunpack.c.l.b16 %v9909
        %v11256 = vunpack.c.h.b16 %v9909
        %v11257 = vunpack.c.l.b16 %v9910
        %v11258 = vunpack.c.h.b16 %v9910
        %v11259 = vunpack.c.l.b16 %v9911
        %v11260 = vunpack.c.l.b16 %v9912
        %v11261 = vunpack.c.h.b16 %v9912
        %v11262 = vunpack.c.l.b16 %v9913
        %v11263 = vunpack.c.h.b16 %v9913
        %v11264 = vunpack.c.l.b16 %v9914
        %v11265 = vunpack.c.h.b16 %v9914
        %v11266 = vunpack.c.l.b16 %v9915
        %v11267 = vunpack.c.l.b16 %v9916
        %v11268 = vunpack.c.h.b16 %v9916
        %v11269 = vunpack.c.l.b16 %v9917
        %v11270 = vunpack.c.h.b16 %v9917
        %v11271 = vunpack.c.l.b16 %v9918
        %v11272 = vunpack.c.h.b16 %v9918
        %v11273 = vunpack.c.l.b16 %v9919
        %v11274 = vunpack.c.l.b16 %v9920
        %v11275 = vunpack.c.h.b16 %v9920
        %v11276 = vunpack.c.l.b16 %v9921
        %v11277 = vunpack.c.h.b16 %v9921
        %v11278 = vunpack.c.l.b16 %v9922
        %v11279 = vunpack.c.h.b16 %v9922
        %v11280 = vunpack.c.l.b16 %v9923
        %v11281 = vunpack.c.l.b16 %v9924
        %v11282 = vunpack.c.h.b16 %v9924
        %v11283 = vunpack.c.l.b16 %v9925
        %v11284 = vunpack.c.h.b16 %v9925
        %v11285 = vunpack.c.l.b16 %v9926
        %v11286 = vunpack.c.h.b16 %v9926
        %v11287 = vunpack.c.l.b16 %v9927
        %v11288 = vunpack.c.l.b16 %v9928
        %v11289 = vunpack.c.h.b16 %v9928
        %v11290 = vunpack.c.l.b16 %v9929
        %v11291 = vunpack.c.h.b16 %v9929
        %v11292 = vunpack.c.l.b16 %v9930
        %v11293 = vunpack.c.h.b16 %v9930
        %v11294 = vunpack.c.l.b16 %v9931
        %v11295 = vunpack.c.l.b16 %v9932
        %v11296 = vunpack.c.h.b16 %v9932
        %v11297 = vunpack.c.l.b16 %v9933
        %v11298 = vunpack.c.h.b16 %v9933
        %v11299 = vunpack.c.l.b16 %v9934
        %v11300 = vunpack.c.h.b16 %v9934
        %v11301 = vunpack.c.l.b16 %v9935
        %v11302 = vunpack.c.l.b16 %v9936
        %v11303 = vunpack.c.h.b16 %v9936
        %v11304 = vunpack.c.l.b16 %v9937
        %v11305 = vunpack.c.h.b16 %v9937
        %v11306 = vunpack.c.l.b16 %v9938
        %v11307 = vunpack.c.h.b16 %v9938
        %v11308 = vunpack.c.l.b16 %v9939
        %v11309 = vunpack.c.l.b16 %v9940
        %v11310 = vunpack.c.h.b16 %v9940
        %v11311 = vunpack.c.l.b16 %v9941
        %v11312 = vunpack.c.h.b16 %v9941
        %v11313 = vunpack.c.l.b16 %v9942
        %v11314 = vunpack.c.h.b16 %v9942
        %v11315 = vunpack.c.l.b16 %v9943
        %v11316 = vunpack.c.l.b16 %v9944
        %v11317 = vunpack.c.h.b16 %v9944
        %v11318 = vunpack.c.l.b16 %v9945
        %v11319 = vunpack.c.h.b16 %v9945
        %v11320 = vunpack.c.l.b16 %v9946
        %v11321 = vunpack.c.h.b16 %v9946
        %v11322 = vunpack.c.l.b16 %v9947
        %v11323 = vunpack.c.l.b16 %v9948
        %v11324 = vunpack.c.h.b16 %v9948
        %v11325 = vunpack.c.l.b16 %v9949
        %v11326 = vunpack.c.h.b16 %v9949
        %v11327 = vunpack.c.l.b16 %v9950
        %v11328 = vunpack.c.h.b16 %v9950
        %v11329 = vunpack.c.l.b16 %v9951
        %v11330 = vunpack.c.l.b16 %v9952
        %v11331 = vunpack.c.h.b16 %v9952
        %v11332 = vunpack.c.l.b16 %v9953
        %v11333 = vunpack.c.h.b16 %v9953
        %v11334 = vunpack.c.l.b16 %v9954
        %v11335 = vunpack.c.h.b16 %v9954
        %v11336 = vunpack.c.l.b16 %v9955
        %v11337 = vunpack.c.l.b16 %v9956
        %v11338 = vunpack.c.h.b16 %v9956
        %v11339 = vunpack.c.l.b16 %v9957
        %v11340 = vunpack.c.h.b16 %v9957
        %v11341 = vunpack.c.l.b16 %v9958
        %v11342 = vunpack.c.h.b16 %v9958
        %v11343 = vunpack.c.l.b16 %v9959
        %v11344 = vunpack.c.l.b16 %v9960
        %v11345 = vunpack.c.h.b16 %v9960
        %v11346 = vunpack.c.l.b16 %v9961
        %v11347 = vunpack.c.h.b16 %v9961
        %v11348 = vunpack.c.l.b16 %v9962
        %v11349 = vunpack.c.h.b16 %v9962
        %v11350 = vunpack.c.l.b16 %v9963
        %v11351 = vunpack.c.l.b16 %v9964
        %v11352 = vunpack.c.h.b16 %v9964
        %v11353 = vunpack.c.l.b16 %v9965
        %v11354 = vunpack.c.h.b16 %v9965
        %v11355 = vunpack.c.l.b16 %v9966
        %v11356 = vunpack.c.h.b16 %v9966
        %v11357 = vunpack.c.l.b16 %v9967
        %v11358 = vunpack.c.l.b16 %v9968
        %v11359 = vunpack.c.h.b16 %v9968
        %v11360 = vunpack.c.l.b16 %v9969
        %v11361 = vunpack.c.h.b16 %v9969
        %v11362 = vunpack.c.l.b16 %v9970
        %v11363 = vunpack.c.h.b16 %v9970
        %v11364 = vunpack.c.l.b16 %v9971
        %v11365 = vunpack.c.l.b16 %v9972
        %v11366 = vunpack.c.h.b16 %v9972
        %v11367 = vunpack.c.l.b16 %v9973
        %v11368 = vunpack.c.h.b16 %v9973
        %v11369 = vunpack.c.l.b16 %v9974
        %v11370 = vunpack.c.h.b16 %v9974
        %v11371 = vunpack.c.l.b16 %v9975
        %v11372 = vunpack.c.l.b16 %v9976
        %v11373 = vunpack.c.h.b16 %v9976
        %v11374 = vunpack.c.l.b16 %v9977
        %v11375 = vunpack.c.h.b16 %v9977
        %v11376 = vunpack.c.l.b16 %v9978
        %v11377 = vunpack.c.h.b16 %v9978
        %v11378 = vunpack.c.l.b16 %v9979
        %v11379 = vunpack.c.l.b16 %v9980
        %v11380 = vunpack.c.h.b16 %v9980
        %v11381 = vunpack.c.l.b16 %v9981
        %v11382 = vunpack.c.h.b16 %v9981
        %v11383 = vunpack.c.l.b16 %v9982
        %v11384 = vunpack.c.h.b16 %v9982
        %v11385 = vunpack.c.l.b16 %v9983
        %v11386 = vunpack.c.l.b16 %v9984
        %v11387 = vunpack.c.h.b16 %v9984
        %v11388 = vunpack.c.l.b16 %v9985
        %v11389 = vunpack.c.h.b16 %v9985
        %v11390 = vunpack.c.l.b16 %v9986
        %v11391 = vunpack.c.h.b16 %v9986
        %v11392 = vunpack.c.l.b16 %v9987
        %v11393 = vunpack.c.l.b16 %v9988
        %v11394 = vunpack.c.h.b16 %v9988
        %v11395 = vunpack.c.l.b16 %v9989
        %v11396 = vunpack.c.h.b16 %v9989
        %v11397 = vunpack.c.l.b16 %v9990
        %v11398 = vunpack.c.h.b16 %v9990
        %v11399 = vunpack.c.l.b16 %v9991
        %v11400 = vunpack.c.l.b16 %v9992
        %v11401 = vunpack.c.h.b16 %v9992
        %v11402 = vunpack.c.l.b16 %v9993
        %v11403 = vunpack.c.h.b16 %v9993
        %v11404 = vunpack.c.l.b16 %v9994
        %v11405 = vunpack.c.h.b16 %v9994
        %v11406 = vunpack.c.l.b16 %v9995
        %v11407 = vunpack.c.l.b16 %v9996
        %v11408 = vunpack.c.h.b16 %v9996
        %v11409 = vunpack.c.l.b16 %v9997
        %v11410 = vunpack.c.h.b16 %v9997
        %v11411 = vunpack.c.l.b16 %v9998
        %v11412 = vunpack.c.h.b16 %v9998
        %v11413 = vunpack.c.l.b16 %v9999
        %v11414 = vunpack.c.l.b16 %v10000
        %v11415 = vunpack.c.h.b16 %v10000
        %v11416 = vunpack.c.l.b16 %v10001
        %v11417 = vunpack.c.h.b16 %v10001
        %v11418 = vunpack.c.l.b16 %v10002
        %v11419 = vunpack.c.h.b16 %v10002
        %v11420 = vunpack.c.l.b16 %v10003
        %v11421 = vunpack.c.l.b16 %v10004
        %v11422 = vunpack.c.h.b16 %v10004
        %v11423 = vunpack.c.l.b16 %v10005
        %v11424 = vunpack.c.h.b16 %v10005
        %v11425 = vunpack.c.l.b16 %v10006
        %v11426 = vunpack.c.h.b16 %v10006
        %v11427 = vunpack.c.l.b16 %v10007
        %v11428 = vunpack.c.l.b16 %v10008
        %v11429 = vunpack.c.h.b16 %v10008
        %v11430 = vunpack.c.l.b16 %v10009
        %v11431 = vunpack.c.h.b16 %v10009
        %v11432 = vunpack.c.l.b16 %v10010
        %v11433 = vunpack.c.h.b16 %v10010
        %v11434 = vunpack.c.l.b16 %v10011
        %v11435 = vunpack.c.l.b16 %v10012
        %v11436 = vunpack.c.h.b16 %v10012
        %v11437 = vunpack.c.l.b16 %v10013
        %v11438 = vunpack.c.h.b16 %v10013
        %v11439 = vunpack.c.l.b16 %v10014
        %v11440 = vunpack.c.h.b16 %v10014
        %v11441 = vunpack.c.l.b16 %v10015
        %v11442 = vunpack.c.l.b16 %v10016
        %v11443 = vunpack.c.h.b16 %v10016
        %v11444 = vunpack.c.l.b16 %v10017
        %v11445 = vunpack.c.h.b16 %v10017
        %v11446 = vunpack.c.l.b16 %v10018
        %v11447 = vunpack.c.h.b16 %v10018
        %v11448 = vunpack.c.l.b16 %v10019
        %v11449 = vunpack.c.l.b16 %v10020
        %v11450 = vunpack.c.h.b16 %v10020
        %v11451 = vunpack.c.l.b16 %v10021
        %v11452 = vunpack.c.h.b16 %v10021
        %v11453 = vunpack.c.l.b16 %v10022
        %v11454 = vunpack.c.h.b16 %v10022
        %v11455 = vunpack.c.l.b16 %v10023
        %v11456 = vunpack.c.l.b16 %v10024
        %v11457 = vunpack.c.h.b16 %v10024
        %v11458 = vunpack.c.l.b16 %v10025
        %v11459 = vunpack.c.h.b16 %v10025
        %v11460 = vunpack.c.l.b16 %v10026
        %v11461 = vunpack.c.h.b16 %v10026
        %v11462 = vunpack.c.l.b16 %v10027
        %v11463 = vunpack.c.l.b16 %v10028
        %v11464 = vunpack.c.h.b16 %v10028
        %v11465 = vunpack.c.l.b16 %v10029
        %v11466 = vunpack.c.h.b16 %v10029
        %v11467 = vunpack.c.l.b16 %v10030
        %v11468 = vunpack.c.h.b16 %v10030
        %v11469 = vunpack.c.l.b16 %v10031
        %v11470 = vunpack.c.l.b16 %v10032
        %v11471 = vunpack.c.h.b16 %v10032
        %v11472 = vunpack.c.l.b16 %v10033
        %v11473 = vunpack.c.h.b16 %v10033
        %v11474 = vunpack.c.l.b16 %v10034
        %v11475 = vunpack.c.h.b16 %v10034
        %v11476 = vunpack.c.l.b16 %v10035
        %v11477 = vunpack.c.l.b16 %v10036
        %v11478 = vunpack.c.h.b16 %v10036
        %v11479 = vunpack.c.l.b16 %v10037
        %v11480 = vunpack.c.h.b16 %v10037
        %v11481 = vunpack.c.l.b16 %v10038
        %v11482 = vunpack.c.h.b16 %v10038
        %v11483 = vunpack.c.l.b16 %v10039
        %v11484 = vunpack.c.l.b16 %v10040
        %v11485 = vunpack.c.h.b16 %v10040
        %v11486 = vunpack.c.l.b16 %v10041
        %v11487 = vunpack.c.h.b16 %v10041
        %v11488 = vunpack.c.l.b16 %v10042
        %v11489 = vunpack.c.h.b16 %v10042
        %v11490 = vunpack.c.l.b16 %v10043
        %v11491 = vunpack.c.l.b16 %v10044
        %v11492 = vunpack.c.h.b16 %v10044
        %v11493 = vunpack.c.l.b16 %v10045
        %v11494 = vunpack.c.h.b16 %v10045
        %v11495 = vunpack.c.l.b16 %v10046
        %v11496 = vunpack.c.h.b16 %v10046
        %v11497 = vunpack.c.l.b16 %v10047
        %v11498 = vunpack.c.l.b16 %v10048
        %v11499 = vunpack.c.h.b16 %v10048
        %v11500 = vunpack.c.l.b16 %v10049
        %v11501 = vunpack.c.h.b16 %v10049
        %v11502 = vunpack.c.l.b16 %v10050
        %v11503 = vunpack.c.h.b16 %v10050
        %v11504 = vunpack.c.l.b16 %v10051
        %v11505 = vpack.c.b16 %v10616, %v10609
        %v11506 = vpack.c.b16 %v10617, %v10610
        %v11507 = vpack.c.b16 %v10618, %v10611
        %v11508 = vpack.c.b16 %v10619, %v10612
        %v11509 = vpack.c.b16 %v10620, %v10613
        %v11510 = vpack.c.b16 %v10621, %v10614
        %v11511 = vpack.c.b16 %v10622, %v10615
        %v11512 = vpack.c.b16 %v10630, %v10623
        %v11513 = vpack.c.b16 %v10631, %v10624
        %v11514 = vpack.c.b16 %v10632, %v10625
        %v11515 = vpack.c.b16 %v10633, %v10626
        %v11516 = vpack.c.b16 %v10634, %v10627
        %v11517 = vpack.c.b16 %v10635, %v10628
        %v11518 = vpack.c.b16 %v10636, %v10629
        %v11519 = vpack.c.b16 %v10644, %v10637
        %v11520 = vpack.c.b16 %v10645, %v10638
        %v11521 = vpack.c.b16 %v10646, %v10639
        %v11522 = vpack.c.b16 %v10647, %v10640
        %v11523 = vpack.c.b16 %v10648, %v10641
        %v11524 = vpack.c.b16 %v10649, %v10642
        %v11525 = vpack.c.b16 %v10650, %v10643
        %v11526 = vpack.c.b16 %v10658, %v10651
        %v11527 = vpack.c.b16 %v10659, %v10652
        %v11528 = vpack.c.b16 %v10660, %v10653
        %v11529 = vpack.c.b16 %v10661, %v10654
        %v11530 = vpack.c.b16 %v10662, %v10655
        %v11531 = vpack.c.b16 %v10663, %v10656
        %v11532 = vpack.c.b16 %v10664, %v10657
        %v11533 = vpack.c.b16 %v10672, %v10665
        %v11534 = vpack.c.b16 %v10673, %v10666
        %v11535 = vpack.c.b16 %v10674, %v10667
        %v11536 = vpack.c.b16 %v10675, %v10668
        %v11537 = vpack.c.b16 %v10676, %v10669
        %v11538 = vpack.c.b16 %v10677, %v10670
        %v11539 = vpack.c.b16 %v10678, %v10671
        %v11540 = vpack.c.b16 %v10686, %v10679
        %v11541 = vpack.c.b16 %v10687, %v10680
        %v11542 = vpack.c.b16 %v10688, %v10681
        %v11543 = vpack.c.b16 %v10689, %v10682
        %v11544 = vpack.c.b16 %v10690, %v10683
        %v11545 = vpack.c.b16 %v10691, %v10684
        %v11546 = vpack.c.b16 %v10692, %v10685
        %v11547 = vpack.c.b16 %v10700, %v10693
        %v11548 = vpack.c.b16 %v10701, %v10694
        %v11549 = vpack.c.b16 %v10702, %v10695
        %v11550 = vpack.c.b16 %v10703, %v10696
        %v11551 = vpack.c.b16 %v10704, %v10697
        %v11552 = vpack.c.b16 %v10705, %v10698
        %v11553 = vpack.c.b16 %v10706, %v10699
        %v11554 = vpack.c.b16 %v10714, %v10707
        %v11555 = vpack.c.b16 %v10715, %v10708
        %v11556 = vpack.c.b16 %v10716, %v10709
        %v11557 = vpack.c.b16 %v10717, %v10710
        %v11558 = vpack.c.b16 %v10718, %v10711
        %v11559 = vpack.c.b16 %v10719, %v10712
        %v11560 = vpack.c.b16 %v10720, %v10713
        %v11561 = vpack.c.b16 %v10728, %v10721
        %v11562 = vpack.c.b16 %v10729, %v10722
        %v11563 = vpack.c.b16 %v10730, %v10723
        %v11564 = vpack.c.b16 %v10731, %v10724
        %v11565 = vpack.c.b16 %v10732, %v10725
        %v11566 = vpack.c.b16 %v10733, %v10726
        %v11567 = vpack.c.b16 %v10734, %v10727
        %v11568 = vpack.c.b16 %v10742, %v10735
        %v11569 = vpack.c.b16 %v10743, %v10736
        %v11570 = vpack.c.b16 %v10744, %v10737
        %v11571 = vpack.c.b16 %v10745, %v10738
        %v11572 = vpack.c.b16 %v10746, %v10739
        %v11573 = vpack.c.b16 %v10747, %v10740
        %v11574 = vpack.c.b16 %v10748, %v10741
        %v11575 = vpack.c.b16 %v10756, %v10749
        %v11576 = vpack.c.b16 %v10757, %v10750
        %v11577 = vpack.c.b16 %v10758, %v10751
        %v11578 = vpack.c.b16 %v10759, %v10752
        %v11579 = vpack.c.b16 %v10760, %v10753
        %v11580 = vpack.c.b16 %v10761, %v10754
        %v11581 = vpack.c.b16 %v10762, %v10755
        %v11582 = vpack.c.b16 %v10770, %v10763
        %v11583 = vpack.c.b16 %v10771, %v10764
        %v11584 = vpack.c.b16 %v10772, %v10765
        %v11585 = vpack.c.b16 %v10773, %v10766
        %v11586 = vpack.c.b16 %v10774, %v10767
        %v11587 = vpack.c.b16 %v10775, %v10768
        %v11588 = vpack.c.b16 %v10776, %v10769
        %v11589 = vpack.c.b16 %v10784, %v10777
        %v11590 = vpack.c.b16 %v10785, %v10778
        %v11591 = vpack.c.b16 %v10786, %v10779
        %v11592 = vpack.c.b16 %v10787, %v10780
        %v11593 = vpack.c.b16 %v10788, %v10781
        %v11594 = vpack.c.b16 %v10789, %v10782
        %v11595 = vpack.c.b16 %v10790, %v10783
        %v11596 = vpack.c.b16 %v10798, %v10791
        %v11597 = vpack.c.b16 %v10799, %v10792
        %v11598 = vpack.c.b16 %v10800, %v10793
        %v11599 = vpack.c.b16 %v10801, %v10794
        %v11600 = vpack.c.b16 %v10802, %v10795
        %v11601 = vpack.c.b16 %v10803, %v10796
        %v11602 = vpack.c.b16 %v10804, %v10797
        %v11603 = vpack.c.b16 %v10812, %v10805
        %v11604 = vpack.c.b16 %v10813, %v10806
        %v11605 = vpack.c.b16 %v10814, %v10807
        %v11606 = vpack.c.b16 %v10815, %v10808
        %v11607 = vpack.c.b16 %v10816, %v10809
        %v11608 = vpack.c.b16 %v10817, %v10810
        %v11609 = vpack.c.b16 %v10818, %v10811
        %v11610 = vpack.c.b16 %v10826, %v10819
        %v11611 = vpack.c.b16 %v10827, %v10820
        %v11612 = vpack.c.b16 %v10828, %v10821
        %v11613 = vpack.c.b16 %v10829, %v10822
        %v11614 = vpack.c.b16 %v10830, %v10823
        %v11615 = vpack.c.b16 %v10831, %v10824
        %v11616 = vpack.c.b16 %v10832, %v10825
        %v11617 = vpack.c.b16 %v10840, %v10833
        %v11618 = vpack.c.b16 %v10841, %v10834
        %v11619 = vpack.c.b16 %v10842, %v10835
        %v11620 = vpack.c.b16 %v10843, %v10836
        %v11621 = vpack.c.b16 %v10844, %v10837
        %v11622 = vpack.c.b16 %v10845, %v10838
        %v11623 = vpack.c.b16 %v10846, %v10839
        %v11624 = vpack.c.b16 %v10854, %v10847
        %v11625 = vpack.c.b16 %v10855, %v10848
        %v11626 = vpack.c.b16 %v10856, %v10849
        %v11627 = vpack.c.b16 %v10857, %v10850
        %v11628 = vpack.c.b16 %v10858, %v10851
        %v11629 = vpack.c.b16 %v10859, %v10852
        %v11630 = vpack.c.b16 %v10860, %v10853
        %v11631 = vpack.c.b16 %v10868, %v10861
        %v11632 = vpack.c.b16 %v10869, %v10862
        %v11633 = vpack.c.b16 %v10870, %v10863
        %v11634 = vpack.c.b16 %v10871, %v10864
        %v11635 = vpack.c.b16 %v10872, %v10865
        %v11636 = vpack.c.b16 %v10873, %v10866
        %v11637 = vpack.c.b16 %v10874, %v10867
        %v11638 = vpack.c.b16 %v10882, %v10875
        %v11639 = vpack.c.b16 %v10883, %v10876
        %v11640 = vpack.c.b16 %v10884, %v10877
        %v11641 = vpack.c.b16 %v10885, %v10878
        %v11642 = vpack.c.b16 %v10886, %v10879
        %v11643 = vpack.c.b16 %v10887, %v10880
        %v11644 = vpack.c.b16 %v10888, %v10881
        %v11645 = vpack.c.b16 %v10896, %v10889
        %v11646 = vpack.c.b16 %v10897, %v10890
        %v11647 = vpack.c.b16 %v10898, %v10891
        %v11648 = vpack.c.b16 %v10899, %v10892
        %v11649 = vpack.c.b16 %v10900, %v10893
        %v11650 = vpack.c.b16 %v10901, %v10894
        %v11651 = vpack.c.b16 %v10902, %v10895
        %v11652 = vpack.c.b16 %v10910, %v10903
        %v11653 = vpack.c.b16 %v10911, %v10904
        %v11654 = vpack.c.b16 %v10912, %v10905
        %v11655 = vpack.c.b16 %v10913, %v10906
        %v11656 = vpack.c.b16 %v10914, %v10907
        %v11657 = vpack.c.b16 %v10915, %v10908
        %v11658 = vpack.c.b16 %v10916, %v10909
        %v11659 = vpack.c.b16 %v10924, %v10917
        %v11660 = vpack.c.b16 %v10925, %v10918
        %v11661 = vpack.c.b16 %v10926, %v10919
        %v11662 = vpack.c.b16 %v10927, %v10920
        %v11663 = vpack.c.b16 %v10928, %v10921
        %v11664 = vpack.c.b16 %v10929, %v10922
        %v11665 = vpack.c.b16 %v10930, %v10923
        %v11666 = vpack.c.b16 %v10938, %v10931
        %v11667 = vpack.c.b16 %v10939, %v10932
        %v11668 = vpack.c.b16 %v10940, %v10933
        %v11669 = vpack.c.b16 %v10941, %v10934
        %v11670 = vpack.c.b16 %v10942, %v10935
        %v11671 = vpack.c.b16 %v10943, %v10936
        %v11672 = vpack.c.b16 %v10944, %v10937
        %v11673 = vpack.c.b16 %v10952, %v10945
        %v11674 = vpack.c.b16 %v10953, %v10946
        %v11675 = vpack.c.b16 %v10954, %v10947
        %v11676 = vpack.c.b16 %v10955, %v10948
        %v11677 = vpack.c.b16 %v10956, %v10949
        %v11678 = vpack.c.b16 %v10957, %v10950
        %v11679 = vpack.c.b16 %v10958, %v10951
        %v11680 = vpack.c.b16 %v10966, %v10959
        %v11681 = vpack.c.b16 %v10967, %v10960
        %v11682 = vpack.c.b16 %v10968, %v10961
        %v11683 = vpack.c.b16 %v10969, %v10962
        %v11684 = vpack.c.b16 %v10970, %v10963
        %v11685 = vpack.c.b16 %v10971, %v10964
        %v11686 = vpack.c.b16 %v10972, %v10965
        %v11687 = vpack.c.b16 %v10980, %v10973
        %v11688 = vpack.c.b16 %v10981, %v10974
        %v11689 = vpack.c.b16 %v10982, %v10975
        %v11690 = vpack.c.b16 %v10983, %v10976
        %v11691 = vpack.c.b16 %v10984, %v10977
        %v11692 = vpack.c.b16 %v10985, %v10978
        %v11693 = vpack.c.b16 %v10986, %v10979
        %v11694 = vpack.c.b16 %v10994, %v10987
        %v11695 = vpack.c.b16 %v10995, %v10988
        %v11696 = vpack.c.b16 %v10996, %v10989
        %v11697 = vpack.c.b16 %v10997, %v10990
        %v11698 = vpack.c.b16 %v10998, %v10991
        %v11699 = vpack.c.b16 %v10999, %v10992
        %v11700 = vpack.c.b16 %v11000, %v10993
        %v11701 = vpack.c.b16 %v11008, %v11001
        %v11702 = vpack.c.b16 %v11009, %v11002
        %v11703 = vpack.c.b16 %v11010, %v11003
        %v11704 = vpack.c.b16 %v11011, %v11004
        %v11705 = vpack.c.b16 %v11012, %v11005
        %v11706 = vpack.c.b16 %v11013, %v11006
        %v11707 = vpack.c.b16 %v11014, %v11007
        %v11708 = vpack.c.b16 %v11022, %v11015
        %v11709 = vpack.c.b16 %v11023, %v11016
        %v11710 = vpack.c.b16 %v11024, %v11017
        %v11711 = vpack.c.b16 %v11025, %v11018
        %v11712 = vpack.c.b16 %v11026, %v11019
        %v11713 = vpack.c.b16 %v11027, %v11020
        %v11714 = vpack.c.b16 %v11028, %v11021
        %v11715 = vpack.c.b16 %v11036, %v11029
        %v11716 = vpack.c.b16 %v11037, %v11030
        %v11717 = vpack.c.b16 %v11038, %v11031
        %v11718 = vpack.c.b16 %v11039, %v11032
        %v11719 = vpack.c.b16 %v11040, %v11033
        %v11720 = vpack.c.b16 %v11041, %v11034
        %v11721 = vpack.c.b16 %v11042, %v11035
        %v11722 = vpack.c.b16 %v11050, %v11043
        %v11723 = vpack.c.b16 %v11051, %v11044
        %v11724 = vpack.c.b16 %v11052, %v11045
        %v11725 = vpack.c.b16 %v11053, %v11046
        %v11726 = vpack.c.b16 %v11054, %v11047
        %v11727 = vpack.c.b16 %v11055, %v11048
        %v11728 = vpack.c.b16 %v11056, %v11049
        %v11729 = vpack.c.b16 %v11064, %v11057
        %v11730 = vpack.c.b16 %v11065, %v11058
        %v11731 = vpack.c.b16 %v11066, %v11059
        %v11732 = vpack.c.b16 %v11067, %v11060
        %v11733 = vpack.c.b16 %v11068, %v11061
        %v11734 = vpack.c.b16 %v11069, %v11062
        %v11735 = vpack.c.b16 %v11070, %v11063
        %v11736 = vpack.c.b16 %v11078, %v11071
        %v11737 = vpack.c.b16 %v11079, %v11072
        %v11738 = vpack.c.b16 %v11080, %v11073
        %v11739 = vpack.c.b16 %v11081, %v11074
        %v11740 = vpack.c.b16 %v11082, %v11075
        %v11741 = vpack.c.b16 %v11083, %v11076
        %v11742 = vpack.c.b16 %v11084, %v11077
        %v11743 = vpack.c.b16 %v11092, %v11085
        %v11744 = vpack.c.b16 %v11093, %v11086
        %v11745 = vpack.c.b16 %v11094, %v11087
        %v11746 = vpack.c.b16 %v11095, %v11088
        %v11747 = vpack.c.b16 %v11096, %v11089
        %v11748 = vpack.c.b16 %v11097, %v11090
        %v11749 = vpack.c.b16 %v11098, %v11091
        %v11750 = vpack.c.b16 %v11106, %v11099
        %v11751 = vpack.c.b16 %v11107, %v11100
        %v11752 = vpack.c.b16 %v11108, %v11101
        %v11753 = vpack.c.b16 %v11109, %v11102
        %v11754 = vpack.c.b16 %v11110, %v11103
        %v11755 = vpack.c.b16 %v11111, %v11104
        %v11756 = vpack.c.b16 %v11112, %v11105
        %v11757 = vpack.c.b16 %v11120, %v11113
        %v11758 = vpack.c.b16 %v11121, %v11114
        %v11759 = vpack.c.b16 %v11122, %v11115
        %v11760 = vpack.c.b16 %v11123, %v11116
        %v11761 = vpack.c.b16 %v11124, %v11117
        %v11762 = vpack.c.b16 %v11125, %v11118
        %v11763 = vpack.c.b16 %v11126, %v11119
        %v11764 = vpack.c.b16 %v11134, %v11127
        %v11765 = vpack.c.b16 %v11135, %v11128
        %v11766 = vpack.c.b16 %v11136, %v11129
        %v11767 = vpack.c.b16 %v11137, %v11130
        %v11768 = vpack.c.b16 %v11138, %v11131
        %v11769 = vpack.c.b16 %v11139, %v11132
        %v11770 = vpack.c.b16 %v11140, %v11133
        %v11771 = vpack.c.b16 %v11148, %v11141
        %v11772 = vpack.c.b16 %v11149, %v11142
        %v11773 = vpack.c.b16 %v11150, %v11143
        %v11774 = vpack.c.b16 %v11151, %v11144
        %v11775 = vpack.c.b16 %v11152, %v11145
        %v11776 = vpack.c.b16 %v11153, %v11146
        %v11777 = vpack.c.b16 %v11154, %v11147
        %v11778 = vpack.c.b16 %v11162, %v11155
        %v11779 = vpack.c.b16 %v11163, %v11156
        %v11780 = vpack.c.b16 %v11164, %v11157
        %v11781 = vpack.c.b16 %v11165, %v11158
        %v11782 = vpack.c.b16 %v11166, %v11159
        %v11783 = vpack.c.b16 %v11167, %v11160
        %v11784 = vpack.c.b16 %v11168, %v11161
        %v11785 = vpack.c.b16 %v11176, %v11169
        %v11786 = vpack.c.b16 %v11177, %v11170
        %v11787 = vpack.c.b16 %v11178, %v11171
        %v11788 = vpack.c.b16 %v11179, %v11172
        %v11789 = vpack.c.b16 %v11180, %v11173
        %v11790 = vpack.c.b16 %v11181, %v11174
        %v11791 = vpack.c.b16 %v11182, %v11175
        %v11792 = vpack.c.b16 %v11190, %v11183
        %v11793 = vpack.c.b16 %v11191, %v11184
        %v11794 = vpack.c.b16 %v11192, %v11185
        %v11795 = vpack.c.b16 %v11193, %v11186
        %v11796 = vpack.c.b16 %v11194, %v11187
        %v11797 = vpack.c.b16 %v11195, %v11188
        %v11798 = vpack.c.b16 %v11196, %v11189
        %v11799 = vpack.c.b16 %v11204, %v11197
        %v11800 = vpack.c.b16 %v11205, %v11198
        %v11801 = vpack.c.b16 %v11206, %v11199
        %v11802 = vpack.c.b16 %v11207, %v11200
        %v11803 = vpack.c.b16 %v11208, %v11201
        %v11804 = vpack.c.b16 %v11209, %v11202
        %v11805 = vpack.c.b16 %v11210, %v11203
        %v11806 = vpack.c.b16 %v11218, %v11211
        %v11807 = vpack.c.b16 %v11219, %v11212
        %v11808 = vpack.c.b16 %v11220, %v11213
        %v11809 = vpack.c.b16 %v11221, %v11214
        %v11810 = vpack.c.b16 %v11222, %v11215
        %v11811 = vpack.c.b16 %v11223, %v11216
        %v11812 = vpack.c.b16 %v11224, %v11217
        %v11813 = vpack.c.b16 %v11232, %v11225
        %v11814 = vpack.c.b16 %v11233, %v11226
        %v11815 = vpack.c.b16 %v11234, %v11227
        %v11816 = vpack.c.b16 %v11235, %v11228
        %v11817 = vpack.c.b16 %v11236, %v11229
        %v11818 = vpack.c.b16 %v11237, %v11230
        %v11819 = vpack.c.b16 %v11238, %v11231
        %v11820 = vpack.c.b16 %v11246, %v11239
        %v11821 = vpack.c.b16 %v11247, %v11240
        %v11822 = vpack.c.b16 %v11248, %v11241
        %v11823 = vpack.c.b16 %v11249, %v11242
        %v11824 = vpack.c.b16 %v11250, %v11243
        %v11825 = vpack.c.b16 %v11251, %v11244
        %v11826 = vpack.c.b16 %v11252, %v11245
        %v11827 = vpack.c.b16 %v11260, %v11253
        %v11828 = vpack.c.b16 %v11261, %v11254
        %v11829 = vpack.c.b16 %v11262, %v11255
        %v11830 = vpack.c.b16 %v11263, %v11256
        %v11831 = vpack.c.b16 %v11264, %v11257
        %v11832 = vpack.c.b16 %v11265, %v11258
        %v11833 = vpack.c.b16 %v11266, %v11259
        %v11834 = vpack.c.b16 %v11274, %v11267
        %v11835 = vpack.c.b16 %v11275, %v11268
        %v11836 = vpack.c.b16 %v11276, %v11269
        %v11837 = vpack.c.b16 %v11277, %v11270
        %v11838 = vpack.c.b16 %v11278, %v11271
        %v11839 = vpack.c.b16 %v11279, %v11272
        %v11840 = vpack.c.b16 %v11280, %v11273
        %v11841 = vpack.c.b16 %v11288, %v11281
        %v11842 = vpack.c.b16 %v11289, %v11282
        %v11843 = vpack.c.b16 %v11290, %v11283
        %v11844 = vpack.c.b16 %v11291, %v11284
        %v11845 = vpack.c.b16 %v11292, %v11285
        %v11846 = vpack.c.b16 %v11293, %v11286
        %v11847 = vpack.c.b16 %v11294, %v11287
        %v11848 = vpack.c.b16 %v11302, %v11295
        %v11849 = vpack.c.b16 %v11303, %v11296
        %v11850 = vpack.c.b16 %v11304, %v11297
        %v11851 = vpack.c.b16 %v11305, %v11298
        %v11852 = vpack.c.b16 %v11306, %v11299
        %v11853 = vpack.c.b16 %v11307, %v11300
        %v11854 = vpack.c.b16 %v11308, %v11301
        %v11855 = vpack.c.b16 %v11316, %v11309
        %v11856 = vpack.c.b16 %v11317, %v11310
        %v11857 = vpack.c.b16 %v11318, %v11311
        %v11858 = vpack.c.b16 %v11319, %v11312
        %v11859 = vpack.c.b16 %v11320, %v11313
        %v11860 = vpack.c.b16 %v11321, %v11314
        %v11861 = vpack.c.b16 %v11322, %v11315
        %v11862 = vpack.c.b16 %v11330, %v11323
        %v11863 = vpack.c.b16 %v11331, %v11324
        %v11864 = vpack.c.b16 %v11332, %v11325
        %v11865 = vpack.c.b16 %v11333, %v11326
        %v11866 = vpack.c.b16 %v11334, %v11327
        %v11867 = vpack.c.b16 %v11335, %v11328
        %v11868 = vpack.c.b16 %v11336, %v11329
        %v11869 = vpack.c.b16 %v11344, %v11337
        %v11870 = vpack.c.b16 %v11345, %v11338
        %v11871 = vpack.c.b16 %v11346, %v11339
        %v11872 = vpack.c.b16 %v11347, %v11340
        %v11873 = vpack.c.b16 %v11348, %v11341
        %v11874 = vpack.c.b16 %v11349, %v11342
        %v11875 = vpack.c.b16 %v11350, %v11343
        %v11876 = vpack.c.b16 %v11358, %v11351
        %v11877 = vpack.c.b16 %v11359, %v11352
        %v11878 = vpack.c.b16 %v11360, %v11353
        %v11879 = vpack.c.b16 %v11361, %v11354
        %v11880 = vpack.c.b16 %v11362, %v11355
        %v11881 = vpack.c.b16 %v11363, %v11356
        %v11882 = vpack.c.b16 %v11364, %v11357
        %v11883 = vpack.c.b16 %v11372, %v11365
        %v11884 = vpack.c.b16 %v11373, %v11366
        %v11885 = vpack.c.b16 %v11374, %v11367
        %v11886 = vpack.c.b16 %v11375, %v11368
        %v11887 = vpack.c.b16 %v11376, %v11369
        %v11888 = vpack.c.b16 %v11377, %v11370
        %v11889 = vpack.c.b16 %v11378, %v11371
        %v11890 = vpack.c.b16 %v11386, %v11379
        %v11891 = vpack.c.b16 %v11387, %v11380
        %v11892 = vpack.c.b16 %v11388, %v11381
        %v11893 = vpack.c.b16 %v11389, %v11382
        %v11894 = vpack.c.b16 %v11390, %v11383
        %v11895 = vpack.c.b16 %v11391, %v11384
        %v11896 = vpack.c.b16 %v11392, %v11385
        %v11897 = vpack.c.b16 %v11400, %v11393
        %v11898 = vpack.c.b16 %v11401, %v11394
        %v11899 = vpack.c.b16 %v11402, %v11395
        %v11900 = vpack.c.b16 %v11403, %v11396
        %v11901 = vpack.c.b16 %v11404, %v11397
        %v11902 = vpack.c.b16 %v11405, %v11398
        %v11903 = vpack.c.b16 %v11406, %v11399
        %v11904 = vpack.c.b16 %v11414, %v11407
        %v11905 = vpack.c.b16 %v11415, %v11408
        %v11906 = vpack.c.b16 %v11416, %v11409
        %v11907 = vpack.c.b16 %v11417, %v11410
        %v11908 = vpack.c.b16 %v11418, %v11411
        %v11909 = vpack.c.b16 %v11419, %v11412
        %v11910 = vpack.c.b16 %v11420, %v11413
        %v11911 = vpack.c.b16 %v11428, %v11421
        %v11912 = vpack.c.b16 %v11429, %v11422
        %v11913 = vpack.c.b16 %v11430, %v11423
        %v11914 = vpack.c.b16 %v11431, %v11424
        %v11915 = vpack.c.b16 %v11432, %v11425
        %v11916 = vpack.c.b16 %v11433, %v11426
        %v11917 = vpack.c.b16 %v11434, %v11427
        %v11918 = vpack.c.b16 %v11442, %v11435
        %v11919 = vpack.c.b16 %v11443, %v11436
        %v11920 = vpack.c.b16 %v11444, %v11437
        %v11921 = vpack.c.b16 %v11445, %v11438
        %v11922 = vpack.c.b16 %v11446, %v11439
        %v11923 = vpack.c.b16 %v11447, %v11440
        %v11924 = vpack.c.b16 %v11448, %v11441
        %v11925 = vpack.c.b16 %v11456, %v11449
        %v11926 = vpack.c.b16 %v11457, %v11450
        %v11927 = vpack.c.b16 %v11458, %v11451
        %v11928 = vpack.c.b16 %v11459, %v11452
        %v11929 = vpack.c.b16 %v11460, %v11453
        %v11930 = vpack.c.b16 %v11461, %v11454
        %v11931 = vpack.c.b16 %v11462, %v11455
        %v11932 = vpack.c.b16 %v11470, %v11463
        %v11933 = vpack.c.b16 %v11471, %v11464
        %v11934 = vpack.c.b16 %v11472, %v11465
        %v11935 = vpack.c.b16 %v11473, %v11466
        %v11936 = vpack.c.b16 %v11474, %v11467
        %v11937 = vpack.c.b16 %v11475, %v11468
        %v11938 = vpack.c.b16 %v11476, %v11469
        %v11939 = vpack.c.b16 %v11484, %v11477
        %v11940 = vpack.c.b16 %v11485, %v11478
        %v11941 = vpack.c.b16 %v11486, %v11479
        %v11942 = vpack.c.b16 %v11487, %v11480
        %v11943 = vpack.c.b16 %v11488, %v11481
        %v11944 = vpack.c.b16 %v11489, %v11482
        %v11945 = vpack.c.b16 %v11490, %v11483
        %v11946 = vpack.c.b16 %v11498, %v11491
        %v11947 = vpack.c.b16 %v11499, %v11492
        %v11948 = vpack.c.b16 %v11500, %v11493
        %v11949 = vpack.c.b16 %v11501, %v11494
        %v11950 = vpack.c.b16 %v11502, %v11495
        %v11951 = vpack.c.b16 %v11503, %v11496
        %v11952 = vpack.c.b16 %v11504, %v11497
        %12401 = vmatprep.subr.bf16.mxu0 %v11506
        %12402 = vmatpush1.bf16.msra.mxu0 %v11505
        %12403 = vmatprep.subr.bf16.mxu0 %v11513
        %12404 = vmatpush1.bf16.msra.mxu0 %v11512
        %12405 = vmatprep.subr.bf16.mxu0 %v11520
        %12406 = vmatpush1.bf16.msra.mxu0 %v11519
        %12407 = vmatprep.subr.bf16.mxu0 %v11527
        %12408 = vmatpush1.bf16.msra.mxu0 %v11526
        %12409 = vmatprep.subr.bf16.mxu0 %v11534
        %12410 = vmatpush1.bf16.msra.mxu0 %v11533
        %12411 = vmatprep.subr.bf16.mxu0 %v11541
        %12412 = vmatpush1.bf16.msra.mxu0 %v11540
        %12413 = vmatprep.subr.bf16.mxu0 %v11548
        %12414 = vmatpush1.bf16.msra.mxu0 %v11547
        %12415 = vmatprep.subr.bf16.mxu0 %v11555
        %12416 = vmatpush1.bf16.msra.mxu0 %v11554
        %12417 = vmatprep.subr.bf16.mxu0 %v11562
        %12418 = vmatpush1.bf16.msra.mxu0 %v11561
        %12419 = vmatprep.subr.bf16.mxu0 %v11569
        %12420 = vmatpush1.bf16.msra.mxu0 %v11568
        %12421 = vmatprep.subr.bf16.mxu0 %v11576
        %12422 = vmatpush1.bf16.msra.mxu0 %v11575
        %12423 = vmatprep.subr.bf16.mxu0 %v11583
        %12424 = vmatpush1.bf16.msra.mxu0 %v11582
        %12425 = vmatprep.subr.bf16.mxu0 %v11590
        %12426 = vmatpush1.bf16.msra.mxu0 %v11589
        %12427 = vmatprep.subr.bf16.mxu0 %v11597
        %12428 = vmatpush1.bf16.msra.mxu0 %v11596
        %12429 = vmatprep.subr.bf16.mxu0 %v11604
        %12430 = vmatpush1.bf16.msra.mxu0 %v11603
        %12431 = vmatprep.subr.bf16.mxu0 %v11611
        %12432 = vmatpush1.bf16.msra.mxu0 %v11610
        %12433 = vmatprep.mubr.bf16.mxu0 %v10054
        %12434 = vmatmul.mubr.bf16.gmra.mrb[0].mxu0 %v10053
        %v12435 = vpop.f32.mrb[0].mxu0
        %v12436 = vadd.f32 %v10065, %v12435
        %v12437 = vpop.f32.mrb[0].mxu0
        %v12438 = vadd.f32 %v10069, %v12437
        %v12439 = vpop.f32.mrb[0].mxu0
        %v12440 = vadd.f32 %v10065, %v12439
        %v12441 = vpop.f32.mrb[0].mxu0
        %v12442 = vadd.f32 %v10069, %v12441
        %12443 = vdwg.mxu0
        %12444 = vmatprep.subr.bf16.mxu0 %v11618
        %12445 = vmatpush1.bf16.msra.mxu0 %v11617
        %12446 = vmatprep.subr.bf16.mxu0 %v11625
        %12447 = vmatpush1.bf16.msra.mxu0 %v11624
        %12448 = vmatprep.subr.bf16.mxu0 %v11632
        %12449 = vmatpush1.bf16.msra.mxu0 %v11631
        %12450 = vmatprep.subr.bf16.mxu0 %v11639
        %12451 = vmatpush1.bf16.msra.mxu0 %v11638
        %12452 = vmatprep.subr.bf16.mxu0 %v11646
        %12453 = vmatpush1.bf16.msra.mxu0 %v11645
        %12454 = vmatprep.subr.bf16.mxu0 %v11653
        %12455 = vmatpush1.bf16.msra.mxu0 %v11652
        %12456 = vmatprep.subr.bf16.mxu0 %v11660
        %12457 = vmatpush1.bf16.msra.mxu0 %v11659
        %12458 = vmatprep.subr.bf16.mxu0 %v11667
        %12459 = vmatpush1.bf16.msra.mxu0 %v11666
        %12460 = vmatprep.subr.bf16.mxu0 %v11674
        %12461 = vmatpush1.bf16.msra.mxu0 %v11673
        %12462 = vmatprep.subr.bf16.mxu0 %v11681
        %12463 = vmatpush1.bf16.msra.mxu0 %v11680
        %12464 = vmatprep.subr.bf16.mxu0 %v11688
        %12465 = vmatpush1.bf16.msra.mxu0 %v11687
        %12466 = vmatprep.subr.bf16.mxu0 %v11695
        %12467 = vmatpush1.bf16.msra.mxu0 %v11694
        %12468 = vmatprep.subr.bf16.mxu0 %v11702
        %12469 = vmatpush1.bf16.msra.mxu0 %v11701
        %12470 = vmatprep.subr.bf16.mxu0 %v11709
        %12471 = vmatpush1.bf16.msra.mxu0 %v11708
        %12472 = vmatprep.subr.bf16.mxu0 %v11716
        %12473 = vmatpush1.bf16.msra.mxu0 %v11715
        %12474 = vmatprep.subr.bf16.mxu0 %v11723
        %12475 = vmatpush1.bf16.msra.mxu0 %v11722
        %12476 = vmatprep.mubr.bf16.mxu0 %v10056
        %12477 = vmatmul.mubr.bf16.gmra.mrb[0].mxu0 %v10055
        %v12478 = vpop.f32.mrb[0].mxu0
        %v12479 = vadd.f32 %v12436, %v12478
        %v12480 = vpop.f32.mrb[0].mxu0
        %v12481 = vadd.f32 %v12438, %v12480
        %v12482 = vpop.f32.mrb[0].mxu0
        %v12483 = vadd.f32 %v12440, %v12482
        %v12484 = vpop.f32.mrb[0].mxu0
        %v12485 = vadd.f32 %v12442, %v12484
        %12486 = vdwg.mxu0
        %12487 = vmatprep.subr.bf16.mxu0 %v11730
        %12488 = vmatpush1.bf16.msra.mxu0 %v11729
        %12489 = vmatprep.subr.bf16.mxu0 %v11737
        %12490 = vmatpush1.bf16.msra.mxu0 %v11736
        %12491 = vmatprep.subr.bf16.mxu0 %v11744
        %12492 = vmatpush1.bf16.msra.mxu0 %v11743
        %12493 = vmatprep.subr.bf16.mxu0 %v11751
        %12494 = vmatpush1.bf16.msra.mxu0 %v11750
        %12495 = vmatprep.subr.bf16.mxu0 %v11758
        %12496 = vmatpush1.bf16.msra.mxu0 %v11757
        %12497 = vmatprep.subr.bf16.mxu0 %v11765
        %12498 = vmatpush1.bf16.msra.mxu0 %v11764
        %12499 = vmatprep.subr.bf16.mxu0 %v11772
        %12500 = vmatpush1.bf16.msra.mxu0 %v11771
        %12501 = vmatprep.subr.bf16.mxu0 %v11779
        %12502 = vmatpush1.bf16.msra.mxu0 %v11778
        %12503 = vmatprep.subr.bf16.mxu0 %v11786
        %12504 = vmatpush1.bf16.msra.mxu0 %v11785
        %12505 = vmatprep.subr.bf16.mxu0 %v11793
        %12506 = vmatpush1.bf16.msra.mxu0 %v11792
        %12507 = vmatprep.subr.bf16.mxu0 %v11800
        %12508 = vmatpush1.bf16.msra.mxu0 %v11799
        %12509 = vmatprep.subr.bf16.mxu0 %v11807
        %12510 = vmatpush1.bf16.msra.mxu0 %v11806
        %12511 = vmatprep.subr.bf16.mxu0 %v11814
        %12512 = vmatpush1.bf16.msra.mxu0 %v11813
        %12513 = vmatprep.subr.bf16.mxu0 %v11821
        %12514 = vmatpush1.bf16.msra.mxu0 %v11820
        %12515 = vmatprep.subr.bf16.mxu0 %v11828
        %12516 = vmatpush1.bf16.msra.mxu0 %v11827
        %12517 = vmatprep.subr.bf16.mxu0 %v11835
        %12518 = vmatpush1.bf16.msra.mxu0 %v11834
        %12519 = vmatprep.mubr.bf16.mxu0 %v10058
        %12520 = vmatmul.mubr.bf16.gmra.mrb[0].mxu0 %v10057
        %v12521 = vpop.f32.mrb[0].mxu0
        %v12522 = vadd.f32 %v12479, %v12521
        %v12523 = vpop.f32.mrb[0].mxu0
        %v12524 = vadd.f32 %v12481, %v12523
        %v12525 = vpop.f32.mrb[0].mxu0
        %v12526 = vadd.f32 %v12483, %v12525
        %v12527 = vpop.f32.mrb[0].mxu0
        %v12528 = vadd.f32 %v12485, %v12527
        %12529 = vdwg.mxu0
        %12530 = vmatprep.subr.bf16.mxu0 %v11842
        %12531 = vmatpush1.bf16.msra.mxu0 %v11841
        %12532 = vmatprep.subr.bf16.mxu0 %v11849
        %12533 = vmatpush1.bf16.msra.mxu0 %v11848
        %12534 = vmatprep.subr.bf16.mxu0 %v11856
        %12535 = vmatpush1.bf16.msra.mxu0 %v11855
        %12536 = vmatprep.subr.bf16.mxu0 %v11863
        %12537 = vmatpush1.bf16.msra.mxu0 %v11862
        %12538 = vmatprep.subr.bf16.mxu0 %v11870
        %12539 = vmatpush1.bf16.msra.mxu0 %v11869
        %12540 = vmatprep.subr.bf16.mxu0 %v11877
        %12541 = vmatpush1.bf16.msra.mxu0 %v11876
        %12542 = vmatprep.subr.bf16.mxu0 %v11884
        %12543 = vmatpush1.bf16.msra.mxu0 %v11883
        %12544 = vmatprep.subr.bf16.mxu0 %v11891
        %12545 = vmatpush1.bf16.msra.mxu0 %v11890
        %12546 = vmatprep.subr.bf16.mxu0 %v11898
        %12547 = vmatpush1.bf16.msra.mxu0 %v11897
        %12548 = vmatprep.subr.bf16.mxu0 %v11905
        %12549 = vmatpush1.bf16.msra.mxu0 %v11904
        %12550 = vmatprep.subr.bf16.mxu0 %v11912
        %12551 = vmatpush1.bf16.msra.mxu0 %v11911
        %12552 = vmatprep.subr.bf16.mxu0 %v11919
        %12553 = vmatpush1.bf16.msra.mxu0 %v11918
        %12554 = vmatprep.subr.bf16.mxu0 %v11926
        %12555 = vmatpush1.bf16.msra.mxu0 %v11925
        %12556 = vmatprep.subr.bf16.mxu0 %v11933
        %12557 = vmatpush1.bf16.msra.mxu0 %v11932
        %12558 = vmatprep.subr.bf16.mxu0 %v11940
        %12559 = vmatpush1.bf16.msra.mxu0 %v11939
        %12560 = vmatprep.subr.bf16.mxu0 %v11947
        %12561 = vmatpush1.bf16.msra.mxu0 %v11946
        %12562 = vmatprep.mubr.bf16.mxu0 %v10060
        %12563 = vmatmul.mubr.bf16.gmra.mrb[0].mxu0 %v10059
        %v12564 = vpop.f32.mrb[0].mxu0
        %v12565 = vadd.f32 %v12522, %v12564
        %v12566 = vpop.f32.mrb[0].mxu0
        %v12567 = vadd.f32 %v12524, %v12566
        %v12568 = vpop.f32.mrb[0].mxu0
        %v12569 = vadd.f32 %v12526, %v12568
        %v12570 = vpop.f32.mrb[0].mxu0
        %v12571 = vadd.f32 %v12528, %v12570
        %12572 = vdwg.mxu0
        %12573 = vmatprep.subr.bf16.mxu0 %v11508
        %12574 = vmatpush1.bf16.msra.mxu0 %v11507
        %12575 = vmatprep.subr.bf16.mxu0 %v11515
        %12576 = vmatpush1.bf16.msra.mxu0 %v11514
        %12577 = vmatprep.subr.bf16.mxu0 %v11522
        %12578 = vmatpush1.bf16.msra.mxu0 %v11521
        %12579 = vmatprep.subr.bf16.mxu0 %v11529
        %12580 = vmatpush1.bf16.msra.mxu0 %v11528
        %12581 = vmatprep.subr.bf16.mxu0 %v11536
        %12582 = vmatpush1.bf16.msra.mxu0 %v11535
        %12583 = vmatprep.subr.bf16.mxu0 %v11543
        %12584 = vmatpush1.bf16.msra.mxu0 %v11542
        %12585 = vmatprep.subr.bf16.mxu0 %v11550
        %12586 = vmatpush1.bf16.msra.mxu0 %v11549
        %12587 = vmatprep.subr.bf16.mxu0 %v11557
        %12588 = vmatpush1.bf16.msra.mxu0 %v11556
        %12589 = vmatprep.subr.bf16.mxu0 %v11564
        %12590 = vmatpush1.bf16.msra.mxu0 %v11563
        %12591 = vmatprep.subr.bf16.mxu0 %v11571
        %12592 = vmatpush1.bf16.msra.mxu0 %v11570
        %12593 = vmatprep.subr.bf16.mxu0 %v11578
        %12594 = vmatpush1.bf16.msra.mxu0 %v11577
        %12595 = vmatprep.subr.bf16.mxu0 %v11585
        %12596 = vmatpush1.bf16.msra.mxu0 %v11584
        %12597 = vmatprep.subr.bf16.mxu0 %v11592
        %12598 = vmatpush1.bf16.msra.mxu0 %v11591
        %12599 = vmatprep.subr.bf16.mxu0 %v11599
        %12600 = vmatpush1.bf16.msra.mxu0 %v11598
        %12601 = vmatprep.subr.bf16.mxu0 %v11606
        %12602 = vmatpush1.bf16.msra.mxu0 %v11605
        %12603 = vmatprep.subr.bf16.mxu0 %v11613
        %12604 = vmatpush1.bf16.msra.mxu0 %v11612
        %12605 = vmatprep.mubr.bf16.mxu0 %v10054
        %12606 = vmatmul.mubr.bf16.gmra.mrb[0].mxu0 %v10053
        %v12607 = vpop.f32.mrb[0].mxu0
        %v12608 = vadd.f32 %v10073, %v12607
        %v12609 = vpop.f32.mrb[0].mxu0
        %v12610 = vadd.f32 %v10077, %v12609
        %v12611 = vpop.f32.mrb[0].mxu0
        %v12612 = vadd.f32 %v10073, %v12611
        %v12613 = vpop.f32.mrb[0].mxu0
        %v12614 = vadd.f32 %v10077, %v12613
        %12615 = vdwg.mxu0
        %12616 = vmatprep.subr.bf16.mxu0 %v11620
        %12617 = vmatpush1.bf16.msra.mxu0 %v11619
        %12618 = vmatprep.subr.bf16.mxu0 %v11627
        %12619 = vmatpush1.bf16.msra.mxu0 %v11626
        %12620 = vmatprep.subr.bf16.mxu0 %v11634
        %12621 = vmatpush1.bf16.msra.mxu0 %v11633
        %12622 = vmatprep.subr.bf16.mxu0 %v11641
        %12623 = vmatpush1.bf16.msra.mxu0 %v11640
        %12624 = vmatprep.subr.bf16.mxu0 %v11648
        %12625 = vmatpush1.bf16.msra.mxu0 %v11647
        %12626 = vmatprep.subr.bf16.mxu0 %v11655
        %12627 = vmatpush1.bf16.msra.mxu0 %v11654
        %12628 = vmatprep.subr.bf16.mxu0 %v11662
        %12629 = vmatpush1.bf16.msra.mxu0 %v11661
        %12630 = vmatprep.subr.bf16.mxu0 %v11669
        %12631 = vmatpush1.bf16.msra.mxu0 %v11668
        %12632 = vmatprep.subr.bf16.mxu0 %v11676
        %12633 = vmatpush1.bf16.msra.mxu0 %v11675
        %12634 = vmatprep.subr.bf16.mxu0 %v11683
        %12635 = vmatpush1.bf16.msra.mxu0 %v11682
        %12636 = vmatprep.subr.bf16.mxu0 %v11690
        %12637 = vmatpush1.bf16.msra.mxu0 %v11689
        %12638 = vmatprep.subr.bf16.mxu0 %v11697
        %12639 = vmatpush1.bf16.msra.mxu0 %v11696
        %12640 = vmatprep.subr.bf16.mxu0 %v11704
        %12641 = vmatpush1.bf16.msra.mxu0 %v11703
        %12642 = vmatprep.subr.bf16.mxu0 %v11711
        %12643 = vmatpush1.bf16.msra.mxu0 %v11710
        %12644 = vmatprep.subr.bf16.mxu0 %v11718
        %12645 = vmatpush1.bf16.msra.mxu0 %v11717
        %12646 = vmatprep.subr.bf16.mxu0 %v11725
        %12647 = vmatpush1.bf16.msra.mxu0 %v11724
        %12648 = vmatprep.mubr.bf16.mxu0 %v10056
        %12649 = vmatmul.mubr.bf16.gmra.mrb[0].mxu0 %v10055
        %v12650 = vpop.f32.mrb[0].mxu0
        %v12651 = vadd.f32 %v12608, %v12650
        %v12652 = vpop.f32.mrb[0].mxu0
        %v12653 = vadd.f32 %v12610, %v12652
        %v12654 = vpop.f32.mrb[0].mxu0
        %v12655 = vadd.f32 %v12612, %v12654
        %v12656 = vpop.f32.mrb[0].mxu0
        %v12657 = vadd.f32 %v12614, %v12656
        %12658 = vdwg.mxu0
        %12659 = vmatprep.subr.bf16.mxu0 %v11732
        %12660 = vmatpush1.bf16.msra.mxu0 %v11731
        %12661 = vmatprep.subr.bf16.mxu0 %v11739
        %12662 = vmatpush1.bf16.msra.mxu0 %v11738
        %12663 = vmatprep.subr.bf16.mxu0 %v11746
        %12664 = vmatpush1.bf16.msra.mxu0 %v11745
        %12665 = vmatprep.subr.bf16.mxu0 %v11753
        %12666 = vmatpush1.bf16.msra.mxu0 %v11752
        %12667 = vmatprep.subr.bf16.mxu0 %v11760
        %12668 = vmatpush1.bf16.msra.mxu0 %v11759
        %12669 = vmatprep.subr.bf16.mxu0 %v11767
        %12670 = vmatpush1.bf16.msra.mxu0 %v11766
        %12671 = vmatprep.subr.bf16.mxu0 %v11774
        %12672 = vmatpush1.bf16.msra.mxu0 %v11773
        %12673 = vmatprep.subr.bf16.mxu0 %v11781
        %12674 = vmatpush1.bf16.msra.mxu0 %v11780
        %12675 = vmatprep.subr.bf16.mxu0 %v11788
        %12676 = vmatpush1.bf16.msra.mxu0 %v11787
        %12677 = vmatprep.subr.bf16.mxu0 %v11795
        %12678 = vmatpush1.bf16.msra.mxu0 %v11794
        %12679 = vmatprep.subr.bf16.mxu0 %v11802
        %12680 = vmatpush1.bf16.msra.mxu0 %v11801
        %12681 = vmatprep.subr.bf16.mxu0 %v11809
        %12682 = vmatpush1.bf16.msra.mxu0 %v11808
        %12683 = vmatprep.subr.bf16.mxu0 %v11816
        %12684 = vmatpush1.bf16.msra.mxu0 %v11815
        %12685 = vmatprep.subr.bf16.mxu0 %v11823
        %12686 = vmatpush1.bf16.msra.mxu0 %v11822
        %12687 = vmatprep.subr.bf16.mxu0 %v11830
        %12688 = vmatpush1.bf16.msra.mxu0 %v11829
        %12689 = vmatprep.subr.bf16.mxu0 %v11837
        %12690 = vmatpush1.bf16.msra.mxu0 %v11836
        %12691 = vmatprep.mubr.bf16.mxu0 %v10058
        %12692 = vmatmul.mubr.bf16.gmra.mrb[0].mxu0 %v10057
        %v12693 = vpop.f32.mrb[0].mxu0
        %v12694 = vadd.f32 %v12651, %v12693
        %v12695 = vpop.f32.mrb[0].mxu0
        %v12696 = vadd.f32 %v12653, %v12695
        %v12697 = vpop.f32.mrb[0].mxu0
        %v12698 = vadd.f32 %v12655, %v12697
        %v12699 = vpop.f32.mrb[0].mxu0
        %v12700 = vadd.f32 %v12657, %v12699
        %12701 = vdwg.mxu0
        %12702 = vmatprep.subr.bf16.mxu0 %v11844
        %12703 = vmatpush1.bf16.msra.mxu0 %v11843
        %12704 = vmatprep.subr.bf16.mxu0 %v11851
        %12705 = vmatpush1.bf16.msra.mxu0 %v11850
        %12706 = vmatprep.subr.bf16.mxu0 %v11858
        %12707 = vmatpush1.bf16.msra.mxu0 %v11857
        %12708 = vmatprep.subr.bf16.mxu0 %v11865
        %12709 = vmatpush1.bf16.msra.mxu0 %v11864
        %12710 = vmatprep.subr.bf16.mxu0 %v11872
        %12711 = vmatpush1.bf16.msra.mxu0 %v11871
        %12712 = vmatprep.subr.bf16.mxu0 %v11879
        %12713 = vmatpush1.bf16.msra.mxu0 %v11878
        %12714 = vmatprep.subr.bf16.mxu0 %v11886
        %12715 = vmatpush1.bf16.msra.mxu0 %v11885
        %12716 = vmatprep.subr.bf16.mxu0 %v11893
        %12717 = vmatpush1.bf16.msra.mxu0 %v11892
        %12718 = vmatprep.subr.bf16.mxu0 %v11900
        %12719 = vmatpush1.bf16.msra.mxu0 %v11899
        %12720 = vmatprep.subr.bf16.mxu0 %v11907
        %12721 = vmatpush1.bf16.msra.mxu0 %v11906
        %12722 = vmatprep.subr.bf16.mxu0 %v11914
        %12723 = vmatpush1.bf16.msra.mxu0 %v11913
        %12724 = vmatprep.subr.bf16.mxu0 %v11921
        %12725 = vmatpush1.bf16.msra.mxu0 %v11920
        %12726 = vmatprep.subr.bf16.mxu0 %v11928
        %12727 = vmatpush1.bf16.msra.mxu0 %v11927
        %12728 = vmatprep.subr.bf16.mxu0 %v11935
        %12729 = vmatpush1.bf16.msra.mxu0 %v11934
        %12730 = vmatprep.subr.bf16.mxu0 %v11942
        %12731 = vmatpush1.bf16.msra.mxu0 %v11941
        %12732 = vmatprep.subr.bf16.mxu0 %v11949
        %12733 = vmatpush1.bf16.msra.mxu0 %v11948
        %12734 = vmatprep.mubr.bf16.mxu0 %v10060
        %12735 = vmatmul.mubr.bf16.gmra.mrb[0].mxu0 %v10059
        %v12736 = vpop.f32.mrb[0].mxu0
        %v12737 = vadd.f32 %v12694, %v12736
        %v12738 = vpop.f32.mrb[0].mxu0
        %v12739 = vadd.f32 %v12696, %v12738
        %v12740 = vpop.f32.mrb[0].mxu0
        %v12741 = vadd.f32 %v12698, %v12740
        %v12742 = vpop.f32.mrb[0].mxu0
        %v12743 = vadd.f32 %v12700, %v12742
        %12744 = vdwg.mxu0
        %12745 = vmatprep.subr.bf16.mxu0 %v11510
        %12746 = vmatpush1.bf16.msra.mxu0 %v11509
        %12747 = vmatprep.subr.bf16.mxu0 %v11517
        %12748 = vmatpush1.bf16.msra.mxu0 %v11516
        %12749 = vmatprep.subr.bf16.mxu0 %v11524
        %12750 = vmatpush1.bf16.msra.mxu0 %v11523
        %12751 = vmatprep.subr.bf16.mxu0 %v11531
        %12752 = vmatpush1.bf16.msra.mxu0 %v11530
        %12753 = vmatprep.subr.bf16.mxu0 %v11538
        %12754 = vmatpush1.bf16.msra.mxu0 %v11537
        %12755 = vmatprep.subr.bf16.mxu0 %v11545
        %12756 = vmatpush1.bf16.msra.mxu0 %v11544
        %12757 = vmatprep.subr.bf16.mxu0 %v11552
        %12758 = vmatpush1.bf16.msra.mxu0 %v11551
        %12759 = vmatprep.subr.bf16.mxu0 %v11559
        %12760 = vmatpush1.bf16.msra.mxu0 %v11558
        %12761 = vmatprep.subr.bf16.mxu0 %v11566
        %12762 = vmatpush1.bf16.msra.mxu0 %v11565
        %12763 = vmatprep.subr.bf16.mxu0 %v11573
        %12764 = vmatpush1.bf16.msra.mxu0 %v11572
        %12765 = vmatprep.subr.bf16.mxu0 %v11580
        %12766 = vmatpush1.bf16.msra.mxu0 %v11579
        %12767 = vmatprep.subr.bf16.mxu0 %v11587
        %12768 = vmatpush1.bf16.msra.mxu0 %v11586
        %12769 = vmatprep.subr.bf16.mxu0 %v11594
        %12770 = vmatpush1.bf16.msra.mxu0 %v11593
        %12771 = vmatprep.subr.bf16.mxu0 %v11601
        %12772 = vmatpush1.bf16.msra.mxu0 %v11600
        %12773 = vmatprep.subr.bf16.mxu0 %v11608
        %12774 = vmatpush1.bf16.msra.mxu0 %v11607
        %12775 = vmatprep.subr.bf16.mxu0 %v11615
        %12776 = vmatpush1.bf16.msra.mxu0 %v11614
        %12777 = vmatprep.mubr.bf16.mxu0 %v10054
        %12778 = vmatmul.mubr.bf16.gmra.mrb[0].mxu0 %v10053
        %v12779 = vpop.f32.mrb[0].mxu0
        %v12780 = vadd.f32 %v10081, %v12779
        %v12781 = vpop.f32.mrb[0].mxu0
        %v12782 = vadd.f32 %v10085, %v12781
        %v12783 = vpop.f32.mrb[0].mxu0
        %v12784 = vadd.f32 %v10081, %v12783
        %v12785 = vpop.f32.mrb[0].mxu0
        %v12786 = vadd.f32 %v10085, %v12785
        %12787 = vdwg.mxu0
        %12788 = vmatprep.subr.bf16.mxu0 %v11622
        %12789 = vmatpush1.bf16.msra.mxu0 %v11621
        %12790 = vmatprep.subr.bf16.mxu0 %v11629
        %12791 = vmatpush1.bf16.msra.mxu0 %v11628
        %12792 = vmatprep.subr.bf16.mxu0 %v11636
        %12793 = vmatpush1.bf16.msra.mxu0 %v11635
        %12794 = vmatprep.subr.bf16.mxu0 %v11643
        %12795 = vmatpush1.bf16.msra.mxu0 %v11642
        %12796 = vmatprep.subr.bf16.mxu0 %v11650
        %12797 = vmatpush1.bf16.msra.mxu0 %v11649
        %12798 = vmatprep.subr.bf16.mxu0 %v11657
        %12799 = vmatpush1.bf16.msra.mxu0 %v11656
        %12800 = vmatprep.subr.bf16.mxu0 %v11664
        %12801 = vmatpush1.bf16.msra.mxu0 %v11663
        %12802 = vmatprep.subr.bf16.mxu0 %v11671
        %12803 = vmatpush1.bf16.msra.mxu0 %v11670
        %12804 = vmatprep.subr.bf16.mxu0 %v11678
        %12805 = vmatpush1.bf16.msra.mxu0 %v11677
        %12806 = vmatprep.subr.bf16.mxu0 %v11685
        %12807 = vmatpush1.bf16.msra.mxu0 %v11684
        %12808 = vmatprep.subr.bf16.mxu0 %v11692
        %12809 = vmatpush1.bf16.msra.mxu0 %v11691
        %12810 = vmatprep.subr.bf16.mxu0 %v11699
        %12811 = vmatpush1.bf16.msra.mxu0 %v11698
        %12812 = vmatprep.subr.bf16.mxu0 %v11706
        %12813 = vmatpush1.bf16.msra.mxu0 %v11705
        %12814 = vmatprep.subr.bf16.mxu0 %v11713
        %12815 = vmatpush1.bf16.msra.mxu0 %v11712
        %12816 = vmatprep.subr.bf16.mxu0 %v11720
        %12817 = vmatpush1.bf16.msra.mxu0 %v11719
        %12818 = vmatprep.subr.bf16.mxu0 %v11727
        %12819 = vmatpush1.bf16.msra.mxu0 %v11726
        %12820 = vmatprep.mubr.bf16.mxu0 %v10056
        %12821 = vmatmul.mubr.bf16.gmra.mrb[0].mxu0 %v10055
        %v12822 = vpop.f32.mrb[0].mxu0
        %v12823 = vadd.f32 %v12780, %v12822
        %v12824 = vpop.f32.mrb[0].mxu0
        %v12825 = vadd.f32 %v12782, %v12824
        %v12826 = vpop.f32.mrb[0].mxu0
        %v12827 = vadd.f32 %v12784, %v12826
        %v12828 = vpop.f32.mrb[0].mxu0
        %v12829 = vadd.f32 %v12786, %v12828
        %12830 = vdwg.mxu0
        %12831 = vmatprep.subr.bf16.mxu0 %v11734
        %12832 = vmatpush1.bf16.msra.mxu0 %v11733
        %12833 = vmatprep.subr.bf16.mxu0 %v11741
        %12834 = vmatpush1.bf16.msra.mxu0 %v11740
        %12835 = vmatprep.subr.bf16.mxu0 %v11748
        %12836 = vmatpush1.bf16.msra.mxu0 %v11747
        %12837 = vmatprep.subr.bf16.mxu0 %v11755
        %12838 = vmatpush1.bf16.msra.mxu0 %v11754
        %12839 = vmatprep.subr.bf16.mxu0 %v11762
        %12840 = vmatpush1.bf16.msra.mxu0 %v11761
        %12841 = vmatprep.subr.bf16.mxu0 %v11769
        %12842 = vmatpush1.bf16.msra.mxu0 %v11768
        %12843 = vmatprep.subr.bf16.mxu0 %v11776
        %12844 = vmatpush1.bf16.msra.mxu0 %v11775
        %12845 = vmatprep.subr.bf16.mxu0 %v11783
        %12846 = vmatpush1.bf16.msra.mxu0 %v11782
        %12847 = vmatprep.subr.bf16.mxu0 %v11790
        %12848 = vmatpush1.bf16.msra.mxu0 %v11789
        %12849 = vmatprep.subr.bf16.mxu0 %v11797
        %12850 = vmatpush1.bf16.msra.mxu0 %v11796
        %12851 = vmatprep.subr.bf16.mxu0 %v11804
        %12852 = vmatpush1.bf16.msra.mxu0 %v11803
        %12853 = vmatprep.subr.bf16.mxu0 %v11811
        %12854 = vmatpush1.bf16.msra.mxu0 %v11810
        %12855 = vmatprep.subr.bf16.mxu0 %v11818
        %12856 = vmatpush1.bf16.msra.mxu0 %v11817
        %12857 = vmatprep.subr.bf16.mxu0 %v11825
        %12858 = vmatpush1.bf16.msra.mxu0 %v11824
        %12859 = vmatprep.subr.bf16.mxu0 %v11832
        %12860 = vmatpush1.bf16.msra.mxu0 %v11831
        %12861 = vmatprep.subr.bf16.mxu0 %v11839
        %12862 = vmatpush1.bf16.msra.mxu0 %v11838
        %12863 = vmatprep.mubr.bf16.mxu0 %v10058
        %12864 = vmatmul.mubr.bf16.gmra.mrb[0].mxu0 %v10057
        %v12865 = vpop.f32.mrb[0].mxu0
        %v12866 = vadd.f32 %v12823, %v12865
        %v12867 = vpop.f32.mrb[0].mxu0
        %v12868 = vadd.f32 %v12825, %v12867
        %v12869 = vpop.f32.mrb[0].mxu0
        %v12870 = vadd.f32 %v12827, %v12869
        %v12871 = vpop.f32.mrb[0].mxu0
        %v12872 = vadd.f32 %v12829, %v12871
        %12873 = vdwg.mxu0
        %12874 = vmatprep.subr.bf16.mxu0 %v11846
        %12875 = vmatpush1.bf16.msra.mxu0 %v11845
        %12876 = vmatprep.subr.bf16.mxu0 %v11853
        %12877 = vmatpush1.bf16.msra.mxu0 %v11852
        %12878 = vmatprep.subr.bf16.mxu0 %v11860
        %12879 = vmatpush1.bf16.msra.mxu0 %v11859
        %12880 = vmatprep.subr.bf16.mxu0 %v11867
        %12881 = vmatpush1.bf16.msra.mxu0 %v11866
        %12882 = vmatprep.subr.bf16.mxu0 %v11874
        %12883 = vmatpush1.bf16.msra.mxu0 %v11873
        %12884 = vmatprep.subr.bf16.mxu0 %v11881
        %12885 = vmatpush1.bf16.msra.mxu0 %v11880
        %12886 = vmatprep.subr.bf16.mxu0 %v11888
        %12887 = vmatpush1.bf16.msra.mxu0 %v11887
        %12888 = vmatprep.subr.bf16.mxu0 %v11895
        %12889 = vmatpush1.bf16.msra.mxu0 %v11894
        %12890 = vmatprep.subr.bf16.mxu0 %v11902
        %12891 = vmatpush1.bf16.msra.mxu0 %v11901
        %12892 = vmatprep.subr.bf16.mxu0 %v11909
        %12893 = vmatpush1.bf16.msra.mxu0 %v11908
        %12894 = vmatprep.subr.bf16.mxu0 %v11916
        %12895 = vmatpush1.bf16.msra.mxu0 %v11915
        %12896 = vmatprep.subr.bf16.mxu0 %v11923
        %12897 = vmatpush1.bf16.msra.mxu0 %v11922
        %12898 = vmatprep.subr.bf16.mxu0 %v11930
        %12899 = vmatpush1.bf16.msra.mxu0 %v11929
        %12900 = vmatprep.subr.bf16.mxu0 %v11937
        %12901 = vmatpush1.bf16.msra.mxu0 %v11936
        %12902 = vmatprep.subr.bf16.mxu0 %v11944
        %12903 = vmatpush1.bf16.msra.mxu0 %v11943
        %12904 = vmatprep.subr.bf16.mxu0 %v11951
        %12905 = vmatpush1.bf16.msra.mxu0 %v11950
        %12906 = vmatprep.mubr.bf16.mxu0 %v10060
        %12907 = vmatmul.mubr.bf16.gmra.mrb[0].mxu0 %v10059
        %v12908 = vpop.f32.mrb[0].mxu0
        %v12909 = vadd.f32 %v12866, %v12908
        %v12910 = vpop.f32.mrb[0].mxu0
        %v12911 = vadd.f32 %v12868, %v12910
        %v12912 = vpop.f32.mrb[0].mxu0
        %v12913 = vadd.f32 %v12870, %v12912
        %v12914 = vpop.f32.mrb[0].mxu0
        %v12915 = vadd.f32 %v12872, %v12914
        %12916 = vdwg.mxu0
        %12917 = vmatprep.subr.bf16.mxu0 0
        %12918 = vmatpush1.bf16.msra.mxu0 %v11511
        %12919 = vmatprep.subr.bf16.mxu0 0
        %12920 = vmatpush1.bf16.msra.mxu0 %v11518
        %12921 = vmatprep.subr.bf16.mxu0 0
        %12922 = vmatpush1.bf16.msra.mxu0 %v11525
        %12923 = vmatprep.subr.bf16.mxu0 0
        %12924 = vmatpush1.bf16.msra.mxu0 %v11532
        %12925 = vmatprep.subr.bf16.mxu0 0
        %12926 = vmatpush1.bf16.msra.mxu0 %v11539
        %12927 = vmatprep.subr.bf16.mxu0 0
        %12928 = vmatpush1.bf16.msra.mxu0 %v11546
        %12929 = vmatprep.subr.bf16.mxu0 0
        %12930 = vmatpush1.bf16.msra.mxu0 %v11553
        %12931 = vmatprep.subr.bf16.mxu0 0
        %12932 = vmatpush1.bf16.msra.mxu0 %v11560
        %12933 = vmatprep.subr.bf16.mxu0 0
        %12934 = vmatpush1.bf16.msra.mxu0 %v11567
        %12935 = vmatprep.subr.bf16.mxu0 0
        %12936 = vmatpush1.bf16.msra.mxu0 %v11574
        %12937 = vmatprep.subr.bf16.mxu0 0
        %12938 = vmatpush1.bf16.msra.mxu0 %v11581
        %12939 = vmatprep.subr.bf16.mxu0 0
        %12940 = vmatpush1.bf16.msra.mxu0 %v11588
        %12941 = vmatprep.subr.bf16.mxu0 0
        %12942 = vmatpush1.bf16.msra.mxu0 %v11595
        %12943 = vmatprep.subr.bf16.mxu0 0
        %12944 = vmatpush1.bf16.msra.mxu0 %v11602
        %12945 = vmatprep.subr.bf16.mxu0 0
        %12946 = vmatpush1.bf16.msra.mxu0 %v11609
        %12947 = vmatprep.subr.bf16.mxu0 0
        %12948 = vmatpush1.bf16.msra.mxu0 %v11616
        %12949 = vmatprep.mubr.bf16.mxu0 %v10054
        %12950 = vmatmul.mubr.bf16.gmra.mrb[0].mxu0 %v10053
        %v12951 = vpop.f32.mrb[0].mxu0
        %v12952 = vadd.f32 %v10089, %v12951
        %v12953 = vpop.f32.mrb[0].mxu0
        %v12954 = vpop.f32.mrb[0].mxu0
        %v12955 = vadd.f32 %v10089, %v12954
        %v12956 = vpop.f32.mrb[0].mxu0
        %12957 = vdwg.mxu0
        %12958 = vmatprep.subr.bf16.mxu0 0
        %12959 = vmatpush1.bf16.msra.mxu0 %v11623
        %12960 = vmatprep.subr.bf16.mxu0 0
        %12961 = vmatpush1.bf16.msra.mxu0 %v11630
        %12962 = vmatprep.subr.bf16.mxu0 0
        %12963 = vmatpush1.bf16.msra.mxu0 %v11637
        %12964 = vmatprep.subr.bf16.mxu0 0
        %12965 = vmatpush1.bf16.msra.mxu0 %v11644
        %12966 = vmatprep.subr.bf16.mxu0 0
        %12967 = vmatpush1.bf16.msra.mxu0 %v11651
        %12968 = vmatprep.subr.bf16.mxu0 0
        %12969 = vmatpush1.bf16.msra.mxu0 %v11658
        %12970 = vmatprep.subr.bf16.mxu0 0
        %12971 = vmatpush1.bf16.msra.mxu0 %v11665
        %12972 = vmatprep.subr.bf16.mxu0 0
        %12973 = vmatpush1.bf16.msra.mxu0 %v11672
        %12974 = vmatprep.subr.bf16.mxu0 0
        %12975 = vmatpush1.bf16.msra.mxu0 %v11679
        %12976 = vmatprep.subr.bf16.mxu0 0
        %12977 = vmatpush1.bf16.msra.mxu0 %v11686
        %12978 = vmatprep.subr.bf16.mxu0 0
        %12979 = vmatpush1.bf16.msra.mxu0 %v11693
        %12980 = vmatprep.subr.bf16.mxu0 0
        %12981 = vmatpush1.bf16.msra.mxu0 %v11700
        %12982 = vmatprep.subr.bf16.mxu0 0
        %12983 = vmatpush1.bf16.msra.mxu0 %v11707
        %12984 = vmatprep.subr.bf16.mxu0 0
        %12985 = vmatpush1.bf16.msra.mxu0 %v11714
        %12986 = vmatprep.subr.bf16.mxu0 0
        %12987 = vmatpush1.bf16.msra.mxu0 %v11721
        %12988 = vmatprep.subr.bf16.mxu0 0
        %12989 = vmatpush1.bf16.msra.mxu0 %v11728
        %12990 = vmatprep.mubr.bf16.mxu0 %v10056
        %12991 = vmatmul.mubr.bf16.gmra.mrb[0].mxu0 %v10055
        %v12992 = vpop.f32.mrb[0].mxu0
        %v12993 = vadd.f32 %v12952, %v12992
        %v12994 = vpop.f32.mrb[0].mxu0
        %v12995 = vpop.f32.mrb[0].mxu0
        %v12996 = vadd.f32 %v12955, %v12995
        %v12997 = vpop.f32.mrb[0].mxu0
        %12998 = vdwg.mxu0
        %12999 = vmatprep.subr.bf16.mxu0 0
        %13000 = vmatpush1.bf16.msra.mxu0 %v11735
        %13001 = vmatprep.subr.bf16.mxu0 0
        %13002 = vmatpush1.bf16.msra.mxu0 %v11742
        %13003 = vmatprep.subr.bf16.mxu0 0
        %13004 = vmatpush1.bf16.msra.mxu0 %v11749
        %13005 = vmatprep.subr.bf16.mxu0 0
        %13006 = vmatpush1.bf16.msra.mxu0 %v11756
        %13007 = vmatprep.subr.bf16.mxu0 0
        %13008 = vmatpush1.bf16.msra.mxu0 %v11763
        %13009 = vmatprep.subr.bf16.mxu0 0
        %13010 = vmatpush1.bf16.msra.mxu0 %v11770
        %13011 = vmatprep.subr.bf16.mxu0 0
        %13012 = vmatpush1.bf16.msra.mxu0 %v11777
        %13013 = vmatprep.subr.bf16.mxu0 0
        %13014 = vmatpush1.bf16.msra.mxu0 %v11784
        %13015 = vmatprep.subr.bf16.mxu0 0
        %13016 = vmatpush1.bf16.msra.mxu0 %v11791
        %13017 = vmatprep.subr.bf16.mxu0 0
        %13018 = vmatpush1.bf16.msra.mxu0 %v11798
        %13019 = vmatprep.subr.bf16.mxu0 0
        %13020 = vmatpush1.bf16.msra.mxu0 %v11805
        %13021 = vmatprep.subr.bf16.mxu0 0
        %13022 = vmatpush1.bf16.msra.mxu0 %v11812
        %13023 = vmatprep.subr.bf16.mxu0 0
        %13024 = vmatpush1.bf16.msra.mxu0 %v11819
        %13025 = vmatprep.subr.bf16.mxu0 0
        %13026 = vmatpush1.bf16.msra.mxu0 %v11826
        %13027 = vmatprep.subr.bf16.mxu0 0
        %13028 = vmatpush1.bf16.msra.mxu0 %v11833
        %13029 = vmatprep.subr.bf16.mxu0 0
        %13030 = vmatpush1.bf16.msra.mxu0 %v11840
        %13031 = vmatprep.mubr.bf16.mxu0 %v10058
        %13032 = vmatmul.mubr.bf16.gmra.mrb[0].mxu0 %v10057
        %v13033 = vpop.f32.mrb[0].mxu0
        %v13034 = vadd.f32 %v12993, %v13033
        %v13035 = vpop.f32.mrb[0].mxu0
        %v13036 = vpop.f32.mrb[0].mxu0
        %v13037 = vadd.f32 %v12996, %v13036
        %v13038 = vpop.f32.mrb[0].mxu0
        %13039 = vdwg.mxu0
        %13040 = vmatprep.subr.bf16.mxu0 0
        %13041 = vmatpush1.bf16.msra.mxu0 %v11847
        %13042 = vmatprep.subr.bf16.mxu0 0
        %13043 = vmatpush1.bf16.msra.mxu0 %v11854
        %13044 = vmatprep.subr.bf16.mxu0 0
        %13045 = vmatpush1.bf16.msra.mxu0 %v11861
        %13046 = vmatprep.subr.bf16.mxu0 0
        %13047 = vmatpush1.bf16.msra.mxu0 %v11868
        %13048 = vmatprep.subr.bf16.mxu0 0
        %13049 = vmatpush1.bf16.msra.mxu0 %v11875
        %13050 = vmatprep.subr.bf16.mxu0 0
        %13051 = vmatpush1.bf16.msra.mxu0 %v11882
        %13052 = vmatprep.subr.bf16.mxu0 0
        %13053 = vmatpush1.bf16.msra.mxu0 %v11889
        %13054 = vmatprep.subr.bf16.mxu0 0
        %13055 = vmatpush1.bf16.msra.mxu0 %v11896
        %13056 = vmatprep.subr.bf16.mxu0 0
        %13057 = vmatpush1.bf16.msra.mxu0 %v11903
        %13058 = vmatprep.subr.bf16.mxu0 0
        %13059 = vmatpush1.bf16.msra.mxu0 %v11910
        %13060 = vmatprep.subr.bf16.mxu0 0
        %13061 = vmatpush1.bf16.msra.mxu0 %v11917
        %13062 = vmatprep.subr.bf16.mxu0 0
        %13063 = vmatpush1.bf16.msra.mxu0 %v11924
        %13064 = vmatprep.subr.bf16.mxu0 0
        %13065 = vmatpush1.bf16.msra.mxu0 %v11931
        %13066 = vmatprep.subr.bf16.mxu0 0
        %13067 = vmatpush1.bf16.msra.mxu0 %v11938
        %13068 = vmatprep.subr.bf16.mxu0 0
        %13069 = vmatpush1.bf16.msra.mxu0 %v11945
        %13070 = vmatprep.subr.bf16.mxu0 0
        %13071 = vmatpush1.bf16.msra.mxu0 %v11952
        %13072 = vmatprep.mubr.bf16.mxu0 %v10060
        %13073 = vmatmul.mubr.bf16.gmra.mrb[0].mxu0 %v10059
        %v13074 = vpop.f32.mrb[0].mxu0
        %v13075 = vadd.f32 %v13034, %v13074
        %v13076 = vpop.f32.mrb[0].mxu0
        %v13077 = vpop.f32.mrb[0].mxu0
        %v13078 = vadd.f32 %v13037, %v13077
        %v13079 = vpop.f32.mrb[0].mxu0
        %13080 = vdwg.mxu0
        %v13081 = vxor.u32 %v12565, 2147483648
        %v13082 = vxor.u32 %v12567, 2147483648
        %v13083 = vxor.u32 %v12737, 2147483648
        %v13084 = vxor.u32 %v12739, 2147483648
        %v13085 = vxor.u32 %v12909, 2147483648
        %v13086 = vxor.u32 %v12911, 2147483648
        %v13087 = vxor.u32 %v13075, 2147483648
        %v13088 = vxor.u32 %v12569, 2147483648
        %v13089 = vxor.u32 %v12571, 2147483648
        %v13090 = vxor.u32 %v12741, 2147483648
        %v13091 = vxor.u32 %v12743, 2147483648
        %v13092 = vxor.u32 %v12913, 2147483648
        %v13093 = vxor.u32 %v12915, 2147483648
        %v13094 = vxor.u32 %v13078, 2147483648
        %v13095 = vmul.f32 %v13081, 1.442695
        %v13096 = vpow.pop %v13095
        %v13097 = vmul.f32 %v13082, 1.442695
        %v13098 = vpow.pop %v13097
        %v13099 = vmul.f32 %v13083, 1.442695
        %v13100 = vpow.pop %v13099
        %v13101 = vmul.f32 %v13084, 1.442695
        %v13102 = vpow.pop %v13101
        %v13103 = vmul.f32 %v13085, 1.442695
        %v13104 = vpow.pop %v13103
        %v13105 = vmul.f32 %v13086, 1.442695
        %v13106 = vpow.pop %v13105
        %v13107 = vmul.f32 %v13087, 1.442695
        %v13108 = vpow.pop %v13107
        %v13109 = vmul.f32 %v13088, 1.442695
        %v13110 = vpow.pop %v13109
        %v13111 = vmul.f32 %v13089, 1.442695
        %v13112 = vpow.pop %v13111
        %v13113 = vmul.f32 %v13090, 1.442695
        %v13114 = vpow.pop %v13113
        %v13115 = vmul.f32 %v13091, 1.442695
        %v13116 = vpow.pop %v13115
        %v13117 = vmul.f32 %v13092, 1.442695
        %v13118 = vpow.pop %v13117
        %v13119 = vmul.f32 %v13093, 1.442695
        %v13120 = vpow.pop %v13119
        %v13121 = vmul.f32 %v13094, 1.442695
        %v13122 = vpow.pop %v13121
        %v13123 = vadd.f32 %v13096, 1.0
        %v13124 = vadd.f32 %v13098, 1.0
        %v13125 = vadd.f32 %v13100, 1.0
        %v13126 = vadd.f32 %v13102, 1.0
        %v13127 = vadd.f32 %v13104, 1.0
        %v13128 = vadd.f32 %v13106, 1.0
        %v13129 = vadd.f32 %v13108, 1.0
        %v13130 = vadd.f32 %v13110, 1.0
        %v13131 = vadd.f32 %v13112, 1.0
        %v13132 = vadd.f32 %v13114, 1.0
        %v13133 = vadd.f32 %v13116, 1.0
        %v13134 = vadd.f32 %v13118, 1.0
        %v13135 = vadd.f32 %v13120, 1.0
        %v13136 = vadd.f32 %v13122, 1.0
        %v13137 = vrcp.pop %v13123
        %v13138 = vmul.f32 1.0, %v13137
        %v13139 = vrcp.pop %v13124
        %v13140 = vmul.f32 1.0, %v13139
        %v13141 = vrcp.pop %v13125
        %v13142 = vmul.f32 1.0, %v13141
        %v13143 = vrcp.pop %v13126
        %v13144 = vmul.f32 1.0, %v13143
        %v13145 = vrcp.pop %v13127
        %v13146 = vmul.f32 1.0, %v13145
        %v13147 = vrcp.pop %v13128
        %v13148 = vmul.f32 1.0, %v13147
        %v13149 = vrcp.pop %v13129
        %v13150 = vmul.f32 1.0, %v13149
        %v13151 = vrcp.pop %v13130
        %v13152 = vmul.f32 1.0, %v13151
        %v13153 = vrcp.pop %v13131
        %v13154 = vmul.f32 1.0, %v13153
        %v13155 = vrcp.pop %v13132
        %v13156 = vmul.f32 1.0, %v13155
        %v13157 = vrcp.pop %v13133
        %v13158 = vmul.f32 1.0, %v13157
        %v13159 = vrcp.pop %v13134
        %v13160 = vmul.f32 1.0, %v13159
        %v13161 = vrcp.pop %v13135
        %v13162 = vmul.f32 1.0, %v13161
        %v13163 = vrcp.pop %v13136
        %v13164 = vmul.f32 1.0, %v13163
        %13165 = vst [vmem:[%s783] sm:$0xff] %v13138
        %13166 = vst [vmem:[%s783 + $0x8] sm:$0xff] %v13140
        %13167 = vst [vmem:[%s783 + $0x10] sm:$0xff] %v13142
        %13168 = vst [vmem:[%s783 + $0x18] sm:$0xff] %v13144
        %13169 = vst [vmem:[%s783 + $0x20] sm:$0xff] %v13146
        %13170 = vst [vmem:[%s783 + $0x28] sm:$0xff] %v13148
        %13171 = vst [vmem:[%s783 + $0x30] sm:$0xff] %v13150
        %13172 = vst [vmem:[%s783 + $0x38] sm:$0xff] %v13152
        %13173 = vst [vmem:[%s783 + $0x40] sm:$0xff] %v13154
        %13174 = vst [vmem:[%s783 + $0x48] sm:$0xff] %v13156
        %13175 = vst [vmem:[%s783 + $0x50] sm:$0xff] %v13158
        %13176 = vst [vmem:[%s783 + $0x58] sm:$0xff] %v13160
        %13177 = vst [vmem:[%s783 + $0x60] sm:$0xff] %v13162
        %13178 = vst [vmem:[%s783 + $0x68] sm:$0xff] %v13164
        %s13179 = sand.u32 %s412, 1
        %s13180 = scalar_lea.sflag [#allocation4], %s13179
        %s13181 = sand.u32 %s412, 1
        %s13182 = smul.addr %s13181, 112
        %s13183 = scalar_lea.vmem [#allocation29], %s13182
        // Predicated region
        $region157: #{_ae_forward_padded.1} parent=87 // pred_check
          %p13184 = pneg %p422
        $region158: #{_ae_forward_padded.1} parent=87 // pred_check_branch
          %13186 = sbr.rel (%p13184) target = $region160
        $region159: #{_ae_forward_padded.1} parent=87 // pred_region
          %s13187 = smul.u32 2, %s42
          %s13189 = ssub.s32 1792, 1792
          %13190 = vsyncadd %s13180, %s13189
          %s13191 = smul.addr %s13187, 7
          %s13192 = smul.addr %s13191, 128
          %s13193 = scalar_lea.hbm %s17, %s13192
          %s13194 = sshll.u32 %s13183, 4
          %s13195 = int_to_ptr.vmem [resolvable:$true] %s13194
          %13200 = dma.vmem_to_hbm [thread:$0]  %s13195, 1792, %s13193, %s13180, 896, 896, 56
        $region160: #{_ae_forward_padded.1} parent=87 // pred_fallthru
          _
      $region88: #{_ae_forward_padded.1} parent=5 // pred_fallthru
        _
      %p13201 = scmp.le.s32.totalorder 2, %s37
      // Predicated region
      $region161: #{_ae_forward_padded.1} parent=5 // pred_check
        %p13202 = pneg %p13201
      $region162: #{_ae_forward_padded.1} parent=5 // pred_check_branch
        %13204 = sbr.rel (%p13202) target = $region164
      $region163: #{_ae_forward_padded.1} parent=5 // pred_region
        %s13205 = ssub.s32 %s37, 2
        // Predicated region
        $region165: #{_ae_forward_padded.1} parent=163 // pred_check
          %p13206 = pneg %p428
        $region166: #{_ae_forward_padded.1} parent=163 // pred_check_branch
          %13208 = sbr.rel (%p13206) target = $region168
        $region167: #{_ae_forward_padded.1} parent=163 // pred_region
          %s13209 = sand.u32 %s413, 1
          %s13210 = scalar_lea.sflag [#allocation4], %s13209
          %s13211 = sand.u32 %s413, 1
          %s13212 = smul.addr %s13211, 112
          %s13213 = scalar_lea.vmem [#allocation29], %s13212
          %13214 = dma.done %s13210, 1792
        $region168: #{_ae_forward_padded.1} parent=163 // pred_fallthru
          _
      $region164: #{_ae_forward_padded.1} parent=5 // pred_fallthru
        _
    $region6: #{_ae_forward_padded.1} parent=1 // loop_footer
      %s41 = sadd.s32 1, %s37
    $region7: #{_ae_forward_padded.1} parent=1 // loop_footer_branch
      %36 = sbr.rel target = $region3
    $region8: #{_ae_forward_padded.1} parent=1 // loop_exit
      _
    %13215 = vsyncpa [#allocation3], 1
    %s13216 = scalar_lea.sflag [#allocation3], 1
    %13217 = vsyncpa %s13216, 1
    %13218 = vsyncpa [#allocation6], 1
    %13219 = vsyncpa [#allocation9], 1
    %13220 = vsyncpa [#allocation12], 1
    %13221 = vsyncpa [#allocation15], 1
    %13222 = vsyncpa [#allocation18], 1
    %13223 = vsyncpa [#allocation21], 1
    %13224 = vsyncpa [#allocation24], 1
    %13225 = vsyncpa [#allocation27], 1
    %13226 = vsyncpa [#allocation4], 1
    %s13227 = scalar_lea.sflag [#allocation4], 1
    %13228 = vsyncpa %s13227, 1

</llo_original>
